<compile_context>
chip_gen: v5e
topology: v5e:2x2
jax: 0.10.0
libtpu: 0.0.40
codegen_flags: <defaults>
</compile_context>

<pallas_src>
import numpy as np
import jax
import jax.numpy as jnp
from jax.experimental import pallas as pl
from jax.experimental.pallas import tpu as pltpu

# ---------------- config (mirrors the PyTorch module / T5Config defaults) ----------------
EMBEDDING_DIM = 128            # d_model
MLP_DIM = 1024                 # d_ff
NUM_LAYERS = 4                 # encoder layers == decoder layers
NUM_HEADS = 6
D_KV = 64                      # T5Config default d_kv
INNER_DIM = NUM_HEADS * D_KV   # 384
PAD_VALUE = 256 * 4            # 1024 (pad token & decoder start token)
VOCAB_SIZE = 256 * 4 + 1       # 1025
VOCAB_PAD = 1152               # next multiple of 128 >= 1025 (lane-dense logits)
REL_NUM_BUCKETS = 32
REL_MAX_DISTANCE = 128
LN_EPS = 1e-6
NEG_INF = -1e9


# ------------------------------- in-kernel building blocks -------------------------------

def _rms(x, w):
    # T5LayerNorm: RMS norm, no mean subtraction, no bias (f32 math).
    var = jnp.mean(x * x, axis=-1, keepdims=True)
    return x * jax.lax.rsqrt(var + LN_EPS) * w


def _bf16_dot(x, w_bf16):
    return jnp.dot(x.astype(jnp.bfloat16), w_bf16, preferred_element_type=jnp.float32)


def _mha(q2d, k2d, v2d, bias_hqk, mask_b1k, w_o, B, Tq, Tk):
    """Batched-head attention on lane-dense 2-D activations.

    q2d: (B*Tq, H*Dk), k2d/v2d: (B*Tk, H*Dk); bias_hqk: (H, Tq, Tk) or None;
    mask_b1k: (B, 1, Tk) additive or None; w_o: (H*Dk, D) bf16.
    Returns the o-projected (B*Tq, D) f32.  T5 attention: no 1/sqrt(d) scaling.
    """
    H, Dk = NUM_HEADS, D_KV

    def heads(x2d, T):
        # (B*T, H*Dk) -> (H*B, T, Dk): static 64-lane slices + leading-dim stack/reshape only.
        xs = jnp.stack([x2d[:, h * Dk:(h + 1) * Dk] for h in range(H)], axis=0)  # (H, B*T, Dk)
        return xs.reshape(H * B, T, Dk)

    q = heads(q2d, Tq).astype(jnp.bfloat16)
    k = heads(k2d, Tk).astype(jnp.bfloat16)
    v = heads(v2d, Tk).astype(jnp.bfloat16)

    # all-head scores in one batched matmul, one f32 softmax chain
    s = jnp.einsum('bqd,bkd->bqk', q, k,
                   preferred_element_type=jnp.float32).reshape(H, B, Tq, Tk)
    if bias_hqk is not None:
        s = s + bias_hqk[:, None, :, :]
    if mask_b1k is not None:
        s = s + mask_b1k[None, :, :, :]
    s = s - jnp.max(s, axis=-1, keepdims=True)
    p = jnp.exp(s)
    p = p * pl.reciprocal(jnp.sum(p, axis=-1, keepdims=True), approx=True)

    ctx = jnp.einsum('bqk,bkd->bqd', p.reshape(H * B, Tq, Tk).astype(jnp.bfloat16), v,
                     preferred_element_type=jnp.float32)                # (H*B, Tq, Dk)
    ctx = ctx.reshape(H, B * Tq, Dk)
    ctx2d = jnp.concatenate([ctx[h] for h in range(H)], axis=-1)        # (B*Tq, H*Dk)
    return jnp.dot(ctx2d.astype(jnp.bfloat16), w_o, preferred_element_type=jnp.float32)


# --------------------------------- fused Pallas kernel ---------------------------------

def _make_fused_kernel(B, Te, Td):
    I1, I2, I3 = INNER_DIM, 2 * INNER_DIM, 3 * INNER_DIM

    def kernel(enc_emb_ref, dec_emb_ref, enc_mask_ref, enc_bias_ref, dec_bias_ref,
               lab_ref, lmh_ref,
               e_ln0, e_wqkv, e_wo, e_ln1, e_wi, e_wfo, e_lnf,
               d_ln0, d_wqkv, d_wso, d_ln1, d_wcq, d_wckv, d_wco, d_ln2, d_wi, d_wfo, d_lnf,
               logits_ref, loss_ref,
               h_enc, h_dec, enc_kv):
        i = pl.program_id(0)

        # ---- step 0: load embeddings into the carried hidden-state scratch ----
        @pl.when(i == 0)
        def _init():
            h_enc[...] = enc_emb_ref[...]
            h_dec[...] = dec_emb_ref[...]

        # ---- encoder layer (steps 0 .. L-1), weights streamed per layer ----
        @pl.when(i < NUM_LAYERS)
        def _encoder_layer():
            h = h_enc[...]
            x = _rms(h, e_ln0[0])
            qkv = _bf16_dot(x, e_wqkv[0])                               # (M, 3*inner)
            h = h + _mha(qkv[:, :I1], qkv[:, I1:I2], qkv[:, I2:I3],
                         enc_bias_ref[...], enc_mask_ref[...], e_wo[0], B, Te, Te)
            x = _rms(h, e_ln1[0])
            ff = jnp.maximum(_bf16_dot(x, e_wi[0]), 0.0)
            h = h + _bf16_dot(ff, e_wfo[0])
            h_enc[...] = h

        # ---- encoder final RMS norm -> bf16 cross-attn operand (hoisted, stored once) ----
        @pl.when(i == NUM_LAYERS - 1)
        def _encoder_finalize():
            enc_kv[...] = _rms(h_enc[...], e_lnf[0]).astype(jnp.bfloat16)

        # ---- decoder layer (steps L .. 2L-1) ----
        @pl.when(jnp.logical_and(i >= NUM_LAYERS, i < 2 * NUM_LAYERS))
        def _decoder_layer():
            h = h_dec[...]
            # causal self-attention (rel bias + causal mask folded into dec_bias)
            x = _rms(h, d_ln0[0])
            qkv = _bf16_dot(x, d_wqkv[0])
            h = h + _mha(qkv[:, :I1], qkv[:, I1:I2], qkv[:, I2:I3],
                         dec_bias_ref[...], None, d_wso[0], B, Td, Td)
            # cross-attention over the (bf16, pre-normed) encoder output
            x = _rms(h, d_ln1[0])
            q = _bf16_dot(x, d_wcq[0])
            kv = jnp.dot(enc_kv[...], d_wckv[0], preferred_element_type=jnp.float32)
            h = h + _mha(q, kv[:, :I1], kv[:, I1:], None,
                         enc_mask_ref[...], d_wco[0], B, Td, Te)
            # FFN
            x = _rms(h, d_ln2[0])
            ff = jnp.maximum(_bf16_dot(x, d_wi[0]), 0.0)
            h = h + _bf16_dot(ff, d_wfo[0])
            h_dec[...] = h

        # ---- step 2L: tied lm head + fused cross-entropy (ignore_index = -100) ----
        @pl.when(i == 2 * NUM_LAYERS)
        def _head_and_loss():
            dec_h = _rms(h_dec[...], d_lnf[0])
            xs = (dec_h * (EMBEDDING_DIM ** -0.5)).astype(jnp.bfloat16)   # tied-emb rescale
            lg = jnp.dot(xs, lmh_ref[...], preferred_element_type=jnp.float32)  # (N, VPAD)
            logits_ref[...] = lg
            col = jax.lax.broadcasted_iota(jnp.int32, lg.shape, 1)
            lgm = jnp.where(col < VOCAB_SIZE, lg, NEG_INF)                # mask pad vocab cols
            m = jnp.max(lgm, axis=-1, keepdims=True)
            lse = jnp.log(jnp.sum(jnp.exp(lgm - m), axis=-1, keepdims=True)) + m
            lab = lab_ref[...]                                            # (N, 1) int32
            tgt = jnp.sum(jnp.where(col == lab, lgm, 0.0), axis=-1, keepdims=True)
            valid = (lab != -100).astype(jnp.float32)
            loss = jnp.sum((lse - tgt) * valid) / jnp.maximum(jnp.sum(valid), 1.0)
            lane = jax.lax.broadcasted_iota(jnp.int32, (1, 128), 1)
            loss_ref[...] = jnp.where(lane == 0, loss, 0.0).astype(jnp.float32)

    return kernel


# ---------------------------------- pallas_call wrapper ---------------------------------

def _cost_estimate(B, Te, Td, in_bytes, out_bytes):
    Me, Md = B * Te, B * Td
    d, f, inner, vp = EMBEDDING_DIM, MLP_DIM, INNER_DIM, VOCAB_PAD
    attn = lambda M, Tq, Tk: 4 * B * NUM_HEADS * Tq * Tk * D_KV + 2 * M * inner * d
    enc_l = 2 * Me * d * 3 * inner + attn(Me, Te, Te) + 4 * Me * d * f
    dec_l = (2 * Md * d * 3 * inner + attn(Md, Td, Td)
             + 2 * Md * d * inner + 2 * Me * d * 2 * inner + attn(Md, Td, Te)
             + 4 * Md * d * f)
    flops = NUM_LAYERS * (enc_l + dec_l) + 2 * Md * d * vp
    trans = NUM_LAYERS * B * NUM_HEADS * (Te * Te + Td * Td + Td * Te) + Md * vp
    return pl.CostEstimate(flops=flops, transcendentals=trans,
                           bytes_accessed=in_bytes + out_bytes)


def _fused_forward(p, enc_emb, dec_emb, enc_mask, enc_bias, dec_bias, lab2d, B, Te, Td):
    Me, Md = B * Te, B * Td

    def const_spec(shape):
        n = len(shape)
        return pl.BlockSpec(shape, lambda i: (0,) * n)

    def enc_spec(arr):       # layer l = min(i, L-1): resident/no-refetch during later phases
        return pl.BlockSpec((1,) + arr.shape[1:],
                            lambda i: (jnp.minimum(i, NUM_LAYERS - 1), 0, 0))

    def dec_spec(arr):       # layer l = clamp(i - L, 0, L-1)
        return pl.BlockSpec((1,) + arr.shape[1:],
                            lambda i: (jnp.minimum(jnp.maximum(i - NUM_LAYERS, 0),
                                                   NUM_LAYERS - 1), 0, 0))

    e, d = p["encoder"], p["decoder"]
    inputs = [
        (enc_emb, const_spec(enc_emb.shape)),
        (dec_emb, const_spec(dec_emb.shape)),
        (enc_mask, const_spec(enc_mask.shape)),
        (enc_bias, const_spec(enc_bias.shape)),
        (dec_bias, const_spec(dec_bias.shape)),
        (lab2d, const_spec(lab2d.shape)),
        (p["lm_head_t"], const_spec(p["lm_head_t"].shape)),
        (e["ln0"], enc_spec(e["ln0"])), (e["wqkv"], enc_spec(e["wqkv"])),
        (e["wo"], enc_spec(e["wo"])), (e["ln1"], enc_spec(e["ln1"])),
        (e["wi"], enc_spec(e["wi"])), (e["wfo"], enc_spec(e["wfo"])),
        (e["lnf"], const_spec(e["lnf"].shape)),
        (d["ln0"], dec_spec(d["ln0"])), (d["wqkv"], dec_spec(d["wqkv"])),
        (d["wso"], dec_spec(d["wso"])), (d["ln1"], dec_spec(d["ln1"])),
        (d["wcq"], dec_spec(d["wcq"])), (d["wckv"], dec_spec(d["wckv"])),
        (d["wco"], dec_spec(d["wco"])), (d["ln2"], dec_spec(d["ln2"])),
        (d["wi"], dec_spec(d["wi"])), (d["wfo"], dec_spec(d["wfo"])),
        (d["lnf"], const_spec(d["lnf"].shape)),
    ]
    args = [a for a, _ in inputs]
    in_specs = [s for _, s in inputs]

    out_shape = (jax.ShapeDtypeStruct((Md, VOCAB_PAD), jnp.float32),
                 jax.ShapeDtypeStruct((1, 128), jnp.float32))
    out_specs = (const_spec((Md, VOCAB_PAD)), const_spec((1, 128)))

    in_bytes = sum(int(a.size) * a.dtype.itemsize for a in args)
    out_bytes = Md * VOCAB_PAD * 4 + 128 * 4

    grid_spec = pltpu.PrefetchScalarGridSpec(
        num_scalar_prefetch=0,
        grid=(2 * NUM_LAYERS + 1,),          # 4 enc layers + 4 dec layers + logits/CE
        in_specs=in_specs,
        out_specs=out_specs,
        scratch_shapes=[pltpu.VMEM((Me, EMBEDDING_DIM), jnp.float32),   # encoder hidden
                        pltpu.VMEM((Md, EMBEDDING_DIM), jnp.float32),   # decoder hidden
                        pltpu.VMEM((Me, EMBEDDING_DIM), jnp.bfloat16)], # encoder output (bf16)
    )
    return pl.pallas_call(
        _make_fused_kernel(B, Te, Td),
        out_shape=out_shape,
        grid_spec=grid_spec,
        compiler_params=pltpu.CompilerParams(
            dimension_semantics=("arbitrary",),
            vmem_limit_bytes=32 * 1024 * 1024),
        cost_estimate=_cost_estimate(B, Te, Td, in_bytes, out_bytes),
    )(*args)


# ----------------------------- T5 glue in plain JAX (tiny ops) -----------------------------

def _relative_position_bucket(relative_position, bidirectional, num_buckets, max_distance):
    relative_buckets = jnp.zeros_like(relative_position)
    if bidirectional:
        num_buckets //= 2
        relative_buckets = relative_buckets + (relative_position > 0).astype(jnp.int32) * num_buckets
        relative_position = jnp.abs(relative_position)
    else:
        relative_position = -jnp.minimum(relative_position, 0)
    max_exact = num_buckets // 2
    is_small = relative_position < max_exact
    rp = jnp.maximum(relative_position, 1).astype(jnp.float32)
    rel_if_large = max_exact + (
        jnp.log(rp / max_exact) / np.log(max_distance / max_exact) * (num_buckets - max_exact)
    ).astype(jnp.int32)
    rel_if_large = jnp.minimum(rel_if_large, num_buckets - 1)
    return relative_buckets + jnp.where(is_small, relative_position, rel_if_large)


def compute_position_bias(rel_emb, q_len, k_len, bidirectional):
    ctx = jnp.arange(q_len)[:, None]
    mem = jnp.arange(k_len)[None, :]
    buckets = _relative_position_bucket(mem - ctx, bidirectional, REL_NUM_BUCKETS, REL_MAX_DISTANCE)
    values = rel_emb[buckets]                              # (q, k, H) -- gather stays in JAX
    return jnp.transpose(values, (2, 0, 1))                # (H, q, k)


def shift_right(labels):
    B = labels.shape[0]
    shifted = jnp.concatenate(
        [jnp.full((B, 1), PAD_VALUE, dtype=labels.dtype), labels[:, :-1]], axis=1)
    return jnp.where(shifted == -100, PAD_VALUE, shifted)


def _pad_axis1(x, length, value):
    pad = length - x.shape[1]
    if pad == 0:
        return x
    return jnp.pad(x, ((0, 0), (0, pad)), constant_values=value)


def forward(params, input_ids, attention_mask, labels):
    """Mirrors RecommendationModel.forward -> (loss, logits)."""
    B, Te0 = input_ids.shape
    Td0 = labels.shape[1]
    Te = ((Te0 + 7) // 8) * 8        # sublane-align; padded keys masked out below
    Td = ((Td0 + 7) // 8) * 8        # padded decoder rows get label -100 (ignored)

    input_ids_p = _pad_axis1(input_ids, Te, PAD_VALUE)
    mask_p = _pad_axis1(attention_mask, Te, 0)
    labels_p = _pad_axis1(labels, Td, -100)
    dec_input_ids = shift_right(labels_p)

    shared = params["shared"]                                             # (V, D) f32
    enc_emb = shared[input_ids_p].reshape(B * Te, EMBEDDING_DIM)
    dec_emb = shared[dec_input_ids].reshape(B * Td, EMBEDDING_DIM)
    # TODO(synk): move embedding / bias-bucket gathers into the kernel (scalar-prefetched ids)
    # once sequence lengths are large enough for these XLA gathers to matter.

    enc_mask_add = (1.0 - mask_p.astype(jnp.float32))[:, None, :] * NEG_INF        # (B,1,Te)
    enc_bias = compute_position_bias(params["encoder"]["rel_bias"], Te, Te, True)  # (H,Te,Te)
    causal = (jnp.arange(Td)[None, :] <= jnp.arange(Td)[:, None]).astype(jnp.float32)
    dec_bias = (compute_position_bias(params["decoder"]["rel_bias"], Td, Td, False)
                + (1.0 - causal)[None] * NEG_INF)                                  # (H,Td,Td)
    lab2d = labels_p.reshape(B * Td, 1).astype(jnp.int32)

    logits_pad, loss_vec = _fused_forward(params, enc_emb, dec_emb, enc_mask_add,
                                          enc_bias, dec_bias, lab2d, B, Te, Td)
    logits = logits_pad.reshape(B, Td, VOCAB_PAD)[:, :Td0, :VOCAB_SIZE]
    return loss_vec[0, 0], logits


# ----------------------------------- parameter init -----------------------------------

def init_params(key):
    keys = iter(jax.random.split(key, 512))
    nk = lambda: next(keys)

    def nrm(shape, std, dtype=jnp.bfloat16):
        return (std * jax.random.normal(nk(), shape, dtype=jnp.float32)).astype(dtype)

    def stack(fn):
        return jnp.stack([fn() for _ in range(NUM_LAYERS)], axis=0)

    d, f, inner, dkv = EMBEDDING_DIM, MLP_DIM, INNER_DIM, D_KV
    ones_l = jnp.ones((NUM_LAYERS, 1, d), jnp.float32)
    ones_f = jnp.ones((1, 1, d), jnp.float32)

    def qkv_w():
        return jnp.concatenate([nrm((d, inner), (d * dkv) ** -0.5),
                                nrm((d, inner), d ** -0.5),
                                nrm((d, inner), d ** -0.5)], axis=1)       # (d, 3*inner)

    encoder = {
        "rel_bias": nrm((REL_NUM_BUCKETS, NUM_HEADS), d ** -0.5, jnp.float32),
        "ln0": ones_l, "ln1": ones_l, "lnf": ones_f,
        "wqkv": stack(qkv_w),
        "wo": stack(lambda: nrm((inner, d), inner ** -0.5)),
        "wi": stack(lambda: nrm((d, f), d ** -0.5)),
        "wfo": stack(lambda: nrm((f, d), f ** -0.5)),
    }
    decoder = {
        "rel_bias": nrm((REL_NUM_BUCKETS, NUM_HEADS), d ** -0.5, jnp.float32),
        "ln0": ones_l, "ln1": ones_l, "ln2": ones_l, "lnf": ones_f,
        "wqkv": stack(qkv_w),
        "wso": stack(lambda: nrm((inner, d), inner ** -0.5)),
        "wcq": stack(lambda: nrm((d, inner), (d * dkv) ** -0.5)),
        "wckv": stack(lambda: jnp.concatenate([nrm((d, inner), d ** -0.5),
                                               nrm((d, inner), d ** -0.5)], axis=1)),
        "wco": stack(lambda: nrm((inner, d), inner ** -0.5)),
        "wi": stack(lambda: nrm((d, f), d ** -0.5)),
        "wfo": stack(lambda: nrm((f, d), f ** -0.5)),
    }
    shared = nrm((VOCAB_SIZE, d), 1.0, jnp.float32)
    # Tied lm head, precomputed once (pad to lane-dense 1152, transpose, bf16 cast).
    lm_head_t = jnp.pad(shared, ((0, VOCAB_PAD - VOCAB_SIZE), (0, 0))).T.astype(jnp.bfloat16)
    return {"shared": shared, "lm_head_t": lm_head_t,
            "encoder": encoder, "decoder": decoder}


# ---------------------------------------- main ----------------------------------------

if __name__ == "__main__":
    key = jax.random.PRNGKey(0)
    pkey, ikey, lkey = jax.random.split(key, 3)
    params = init_params(pkey)

    B, T_ENC, T_DEC = 2, 8, 5
    input_ids = jax.random.randint(ikey, (B, T_ENC), 0, VOCAB_SIZE, dtype=jnp.int32)
    labels = jax.random.randint(lkey, (B, T_DEC), 0, VOCAB_SIZE - 1, dtype=jnp.int32)
    attention_mask = jnp.ones((B, T_ENC), dtype=jnp.int32)

    fwd = jax.jit(forward)
    loss, logits = fwd(params, input_ids, attention_mask, labels)
    jax.block_until_ready((loss, logits))
    assert logits.shape == (B, T_DEC, VOCAB_SIZE)
    assert bool(jnp.isfinite(loss))
    print("KERNEL_OK")
</pallas_src>

<mosaic_0001>
module attributes {stable_mosaic.version = 11 : i64} {
  func.func @kernel(%arg0: i32, %arg1: memref<16x128xf32, #tpu.memory_space<vmem>>, %arg2: memref<16x128xf32, #tpu.memory_space<vmem>>, %arg3: memref<2x1x8xf32, #tpu.memory_space<vmem>>, %arg4: memref<6x8x8xf32, #tpu.memory_space<vmem>>, %arg5: memref<6x8x8xf32, #tpu.memory_space<vmem>>, %arg6: memref<16x1xi32, #tpu.memory_space<vmem>>, %arg7: memref<128x1152xbf16, #tpu.memory_space<vmem>>, %arg8: memref<1x1x128xf32, #tpu.memory_space<vmem>>, %arg9: memref<1x128x1152xbf16, #tpu.memory_space<vmem>>, %arg10: memref<1x384x128xbf16, #tpu.memory_space<vmem>>, %arg11: memref<1x1x128xf32, #tpu.memory_space<vmem>>, %arg12: memref<1x128x1024xbf16, #tpu.memory_space<vmem>>, %arg13: memref<1x1024x128xbf16, #tpu.memory_space<vmem>>, %arg14: memref<1x1x128xf32, #tpu.memory_space<vmem>>, %arg15: memref<1x1x128xf32, #tpu.memory_space<vmem>>, %arg16: memref<1x128x1152xbf16, #tpu.memory_space<vmem>>, %arg17: memref<1x384x128xbf16, #tpu.memory_space<vmem>>, %arg18: memref<1x1x128xf32, #tpu.memory_space<vmem>>, %arg19: memref<1x128x384xbf16, #tpu.memory_space<vmem>>, %arg20: memref<1x128x768xbf16, #tpu.memory_space<vmem>>, %arg21: memref<1x384x128xbf16, #tpu.memory_space<vmem>>, %arg22: memref<1x1x128xf32, #tpu.memory_space<vmem>>, %arg23: memref<1x128x1024xbf16, #tpu.memory_space<vmem>>, %arg24: memref<1x1024x128xbf16, #tpu.memory_space<vmem>>, %arg25: memref<1x1x128xf32, #tpu.memory_space<vmem>>, %arg26: memref<16x1152xf32, #tpu.memory_space<vmem>>, %arg27: memref<1x128xf32, #tpu.memory_space<vmem>>, %arg28: memref<16x128xf32, #tpu.memory_space<vmem>>, %arg29: memref<16x128xf32, #tpu.memory_space<vmem>>, %arg30: memref<16x128xbf16, #tpu.memory_space<vmem>>) attributes {dimension_semantics = [#tpu.dimension_semantics<arbitrary>], iteration_bounds = array<i64: 9>, scalar_prefetch = 0 : i64, scratch_operands = 3 : i64, tpu.core_type = #tpu.core_type<tc>, window_params = [{pipeline_mode = #tpu.pipeline_mode<synchronous>, transform_indices = @transform_0, window_bounds = array<i64: 16, 128>}, {pipeline_mode = #tpu.pipeline_mode<synchronous>, transform_indices = @transform_1, window_bounds = array<i64: 16, 128>}, {pipeline_mode = #tpu.pipeline_mode<synchronous>, transform_indices = @transform_2, window_bounds = array<i64: 2, 1, 8>}, {pipeline_mode = #tpu.pipeline_mode<synchronous>, transform_indices = @transform_3, window_bounds = array<i64: 6, 8, 8>}, {pipeline_mode = #tpu.pipeline_mode<synchronous>, transform_indices = @transform_4, window_bounds = array<i64: 6, 8, 8>}, {pipeline_mode = #tpu.pipeline_mode<synchronous>, transform_indices = @transform_5, window_bounds = array<i64: 16, 1>}, {pipeline_mode = #tpu.pipeline_mode<synchronous>, transform_indices = @transform_6, window_bounds = array<i64: 128, 1152>}, {transform_indices = @transform_7, window_bounds = array<i64: 1, 1, 128>}, {transform_indices = @transform_8, window_bounds = array<i64: 1, 128, 1152>}, {transform_indices = @transform_9, window_bounds = array<i64: 1, 384, 128>}, {transform_indices = @transform_10, window_bounds = array<i64: 1, 1, 128>}, {transform_indices = @transform_11, window_bounds = array<i64: 1, 128, 1024>}, {transform_indices = @transform_12, window_bounds = array<i64: 1, 1024, 128>}, {pipeline_mode = #tpu.pipeline_mode<synchronous>, transform_indices = @transform_13, window_bounds = array<i64: 1, 1, 128>}, {transform_indices = @transform_14, window_bounds = array<i64: 1, 1, 128>}, {transform_indices = @transform_15, window_bounds = array<i64: 1, 128, 1152>}, {transform_indices = @transform_16, window_bounds = array<i64: 1, 384, 128>}, {transform_indices = @transform_17, window_bounds = array<i64: 1, 1, 128>}, {transform_indices = @transform_18, window_bounds = array<i64: 1, 128, 384>}, {transform_indices = @transform_19, window_bounds = array<i64: 1, 128, 768>}, {transform_indices = @transform_20, window_bounds = array<i64: 1, 384, 128>}, {transform_indices = @transform_21, window_bounds = array<i64: 1, 1, 128>}, {transform_indices = @transform_22, window_bounds = array<i64: 1, 128, 1024>}, {transform_indices = @transform_23, window_bounds = array<i64: 1, 1024, 128>}, {pipeline_mode = #tpu.pipeline_mode<synchronous>, transform_indices = @transform_24, window_bounds = array<i64: 1, 1, 128>}, {pipeline_mode = #tpu.pipeline_mode<synchronous>, transform_indices = @transform_25, window_bounds = array<i64: 16, 1152>}, {pipeline_mode = #tpu.pipeline_mode<synchronous>, transform_indices = @transform_26, window_bounds = array<i64: 1, 128>}]} {
    %c0_i32 = arith.constant 0 : i32
    %0 = arith.cmpi eq, %arg0, %c0_i32 : i32
    %1 = arith.extui %0 : i1 to i32
    %c0_i32_0 = arith.constant 0 : i32
    %2 = arith.cmpi ne, %1, %c0_i32_0 : i32
    scf.if %2 {
      %c0 = arith.constant 0 : index
      %c0_7 = arith.constant 0 : index
      %17 = vector.load %arg1[%c0, %c0_7] : memref<16x128xf32, #tpu.memory_space<vmem>>, vector<16x128xf32>
      %c0_8 = arith.constant 0 : index
      %c0_9 = arith.constant 0 : index
      %18 = vector.load %arg28[%c0_8, %c0_9] : memref<16x128xf32, #tpu.memory_space<vmem>>, vector<16x128xf32>
      tpu.vector_store %arg28[%c0_8, %c0_9], %17 {strides = array<i32>} : memref<16x128xf32, #tpu.memory_space<vmem>>, vector<16x128xf32>,
      %c0_10 = arith.constant 0 : index
      %c0_11 = arith.constant 0 : index
      %19 = vector.load %arg2[%c0_10, %c0_11] : memref<16x128xf32, #tpu.memory_space<vmem>>, vector<16x128xf32>
      %c0_12 = arith.constant 0 : index
      %c0_13 = arith.constant 0 : index
      %20 = vector.load %arg29[%c0_12, %c0_13] : memref<16x128xf32, #tpu.memory_space<vmem>>, vector<16x128xf32>
      tpu.vector_store %arg29[%c0_12, %c0_13], %19 {strides = array<i32>} : memref<16x128xf32, #tpu.memory_space<vmem>>, vector<16x128xf32>,
    } else {
    }
    %c4_i32 = arith.constant 4 : i32
    %3 = arith.cmpi slt, %arg0, %c4_i32 : i32
    %4 = arith.extui %3 : i1 to i32
    %c0_i32_1 = arith.constant 0 : i32
    %5 = arith.cmpi ne, %4, %c0_i32_1 : i32
    scf.if %5 {
      %c0 = arith.constant 0 : index
      %c0_7 = arith.constant 0 : index
      %17 = vector.load %arg28[%c0, %c0_7] : memref<16x128xf32, #tpu.memory_space<vmem>>, vector<16x128xf32>
      %c0_8 = arith.constant 0 : index
      %c0_9 = arith.constant 0 : index
      %c0_10 = arith.constant 0 : index
      %18 = vector.load %arg8[%c0_8, %c0_9, %c0_10] : memref<1x1x128xf32, #tpu.memory_space<vmem>>, vector<1x1x128xf32>
      %19 = vector.shape_cast %18 : vector<1x1x128xf32> to vector<1x128xf32>
      %20 = arith.mulf %17, %17 : vector<16x128xf32>
      %cst = arith.constant dense<0.000000e+00> : vector<16xf32>
      %21 = vector.multi_reduction <add>, %20, %cst [1] : vector<16x128xf32> to vector<16xf32>
      %22 = vector.shape_cast %21 : vector<16xf32> to vector<16x1xf32>
      %cst_11 = arith.constant 1.280000e+02 : f32
      %23 = vector.broadcast %cst_11 : f32 to vector<16x1xf32>
      %24 = arith.divf %22, %23 : vector<16x1xf32>
      %cst_12 = arith.constant 9.99999997E-7 : f32
      %25 = vector.broadcast %cst_12 : f32 to vector<16x1xf32>
      %26 = arith.addf %24, %25 : vector<16x1xf32>
      %27 = math.rsqrt %26 : vector<16x1xf32>
      %28 = vector.broadcast %27 : vector<16x1xf32> to vector<16x128xf32>
      %29 = arith.mulf %17, %28 : vector<16x128xf32>
      %30 = vector.broadcast %19 : vector<1x128xf32> to vector<16x128xf32>
      %31 = arith.mulf %29, %30 : vector<16x128xf32>
      %c0_13 = arith.constant 0 : index
      %c0_14 = arith.constant 0 : index
      %c0_15 = arith.constant 0 : index
      %32 = vector.load %arg9[%c0_13, %c0_14, %c0_15] : memref<1x128x1152xbf16, #tpu.memory_space<vmem>>, vector<1x128x1152xbf16>
      %33 = vector.shape_cast %32 : vector<1x128x1152xbf16> to vector<128x1152xbf16>
      %34 = arith.truncf %31 : vector<16x128xf32> to vector<16x128xbf16>
      %cst_16 = arith.constant dense<0.000000e+00> : vector<16x1152xf32>
      %35 = tpu.matmul %34, %33, %cst_16 {dimension_numbers = #tpu.dot_dimension_numbers<[1], [0], [0], [1], [0, 0, 1, 1], [], []>} : vector<16x128xbf16>, vector<128x1152xbf16>, vector<16x1152xf32> -> vector<16x1152xf32>
      %36 = vector.extract_strided_slice %35 {offsets = [0, 0], sizes = [16, 384], strides = [1, 1]} : vector<16x1152xf32> to vector<16x384xf32>
      %37 = vector.extract_strided_slice %35 {offsets = [0, 384], sizes = [16, 384], strides = [1, 1]} : vector<16x1152xf32> to vector<16x384xf32>
      %38 = vector.extract_strided_slice %35 {offsets = [0, 768], sizes = [16, 384], strides = [1, 1]} : vector<16x1152xf32> to vector<16x384xf32>
      %c0_17 = arith.constant 0 : index
      %c0_18 = arith.constant 0 : index
      %c0_19 = arith.constant 0 : index
      %39 = vector.load %arg4[%c0_17, %c0_18, %c0_19] : memref<6x8x8xf32, #tpu.memory_space<vmem>>, vector<6x8x8xf32>
      %c0_20 = arith.constant 0 : index
      %c0_21 = arith.constant 0 : index
      %c0_22 = arith.constant 0 : index
      %40 = vector.load %arg3[%c0_20, %c0_21, %c0_22] : memref<2x1x8xf32, #tpu.memory_space<vmem>>, vector<2x1x8xf32>
      %c0_23 = arith.constant 0 : index
      %c0_24 = arith.constant 0 : index
      %c0_25 = arith.constant 0 : index
      %41 = vector.load %arg10[%c0_23, %c0_24, %c0_25] : memref<1x384x128xbf16, #tpu.memory_space<vmem>>, vector<1x384x128xbf16>
      %42 = vector.shape_cast %41 : vector<1x384x128xbf16> to vector<384x128xbf16>
      %43 = vector.extract_strided_slice %36 {offsets = [0, 0], sizes = [16, 64], strides = [1, 1]} : vector<16x384xf32> to vector<16x64xf32>
      %44 = vector.extract_strided_slice %36 {offsets = [0, 64], sizes = [16, 64], strides = [1, 1]} : vector<16x384xf32> to vector<16x64xf32>
      %45 = vector.extract_strided_slice %36 {offsets = [0, 128], sizes = [16, 64], strides = [1, 1]} : vector<16x384xf32> to vector<16x64xf32>
      %46 = vector.extract_strided_slice %36 {offsets = [0, 192], sizes = [16, 64], strides = [1, 1]} : vector<16x384xf32> to vector<16x64xf32>
      %47 = vector.extract_strided_slice %36 {offsets = [0, 256], sizes = [16, 64], strides = [1, 1]} : vector<16x384xf32> to vector<16x64xf32>
      %48 = vector.extract_strided_slice %36 {offsets = [0, 320], sizes = [16, 64], strides = [1, 1]} : vector<16x384xf32> to vector<16x64xf32>
      %49 = vector.shape_cast %43 : vector<16x64xf32> to vector<1x16x64xf32>
      %50 = vector.shape_cast %44 : vector<16x64xf32> to vector<1x16x64xf32>
      %51 = vector.shape_cast %45 : vector<16x64xf32> to vector<1x16x64xf32>
      %52 = vector.shape_cast %46 : vector<16x64xf32> to vector<1x16x64xf32>
      %53 = vector.shape_cast %47 : vector<16x64xf32> to vector<1x16x64xf32>
      %54 = vector.shape_cast %48 : vector<16x64xf32> to vector<1x16x64xf32>
      %55 = tpu.concatenate %49, %50, %51, %52, %53, %54 in 0 : vector<1x16x64xf32>, vector<1x16x64xf32>, vector<1x16x64xf32>, vector<1x16x64xf32>, vector<1x16x64xf32>, vector<1x16x64xf32> -> vector<6x16x64xf32>
      %56 = vector.shape_cast %55 : vector<6x16x64xf32> to vector<12x8x64xf32>
      %57 = arith.truncf %56 : vector<12x8x64xf32> to vector<12x8x64xbf16>
      %58 = vector.extract_strided_slice %37 {offsets = [0, 0], sizes = [16, 64], strides = [1, 1]} : vector<16x384xf32> to vector<16x64xf32>
      %59 = vector.extract_strided_slice %37 {offsets = [0, 64], sizes = [16, 64], strides = [1, 1]} : vector<16x384xf32> to vector<16x64xf32>
      %60 = vector.extract_strided_slice %37 {offsets = [0, 128], sizes = [16, 64], strides = [1, 1]} : vector<16x384xf32> to vector<16x64xf32>
      %61 = vector.extract_strided_slice %37 {offsets = [0, 192], sizes = [16, 64], strides = [1, 1]} : vector<16x384xf32> to vector<16x64xf32>
      %62 = vector.extract_strided_slice %37 {offsets = [0, 256], sizes = [16, 64], strides = [1, 1]} : vector<16x384xf32> to vector<16x64xf32>
      %63 = vector.extract_strided_slice %37 {offsets = [0, 320], sizes = [16, 64], strides = [1, 1]} : vector<16x384xf32> to vector<16x64xf32>
      %64 = vector.shape_cast %58 : vector<16x64xf32> to vector<1x16x64xf32>
      %65 = vector.shape_cast %59 : vector<16x64xf32> to vector<1x16x64xf32>
      %66 = vector.shape_cast %60 : vector<16x64xf32> to vector<1x16x64xf32>
      %67 = vector.shape_cast %61 : vector<16x64xf32> to vector<1x16x64xf32>
      %68 = vector.shape_cast %62 : vector<16x64xf32> to vector<1x16x64xf32>
      %69 = vector.shape_cast %63 : vector<16x64xf32> to vector<1x16x64xf32>
      %70 = tpu.concatenate %64, %65, %66, %67, %68, %69 in 0 : vector<1x16x64xf32>, vector<1x16x64xf32>, vector<1x16x64xf32>, vector<1x16x64xf32>, vector<1x16x64xf32>, vector<1x16x64xf32> -> vector<6x16x64xf32>
      %71 = vector.shape_cast %70 : vector<6x16x64xf32> to vector<12x8x64xf32>
      %72 = arith.truncf %71 : vector<12x8x64xf32> to vector<12x8x64xbf16>
      %73 = vector.extract_strided_slice %38 {offsets = [0, 0], sizes = [16, 64], strides = [1, 1]} : vector<16x384xf32> to vector<16x64xf32>
      %74 = vector.extract_strided_slice %38 {offsets = [0, 64], sizes = [16, 64], strides = [1, 1]} : vector<16x384xf32> to vector<16x64xf32>
      %75 = vector.extract_strided_slice %38 {offsets = [0, 128], sizes = [16, 64], strides = [1, 1]} : vector<16x384xf32> to vector<16x64xf32>
      %76 = vector.extract_strided_slice %38 {offsets = [0, 192], sizes = [16, 64], strides = [1, 1]} : vector<16x384xf32> to vector<16x64xf32>
      %77 = vector.extract_strided_slice %38 {offsets = [0, 256], sizes = [16, 64], strides = [1, 1]} : vector<16x384xf32> to vector<16x64xf32>
      %78 = vector.extract_strided_slice %38 {offsets = [0, 320], sizes = [16, 64], strides = [1, 1]} : vector<16x384xf32> to vector<16x64xf32>
      %79 = vector.shape_cast %73 : vector<16x64xf32> to vector<1x16x64xf32>
      %80 = vector.shape_cast %74 : vector<16x64xf32> to vector<1x16x64xf32>
      %81 = vector.shape_cast %75 : vector<16x64xf32> to vector<1x16x64xf32>
      %82 = vector.shape_cast %76 : vector<16x64xf32> to vector<1x16x64xf32>
      %83 = vector.shape_cast %77 : vector<16x64xf32> to vector<1x16x64xf32>
      %84 = vector.shape_cast %78 : vector<16x64xf32> to vector<1x16x64xf32>
      %85 = tpu.concatenate %79, %80, %81, %82, %83, %84 in 0 : vector<1x16x64xf32>, vector<1x16x64xf32>, vector<1x16x64xf32>, vector<1x16x64xf32>, vector<1x16x64xf32>, vector<1x16x64xf32> -> vector<6x16x64xf32>
      %86 = vector.shape_cast %85 : vector<6x16x64xf32> to vector<12x8x64xf32>
      %87 = arith.truncf %86 : vector<12x8x64xf32> to vector<12x8x64xbf16>
      "tpu.trace_start"() <{level = 10 : i32, message = "bqd,bkd->bqk"}> : () -> ()
      %cst_26 = arith.constant dense<0.000000e+00> : vector<12x8x8xf32>
      %88 = tpu.matmul %57, %72, %cst_26 {dimension_numbers = #tpu.dot_dimension_numbers<[2], [2], [1], [1], [0, 0, 0, 1, 1, 1], [0], [0]>} : vector<12x8x64xbf16>, vector<12x8x64xbf16>, vector<12x8x8xf32> -> vector<12x8x8xf32>
      "tpu.trace_stop"() : () -> ()
      %89 = vector.shape_cast %88 : vector<12x8x8xf32> to vector<6x2x8x8xf32>
      %90 = vector.shape_cast %39 : vector<6x8x8xf32> to vector<6x1x8x8xf32>
      %91 = vector.broadcast %90 : vector<6x1x8x8xf32> to vector<6x2x8x8xf32>
      %92 = arith.addf %89, %91 : vector<6x2x8x8xf32>
      %93 = vector.shape_cast %40 : vector<2x1x8xf32> to vector<1x2x1x8xf32>
      %94 = vector.broadcast %93 : vector<1x2x1x8xf32> to vector<6x2x8x8xf32>
      %95 = arith.addf %92, %94 : vector<6x2x8x8xf32>
      %cst_27 = arith.constant dense<0xFF800000> : vector<6x2x8xf32>
      %96 = vector.multi_reduction <maximumf>, %95, %cst_27 [3] : vector<6x2x8x8xf32> to vector<6x2x8xf32>
      %97 = vector.shape_cast %96 : vector<6x2x8xf32> to vector<6x2x8x1xf32>
      %98 = vector.broadcast %97 : vector<6x2x8x1xf32> to vector<6x2x8x8xf32>
      %99 = arith.subf %95, %98 : vector<6x2x8x8xf32>
      %100 = math.exp %99 : vector<6x2x8x8xf32>
      %cst_28 = arith.constant dense<0.000000e+00> : vector<6x2x8xf32>
      %101 = vector.multi_reduction <add>, %100, %cst_28 [3] : vector<6x2x8x8xf32> to vector<6x2x8xf32>
      %102 = vector.shape_cast %101 : vector<6x2x8xf32> to vector<6x2x8x1xf32>
      %103 = tpu.reciprocal %102 {approx = true} : vector<6x2x8x1xf32> -> vector<6x2x8x1xf32>
      %104 = vector.broadcast %103 : vector<6x2x8x1xf32> to vector<6x2x8x8xf32>
      %105 = arith.mulf %100, %104 : vector<6x2x8x8xf32>
      %106 = vector.shape_cast %105 : vector<6x2x8x8xf32> to vector<12x8x8xf32>
      %107 = arith.truncf %106 : vector<12x8x8xf32> to vector<12x8x8xbf16>
      "tpu.trace_start"() <{level = 10 : i32, message = "bqk,bkd->bqd"}> : () -> ()
      %cst_29 = arith.constant dense<0.000000e+00> : vector<12x8x64xf32>
      %108 = tpu.matmul %107, %87, %cst_29 {dimension_numbers = #tpu.dot_dimension_numbers<[2], [1], [1], [2], [0, 0, 0, 1, 1, 2], [0], [0]>} : vector<12x8x8xbf16>, vector<12x8x64xbf16>, vector<12x8x64xf32> -> vector<12x8x64xf32>
      "tpu.trace_stop"() : () -> ()
      %109 = vector.shape_cast %108 : vector<12x8x64xf32> to vector<6x16x64xf32>
      %110 = vector.extract_strided_slice %109 {offsets = [0, 0, 0], sizes = [1, 16, 64], strides = [1, 1, 1]} : vector<6x16x64xf32> to vector<1x16x64xf32>
      %111 = vector.shape_cast %110 : vector<1x16x64xf32> to vector<16x64xf32>
      %112 = vector.extract_strided_slice %109 {offsets = [1, 0, 0], sizes = [1, 16, 64], strides = [1, 1, 1]} : vector<6x16x64xf32> to vector<1x16x64xf32>
      %113 = vector.shape_cast %112 : vector<1x16x64xf32> to vector<16x64xf32>
      %114 = vector.extract_strided_slice %109 {offsets = [2, 0, 0], sizes = [1, 16, 64], strides = [1, 1, 1]} : vector<6x16x64xf32> to vector<1x16x64xf32>
      %115 = vector.shape_cast %114 : vector<1x16x64xf32> to vector<16x64xf32>
      %116 = vector.extract_strided_slice %109 {offsets = [3, 0, 0], sizes = [1, 16, 64], strides = [1, 1, 1]} : vector<6x16x64xf32> to vector<1x16x64xf32>
      %117 = vector.shape_cast %116 : vector<1x16x64xf32> to vector<16x64xf32>
      %118 = vector.extract_strided_slice %109 {offsets = [4, 0, 0], sizes = [1, 16, 64], strides = [1, 1, 1]} : vector<6x16x64xf32> to vector<1x16x64xf32>
      %119 = vector.shape_cast %118 : vector<1x16x64xf32> to vector<16x64xf32>
      %120 = vector.extract_strided_slice %109 {offsets = [5, 0, 0], sizes = [1, 16, 64], strides = [1, 1, 1]} : vector<6x16x64xf32> to vector<1x16x64xf32>
      %121 = vector.shape_cast %120 : vector<1x16x64xf32> to vector<16x64xf32>
      %122 = tpu.concatenate %111, %113, %115, %117, %119, %121 in 1 : vector<16x64xf32>, vector<16x64xf32>, vector<16x64xf32>, vector<16x64xf32>, vector<16x64xf32>, vector<16x64xf32> -> vector<16x384xf32>
      %123 = arith.truncf %122 : vector<16x384xf32> to vector<16x384xbf16>
      %cst_30 = arith.constant dense<0.000000e+00> : vector<16x128xf32>
      %124 = tpu.matmul %123, %42, %cst_30 {dimension_numbers = #tpu.dot_dimension_numbers<[1], [0], [0], [1], [0, 0, 1, 1], [], []>} : vector<16x384xbf16>, vector<384x128xbf16>, vector<16x128xf32> -> vector<16x128xf32>
      %125 = arith.addf %17, %124 : vector<16x128xf32>
      %c0_31 = arith.constant 0 : index
      %c0_32 = arith.constant 0 : index
      %c0_33 = arith.constant 0 : index
      %126 = vector.load %arg11[%c0_31, %c0_32, %c0_33] : memref<1x1x128xf32, #tpu.memory_space<vmem>>, vector<1x1x128xf32>
      %127 = vector.shape_cast %126 : vector<1x1x128xf32> to vector<1x128xf32>
      %128 = arith.mulf %125, %125 : vector<16x128xf32>
      %cst_34 = arith.constant dense<0.000000e+00> : vector<16xf32>
      %129 = vector.multi_reduction <add>, %128, %cst_34 [1] : vector<16x128xf32> to vector<16xf32>
      %130 = vector.shape_cast %129 : vector<16xf32> to vector<16x1xf32>
      %cst_35 = arith.constant 1.280000e+02 : f32
      %131 = vector.broadcast %cst_35 : f32 to vector<16x1xf32>
      %132 = arith.divf %130, %131 : vector<16x1xf32>
      %cst_36 = arith.constant 9.99999997E-7 : f32
      %133 = vector.broadcast %cst_36 : f32 to vector<16x1xf32>
      %134 = arith.addf %132, %133 : vector<16x1xf32>
      %135 = math.rsqrt %134 : vector<16x1xf32>
      %136 = vector.broadcast %135 : vector<16x1xf32> to vector<16x128xf32>
      %137 = arith.mulf %125, %136 : vector<16x128xf32>
      %138 = vector.broadcast %127 : vector<1x128xf32> to vector<16x128xf32>
      %139 = arith.mulf %137, %138 : vector<16x128xf32>
      %c0_37 = arith.constant 0 : index
      %c0_38 = arith.constant 0 : index
      %c0_39 = arith.constant 0 : index
      %140 = vector.load %arg12[%c0_37, %c0_38, %c0_39] : memref<1x128x1024xbf16, #tpu.memory_space<vmem>>, vector<1x128x1024xbf16>
      %141 = vector.shape_cast %140 : vector<1x128x1024xbf16> to vector<128x1024xbf16>
      %142 = arith.truncf %139 : vector<16x128xf32> to vector<16x128xbf16>
      %cst_40 = arith.constant dense<0.000000e+00> : vector<16x1024xf32>
      %143 = tpu.matmul %142, %141, %cst_40 {dimension_numbers = #tpu.dot_dimension_numbers<[1], [0], [0], [1], [0, 0, 1, 1], [], []>} : vector<16x128xbf16>, vector<128x1024xbf16>, vector<16x1024xf32> -> vector<16x1024xf32>
      %cst_41 = arith.constant 0.000000e+00 : f32
      %144 = vector.broadcast %cst_41 : f32 to vector<16x1024xf32>
      %145 = arith.maximumf %143, %144 : vector<16x1024xf32>
      %c0_42 = arith.constant 0 : index
      %c0_43 = arith.constant 0 : index
      %c0_44 = arith.constant 0 : index
      %146 = vector.load %arg13[%c0_42, %c0_43, %c0_44] : memref<1x1024x128xbf16, #tpu.memory_space<vmem>>, vector<1x1024x128xbf16>
      %147 = vector.shape_cast %146 : vector<1x1024x128xbf16> to vector<1024x128xbf16>
      %148 = arith.truncf %145 : vector<16x1024xf32> to vector<16x1024xbf16>
      %cst_45 = arith.constant dense<0.000000e+00> : vector<16x128xf32>
      %149 = tpu.matmul %148, %147, %cst_45 {dimension_numbers = #tpu.dot_dimension_numbers<[1], [0], [0], [1], [0, 0, 1, 1], [], []>} : vector<16x1024xbf16>, vector<1024x128xbf16>, vector<16x128xf32> -> vector<16x128xf32>
      %150 = arith.addf %125, %149 : vector<16x128xf32>
      %c0_46 = arith.constant 0 : index
      %c0_47 = arith.constant 0 : index
      %151 = vector.load %arg28[%c0_46, %c0_47] : memref<16x128xf32, #tpu.memory_space<vmem>>, vector<16x128xf32>
      tpu.vector_store %arg28[%c0_46, %c0_47], %150 {strides = array<i32>} : memref<16x128xf32, #tpu.memory_space<vmem>>, vector<16x128xf32>,
    } else {
    }
    %c3_i32 = arith.constant 3 : i32
    %6 = arith.cmpi eq, %arg0, %c3_i32 : i32
    %7 = arith.extui %6 : i1 to i32
    %c0_i32_2 = arith.constant 0 : i32
    %8 = arith.cmpi ne, %7, %c0_i32_2 : i32
    scf.if %8 {
      %c0 = arith.constant 0 : index
      %c0_7 = arith.constant 0 : index
      %17 = vector.load %arg28[%c0, %c0_7] : memref<16x128xf32, #tpu.memory_space<vmem>>, vector<16x128xf32>
      %c0_8 = arith.constant 0 : index
      %c0_9 = arith.constant 0 : index
      %c0_10 = arith.constant 0 : index
      %18 = vector.load %arg14[%c0_8, %c0_9, %c0_10] : memref<1x1x128xf32, #tpu.memory_space<vmem>>, vector<1x1x128xf32>
      %19 = vector.shape_cast %18 : vector<1x1x128xf32> to vector<1x128xf32>
      %20 = arith.mulf %17, %17 : vector<16x128xf32>
      %cst = arith.constant dense<0.000000e+00> : vector<16xf32>
      %21 = vector.multi_reduction <add>, %20, %cst [1] : vector<16x128xf32> to vector<16xf32>
      %22 = vector.shape_cast %21 : vector<16xf32> to vector<16x1xf32>
      %cst_11 = arith.constant 1.280000e+02 : f32
      %23 = vector.broadcast %cst_11 : f32 to vector<16x1xf32>
      %24 = arith.divf %22, %23 : vector<16x1xf32>
      %cst_12 = arith.constant 9.99999997E-7 : f32
      %25 = vector.broadcast %cst_12 : f32 to vector<16x1xf32>
      %26 = arith.addf %24, %25 : vector<16x1xf32>
      %27 = math.rsqrt %26 : vector<16x1xf32>
      %28 = vector.broadcast %27 : vector<16x1xf32> to vector<16x128xf32>
      %29 = arith.mulf %17, %28 : vector<16x128xf32>
      %30 = vector.broadcast %19 : vector<1x128xf32> to vector<16x128xf32>
      %31 = arith.mulf %29, %30 : vector<16x128xf32>
      %32 = arith.truncf %31 : vector<16x128xf32> to vector<16x128xbf16>
      %c0_13 = arith.constant 0 : index
      %c0_14 = arith.constant 0 : index
      %33 = vector.load %arg30[%c0_13, %c0_14] : memref<16x128xbf16, #tpu.memory_space<vmem>>, vector<16x128xbf16>
      tpu.vector_store %arg30[%c0_13, %c0_14], %32 {strides = array<i32>} : memref<16x128xbf16, #tpu.memory_space<vmem>>, vector<16x128xbf16>,
    } else {
    }
    %c4_i32_3 = arith.constant 4 : i32
    %9 = arith.cmpi sge, %arg0, %c4_i32_3 : i32
    %c8_i32 = arith.constant 8 : i32
    %10 = arith.cmpi slt, %arg0, %c8_i32 : i32
    %11 = arith.andi %9, %10 : i1
    %12 = arith.extui %11 : i1 to i32
    %c0_i32_4 = arith.constant 0 : i32
    %13 = arith.cmpi ne, %12, %c0_i32_4 : i32
    scf.if %13 {
      %c0 = arith.constant 0 : index
      %c0_7 = arith.constant 0 : index
      %17 = vector.load %arg29[%c0, %c0_7] : memref<16x128xf32, #tpu.memory_space<vmem>>, vector<16x128xf32>
      %c0_8 = arith.constant 0 : index
      %c0_9 = arith.constant 0 : index
      %c0_10 = arith.constant 0 : index
      %18 = vector.load %arg15[%c0_8, %c0_9, %c0_10] : memref<1x1x128xf32, #tpu.memory_space<vmem>>, vector<1x1x128xf32>
      %19 = vector.shape_cast %18 : vector<1x1x128xf32> to vector<1x128xf32>
      %20 = arith.mulf %17, %17 : vector<16x128xf32>
      %cst = arith.constant dense<0.000000e+00> : vector<16xf32>
      %21 = vector.multi_reduction <add>, %20, %cst [1] : vector<16x128xf32> to vector<16xf32>
      %22 = vector.shape_cast %21 : vector<16xf32> to vector<16x1xf32>
      %cst_11 = arith.constant 1.280000e+02 : f32
      %23 = vector.broadcast %cst_11 : f32 to vector<16x1xf32>
      %24 = arith.divf %22, %23 : vector<16x1xf32>
      %cst_12 = arith.constant 9.99999997E-7 : f32
      %25 = vector.broadcast %cst_12 : f32 to vector<16x1xf32>
      %26 = arith.addf %24, %25 : vector<16x1xf32>
      %27 = math.rsqrt %26 : vector<16x1xf32>
      %28 = vector.broadcast %27 : vector<16x1xf32> to vector<16x128xf32>
      %29 = arith.mulf %17, %28 : vector<16x128xf32>
      %30 = vector.broadcast %19 : vector<1x128xf32> to vector<16x128xf32>
      %31 = arith.mulf %29, %30 : vector<16x128xf32>
      %c0_13 = arith.constant 0 : index
      %c0_14 = arith.constant 0 : index
      %c0_15 = arith.constant 0 : index
      %32 = vector.load %arg16[%c0_13, %c0_14, %c0_15] : memref<1x128x1152xbf16, #tpu.memory_space<vmem>>, vector<1x128x1152xbf16>
      %33 = vector.shape_cast %32 : vector<1x128x1152xbf16> to vector<128x1152xbf16>
      %34 = arith.truncf %31 : vector<16x128xf32> to vector<16x128xbf16>
      %cst_16 = arith.constant dense<0.000000e+00> : vector<16x1152xf32>
      %35 = tpu.matmul %34, %33, %cst_16 {dimension_numbers = #tpu.dot_dimension_numbers<[1], [0], [0], [1], [0, 0, 1, 1], [], []>} : vector<16x128xbf16>, vector<128x1152xbf16>, vector<16x1152xf32> -> vector<16x1152xf32>
      %36 = vector.extract_strided_slice %35 {offsets = [0, 0], sizes = [16, 384], strides = [1, 1]} : vector<16x1152xf32> to vector<16x384xf32>
      %37 = vector.extract_strided_slice %35 {offsets = [0, 384], sizes = [16, 384], strides = [1, 1]} : vector<16x1152xf32> to vector<16x384xf32>
      %38 = vector.extract_strided_slice %35 {offsets = [0, 768], sizes = [16, 384], strides = [1, 1]} : vector<16x1152xf32> to vector<16x384xf32>
      %c0_17 = arith.constant 0 : index
      %c0_18 = arith.constant 0 : index
      %c0_19 = arith.constant 0 : index
      %39 = vector.load %arg5[%c0_17, %c0_18, %c0_19] : memref<6x8x8xf32, #tpu.memory_space<vmem>>, vector<6x8x8xf32>
      %c0_20 = arith.constant 0 : index
      %c0_21 = arith.constant 0 : index
      %c0_22 = arith.constant 0 : index
      %40 = vector.load %arg17[%c0_20, %c0_21, %c0_22] : memref<1x384x128xbf16, #tpu.memory_space<vmem>>, vector<1x384x128xbf16>
      %41 = vector.shape_cast %40 : vector<1x384x128xbf16> to vector<384x128xbf16>
      %42 = vector.extract_strided_slice %36 {offsets = [0, 0], sizes = [16, 64], strides = [1, 1]} : vector<16x384xf32> to vector<16x64xf32>
      %43 = vector.extract_strided_slice %36 {offsets = [0, 64], sizes = [16, 64], strides = [1, 1]} : vector<16x384xf32> to vector<16x64xf32>
      %44 = vector.extract_strided_slice %36 {offsets = [0, 128], sizes = [16, 64], strides = [1, 1]} : vector<16x384xf32> to vector<16x64xf32>
      %45 = vector.extract_strided_slice %36 {offsets = [0, 192], sizes = [16, 64], strides = [1, 1]} : vector<16x384xf32> to vector<16x64xf32>
      %46 = vector.extract_strided_slice %36 {offsets = [0, 256], sizes = [16, 64], strides = [1, 1]} : vector<16x384xf32> to vector<16x64xf32>
      %47 = vector.extract_strided_slice %36 {offsets = [0, 320], sizes = [16, 64], strides = [1, 1]} : vector<16x384xf32> to vector<16x64xf32>
      %48 = vector.shape_cast %42 : vector<16x64xf32> to vector<1x16x64xf32>
      %49 = vector.shape_cast %43 : vector<16x64xf32> to vector<1x16x64xf32>
      %50 = vector.shape_cast %44 : vector<16x64xf32> to vector<1x16x64xf32>
      %51 = vector.shape_cast %45 : vector<16x64xf32> to vector<1x16x64xf32>
      %52 = vector.shape_cast %46 : vector<16x64xf32> to vector<1x16x64xf32>
      %53 = vector.shape_cast %47 : vector<16x64xf32> to vector<1x16x64xf32>
      %54 = tpu.concatenate %48, %49, %50, %51, %52, %53 in 0 : vector<1x16x64xf32>, vector<1x16x64xf32>, vector<1x16x64xf32>, vector<1x16x64xf32>, vector<1x16x64xf32>, vector<1x16x64xf32> -> vector<6x16x64xf32>
      %55 = vector.shape_cast %54 : vector<6x16x64xf32> to vector<12x8x64xf32>
      %56 = arith.truncf %55 : vector<12x8x64xf32> to vector<12x8x64xbf16>
      %57 = vector.extract_strided_slice %37 {offsets = [0, 0], sizes = [16, 64], strides = [1, 1]} : vector<16x384xf32> to vector<16x64xf32>
      %58 = vector.extract_strided_slice %37 {offsets = [0, 64], sizes = [16, 64], strides = [1, 1]} : vector<16x384xf32> to vector<16x64xf32>
      %59 = vector.extract_strided_slice %37 {offsets = [0, 128], sizes = [16, 64], strides = [1, 1]} : vector<16x384xf32> to vector<16x64xf32>
      %60 = vector.extract_strided_slice %37 {offsets = [0, 192], sizes = [16, 64], strides = [1, 1]} : vector<16x384xf32> to vector<16x64xf32>
      %61 = vector.extract_strided_slice %37 {offsets = [0, 256], sizes = [16, 64], strides = [1, 1]} : vector<16x384xf32> to vector<16x64xf32>
      %62 = vector.extract_strided_slice %37 {offsets = [0, 320], sizes = [16, 64], strides = [1, 1]} : vector<16x384xf32> to vector<16x64xf32>
      %63 = vector.shape_cast %57 : vector<16x64xf32> to vector<1x16x64xf32>
      %64 = vector.shape_cast %58 : vector<16x64xf32> to vector<1x16x64xf32>
      %65 = vector.shape_cast %59 : vector<16x64xf32> to vector<1x16x64xf32>
      %66 = vector.shape_cast %60 : vector<16x64xf32> to vector<1x16x64xf32>
      %67 = vector.shape_cast %61 : vector<16x64xf32> to vector<1x16x64xf32>
      %68 = vector.shape_cast %62 : vector<16x64xf32> to vector<1x16x64xf32>
      %69 = tpu.concatenate %63, %64, %65, %66, %67, %68 in 0 : vector<1x16x64xf32>, vector<1x16x64xf32>, vector<1x16x64xf32>, vector<1x16x64xf32>, vector<1x16x64xf32>, vector<1x16x64xf32> -> vector<6x16x64xf32>
      %70 = vector.shape_cast %69 : vector<6x16x64xf32> to vector<12x8x64xf32>
      %71 = arith.truncf %70 : vector<12x8x64xf32> to vector<12x8x64xbf16>
      %72 = vector.extract_strided_slice %38 {offsets = [0, 0], sizes = [16, 64], strides = [1, 1]} : vector<16x384xf32> to vector<16x64xf32>
      %73 = vector.extract_strided_slice %38 {offsets = [0, 64], sizes = [16, 64], strides = [1, 1]} : vector<16x384xf32> to vector<16x64xf32>
      %74 = vector.extract_strided_slice %38 {offsets = [0, 128], sizes = [16, 64], strides = [1, 1]} : vector<16x384xf32> to vector<16x64xf32>
      %75 = vector.extract_strided_slice %38 {offsets = [0, 192], sizes = [16, 64], strides = [1, 1]} : vector<16x384xf32> to vector<16x64xf32>
      %76 = vector.extract_strided_slice %38 {offsets = [0, 256], sizes = [16, 64], strides = [1, 1]} : vector<16x384xf32> to vector<16x64xf32>
      %77 = vector.extract_strided_slice %38 {offsets = [0, 320], sizes = [16, 64], strides = [1, 1]} : vector<16x384xf32> to vector<16x64xf32>
      %78 = vector.shape_cast %72 : vector<16x64xf32> to vector<1x16x64xf32>
      %79 = vector.shape_cast %73 : vector<16x64xf32> to vector<1x16x64xf32>
      %80 = vector.shape_cast %74 : vector<16x64xf32> to vector<1x16x64xf32>
      %81 = vector.shape_cast %75 : vector<16x64xf32> to vector<1x16x64xf32>
      %82 = vector.shape_cast %76 : vector<16x64xf32> to vector<1x16x64xf32>
      %83 = vector.shape_cast %77 : vector<16x64xf32> to vector<1x16x64xf32>
      %84 = tpu.concatenate %78, %79, %80, %81, %82, %83 in 0 : vector<1x16x64xf32>, vector<1x16x64xf32>, vector<1x16x64xf32>, vector<1x16x64xf32>, vector<1x16x64xf32>, vector<1x16x64xf32> -> vector<6x16x64xf32>
      %85 = vector.shape_cast %84 : vector<6x16x64xf32> to vector<12x8x64xf32>
      %86 = arith.truncf %85 : vector<12x8x64xf32> to vector<12x8x64xbf16>
      "tpu.trace_start"() <{level = 10 : i32, message = "bqd,bkd->bqk"}> : () -> ()
      %cst_23 = arith.constant dense<0.000000e+00> : vector<12x8x8xf32>
      %87 = tpu.matmul %56, %71, %cst_23 {dimension_numbers = #tpu.dot_dimension_numbers<[2], [2], [1], [1], [0, 0, 0, 1, 1, 1], [0], [0]>} : vector<12x8x64xbf16>, vector<12x8x64xbf16>, vector<12x8x8xf32> -> vector<12x8x8xf32>
      "tpu.trace_stop"() : () -> ()
      %88 = vector.shape_cast %87 : vector<12x8x8xf32> to vector<6x2x8x8xf32>
      %89 = vector.shape_cast %39 : vector<6x8x8xf32> to vector<6x1x8x8xf32>
      %90 = vector.broadcast %89 : vector<6x1x8x8xf32> to vector<6x2x8x8xf32>
      %91 = arith.addf %88, %90 : vector<6x2x8x8xf32>
      %cst_24 = arith.constant dense<0xFF800000> : vector<6x2x8xf32>
      %92 = vector.multi_reduction <maximumf>, %91, %cst_24 [3] : vector<6x2x8x8xf32> to vector<6x2x8xf32>
      %93 = vector.shape_cast %92 : vector<6x2x8xf32> to vector<6x2x8x1xf32>
      %94 = vector.broadcast %93 : vector<6x2x8x1xf32> to vector<6x2x8x8xf32>
      %95 = arith.subf %91, %94 : vector<6x2x8x8xf32>
      %96 = math.exp %95 : vector<6x2x8x8xf32>
      %cst_25 = arith.constant dense<0.000000e+00> : vector<6x2x8xf32>
      %97 = vector.multi_reduction <add>, %96, %cst_25 [3] : vector<6x2x8x8xf32> to vector<6x2x8xf32>
      %98 = vector.shape_cast %97 : vector<6x2x8xf32> to vector<6x2x8x1xf32>
      %99 = tpu.reciprocal %98 {approx = true} : vector<6x2x8x1xf32> -> vector<6x2x8x1xf32>
      %100 = vector.broadcast %99 : vector<6x2x8x1xf32> to vector<6x2x8x8xf32>
      %101 = arith.mulf %96, %100 : vector<6x2x8x8xf32>
      %102 = vector.shape_cast %101 : vector<6x2x8x8xf32> to vector<12x8x8xf32>
      %103 = arith.truncf %102 : vector<12x8x8xf32> to vector<12x8x8xbf16>
      "tpu.trace_start"() <{level = 10 : i32, message = "bqk,bkd->bqd"}> : () -> ()
      %cst_26 = arith.constant dense<0.000000e+00> : vector<12x8x64xf32>
      %104 = tpu.matmul %103, %86, %cst_26 {dimension_numbers = #tpu.dot_dimension_numbers<[2], [1], [1], [2], [0, 0, 0, 1, 1, 2], [0], [0]>} : vector<12x8x8xbf16>, vector<12x8x64xbf16>, vector<12x8x64xf32> -> vector<12x8x64xf32>
      "tpu.trace_stop"() : () -> ()
      %105 = vector.shape_cast %104 : vector<12x8x64xf32> to vector<6x16x64xf32>
      %106 = vector.extract_strided_slice %105 {offsets = [0, 0, 0], sizes = [1, 16, 64], strides = [1, 1, 1]} : vector<6x16x64xf32> to vector<1x16x64xf32>
      %107 = vector.shape_cast %106 : vector<1x16x64xf32> to vector<16x64xf32>
      %108 = vector.extract_strided_slice %105 {offsets = [1, 0, 0], sizes = [1, 16, 64], strides = [1, 1, 1]} : vector<6x16x64xf32> to vector<1x16x64xf32>
      %109 = vector.shape_cast %108 : vector<1x16x64xf32> to vector<16x64xf32>
      %110 = vector.extract_strided_slice %105 {offsets = [2, 0, 0], sizes = [1, 16, 64], strides = [1, 1, 1]} : vector<6x16x64xf32> to vector<1x16x64xf32>
      %111 = vector.shape_cast %110 : vector<1x16x64xf32> to vector<16x64xf32>
      %112 = vector.extract_strided_slice %105 {offsets = [3, 0, 0], sizes = [1, 16, 64], strides = [1, 1, 1]} : vector<6x16x64xf32> to vector<1x16x64xf32>
      %113 = vector.shape_cast %112 : vector<1x16x64xf32> to vector<16x64xf32>
      %114 = vector.extract_strided_slice %105 {offsets = [4, 0, 0], sizes = [1, 16, 64], strides = [1, 1, 1]} : vector<6x16x64xf32> to vector<1x16x64xf32>
      %115 = vector.shape_cast %114 : vector<1x16x64xf32> to vector<16x64xf32>
      %116 = vector.extract_strided_slice %105 {offsets = [5, 0, 0], sizes = [1, 16, 64], strides = [1, 1, 1]} : vector<6x16x64xf32> to vector<1x16x64xf32>
      %117 = vector.shape_cast %116 : vector<1x16x64xf32> to vector<16x64xf32>
      %118 = tpu.concatenate %107, %109, %111, %113, %115, %117 in 1 : vector<16x64xf32>, vector<16x64xf32>, vector<16x64xf32>, vector<16x64xf32>, vector<16x64xf32>, vector<16x64xf32> -> vector<16x384xf32>
      %119 = arith.truncf %118 : vector<16x384xf32> to vector<16x384xbf16>
      %cst_27 = arith.constant dense<0.000000e+00> : vector<16x128xf32>
      %120 = tpu.matmul %119, %41, %cst_27 {dimension_numbers = #tpu.dot_dimension_numbers<[1], [0], [0], [1], [0, 0, 1, 1], [], []>} : vector<16x384xbf16>, vector<384x128xbf16>, vector<16x128xf32> -> vector<16x128xf32>
      %121 = arith.addf %17, %120 : vector<16x128xf32>
      %c0_28 = arith.constant 0 : index
      %c0_29 = arith.constant 0 : index
      %c0_30 = arith.constant 0 : index
      %122 = vector.load %arg18[%c0_28, %c0_29, %c0_30] : memref<1x1x128xf32, #tpu.memory_space<vmem>>, vector<1x1x128xf32>
      %123 = vector.shape_cast %122 : vector<1x1x128xf32> to vector<1x128xf32>
      %124 = arith.mulf %121, %121 : vector<16x128xf32>
      %cst_31 = arith.constant dense<0.000000e+00> : vector<16xf32>
      %125 = vector.multi_reduction <add>, %124, %cst_31 [1] : vector<16x128xf32> to vector<16xf32>
      %126 = vector.shape_cast %125 : vector<16xf32> to vector<16x1xf32>
      %cst_32 = arith.constant 1.280000e+02 : f32
      %127 = vector.broadcast %cst_32 : f32 to vector<16x1xf32>
      %128 = arith.divf %126, %127 : vector<16x1xf32>
      %cst_33 = arith.constant 9.99999997E-7 : f32
      %129 = vector.broadcast %cst_33 : f32 to vector<16x1xf32>
      %130 = arith.addf %128, %129 : vector<16x1xf32>
      %131 = math.rsqrt %130 : vector<16x1xf32>
      %132 = vector.broadcast %131 : vector<16x1xf32> to vector<16x128xf32>
      %133 = arith.mulf %121, %132 : vector<16x128xf32>
      %134 = vector.broadcast %123 : vector<1x128xf32> to vector<16x128xf32>
      %135 = arith.mulf %133, %134 : vector<16x128xf32>
      %c0_34 = arith.constant 0 : index
      %c0_35 = arith.constant 0 : index
      %c0_36 = arith.constant 0 : index
      %136 = vector.load %arg19[%c0_34, %c0_35, %c0_36] : memref<1x128x384xbf16, #tpu.memory_space<vmem>>, vector<1x128x384xbf16>
      %137 = vector.shape_cast %136 : vector<1x128x384xbf16> to vector<128x384xbf16>
      %138 = arith.truncf %135 : vector<16x128xf32> to vector<16x128xbf16>
      %cst_37 = arith.constant dense<0.000000e+00> : vector<16x384xf32>
      %139 = tpu.matmul %138, %137, %cst_37 {dimension_numbers = #tpu.dot_dimension_numbers<[1], [0], [0], [1], [0, 0, 1, 1], [], []>} : vector<16x128xbf16>, vector<128x384xbf16>, vector<16x384xf32> -> vector<16x384xf32>
      %c0_38 = arith.constant 0 : index
      %c0_39 = arith.constant 0 : index
      %140 = vector.load %arg30[%c0_38, %c0_39] : memref<16x128xbf16, #tpu.memory_space<vmem>>, vector<16x128xbf16>
      %c0_40 = arith.constant 0 : index
      %c0_41 = arith.constant 0 : index
      %c0_42 = arith.constant 0 : index
      %141 = vector.load %arg20[%c0_40, %c0_41, %c0_42] : memref<1x128x768xbf16, #tpu.memory_space<vmem>>, vector<1x128x768xbf16>
      %142 = vector.shape_cast %141 : vector<1x128x768xbf16> to vector<128x768xbf16>
      %cst_43 = arith.constant dense<0.000000e+00> : vector<16x768xf32>
      %143 = tpu.matmul %140, %142, %cst_43 {dimension_numbers = #tpu.dot_dimension_numbers<[1], [0], [0], [1], [0, 0, 1, 1], [], []>} : vector<16x128xbf16>, vector<128x768xbf16>, vector<16x768xf32> -> vector<16x768xf32>
      %144 = vector.extract_strided_slice %143 {offsets = [0, 0], sizes = [16, 384], strides = [1, 1]} : vector<16x768xf32> to vector<16x384xf32>
      %145 = vector.extract_strided_slice %143 {offsets = [0, 384], sizes = [16, 384], strides = [1, 1]} : vector<16x768xf32> to vector<16x384xf32>
      %c0_44 = arith.constant 0 : index
      %c0_45 = arith.constant 0 : index
      %c0_46 = arith.constant 0 : index
      %146 = vector.load %arg3[%c0_44, %c0_45, %c0_46] : memref<2x1x8xf32, #tpu.memory_space<vmem>>, vector<2x1x8xf32>
      %c0_47 = arith.constant 0 : index
      %c0_48 = arith.constant 0 : index
      %c0_49 = arith.constant 0 : index
      %147 = vector.load %arg21[%c0_47, %c0_48, %c0_49] : memref<1x384x128xbf16, #tpu.memory_space<vmem>>, vector<1x384x128xbf16>
      %148 = vector.shape_cast %147 : vector<1x384x128xbf16> to vector<384x128xbf16>
      %149 = vector.extract_strided_slice %139 {offsets = [0, 0], sizes = [16, 64], strides = [1, 1]} : vector<16x384xf32> to vector<16x64xf32>
      %150 = vector.extract_strided_slice %139 {offsets = [0, 64], sizes = [16, 64], strides = [1, 1]} : vector<16x384xf32> to vector<16x64xf32>
      %151 = vector.extract_strided_slice %139 {offsets = [0, 128], sizes = [16, 64], strides = [1, 1]} : vector<16x384xf32> to vector<16x64xf32>
      %152 = vector.extract_strided_slice %139 {offsets = [0, 192], sizes = [16, 64], strides = [1, 1]} : vector<16x384xf32> to vector<16x64xf32>
      %153 = vector.extract_strided_slice %139 {offsets = [0, 256], sizes = [16, 64], strides = [1, 1]} : vector<16x384xf32> to vector<16x64xf32>
      %154 = vector.extract_strided_slice %139 {offsets = [0, 320], sizes = [16, 64], strides = [1, 1]} : vector<16x384xf32> to vector<16x64xf32>
      %155 = vector.shape_cast %149 : vector<16x64xf32> to vector<1x16x64xf32>
      %156 = vector.shape_cast %150 : vector<16x64xf32> to vector<1x16x64xf32>
      %157 = vector.shape_cast %151 : vector<16x64xf32> to vector<1x16x64xf32>
      %158 = vector.shape_cast %152 : vector<16x64xf32> to vector<1x16x64xf32>
      %159 = vector.shape_cast %153 : vector<16x64xf32> to vector<1x16x64xf32>
      %160 = vector.shape_cast %154 : vector<16x64xf32> to vector<1x16x64xf32>
      %161 = tpu.concatenate %155, %156, %157, %158, %159, %160 in 0 : vector<1x16x64xf32>, vector<1x16x64xf32>, vector<1x16x64xf32>, vector<1x16x64xf32>, vector<1x16x64xf32>, vector<1x16x64xf32> -> vector<6x16x64xf32>
      %162 = vector.shape_cast %161 : vector<6x16x64xf32> to vector<12x8x64xf32>
      %163 = arith.truncf %162 : vector<12x8x64xf32> to vector<12x8x64xbf16>
      %164 = vector.extract_strided_slice %144 {offsets = [0, 0], sizes = [16, 64], strides = [1, 1]} : vector<16x384xf32> to vector<16x64xf32>
      %165 = vector.extract_strided_slice %144 {offsets = [0, 64], sizes = [16, 64], strides = [1, 1]} : vector<16x384xf32> to vector<16x64xf32>
      %166 = vector.extract_strided_slice %144 {offsets = [0, 128], sizes = [16, 64], strides = [1, 1]} : vector<16x384xf32> to vector<16x64xf32>
      %167 = vector.extract_strided_slice %144 {offsets = [0, 192], sizes = [16, 64], strides = [1, 1]} : vector<16x384xf32> to vector<16x64xf32>
      %168 = vector.extract_strided_slice %144 {offsets = [0, 256], sizes = [16, 64], strides = [1, 1]} : vector<16x384xf32> to vector<16x64xf32>
      %169 = vector.extract_strided_slice %144 {offsets = [0, 320], sizes = [16, 64], strides = [1, 1]} : vector<16x384xf32> to vector<16x64xf32>
      %170 = vector.shape_cast %164 : vector<16x64xf32> to vector<1x16x64xf32>
      %171 = vector.shape_cast %165 : vector<16x64xf32> to vector<1x16x64xf32>
      %172 = vector.shape_cast %166 : vector<16x64xf32> to vector<1x16x64xf32>
      %173 = vector.shape_cast %167 : vector<16x64xf32> to vector<1x16x64xf32>
      %174 = vector.shape_cast %168 : vector<16x64xf32> to vector<1x16x64xf32>
      %175 = vector.shape_cast %169 : vector<16x64xf32> to vector<1x16x64xf32>
      %176 = tpu.concatenate %170, %171, %172, %173, %174, %175 in 0 : vector<1x16x64xf32>, vector<1x16x64xf32>, vector<1x16x64xf32>, vector<1x16x64xf32>, vector<1x16x64xf32>, vector<1x16x64xf32> -> vector<6x16x64xf32>
      %177 = vector.shape_cast %176 : vector<6x16x64xf32> to vector<12x8x64xf32>
      %178 = arith.truncf %177 : vector<12x8x64xf32> to vector<12x8x64xbf16>
      %179 = vector.extract_strided_slice %145 {offsets = [0, 0], sizes = [16, 64], strides = [1, 1]} : vector<16x384xf32> to vector<16x64xf32>
      %180 = vector.extract_strided_slice %145 {offsets = [0, 64], sizes = [16, 64], strides = [1, 1]} : vector<16x384xf32> to vector<16x64xf32>
      %181 = vector.extract_strided_slice %145 {offsets = [0, 128], sizes = [16, 64], strides = [1, 1]} : vector<16x384xf32> to vector<16x64xf32>
      %182 = vector.extract_strided_slice %145 {offsets = [0, 192], sizes = [16, 64], strides = [1, 1]} : vector<16x384xf32> to vector<16x64xf32>
      %183 = vector.extract_strided_slice %145 {offsets = [0, 256], sizes = [16, 64], strides = [1, 1]} : vector<16x384xf32> to vector<16x64xf32>
      %184 = vector.extract_strided_slice %145 {offsets = [0, 320], sizes = [16, 64], strides = [1, 1]} : vector<16x384xf32> to vector<16x64xf32>
      %185 = vector.shape_cast %179 : vector<16x64xf32> to vector<1x16x64xf32>
      %186 = vector.shape_cast %180 : vector<16x64xf32> to vector<1x16x64xf32>
      %187 = vector.shape_cast %181 : vector<16x64xf32> to vector<1x16x64xf32>
      %188 = vector.shape_cast %182 : vector<16x64xf32> to vector<1x16x64xf32>
      %189 = vector.shape_cast %183 : vector<16x64xf32> to vector<1x16x64xf32>
      %190 = vector.shape_cast %184 : vector<16x64xf32> to vector<1x16x64xf32>
      %191 = tpu.concatenate %185, %186, %187, %188, %189, %190 in 0 : vector<1x16x64xf32>, vector<1x16x64xf32>, vector<1x16x64xf32>, vector<1x16x64xf32>, vector<1x16x64xf32>, vector<1x16x64xf32> -> vector<6x16x64xf32>
      %192 = vector.shape_cast %191 : vector<6x16x64xf32> to vector<12x8x64xf32>
      %193 = arith.truncf %192 : vector<12x8x64xf32> to vector<12x8x64xbf16>
      "tpu.trace_start"() <{level = 10 : i32, message = "bqd,bkd->bqk"}> : () -> ()
      %cst_50 = arith.constant dense<0.000000e+00> : vector<12x8x8xf32>
      %194 = tpu.matmul %163, %178, %cst_50 {dimension_numbers = #tpu.dot_dimension_numbers<[2], [2], [1], [1], [0, 0, 0, 1, 1, 1], [0], [0]>} : vector<12x8x64xbf16>, vector<12x8x64xbf16>, vector<12x8x8xf32> -> vector<12x8x8xf32>
      "tpu.trace_stop"() : () -> ()
      %195 = vector.shape_cast %194 : vector<12x8x8xf32> to vector<6x2x8x8xf32>
      %196 = vector.shape_cast %146 : vector<2x1x8xf32> to vector<1x2x1x8xf32>
      %197 = vector.broadcast %196 : vector<1x2x1x8xf32> to vector<6x2x8x8xf32>
      %198 = arith.addf %195, %197 : vector<6x2x8x8xf32>
      %cst_51 = arith.constant dense<0xFF800000> : vector<6x2x8xf32>
      %199 = vector.multi_reduction <maximumf>, %198, %cst_51 [3] : vector<6x2x8x8xf32> to vector<6x2x8xf32>
      %200 = vector.shape_cast %199 : vector<6x2x8xf32> to vector<6x2x8x1xf32>
      %201 = vector.broadcast %200 : vector<6x2x8x1xf32> to vector<6x2x8x8xf32>
      %202 = arith.subf %198, %201 : vector<6x2x8x8xf32>
      %203 = math.exp %202 : vector<6x2x8x8xf32>
      %cst_52 = arith.constant dense<0.000000e+00> : vector<6x2x8xf32>
      %204 = vector.multi_reduction <add>, %203, %cst_52 [3] : vector<6x2x8x8xf32> to vector<6x2x8xf32>
      %205 = vector.shape_cast %204 : vector<6x2x8xf32> to vector<6x2x8x1xf32>
      %206 = tpu.reciprocal %205 {approx = true} : vector<6x2x8x1xf32> -> vector<6x2x8x1xf32>
      %207 = vector.broadcast %206 : vector<6x2x8x1xf32> to vector<6x2x8x8xf32>
      %208 = arith.mulf %203, %207 : vector<6x2x8x8xf32>
      %209 = vector.shape_cast %208 : vector<6x2x8x8xf32> to vector<12x8x8xf32>
      %210 = arith.truncf %209 : vector<12x8x8xf32> to vector<12x8x8xbf16>
      "tpu.trace_start"() <{level = 10 : i32, message = "bqk,bkd->bqd"}> : () -> ()
      %cst_53 = arith.constant dense<0.000000e+00> : vector<12x8x64xf32>
      %211 = tpu.matmul %210, %193, %cst_53 {dimension_numbers = #tpu.dot_dimension_numbers<[2], [1], [1], [2], [0, 0, 0, 1, 1, 2], [0], [0]>} : vector<12x8x8xbf16>, vector<12x8x64xbf16>, vector<12x8x64xf32> -> vector<12x8x64xf32>
      "tpu.trace_stop"() : () -> ()
      %212 = vector.shape_cast %211 : vector<12x8x64xf32> to vector<6x16x64xf32>
      %213 = vector.extract_strided_slice %212 {offsets = [0, 0, 0], sizes = [1, 16, 64], strides = [1, 1, 1]} : vector<6x16x64xf32> to vector<1x16x64xf32>
      %214 = vector.shape_cast %213 : vector<1x16x64xf32> to vector<16x64xf32>
      %215 = vector.extract_strided_slice %212 {offsets = [1, 0, 0], sizes = [1, 16, 64], strides = [1, 1, 1]} : vector<6x16x64xf32> to vector<1x16x64xf32>
      %216 = vector.shape_cast %215 : vector<1x16x64xf32> to vector<16x64xf32>
      %217 = vector.extract_strided_slice %212 {offsets = [2, 0, 0], sizes = [1, 16, 64], strides = [1, 1, 1]} : vector<6x16x64xf32> to vector<1x16x64xf32>
      %218 = vector.shape_cast %217 : vector<1x16x64xf32> to vector<16x64xf32>
      %219 = vector.extract_strided_slice %212 {offsets = [3, 0, 0], sizes = [1, 16, 64], strides = [1, 1, 1]} : vector<6x16x64xf32> to vector<1x16x64xf32>
      %220 = vector.shape_cast %219 : vector<1x16x64xf32> to vector<16x64xf32>
      %221 = vector.extract_strided_slice %212 {offsets = [4, 0, 0], sizes = [1, 16, 64], strides = [1, 1, 1]} : vector<6x16x64xf32> to vector<1x16x64xf32>
      %222 = vector.shape_cast %221 : vector<1x16x64xf32> to vector<16x64xf32>
      %223 = vector.extract_strided_slice %212 {offsets = [5, 0, 0], sizes = [1, 16, 64], strides = [1, 1, 1]} : vector<6x16x64xf32> to vector<1x16x64xf32>
      %224 = vector.shape_cast %223 : vector<1x16x64xf32> to vector<16x64xf32>
      %225 = tpu.concatenate %214, %216, %218, %220, %222, %224 in 1 : vector<16x64xf32>, vector<16x64xf32>, vector<16x64xf32>, vector<16x64xf32>, vector<16x64xf32>, vector<16x64xf32> -> vector<16x384xf32>
      %226 = arith.truncf %225 : vector<16x384xf32> to vector<16x384xbf16>
      %cst_54 = arith.constant dense<0.000000e+00> : vector<16x128xf32>
      %227 = tpu.matmul %226, %148, %cst_54 {dimension_numbers = #tpu.dot_dimension_numbers<[1], [0], [0], [1], [0, 0, 1, 1], [], []>} : vector<16x384xbf16>, vector<384x128xbf16>, vector<16x128xf32> -> vector<16x128xf32>
      %228 = arith.addf %121, %227 : vector<16x128xf32>
      %c0_55 = arith.constant 0 : index
      %c0_56 = arith.constant 0 : index
      %c0_57 = arith.constant 0 : index
      %229 = vector.load %arg22[%c0_55, %c0_56, %c0_57] : memref<1x1x128xf32, #tpu.memory_space<vmem>>, vector<1x1x128xf32>
      %230 = vector.shape_cast %229 : vector<1x1x128xf32> to vector<1x128xf32>
      %231 = arith.mulf %228, %228 : vector<16x128xf32>
      %cst_58 = arith.constant dense<0.000000e+00> : vector<16xf32>
      %232 = vector.multi_reduction <add>, %231, %cst_58 [1] : vector<16x128xf32> to vector<16xf32>
      %233 = vector.shape_cast %232 : vector<16xf32> to vector<16x1xf32>
      %cst_59 = arith.constant 1.280000e+02 : f32
      %234 = vector.broadcast %cst_59 : f32 to vector<16x1xf32>
      %235 = arith.divf %233, %234 : vector<16x1xf32>
      %cst_60 = arith.constant 9.99999997E-7 : f32
      %236 = vector.broadcast %cst_60 : f32 to vector<16x1xf32>
      %237 = arith.addf %235, %236 : vector<16x1xf32>
      %238 = math.rsqrt %237 : vector<16x1xf32>
      %239 = vector.broadcast %238 : vector<16x1xf32> to vector<16x128xf32>
      %240 = arith.mulf %228, %239 : vector<16x128xf32>
      %241 = vector.broadcast %230 : vector<1x128xf32> to vector<16x128xf32>
      %242 = arith.mulf %240, %241 : vector<16x128xf32>
      %c0_61 = arith.constant 0 : index
      %c0_62 = arith.constant 0 : index
      %c0_63 = arith.constant 0 : index
      %243 = vector.load %arg23[%c0_61, %c0_62, %c0_63] : memref<1x128x1024xbf16, #tpu.memory_space<vmem>>, vector<1x128x1024xbf16>
      %244 = vector.shape_cast %243 : vector<1x128x1024xbf16> to vector<128x1024xbf16>
      %245 = arith.truncf %242 : vector<16x128xf32> to vector<16x128xbf16>
      %cst_64 = arith.constant dense<0.000000e+00> : vector<16x1024xf32>
      %246 = tpu.matmul %245, %244, %cst_64 {dimension_numbers = #tpu.dot_dimension_numbers<[1], [0], [0], [1], [0, 0, 1, 1], [], []>} : vector<16x128xbf16>, vector<128x1024xbf16>, vector<16x1024xf32> -> vector<16x1024xf32>
      %cst_65 = arith.constant 0.000000e+00 : f32
      %247 = vector.broadcast %cst_65 : f32 to vector<16x1024xf32>
      %248 = arith.maximumf %246, %247 : vector<16x1024xf32>
      %c0_66 = arith.constant 0 : index
      %c0_67 = arith.constant 0 : index
      %c0_68 = arith.constant 0 : index
      %249 = vector.load %arg24[%c0_66, %c0_67, %c0_68] : memref<1x1024x128xbf16, #tpu.memory_space<vmem>>, vector<1x1024x128xbf16>
      %250 = vector.shape_cast %249 : vector<1x1024x128xbf16> to vector<1024x128xbf16>
      %251 = arith.truncf %248 : vector<16x1024xf32> to vector<16x1024xbf16>
      %cst_69 = arith.constant dense<0.000000e+00> : vector<16x128xf32>
      %252 = tpu.matmul %251, %250, %cst_69 {dimension_numbers = #tpu.dot_dimension_numbers<[1], [0], [0], [1], [0, 0, 1, 1], [], []>} : vector<16x1024xbf16>, vector<1024x128xbf16>, vector<16x128xf32> -> vector<16x128xf32>
      %253 = arith.addf %228, %252 : vector<16x128xf32>
      %c0_70 = arith.constant 0 : index
      %c0_71 = arith.constant 0 : index
      %254 = vector.load %arg29[%c0_70, %c0_71] : memref<16x128xf32, #tpu.memory_space<vmem>>, vector<16x128xf32>
      tpu.vector_store %arg29[%c0_70, %c0_71], %253 {strides = array<i32>} : memref<16x128xf32, #tpu.memory_space<vmem>>, vector<16x128xf32>,
    } else {
    }
    %c8_i32_5 = arith.constant 8 : i32
    %14 = arith.cmpi eq, %arg0, %c8_i32_5 : i32
    %15 = arith.extui %14 : i1 to i32
    %c0_i32_6 = arith.constant 0 : i32
    %16 = arith.cmpi ne, %15, %c0_i32_6 : i32
    scf.if %16 {
      %c0 = arith.constant 0 : index
      %c0_7 = arith.constant 0 : index
      %17 = vector.load %arg29[%c0, %c0_7] : memref<16x128xf32, #tpu.memory_space<vmem>>, vector<16x128xf32>
      %c0_8 = arith.constant 0 : index
      %c0_9 = arith.constant 0 : index
      %c0_10 = arith.constant 0 : index
      %18 = vector.load %arg25[%c0_8, %c0_9, %c0_10] : memref<1x1x128xf32, #tpu.memory_space<vmem>>, vector<1x1x128xf32>
      %19 = vector.shape_cast %18 : vector<1x1x128xf32> to vector<1x128xf32>
      %20 = arith.mulf %17, %17 : vector<16x128xf32>
      %cst = arith.constant dense<0.000000e+00> : vector<16xf32>
      %21 = vector.multi_reduction <add>, %20, %cst [1] : vector<16x128xf32> to vector<16xf32>
      %22 = vector.shape_cast %21 : vector<16xf32> to vector<16x1xf32>
      %cst_11 = arith.constant 1.280000e+02 : f32
      %23 = vector.broadcast %cst_11 : f32 to vector<16x1xf32>
      %24 = arith.divf %22, %23 : vector<16x1xf32>
      %cst_12 = arith.constant 9.99999997E-7 : f32
      %25 = vector.broadcast %cst_12 : f32 to vector<16x1xf32>
      %26 = arith.addf %24, %25 : vector<16x1xf32>
      %27 = math.rsqrt %26 : vector<16x1xf32>
      %28 = vector.broadcast %27 : vector<16x1xf32> to vector<16x128xf32>
      %29 = arith.mulf %17, %28 : vector<16x128xf32>
      %30 = vector.broadcast %19 : vector<1x128xf32> to vector<16x128xf32>
      %31 = arith.mulf %29, %30 : vector<16x128xf32>
      %cst_13 = arith.constant 0.0883883461 : f32
      %32 = vector.broadcast %cst_13 : f32 to vector<16x128xf32>
      %33 = arith.mulf %31, %32 : vector<16x128xf32>
      %34 = arith.truncf %33 : vector<16x128xf32> to vector<16x128xbf16>
      %c0_14 = arith.constant 0 : index
      %c0_15 = arith.constant 0 : index
      %35 = vector.load %arg7[%c0_14, %c0_15] : memref<128x1152xbf16, #tpu.memory_space<vmem>>, vector<128x1152xbf16>
      %cst_16 = arith.constant dense<0.000000e+00> : vector<16x1152xf32>
      %36 = tpu.matmul %34, %35, %cst_16 {dimension_numbers = #tpu.dot_dimension_numbers<[1], [0], [0], [1], [0, 0, 1, 1], [], []>} : vector<16x128xbf16>, vector<128x1152xbf16>, vector<16x1152xf32> -> vector<16x1152xf32>
      %c0_17 = arith.constant 0 : index
      %c0_18 = arith.constant 0 : index
      %37 = vector.load %arg26[%c0_17, %c0_18] : memref<16x1152xf32, #tpu.memory_space<vmem>>, vector<16x1152xf32>
      tpu.vector_store %arg26[%c0_17, %c0_18], %36 {strides = array<i32>} : memref<16x1152xf32, #tpu.memory_space<vmem>>, vector<16x1152xf32>,
      %38 = tpu.iota {dimensions = array<i32: 1>} : vector<16x1152xi32>
      %c1025_i32 = arith.constant 1025 : i32
      %39 = vector.broadcast %c1025_i32 : i32 to vector<16x1152xi32>
      %40 = arith.cmpi slt, %38, %39 : vector<16x1152xi32>
      %cst_19 = arith.constant -1.000000e+09 : f32
      %41 = vector.broadcast %cst_19 : f32 to vector<16x1152xf32>
      %42 = arith.select %40, %36, %41 : vector<16x1152xi1>, vector<16x1152xf32>
      %cst_20 = arith.constant dense<0xFF800000> : vector<16xf32>
      %43 = vector.multi_reduction <maximumf>, %42, %cst_20 [1] : vector<16x1152xf32> to vector<16xf32>
      %44 = vector.shape_cast %43 : vector<16xf32> to vector<16x1xf32>
      %45 = vector.broadcast %44 : vector<16x1xf32> to vector<16x1152xf32>
      %46 = arith.subf %42, %45 : vector<16x1152xf32>
      %47 = math.exp %46 : vector<16x1152xf32>
      %cst_21 = arith.constant dense<0.000000e+00> : vector<16xf32>
      %48 = vector.multi_reduction <add>, %47, %cst_21 [1] : vector<16x1152xf32> to vector<16xf32>
      %49 = vector.shape_cast %48 : vector<16xf32> to vector<16x1xf32>
      %50 = math.log %49 : vector<16x1xf32>
      %51 = arith.addf %50, %44 : vector<16x1xf32>
      %c0_22 = arith.constant 0 : index
      %c0_23 = arith.constant 0 : index
      %52 = vector.load %arg6[%c0_22, %c0_23] : memref<16x1xi32, #tpu.memory_space<vmem>>, vector<16x1xi32>
      %53 = vector.broadcast %52 : vector<16x1xi32> to vector<16x1152xi32>
      %54 = arith.cmpi eq, %38, %53 : vector<16x1152xi32>
      %cst_24 = arith.constant 0.000000e+00 : f32
      %55 = vector.broadcast %cst_24 : f32 to vector<16x1152xf32>
      %56 = arith.select %54, %42, %55 : vector<16x1152xi1>, vector<16x1152xf32>
      %cst_25 = arith.constant dense<0.000000e+00> : vector<16xf32>
      %57 = vector.multi_reduction <add>, %56, %cst_25 [1] : vector<16x1152xf32> to vector<16xf32>
      %58 = vector.shape_cast %57 : vector<16xf32> to vector<16x1xf32>
      %c-100_i32 = arith.constant -100 : i32
      %59 = vector.broadcast %c-100_i32 : i32 to vector<16x1xi32>
      %60 = arith.cmpi ne, %52, %59 : vector<16x1xi32>
      %61 = arith.extui %60 : vector<16x1xi1> to vector<16x1xi32>
      %62 = arith.sitofp %61 : vector<16x1xi32> to vector<16x1xf32>
      %63 = arith.subf %51, %58 : vector<16x1xf32>
      %64 = arith.mulf %63, %62 : vector<16x1xf32>
      %65 = vector.shape_cast %64 : vector<16x1xf32> to vector<1x16x1xf32>
      %cst_26 = arith.constant dense<0.000000e+00> : vector<1xf32>
      %66 = vector.multi_reduction <add>, %65, %cst_26 [1, 2] : vector<1x16x1xf32> to vector<1xf32>
      %67 = vector.shape_cast %66 : vector<1xf32> to vector<1x1x1xf32>
      %68 = vector.extract %67[0, 0, 0] : f32 from vector<1x1x1xf32>
      %69 = vector.shape_cast %62 : vector<16x1xf32> to vector<1x16x1xf32>
      %cst_27 = arith.constant dense<0.000000e+00> : vector<1xf32>
      %70 = vector.multi_reduction <add>, %69, %cst_27 [1, 2] : vector<1x16x1xf32> to vector<1xf32>
      %71 = vector.shape_cast %70 : vector<1xf32> to vector<1x1x1xf32>
      %72 = vector.extract %71[0, 0, 0] : f32 from vector<1x1x1xf32>
      %cst_28 = arith.constant 1.000000e+00 : f32
      %73 = arith.maximumf %72, %cst_28 : f32
      %74 = arith.divf %68, %73 : f32
      %75 = tpu.iota {dimensions = array<i32: 1>} : vector<1x128xi32>
      %c0_i32_29 = arith.constant 0 : i32
      %76 = vector.broadcast %c0_i32_29 : i32 to vector<1x128xi32>
      %77 = arith.cmpi eq, %75, %76 : vector<1x128xi32>
      %cst_30 = arith.constant 0.000000e+00 : f32
      %78 = vector.broadcast %74 : f32 to vector<1x128xf32>
      %79 = vector.broadcast %cst_30 : f32 to vector<1x128xf32>
      %80 = arith.select %77, %78, %79 : vector<1x128xi1>, vector<1x128xf32>
      %c0_31 = arith.constant 0 : index
      %c0_32 = arith.constant 0 : index
      %81 = vector.load %arg27[%c0_31, %c0_32] : memref<1x128xf32, #tpu.memory_space<vmem>>, vector<1x128xf32>
      tpu.vector_store %arg27[%c0_31, %c0_32], %80 {strides = array<i32>} : memref<1x128xf32, #tpu.memory_space<vmem>>, vector<1x128xf32>,
    } else {
    }
    return
  }
  func.func @transform_0(%arg0: i32) -> (i32, i32) {
    %c0_i32 = arith.constant 0 : i32
    %c0_i32_0 = arith.constant 0 : i32
    %c0_i32_1 = arith.constant 0 : i32
    return %c0_i32, %c0_i32_0 : i32, i32
  }
  func.func @transform_1(%arg0: i32) -> (i32, i32) {
    %c0_i32 = arith.constant 0 : i32
    %c0_i32_0 = arith.constant 0 : i32
    %c0_i32_1 = arith.constant 0 : i32
    return %c0_i32, %c0_i32_0 : i32, i32
  }
  func.func @transform_2(%arg0: i32) -> (i32, i32, i32) {
    %c0_i32 = arith.constant 0 : i32
    %c0_i32_0 = arith.constant 0 : i32
    %c0_i32_1 = arith.constant 0 : i32
    %c0_i32_2 = arith.constant 0 : i32
    return %c0_i32, %c0_i32_0, %c0_i32_1 : i32, i32, i32
  }
  func.func @transform_3(%arg0: i32) -> (i32, i32, i32) {
    %c0_i32 = arith.constant 0 : i32
    %c0_i32_0 = arith.constant 0 : i32
    %c0_i32_1 = arith.constant 0 : i32
    %c0_i32_2 = arith.constant 0 : i32
    return %c0_i32, %c0_i32_0, %c0_i32_1 : i32, i32, i32
  }
  func.func @transform_4(%arg0: i32) -> (i32, i32, i32) {
    %c0_i32 = arith.constant 0 : i32
    %c0_i32_0 = arith.constant 0 : i32
    %c0_i32_1 = arith.constant 0 : i32
    %c0_i32_2 = arith.constant 0 : i32
    return %c0_i32, %c0_i32_0, %c0_i32_1 : i32, i32, i32
  }
  func.func @transform_5(%arg0: i32) -> (i32, i32) {
    %c0_i32 = arith.constant 0 : i32
    %c0_i32_0 = arith.constant 0 : i32
    %c0_i32_1 = arith.constant 0 : i32
    return %c0_i32, %c0_i32_0 : i32, i32
  }
  func.func @transform_6(%arg0: i32) -> (i32, i32) {
    %c0_i32 = arith.constant 0 : i32
    %c0_i32_0 = arith.constant 0 : i32
    %c0_i32_1 = arith.constant 0 : i32
    return %c0_i32, %c0_i32_0 : i32, i32
  }
  func.func @transform_7(%arg0: i32) -> (i32, i32, i32) {
    %c3_i32 = arith.constant 3 : i32
    %0 = arith.minsi %arg0, %c3_i32 : i32
    %c0_i32 = arith.constant 0 : i32
    %c0_i32_0 = arith.constant 0 : i32
    %c0_i32_1 = arith.constant 0 : i32
    return %0, %c0_i32, %c0_i32_0 : i32, i32, i32
  }
  func.func @transform_8(%arg0: i32) -> (i32, i32, i32) {
    %c3_i32 = arith.constant 3 : i32
    %0 = arith.minsi %arg0, %c3_i32 : i32
    %c0_i32 = arith.constant 0 : i32
    %c0_i32_0 = arith.constant 0 : i32
    %c0_i32_1 = arith.constant 0 : i32
    return %0, %c0_i32, %c0_i32_0 : i32, i32, i32
  }
  func.func @transform_9(%arg0: i32) -> (i32, i32, i32) {
    %c3_i32 = arith.constant 3 : i32
    %0 = arith.minsi %arg0, %c3_i32 : i32
    %c0_i32 = arith.constant 0 : i32
    %c0_i32_0 = arith.constant 0 : i32
    %c0_i32_1 = arith.constant 0 : i32
    return %0, %c0_i32, %c0_i32_0 : i32, i32, i32
  }
  func.func @transform_10(%arg0: i32) -> (i32, i32, i32) {
    %c3_i32 = arith.constant 3 : i32
    %0 = arith.minsi %arg0, %c3_i32 : i32
    %c0_i32 = arith.constant 0 : i32
    %c0_i32_0 = arith.constant 0 : i32
    %c0_i32_1 = arith.constant 0 : i32
    return %0, %c0_i32, %c0_i32_0 : i32, i32, i32
  }
  func.func @transform_11(%arg0: i32) -> (i32, i32, i32) {
    %c3_i32 = arith.constant 3 : i32
    %0 = arith.minsi %arg0, %c3_i32 : i32
    %c0_i32 = arith.constant 0 : i32
    %c0_i32_0 = arith.constant 0 : i32
    %c0_i32_1 = arith.constant 0 : i32
    return %0, %c0_i32, %c0_i32_0 : i32, i32, i32
  }
  func.func @transform_12(%arg0: i32) -> (i32, i32, i32) {
    %c3_i32 = arith.constant 3 : i32
    %0 = arith.minsi %arg0, %c3_i32 : i32
    %c0_i32 = arith.constant 0 : i32
    %c0_i32_0 = arith.constant 0 : i32
    %c0_i32_1 = arith.constant 0 : i32
    return %0, %c0_i32, %c0_i32_0 : i32, i32, i32
  }
  func.func @transform_13(%arg0: i32) -> (i32, i32, i32) {
    %c0_i32 = arith.constant 0 : i32
    %c0_i32_0 = arith.constant 0 : i32
    %c0_i32_1 = arith.constant 0 : i32
    %c0_i32_2 = arith.constant 0 : i32
    return %c0_i32, %c0_i32_0, %c0_i32_1 : i32, i32, i32
  }
  func.func @transform_14(%arg0: i32) -> (i32, i32, i32) {
    %c4_i32 = arith.constant 4 : i32
    %0 = arith.subi %arg0, %c4_i32 : i32
    %c0_i32 = arith.constant 0 : i32
    %1 = arith.maxsi %0, %c0_i32 : i32
    %c3_i32 = arith.constant 3 : i32
    %2 = arith.minsi %1, %c3_i32 : i32
    %c0_i32_0 = arith.constant 0 : i32
    %c0_i32_1 = arith.constant 0 : i32
    %c0_i32_2 = arith.constant 0 : i32
    return %2, %c0_i32_0, %c0_i32_1 : i32, i32, i32
  }
  func.func @transform_15(%arg0: i32) -> (i32, i32, i32) {
    %c4_i32 = arith.constant 4 : i32
    %0 = arith.subi %arg0, %c4_i32 : i32
    %c0_i32 = arith.constant 0 : i32
    %1 = arith.maxsi %0, %c0_i32 : i32
    %c3_i32 = arith.constant 3 : i32
    %2 = arith.minsi %1, %c3_i32 : i32
    %c0_i32_0 = arith.constant 0 : i32
    %c0_i32_1 = arith.constant 0 : i32
    %c0_i32_2 = arith.constant 0 : i32
    return %2, %c0_i32_0, %c0_i32_1 : i32, i32, i32
  }
  func.func @transform_16(%arg0: i32) -> (i32, i32, i32) {
    %c4_i32 = arith.constant 4 : i32
    %0 = arith.subi %arg0, %c4_i32 : i32
    %c0_i32 = arith.constant 0 : i32
    %1 = arith.maxsi %0, %c0_i32 : i32
    %c3_i32 = arith.constant 3 : i32
    %2 = arith.minsi %1, %c3_i32 : i32
    %c0_i32_0 = arith.constant 0 : i32
    %c0_i32_1 = arith.constant 0 : i32
    %c0_i32_2 = arith.constant 0 : i32
    return %2, %c0_i32_0, %c0_i32_1 : i32, i32, i32
  }
  func.func @transform_17(%arg0: i32) -> (i32, i32, i32) {
    %c4_i32 = arith.constant 4 : i32
    %0 = arith.subi %arg0, %c4_i32 : i32
    %c0_i32 = arith.constant 0 : i32
    %1 = arith.maxsi %0, %c0_i32 : i32
    %c3_i32 = arith.constant 3 : i32
    %2 = arith.minsi %1, %c3_i32 : i32
    %c0_i32_0 = arith.constant 0 : i32
    %c0_i32_1 = arith.constant 0 : i32
    %c0_i32_2 = arith.constant 0 : i32
    return %2, %c0_i32_0, %c0_i32_1 : i32, i32, i32
  }
  func.func @transform_18(%arg0: i32) -> (i32, i32, i32) {
    %c4_i32 = arith.constant 4 : i32
    %0 = arith.subi %arg0, %c4_i32 : i32
    %c0_i32 = arith.constant 0 : i32
    %1 = arith.maxsi %0, %c0_i32 : i32
    %c3_i32 = arith.constant 3 : i32
    %2 = arith.minsi %1, %c3_i32 : i32
    %c0_i32_0 = arith.constant 0 : i32
    %c0_i32_1 = arith.constant 0 : i32
    %c0_i32_2 = arith.constant 0 : i32
    return %2, %c0_i32_0, %c0_i32_1 : i32, i32, i32
  }
  func.func @transform_19(%arg0: i32) -> (i32, i32, i32) {
    %c4_i32 = arith.constant 4 : i32
    %0 = arith.subi %arg0, %c4_i32 : i32
    %c0_i32 = arith.constant 0 : i32
    %1 = arith.maxsi %0, %c0_i32 : i32
    %c3_i32 = arith.constant 3 : i32
    %2 = arith.minsi %1, %c3_i32 : i32
    %c0_i32_0 = arith.constant 0 : i32
    %c0_i32_1 = arith.constant 0 : i32
    %c0_i32_2 = arith.constant 0 : i32
    return %2, %c0_i32_0, %c0_i32_1 : i32, i32, i32
  }
  func.func @transform_20(%arg0: i32) -> (i32, i32, i32) {
    %c4_i32 = arith.constant 4 : i32
    %0 = arith.subi %arg0, %c4_i32 : i32
    %c0_i32 = arith.constant 0 : i32
    %1 = arith.maxsi %0, %c0_i32 : i32
    %c3_i32 = arith.constant 3 : i32
    %2 = arith.minsi %1, %c3_i32 : i32
    %c0_i32_0 = arith.constant 0 : i32
    %c0_i32_1 = arith.constant 0 : i32
    %c0_i32_2 = arith.constant 0 : i32
    return %2, %c0_i32_0, %c0_i32_1 : i32, i32, i32
  }
  func.func @transform_21(%arg0: i32) -> (i32, i32, i32) {
    %c4_i32 = arith.constant 4 : i32
    %0 = arith.subi %arg0, %c4_i32 : i32
    %c0_i32 = arith.constant 0 : i32
    %1 = arith.maxsi %0, %c0_i32 : i32
    %c3_i32 = arith.constant 3 : i32
    %2 = arith.minsi %1, %c3_i32 : i32
    %c0_i32_0 = arith.constant 0 : i32
    %c0_i32_1 = arith.constant 0 : i32
    %c0_i32_2 = arith.constant 0 : i32
    return %2, %c0_i32_0, %c0_i32_1 : i32, i32, i32
  }
  func.func @transform_22(%arg0: i32) -> (i32, i32, i32) {
    %c4_i32 = arith.constant 4 : i32
    %0 = arith.subi %arg0, %c4_i32 : i32
    %c0_i32 = arith.constant 0 : i32
    %1 = arith.maxsi %0, %c0_i32 : i32
    %c3_i32 = arith.constant 3 : i32
    %2 = arith.minsi %1, %c3_i32 : i32
    %c0_i32_0 = arith.constant 0 : i32
    %c0_i32_1 = arith.constant 0 : i32
    %c0_i32_2 = arith.constant 0 : i32
    return %2, %c0_i32_0, %c0_i32_1 : i32, i32, i32
  }
  func.func @transform_23(%arg0: i32) -> (i32, i32, i32) {
    %c4_i32 = arith.constant 4 : i32
    %0 = arith.subi %arg0, %c4_i32 : i32
    %c0_i32 = arith.constant 0 : i32
    %1 = arith.maxsi %0, %c0_i32 : i32
    %c3_i32 = arith.constant 3 : i32
    %2 = arith.minsi %1, %c3_i32 : i32
    %c0_i32_0 = arith.constant 0 : i32
    %c0_i32_1 = arith.constant 0 : i32
    %c0_i32_2 = arith.constant 0 : i32
    return %2, %c0_i32_0, %c0_i32_1 : i32, i32, i32
  }
  func.func @transform_24(%arg0: i32) -> (i32, i32, i32) {
    %c0_i32 = arith.constant 0 : i32
    %c0_i32_0 = arith.constant 0 : i32
    %c0_i32_1 = arith.constant 0 : i32
    %c0_i32_2 = arith.constant 0 : i32
    return %c0_i32, %c0_i32_0, %c0_i32_1 : i32, i32, i32
  }
  func.func @transform_25(%arg0: i32) -> (i32, i32) {
    %c0_i32 = arith.constant 0 : i32
    %c0_i32_0 = arith.constant 0 : i32
    %c0_i32_1 = arith.constant 0 : i32
    return %c0_i32, %c0_i32_0 : i32, i32
  }
  func.func @transform_26(%arg0: i32) -> (i32, i32) {
    %c0_i32 = arith.constant 0 : i32
    %c0_i32_0 = arith.constant 0 : i32
    %c0_i32_1 = arith.constant 0 : i32
    return %c0_i32, %c0_i32_0 : i32, i32
  }
}

</mosaic_0001>

<llo_original>
// kernel: forward.1
$region0: #{forward.1}
  #allocation0 [shape = 'u32[]', space=smem, size = 0x4, offset = 0x4, fixed_abs, tag = 'smem constant byte address 0x4 - core index']
  #allocation1 [shape = 'u32[72,128]{1,0:T(1,128)}', space=vmem, size = 0x9000, scoped, tag = 'internal scratch']
  #allocation2 [shape = 'f32[16,128]{1,0:T(8,128)}', space=vmem, size = 0x2000, scoped, tag = 'scratch operand']
  #allocation3 [shape = 'f32[16,128]{1,0:T(8,128)}', space=vmem, size = 0x2000, scoped, tag = 'scratch operand']
  #allocation4 [shape = 'bf16[16,128]{1,0:T(8,128)(2,1)}', space=vmem, size = 0x1000, scoped, tag = 'scratch operand']
  %s0 = inlined_call_operand.vmem [shape: f32[16,128], index: 0, kind: input, shape index: {}]
  %s1 = inlined_call_operand.vmem [shape: f32[16,128], index: 1, kind: input, shape index: {}]
  %s2 = inlined_call_operand.vmem [shape: f32[2,1,8], index: 2, kind: input, shape index: {}]
  %s3 = inlined_call_operand.vmem [shape: f32[6,8,8], index: 3, kind: input, shape index: {}]
  %s4 = inlined_call_operand.vmem [shape: f32[6,8,8], index: 4, kind: input, shape index: {}]
  %s5 = inlined_call_operand.vmem [shape: s32[16,1], index: 5, kind: input, shape index: {}]
  %s6 = inlined_call_operand.hbm [shape: bf16[128,1152], index: 6, kind: input, shape index: {}]
  %s7 = inlined_call_operand.hbm [shape: f32[4,1,128], index: 7, kind: input, shape index: {}]
  %s8 = inlined_call_operand.hbm [shape: bf16[4,128,1152], index: 8, kind: input, shape index: {}]
  %s9 = inlined_call_operand.hbm [shape: bf16[4,384,128], index: 9, kind: input, shape index: {}]
  %s10 = inlined_call_operand.hbm [shape: f32[4,1,128], index: 10, kind: input, shape index: {}]
  %s11 = inlined_call_operand.hbm [shape: bf16[4,128,1024], index: 11, kind: input, shape index: {}]
  %s12 = inlined_call_operand.hbm [shape: bf16[4,1024,128], index: 12, kind: input, shape index: {}]
  %s13 = inlined_call_operand.hbm [shape: f32[1,1,128], index: 13, kind: input, shape index: {}]
  %s14 = inlined_call_operand.hbm [shape: f32[4,1,128], index: 14, kind: input, shape index: {}]
  %s15 = inlined_call_operand.hbm [shape: bf16[4,128,1152], index: 15, kind: input, shape index: {}]
  %s16 = inlined_call_operand.hbm [shape: bf16[4,384,128], index: 16, kind: input, shape index: {}]
  %s17 = inlined_call_operand.hbm [shape: f32[4,1,128], index: 17, kind: input, shape index: {}]
  %s18 = inlined_call_operand.hbm [shape: bf16[4,128,384], index: 18, kind: input, shape index: {}]
  %s19 = inlined_call_operand.vmem [shape: bf16[4,128,768], index: 19, kind: input, shape index: {}]
  %s20 = inlined_call_operand.hbm [shape: bf16[4,384,128], index: 20, kind: input, shape index: {}]
  %s21 = inlined_call_operand.hbm [shape: f32[4,1,128], index: 21, kind: input, shape index: {}]
  %s22 = inlined_call_operand.hbm [shape: bf16[4,128,1024], index: 22, kind: input, shape index: {}]
  %s23 = inlined_call_operand.hbm [shape: bf16[4,1024,128], index: 23, kind: input, shape index: {}]
  %s24 = inlined_call_operand.hbm [shape: f32[1,1,128], index: 24, kind: input, shape index: {}]
  %s25 = inlined_call_operand.vmem [shape: f32[16,1152], index: 25, kind: output, shape index: {0}]
  %s26 = inlined_call_operand.hbm [shape: f32[1,128], index: 26, kind: output, shape index: {1}]
  %27 = xla_tuple %s25, %s26
  %s28 = sld [smem:[#allocation0]]
  $region233: #{forward.1} parent=0
    _
  %s30 = ssub.s32 1, %s28
  %s31 = scalar_select 0, %s30, %s28
  $region1: #{forward.1} parent=0
    #allocation5 [shape = 'u8[294912]{0}', space=vmem, size = 0x48000, scoped, tag = 'input window, operand 6, single buffered']
    #allocation6 [shape = 's32[2]{0}', space=sflag, size = 0x8, scoped, tag = 'scoped memory for forward.1']
    #allocation7 [shape = 's32[2]{0}', space=sflag, size = 0x8, scoped, tag = 'scoped memory for forward.1']
    #allocation8 [shape = 'u8[1024]{0}', space=vmem, size = 0x400, scoped, tag = 'input window, operand 7']
    #allocation9 [shape = 's32[2]{0}', space=sflag, size = 0x8, scoped, tag = 'scoped memory for forward.1']
    #allocation10 [shape = 'u8[589824]{0}', space=vmem, size = 0x90000, scoped, tag = 'input window, operand 8']
    #allocation11 [shape = 'u8[196608]{0}', space=vmem, size = 0x30000, scoped, tag = 'input window, operand 9']
    #allocation12 [shape = 's32[2]{0}', space=sflag, size = 0x8, scoped, tag = 'scoped memory for forward.1']
    #allocation13 [shape = 'u8[1024]{0}', space=vmem, size = 0x400, scoped, tag = 'input window, operand 10']
    #allocation14 [shape = 'u8[524288]{0}', space=vmem, size = 0x80000, scoped, tag = 'input window, operand 11']
    #allocation15 [shape = 's32[2]{0}', space=sflag, size = 0x8, scoped, tag = 'scoped memory for forward.1']
    #allocation16 [shape = 'u8[524288]{0}', space=vmem, size = 0x80000, scoped, tag = 'input window, operand 12']
    #allocation17 [shape = 'u8[512]{0}', space=vmem, size = 0x400, scoped, tag = 'input window, operand 13, single buffered']
    #allocation18 [shape = 's32[1]{0}', space=sflag, size = 0x4, scoped, tag = 'scoped memory for forward.1']
    #allocation19 [shape = 'u8[1024]{0}', space=vmem, size = 0x400, scoped, tag = 'input window, operand 14']
    #allocation20 [shape = 'u8[589824]{0}', space=vmem, size = 0x90000, scoped, tag = 'input window, operand 15']
    #allocation21 [shape = 'u8[196608]{0}', space=vmem, size = 0x30000, scoped, tag = 'input window, operand 16']
    #allocation22 [shape = 'u8[1024]{0}', space=vmem, size = 0x400, scoped, tag = 'input window, operand 17']
    #allocation23 [shape = 'u8[196608]{0}', space=vmem, size = 0x30000, scoped, tag = 'input window, operand 18']
    #allocation24 [shape = 'u8[196608]{0}', space=vmem, size = 0x30000, scoped, tag = 'input window, operand 20']
    #allocation25 [shape = 'u8[1024]{0}', space=vmem, size = 0x400, scoped, tag = 'input window, operand 21']
    #allocation26 [shape = 'u8[524288]{0}', space=vmem, size = 0x80000, scoped, tag = 'input window, operand 22']
    #allocation27 [shape = 'u8[524288]{0}', space=vmem, size = 0x80000, scoped, tag = 'input window, operand 23']
    #allocation28 [shape = 'u8[512]{0}', space=vmem, size = 0x400, scoped, tag = 'input window, operand 24, single buffered']
    #allocation29 [shape = 'u8[512]{0}', space=vmem, size = 0x400, scoped, tag = 'output window, operand 1, single buffered']
    %32 = vsyncpa [#allocation6], 0
    %33 = vsyncpa [#allocation9], 0
    %s34 = scalar_lea.sflag [#allocation9], 1
    %35 = vsyncpa %s34, 0
    %36 = vsyncpa [#allocation12], 0
    %s37 = scalar_lea.sflag [#allocation12], 1
    %38 = vsyncpa %s37, 0
    %39 = vsyncpa [#allocation15], 0
    %s40 = scalar_lea.sflag [#allocation15], 1
    %41 = vsyncpa %s40, 0
    %42 = vsyncpa [#allocation18], 0
    %43 = vsyncpa [#allocation7], 0
    loop: start=0, step=1, limit=11
    $region2: #{forward.1} parent=1 // loop_pre_header
      _
    $region3: #{forward.1} parent=1 // loop_header
      %s45 = sphi 0, %s49
      %p46 = scmp.ge.s32.totalorder %s45, 11
      %s53 = sphi 0, %s53
      %s55 = sphi 0, %s53
      %s56 = sphi 0, %s55
      %s70 = sphi 0, %s56
      %s74 = sphi 0, %s74
      %s76 = sphi 0, %s74
      %s77 = sphi 0, %s76
      %s91 = sphi 0, %s77
      %s95 = sphi 0, %s95
      %s97 = sphi 0, %s95
      %s98 = sphi 0, %s97
      %s112 = sphi 0, %s98
      %s116 = sphi 0, %s116
      %s118 = sphi 0, %s116
      %s119 = sphi 0, %s118
      %s133 = sphi 0, %s119
      %s137 = sphi 0, %s137
      %s139 = sphi 0, %s137
      %s140 = sphi 0, %s139
      %s154 = sphi 0, %s140
      %s158 = sphi 0, %s158
      %s160 = sphi 0, %s158
      %s161 = sphi 0, %s160
      %s175 = sphi 0, %s161
      %s179 = sphi 0, %s179
      %s181 = sphi 0, %s179
      %s182 = sphi 0, %s181
      %s196 = sphi 0, %s182
      %s206 = sphi 0, %s208
      %s209 = sphi 0, %s206
      %s210 = sphi 0, %s209
      %s226 = sphi 0, %s210
      %s236 = sphi 0, %s238
      %s239 = sphi 0, %s236
      %s240 = sphi 0, %s239
      %s256 = sphi 0, %s240
      %s266 = sphi 0, %s268
      %s269 = sphi 0, %s266
      %s270 = sphi 0, %s269
      %s286 = sphi 0, %s270
      %s296 = sphi 0, %s298
      %s299 = sphi 0, %s296
      %s300 = sphi 0, %s299
      %s316 = sphi 0, %s300
      %s326 = sphi 0, %s328
      %s329 = sphi 0, %s326
      %s330 = sphi 0, %s329
      %s346 = sphi 0, %s330
      %s356 = sphi 0, %s358
      %s359 = sphi 0, %s356
      %s360 = sphi 0, %s359
      %s376 = sphi 0, %s360
      %s380 = sphi 0, %s380
      %s382 = sphi 0, %s380
      %s383 = sphi 0, %s382
      %s397 = sphi 0, %s383
      %s413 = sphi 0, %s415
      %s416 = sphi 0, %s413
      %s417 = sphi 0, %s416
      %s433 = sphi 0, %s417
      %s449 = sphi 0, %s451
      %s452 = sphi 0, %s449
      %s453 = sphi 0, %s452
      %s469 = sphi 0, %s453
      %s485 = sphi 0, %s487
      %s488 = sphi 0, %s485
      %s489 = sphi 0, %s488
      %s505 = sphi 0, %s489
      %s521 = sphi 0, %s523
      %s524 = sphi 0, %s521
      %s525 = sphi 0, %s524
      %s541 = sphi 0, %s525
      %s557 = sphi 0, %s559
      %s560 = sphi 0, %s557
      %s561 = sphi 0, %s560
      %s577 = sphi 0, %s561
      %s593 = sphi 0, %s595
      %s596 = sphi 0, %s593
      %s597 = sphi 0, %s596
      %s613 = sphi 0, %s597
      %s629 = sphi 0, %s631
      %s632 = sphi 0, %s629
      %s633 = sphi 0, %s632
      %s649 = sphi 0, %s633
      %s665 = sphi 0, %s667
      %s668 = sphi 0, %s665
      %s669 = sphi 0, %s668
      %s685 = sphi 0, %s669
      %s701 = sphi 0, %s703
      %s704 = sphi 0, %s701
      %s705 = sphi 0, %s704
      %s721 = sphi 0, %s705
      %s737 = sphi 0, %s739
      %s740 = sphi 0, %s737
      %s741 = sphi 0, %s740
      %s757 = sphi 0, %s741
      %s761 = sphi 0, %s761
      %s763 = sphi 0, %s761
      %s764 = sphi 0, %s763
      %s778 = sphi 0, %s764
      %s782 = sphi 0, %s782
      %s784 = sphi 0, %s782
      %s785 = sphi 0, %s784
      %s799 = sphi 0, %s785
      %s803 = sphi 0, %s803
      %s805 = sphi 0, %s803
      %s806 = sphi 0, %s805
      %s820 = sphi 0, %s806
    $region4: #{forward.1} parent=1 // loop_header_branch
      %48 = sbr.rel (%p46) target = $region8
    $region5: #{forward.1} parent=1 // loop_body
      %s50 = ssub.s32 %s45, 1
      %s51 = ssub.s32 %s45, 2
      %s52 = sadd.s32 %s45, 1
      %s54 = sadd.s32 %s53, 1
      %p57 = scmp.eq.s32.totalorder %s45, 8
      %p58 = scmp.ne.s32.totalorder %s53, %s55
      %p59 = scmp.eq.s32.totalorder %s45, 0
      %p60 = por %p58, %p59
      %p61 = scmp.ne.s32.totalorder %s53, %s55
      %p62 = scmp.eq.s32.totalorder %s50, 8
      %p63 = por %p61, %p62
      %p64 = scmp.ne.s32.totalorder %s55, %s56
      %p65 = scmp.eq.s32.totalorder %s50, 0
      %p66 = por %p64, %p65
      %p67 = scmp.ne.s32.totalorder %s55, %s56
      %p68 = scmp.eq.s32.totalorder %s51, 8
      %p69 = por %p67, %p68
      %p71 = scmp.ne.s32.totalorder %s56, %s70
      %p72 = scmp.eq.s32.totalorder %s51, 0
      %p73 = por %p71, %p72
      %s75 = sadd.s32 %s74, 1
      %p78 = scmp.eq.s32.totalorder %s45, 8
      %p79 = scmp.ne.s32.totalorder %s74, %s76
      %p80 = scmp.eq.s32.totalorder %s45, 0
      %p81 = por %p79, %p80
      %p82 = scmp.ne.s32.totalorder %s74, %s76
      %p83 = scmp.eq.s32.totalorder %s50, 8
      %p84 = por %p82, %p83
      %p85 = scmp.ne.s32.totalorder %s76, %s77
      %p86 = scmp.eq.s32.totalorder %s50, 0
      %p87 = por %p85, %p86
      %p88 = scmp.ne.s32.totalorder %s76, %s77
      %p89 = scmp.eq.s32.totalorder %s51, 8
      %p90 = por %p88, %p89
      %p92 = scmp.ne.s32.totalorder %s77, %s91
      %p93 = scmp.eq.s32.totalorder %s51, 0
      %p94 = por %p92, %p93
      %s96 = sadd.s32 %s95, 1
      %p99 = scmp.eq.s32.totalorder %s45, 8
      %p100 = scmp.ne.s32.totalorder %s95, %s97
      %p101 = scmp.eq.s32.totalorder %s45, 0
      %p102 = por %p100, %p101
      %p103 = scmp.ne.s32.totalorder %s95, %s97
      %p104 = scmp.eq.s32.totalorder %s50, 8
      %p105 = por %p103, %p104
      %p106 = scmp.ne.s32.totalorder %s97, %s98
      %p107 = scmp.eq.s32.totalorder %s50, 0
      %p108 = por %p106, %p107
      %p109 = scmp.ne.s32.totalorder %s97, %s98
      %p110 = scmp.eq.s32.totalorder %s51, 8
      %p111 = por %p109, %p110
      %p113 = scmp.ne.s32.totalorder %s98, %s112
      %p114 = scmp.eq.s32.totalorder %s51, 0
      %p115 = por %p113, %p114
      %s117 = sadd.s32 %s116, 1
      %p120 = scmp.eq.s32.totalorder %s45, 8
      %p121 = scmp.ne.s32.totalorder %s116, %s118
      %p122 = scmp.eq.s32.totalorder %s45, 0
      %p123 = por %p121, %p122
      %p124 = scmp.ne.s32.totalorder %s116, %s118
      %p125 = scmp.eq.s32.totalorder %s50, 8
      %p126 = por %p124, %p125
      %p127 = scmp.ne.s32.totalorder %s118, %s119
      %p128 = scmp.eq.s32.totalorder %s50, 0
      %p129 = por %p127, %p128
      %p130 = scmp.ne.s32.totalorder %s118, %s119
      %p131 = scmp.eq.s32.totalorder %s51, 8
      %p132 = por %p130, %p131
      %p134 = scmp.ne.s32.totalorder %s119, %s133
      %p135 = scmp.eq.s32.totalorder %s51, 0
      %p136 = por %p134, %p135
      %s138 = sadd.s32 %s137, 1
      %p141 = scmp.eq.s32.totalorder %s45, 8
      %p142 = scmp.ne.s32.totalorder %s137, %s139
      %p143 = scmp.eq.s32.totalorder %s45, 0
      %p144 = por %p142, %p143
      %p145 = scmp.ne.s32.totalorder %s137, %s139
      %p146 = scmp.eq.s32.totalorder %s50, 8
      %p147 = por %p145, %p146
      %p148 = scmp.ne.s32.totalorder %s139, %s140
      %p149 = scmp.eq.s32.totalorder %s50, 0
      %p150 = por %p148, %p149
      %p151 = scmp.ne.s32.totalorder %s139, %s140
      %p152 = scmp.eq.s32.totalorder %s51, 8
      %p153 = por %p151, %p152
      %p155 = scmp.ne.s32.totalorder %s140, %s154
      %p156 = scmp.eq.s32.totalorder %s51, 0
      %p157 = por %p155, %p156
      %s159 = sadd.s32 %s158, 1
      %p162 = scmp.eq.s32.totalorder %s45, 8
      %p163 = scmp.ne.s32.totalorder %s158, %s160
      %p164 = scmp.eq.s32.totalorder %s45, 0
      %p165 = por %p163, %p164
      %p166 = scmp.ne.s32.totalorder %s158, %s160
      %p167 = scmp.eq.s32.totalorder %s50, 8
      %p168 = por %p166, %p167
      %p169 = scmp.ne.s32.totalorder %s160, %s161
      %p170 = scmp.eq.s32.totalorder %s50, 0
      %p171 = por %p169, %p170
      %p172 = scmp.ne.s32.totalorder %s160, %s161
      %p173 = scmp.eq.s32.totalorder %s51, 8
      %p174 = por %p172, %p173
      %p176 = scmp.ne.s32.totalorder %s161, %s175
      %p177 = scmp.eq.s32.totalorder %s51, 0
      %p178 = por %p176, %p177
      %s180 = sadd.s32 %s179, 1
      %p183 = scmp.eq.s32.totalorder %s45, 8
      %p184 = scmp.ne.s32.totalorder %s179, %s181
      %p185 = scmp.eq.s32.totalorder %s45, 0
      %p186 = por %p184, %p185
      %p187 = scmp.ne.s32.totalorder %s179, %s181
      %p188 = scmp.eq.s32.totalorder %s50, 8
      %p189 = por %p187, %p188
      %p190 = scmp.ne.s32.totalorder %s181, %s182
      %p191 = scmp.eq.s32.totalorder %s50, 0
      %p192 = por %p190, %p191
      %p193 = scmp.ne.s32.totalorder %s181, %s182
      %p194 = scmp.eq.s32.totalorder %s51, 8
      %p195 = por %p193, %p194
      %p197 = scmp.ne.s32.totalorder %s182, %s196
      %p198 = scmp.eq.s32.totalorder %s51, 0
      %p199 = por %p197, %p198
      %p200 = scmp.lt.s32.totalorder %s45, 3
      %s201 = scalar_select %p200, %s45, 3
      %p202 = scmp.lt.s32.totalorder %s52, 3
      %s203 = scalar_select %p202, %s52, 3
      %s204 = ssub.s32 %s201, %s203
      %p205 = scmp.eq.s32.totalorder %s204, 0
      %s207 = sadd.s32 %s206, 1
      %s208 = scalar_select %p205, %s206, %s207
      %p211 = pneg %p205
      %p212 = scmp.eq.s32.totalorder %s45, 8
      %p213 = por %p211, %p212
      %p214 = scmp.ne.s32.totalorder %s206, %s209
      %p215 = scmp.eq.s32.totalorder %s45, 0
      %p216 = por %p214, %p215
      %p217 = scmp.ne.s32.totalorder %s206, %s209
      %p218 = scmp.eq.s32.totalorder %s50, 8
      %p219 = por %p217, %p218
      %p220 = scmp.ne.s32.totalorder %s209, %s210
      %p221 = scmp.eq.s32.totalorder %s50, 0
      %p222 = por %p220, %p221
      %p223 = scmp.ne.s32.totalorder %s209, %s210
      %p224 = scmp.eq.s32.totalorder %s51, 8
      %p225 = por %p223, %p224
      %p227 = scmp.ne.s32.totalorder %s210, %s226
      %p228 = scmp.eq.s32.totalorder %s51, 0
      %p229 = por %p227, %p228
      %p230 = scmp.lt.s32.totalorder %s45, 3
      %s231 = scalar_select %p230, %s45, 3
      %p232 = scmp.lt.s32.totalorder %s52, 3
      %s233 = scalar_select %p232, %s52, 3
      %s234 = ssub.s32 %s231, %s233
      %p235 = scmp.eq.s32.totalorder %s234, 0
      %s237 = sadd.s32 %s236, 1
      %s238 = scalar_select %p235, %s236, %s237
      %p241 = pneg %p235
      %p242 = scmp.eq.s32.totalorder %s45, 8
      %p243 = por %p241, %p242
      %p244 = scmp.ne.s32.totalorder %s236, %s239
      %p245 = scmp.eq.s32.totalorder %s45, 0
      %p246 = por %p244, %p245
      %p247 = scmp.ne.s32.totalorder %s236, %s239
      %p248 = scmp.eq.s32.totalorder %s50, 8
      %p249 = por %p247, %p248
      %p250 = scmp.ne.s32.totalorder %s239, %s240
      %p251 = scmp.eq.s32.totalorder %s50, 0
      %p252 = por %p250, %p251
      %p253 = scmp.ne.s32.totalorder %s239, %s240
      %p254 = scmp.eq.s32.totalorder %s51, 8
      %p255 = por %p253, %p254
      %p257 = scmp.ne.s32.totalorder %s240, %s256
      %p258 = scmp.eq.s32.totalorder %s51, 0
      %p259 = por %p257, %p258
      %p260 = scmp.lt.s32.totalorder %s45, 3
      %s261 = scalar_select %p260, %s45, 3
      %p262 = scmp.lt.s32.totalorder %s52, 3
      %s263 = scalar_select %p262, %s52, 3
      %s264 = ssub.s32 %s261, %s263
      %p265 = scmp.eq.s32.totalorder %s264, 0
      %s267 = sadd.s32 %s266, 1
      %s268 = scalar_select %p265, %s266, %s267
      %p271 = pneg %p265
      %p272 = scmp.eq.s32.totalorder %s45, 8
      %p273 = por %p271, %p272
      %p274 = scmp.ne.s32.totalorder %s266, %s269
      %p275 = scmp.eq.s32.totalorder %s45, 0
      %p276 = por %p274, %p275
      %p277 = scmp.ne.s32.totalorder %s266, %s269
      %p278 = scmp.eq.s32.totalorder %s50, 8
      %p279 = por %p277, %p278
      %p280 = scmp.ne.s32.totalorder %s269, %s270
      %p281 = scmp.eq.s32.totalorder %s50, 0
      %p282 = por %p280, %p281
      %p283 = scmp.ne.s32.totalorder %s269, %s270
      %p284 = scmp.eq.s32.totalorder %s51, 8
      %p285 = por %p283, %p284
      %p287 = scmp.ne.s32.totalorder %s270, %s286
      %p288 = scmp.eq.s32.totalorder %s51, 0
      %p289 = por %p287, %p288
      %p290 = scmp.lt.s32.totalorder %s45, 3
      %s291 = scalar_select %p290, %s45, 3
      %p292 = scmp.lt.s32.totalorder %s52, 3
      %s293 = scalar_select %p292, %s52, 3
      %s294 = ssub.s32 %s291, %s293
      %p295 = scmp.eq.s32.totalorder %s294, 0
      %s297 = sadd.s32 %s296, 1
      %s298 = scalar_select %p295, %s296, %s297
      %p301 = pneg %p295
      %p302 = scmp.eq.s32.totalorder %s45, 8
      %p303 = por %p301, %p302
      %p304 = scmp.ne.s32.totalorder %s296, %s299
      %p305 = scmp.eq.s32.totalorder %s45, 0
      %p306 = por %p304, %p305
      %p307 = scmp.ne.s32.totalorder %s296, %s299
      %p308 = scmp.eq.s32.totalorder %s50, 8
      %p309 = por %p307, %p308
      %p310 = scmp.ne.s32.totalorder %s299, %s300
      %p311 = scmp.eq.s32.totalorder %s50, 0
      %p312 = por %p310, %p311
      %p313 = scmp.ne.s32.totalorder %s299, %s300
      %p314 = scmp.eq.s32.totalorder %s51, 8
      %p315 = por %p313, %p314
      %p317 = scmp.ne.s32.totalorder %s300, %s316
      %p318 = scmp.eq.s32.totalorder %s51, 0
      %p319 = por %p317, %p318
      %p320 = scmp.lt.s32.totalorder %s45, 3
      %s321 = scalar_select %p320, %s45, 3
      %p322 = scmp.lt.s32.totalorder %s52, 3
      %s323 = scalar_select %p322, %s52, 3
      %s324 = ssub.s32 %s321, %s323
      %p325 = scmp.eq.s32.totalorder %s324, 0
      %s327 = sadd.s32 %s326, 1
      %s328 = scalar_select %p325, %s326, %s327
      %p331 = pneg %p325
      %p332 = scmp.eq.s32.totalorder %s45, 8
      %p333 = por %p331, %p332
      %p334 = scmp.ne.s32.totalorder %s326, %s329
      %p335 = scmp.eq.s32.totalorder %s45, 0
      %p336 = por %p334, %p335
      %p337 = scmp.ne.s32.totalorder %s326, %s329
      %p338 = scmp.eq.s32.totalorder %s50, 8
      %p339 = por %p337, %p338
      %p340 = scmp.ne.s32.totalorder %s329, %s330
      %p341 = scmp.eq.s32.totalorder %s50, 0
      %p342 = por %p340, %p341
      %p343 = scmp.ne.s32.totalorder %s329, %s330
      %p344 = scmp.eq.s32.totalorder %s51, 8
      %p345 = por %p343, %p344
      %p347 = scmp.ne.s32.totalorder %s330, %s346
      %p348 = scmp.eq.s32.totalorder %s51, 0
      %p349 = por %p347, %p348
      %p350 = scmp.lt.s32.totalorder %s45, 3
      %s351 = scalar_select %p350, %s45, 3
      %p352 = scmp.lt.s32.totalorder %s52, 3
      %s353 = scalar_select %p352, %s52, 3
      %s354 = ssub.s32 %s351, %s353
      %p355 = scmp.eq.s32.totalorder %s354, 0
      %s357 = sadd.s32 %s356, 1
      %s358 = scalar_select %p355, %s356, %s357
      %p361 = pneg %p355
      %p362 = scmp.eq.s32.totalorder %s45, 8
      %p363 = por %p361, %p362
      %p364 = scmp.ne.s32.totalorder %s356, %s359
      %p365 = scmp.eq.s32.totalorder %s45, 0
      %p366 = por %p364, %p365
      %p367 = scmp.ne.s32.totalorder %s356, %s359
      %p368 = scmp.eq.s32.totalorder %s50, 8
      %p369 = por %p367, %p368
      %p370 = scmp.ne.s32.totalorder %s359, %s360
      %p371 = scmp.eq.s32.totalorder %s50, 0
      %p372 = por %p370, %p371
      %p373 = scmp.ne.s32.totalorder %s359, %s360
      %p374 = scmp.eq.s32.totalorder %s51, 8
      %p375 = por %p373, %p374
      %p377 = scmp.ne.s32.totalorder %s360, %s376
      %p378 = scmp.eq.s32.totalorder %s51, 0
      %p379 = por %p377, %p378
      %s381 = sadd.s32 %s380, 1
      %p384 = scmp.eq.s32.totalorder %s45, 8
      %p385 = scmp.ne.s32.totalorder %s380, %s382
      %p386 = scmp.eq.s32.totalorder %s45, 0
      %p387 = por %p385, %p386
      %p388 = scmp.ne.s32.totalorder %s380, %s382
      %p389 = scmp.eq.s32.totalorder %s50, 8
      %p390 = por %p388, %p389
      %p391 = scmp.ne.s32.totalorder %s382, %s383
      %p392 = scmp.eq.s32.totalorder %s50, 0
      %p393 = por %p391, %p392
      %p394 = scmp.ne.s32.totalorder %s382, %s383
      %p395 = scmp.eq.s32.totalorder %s51, 8
      %p396 = por %p394, %p395
      %p398 = scmp.ne.s32.totalorder %s383, %s397
      %p399 = scmp.eq.s32.totalorder %s51, 0
      %p400 = por %p398, %p399
      %s401 = ssub.s32 %s45, 4
      %p402 = scmp.gt.s32.totalorder %s401, 0
      %s403 = scalar_select %p402, %s401, 0
      %p404 = scmp.lt.s32.totalorder %s403, 3
      %s405 = scalar_select %p404, %s403, 3
      %s406 = ssub.s32 %s52, 4
      %p407 = scmp.gt.s32.totalorder %s406, 0
      %s408 = scalar_select %p407, %s406, 0
      %p409 = scmp.lt.s32.totalorder %s408, 3
      %s410 = scalar_select %p409, %s408, 3
      %s411 = ssub.s32 %s405, %s410
      %p412 = scmp.eq.s32.totalorder %s411, 0
      %s414 = sadd.s32 %s413, 1
      %s415 = scalar_select %p412, %s413, %s414
      %p418 = pneg %p412
      %p419 = scmp.eq.s32.totalorder %s45, 8
      %p420 = por %p418, %p419
      %p421 = scmp.ne.s32.totalorder %s413, %s416
      %p422 = scmp.eq.s32.totalorder %s45, 0
      %p423 = por %p421, %p422
      %p424 = scmp.ne.s32.totalorder %s413, %s416
      %p425 = scmp.eq.s32.totalorder %s50, 8
      %p426 = por %p424, %p425
      %p427 = scmp.ne.s32.totalorder %s416, %s417
      %p428 = scmp.eq.s32.totalorder %s50, 0
      %p429 = por %p427, %p428
      %p430 = scmp.ne.s32.totalorder %s416, %s417
      %p431 = scmp.eq.s32.totalorder %s51, 8
      %p432 = por %p430, %p431
      %p434 = scmp.ne.s32.totalorder %s417, %s433
      %p435 = scmp.eq.s32.totalorder %s51, 0
      %p436 = por %p434, %p435
      %s437 = ssub.s32 %s45, 4
      %p438 = scmp.gt.s32.totalorder %s437, 0
      %s439 = scalar_select %p438, %s437, 0
      %p440 = scmp.lt.s32.totalorder %s439, 3
      %s441 = scalar_select %p440, %s439, 3
      %s442 = ssub.s32 %s52, 4
      %p443 = scmp.gt.s32.totalorder %s442, 0
      %s444 = scalar_select %p443, %s442, 0
      %p445 = scmp.lt.s32.totalorder %s444, 3
      %s446 = scalar_select %p445, %s444, 3
      %s447 = ssub.s32 %s441, %s446
      %p448 = scmp.eq.s32.totalorder %s447, 0
      %s450 = sadd.s32 %s449, 1
      %s451 = scalar_select %p448, %s449, %s450
      %p454 = pneg %p448
      %p455 = scmp.eq.s32.totalorder %s45, 8
      %p456 = por %p454, %p455
      %p457 = scmp.ne.s32.totalorder %s449, %s452
      %p458 = scmp.eq.s32.totalorder %s45, 0
      %p459 = por %p457, %p458
      %p460 = scmp.ne.s32.totalorder %s449, %s452
      %p461 = scmp.eq.s32.totalorder %s50, 8
      %p462 = por %p460, %p461
      %p463 = scmp.ne.s32.totalorder %s452, %s453
      %p464 = scmp.eq.s32.totalorder %s50, 0
      %p465 = por %p463, %p464
      %p466 = scmp.ne.s32.totalorder %s452, %s453
      %p467 = scmp.eq.s32.totalorder %s51, 8
      %p468 = por %p466, %p467
      %p470 = scmp.ne.s32.totalorder %s453, %s469
      %p471 = scmp.eq.s32.totalorder %s51, 0
      %p472 = por %p470, %p471
      %s473 = ssub.s32 %s45, 4
      %p474 = scmp.gt.s32.totalorder %s473, 0
      %s475 = scalar_select %p474, %s473, 0
      %p476 = scmp.lt.s32.totalorder %s475, 3
      %s477 = scalar_select %p476, %s475, 3
      %s478 = ssub.s32 %s52, 4
      %p479 = scmp.gt.s32.totalorder %s478, 0
      %s480 = scalar_select %p479, %s478, 0
      %p481 = scmp.lt.s32.totalorder %s480, 3
      %s482 = scalar_select %p481, %s480, 3
      %s483 = ssub.s32 %s477, %s482
      %p484 = scmp.eq.s32.totalorder %s483, 0
      %s486 = sadd.s32 %s485, 1
      %s487 = scalar_select %p484, %s485, %s486
      %p490 = pneg %p484
      %p491 = scmp.eq.s32.totalorder %s45, 8
      %p492 = por %p490, %p491
      %p493 = scmp.ne.s32.totalorder %s485, %s488
      %p494 = scmp.eq.s32.totalorder %s45, 0
      %p495 = por %p493, %p494
      %p496 = scmp.ne.s32.totalorder %s485, %s488
      %p497 = scmp.eq.s32.totalorder %s50, 8
      %p498 = por %p496, %p497
      %p499 = scmp.ne.s32.totalorder %s488, %s489
      %p500 = scmp.eq.s32.totalorder %s50, 0
      %p501 = por %p499, %p500
      %p502 = scmp.ne.s32.totalorder %s488, %s489
      %p503 = scmp.eq.s32.totalorder %s51, 8
      %p504 = por %p502, %p503
      %p506 = scmp.ne.s32.totalorder %s489, %s505
      %p507 = scmp.eq.s32.totalorder %s51, 0
      %p508 = por %p506, %p507
      %s509 = ssub.s32 %s45, 4
      %p510 = scmp.gt.s32.totalorder %s509, 0
      %s511 = scalar_select %p510, %s509, 0
      %p512 = scmp.lt.s32.totalorder %s511, 3
      %s513 = scalar_select %p512, %s511, 3
      %s514 = ssub.s32 %s52, 4
      %p515 = scmp.gt.s32.totalorder %s514, 0
      %s516 = scalar_select %p515, %s514, 0
      %p517 = scmp.lt.s32.totalorder %s516, 3
      %s518 = scalar_select %p517, %s516, 3
      %s519 = ssub.s32 %s513, %s518
      %p520 = scmp.eq.s32.totalorder %s519, 0
      %s522 = sadd.s32 %s521, 1
      %s523 = scalar_select %p520, %s521, %s522
      %p526 = pneg %p520
      %p527 = scmp.eq.s32.totalorder %s45, 8
      %p528 = por %p526, %p527
      %p529 = scmp.ne.s32.totalorder %s521, %s524
      %p530 = scmp.eq.s32.totalorder %s45, 0
      %p531 = por %p529, %p530
      %p532 = scmp.ne.s32.totalorder %s521, %s524
      %p533 = scmp.eq.s32.totalorder %s50, 8
      %p534 = por %p532, %p533
      %p535 = scmp.ne.s32.totalorder %s524, %s525
      %p536 = scmp.eq.s32.totalorder %s50, 0
      %p537 = por %p535, %p536
      %p538 = scmp.ne.s32.totalorder %s524, %s525
      %p539 = scmp.eq.s32.totalorder %s51, 8
      %p540 = por %p538, %p539
      %p542 = scmp.ne.s32.totalorder %s525, %s541
      %p543 = scmp.eq.s32.totalorder %s51, 0
      %p544 = por %p542, %p543
      %s545 = ssub.s32 %s45, 4
      %p546 = scmp.gt.s32.totalorder %s545, 0
      %s547 = scalar_select %p546, %s545, 0
      %p548 = scmp.lt.s32.totalorder %s547, 3
      %s549 = scalar_select %p548, %s547, 3
      %s550 = ssub.s32 %s52, 4
      %p551 = scmp.gt.s32.totalorder %s550, 0
      %s552 = scalar_select %p551, %s550, 0
      %p553 = scmp.lt.s32.totalorder %s552, 3
      %s554 = scalar_select %p553, %s552, 3
      %s555 = ssub.s32 %s549, %s554
      %p556 = scmp.eq.s32.totalorder %s555, 0
      %s558 = sadd.s32 %s557, 1
      %s559 = scalar_select %p556, %s557, %s558
      %p562 = pneg %p556
      %p563 = scmp.eq.s32.totalorder %s45, 8
      %p564 = por %p562, %p563
      %p565 = scmp.ne.s32.totalorder %s557, %s560
      %p566 = scmp.eq.s32.totalorder %s45, 0
      %p567 = por %p565, %p566
      %p568 = scmp.ne.s32.totalorder %s557, %s560
      %p569 = scmp.eq.s32.totalorder %s50, 8
      %p570 = por %p568, %p569
      %p571 = scmp.ne.s32.totalorder %s560, %s561
      %p572 = scmp.eq.s32.totalorder %s50, 0
      %p573 = por %p571, %p572
      %p574 = scmp.ne.s32.totalorder %s560, %s561
      %p575 = scmp.eq.s32.totalorder %s51, 8
      %p576 = por %p574, %p575
      %p578 = scmp.ne.s32.totalorder %s561, %s577
      %p579 = scmp.eq.s32.totalorder %s51, 0
      %p580 = por %p578, %p579
      %s581 = ssub.s32 %s45, 4
      %p582 = scmp.gt.s32.totalorder %s581, 0
      %s583 = scalar_select %p582, %s581, 0
      %p584 = scmp.lt.s32.totalorder %s583, 3
      %s585 = scalar_select %p584, %s583, 3
      %s586 = ssub.s32 %s52, 4
      %p587 = scmp.gt.s32.totalorder %s586, 0
      %s588 = scalar_select %p587, %s586, 0
      %p589 = scmp.lt.s32.totalorder %s588, 3
      %s590 = scalar_select %p589, %s588, 3
      %s591 = ssub.s32 %s585, %s590
      %p592 = scmp.eq.s32.totalorder %s591, 0
      %s594 = sadd.s32 %s593, 1
      %s595 = scalar_select %p592, %s593, %s594
      %p598 = pneg %p592
      %p599 = scmp.eq.s32.totalorder %s45, 8
      %p600 = por %p598, %p599
      %p601 = scmp.ne.s32.totalorder %s593, %s596
      %p602 = scmp.eq.s32.totalorder %s45, 0
      %p603 = por %p601, %p602
      %p604 = scmp.ne.s32.totalorder %s593, %s596
      %p605 = scmp.eq.s32.totalorder %s50, 8
      %p606 = por %p604, %p605
      %p607 = scmp.ne.s32.totalorder %s596, %s597
      %p608 = scmp.eq.s32.totalorder %s50, 0
      %p609 = por %p607, %p608
      %p610 = scmp.ne.s32.totalorder %s596, %s597
      %p611 = scmp.eq.s32.totalorder %s51, 8
      %p612 = por %p610, %p611
      %p614 = scmp.ne.s32.totalorder %s597, %s613
      %p615 = scmp.eq.s32.totalorder %s51, 0
      %p616 = por %p614, %p615
      %s617 = ssub.s32 %s45, 4
      %p618 = scmp.gt.s32.totalorder %s617, 0
      %s619 = scalar_select %p618, %s617, 0
      %p620 = scmp.lt.s32.totalorder %s619, 3
      %s621 = scalar_select %p620, %s619, 3
      %s622 = ssub.s32 %s52, 4
      %p623 = scmp.gt.s32.totalorder %s622, 0
      %s624 = scalar_select %p623, %s622, 0
      %p625 = scmp.lt.s32.totalorder %s624, 3
      %s626 = scalar_select %p625, %s624, 3
      %s627 = ssub.s32 %s621, %s626
      %p628 = scmp.eq.s32.totalorder %s627, 0
      %s630 = sadd.s32 %s629, 1
      %s631 = scalar_select %p628, %s629, %s630
      %p634 = pneg %p628
      %p635 = scmp.eq.s32.totalorder %s45, 8
      %p636 = por %p634, %p635
      %p637 = scmp.ne.s32.totalorder %s629, %s632
      %p638 = scmp.eq.s32.totalorder %s45, 0
      %p639 = por %p637, %p638
      %p640 = scmp.ne.s32.totalorder %s629, %s632
      %p641 = scmp.eq.s32.totalorder %s50, 8
      %p642 = por %p640, %p641
      %p643 = scmp.ne.s32.totalorder %s632, %s633
      %p644 = scmp.eq.s32.totalorder %s50, 0
      %p645 = por %p643, %p644
      %p646 = scmp.ne.s32.totalorder %s632, %s633
      %p647 = scmp.eq.s32.totalorder %s51, 8
      %p648 = por %p646, %p647
      %p650 = scmp.ne.s32.totalorder %s633, %s649
      %p651 = scmp.eq.s32.totalorder %s51, 0
      %p652 = por %p650, %p651
      %s653 = ssub.s32 %s45, 4
      %p654 = scmp.gt.s32.totalorder %s653, 0
      %s655 = scalar_select %p654, %s653, 0
      %p656 = scmp.lt.s32.totalorder %s655, 3
      %s657 = scalar_select %p656, %s655, 3
      %s658 = ssub.s32 %s52, 4
      %p659 = scmp.gt.s32.totalorder %s658, 0
      %s660 = scalar_select %p659, %s658, 0
      %p661 = scmp.lt.s32.totalorder %s660, 3
      %s662 = scalar_select %p661, %s660, 3
      %s663 = ssub.s32 %s657, %s662
      %p664 = scmp.eq.s32.totalorder %s663, 0
      %s666 = sadd.s32 %s665, 1
      %s667 = scalar_select %p664, %s665, %s666
      %p670 = pneg %p664
      %p671 = scmp.eq.s32.totalorder %s45, 8
      %p672 = por %p670, %p671
      %p673 = scmp.ne.s32.totalorder %s665, %s668
      %p674 = scmp.eq.s32.totalorder %s45, 0
      %p675 = por %p673, %p674
      %p676 = scmp.ne.s32.totalorder %s665, %s668
      %p677 = scmp.eq.s32.totalorder %s50, 8
      %p678 = por %p676, %p677
      %p679 = scmp.ne.s32.totalorder %s668, %s669
      %p680 = scmp.eq.s32.totalorder %s50, 0
      %p681 = por %p679, %p680
      %p682 = scmp.ne.s32.totalorder %s668, %s669
      %p683 = scmp.eq.s32.totalorder %s51, 8
      %p684 = por %p682, %p683
      %p686 = scmp.ne.s32.totalorder %s669, %s685
      %p687 = scmp.eq.s32.totalorder %s51, 0
      %p688 = por %p686, %p687
      %s689 = ssub.s32 %s45, 4
      %p690 = scmp.gt.s32.totalorder %s689, 0
      %s691 = scalar_select %p690, %s689, 0
      %p692 = scmp.lt.s32.totalorder %s691, 3
      %s693 = scalar_select %p692, %s691, 3
      %s694 = ssub.s32 %s52, 4
      %p695 = scmp.gt.s32.totalorder %s694, 0
      %s696 = scalar_select %p695, %s694, 0
      %p697 = scmp.lt.s32.totalorder %s696, 3
      %s698 = scalar_select %p697, %s696, 3
      %s699 = ssub.s32 %s693, %s698
      %p700 = scmp.eq.s32.totalorder %s699, 0
      %s702 = sadd.s32 %s701, 1
      %s703 = scalar_select %p700, %s701, %s702
      %p706 = pneg %p700
      %p707 = scmp.eq.s32.totalorder %s45, 8
      %p708 = por %p706, %p707
      %p709 = scmp.ne.s32.totalorder %s701, %s704
      %p710 = scmp.eq.s32.totalorder %s45, 0
      %p711 = por %p709, %p710
      %p712 = scmp.ne.s32.totalorder %s701, %s704
      %p713 = scmp.eq.s32.totalorder %s50, 8
      %p714 = por %p712, %p713
      %p715 = scmp.ne.s32.totalorder %s704, %s705
      %p716 = scmp.eq.s32.totalorder %s50, 0
      %p717 = por %p715, %p716
      %p718 = scmp.ne.s32.totalorder %s704, %s705
      %p719 = scmp.eq.s32.totalorder %s51, 8
      %p720 = por %p718, %p719
      %p722 = scmp.ne.s32.totalorder %s705, %s721
      %p723 = scmp.eq.s32.totalorder %s51, 0
      %p724 = por %p722, %p723
      %s725 = ssub.s32 %s45, 4
      %p726 = scmp.gt.s32.totalorder %s725, 0
      %s727 = scalar_select %p726, %s725, 0
      %p728 = scmp.lt.s32.totalorder %s727, 3
      %s729 = scalar_select %p728, %s727, 3
      %s730 = ssub.s32 %s52, 4
      %p731 = scmp.gt.s32.totalorder %s730, 0
      %s732 = scalar_select %p731, %s730, 0
      %p733 = scmp.lt.s32.totalorder %s732, 3
      %s734 = scalar_select %p733, %s732, 3
      %s735 = ssub.s32 %s729, %s734
      %p736 = scmp.eq.s32.totalorder %s735, 0
      %s738 = sadd.s32 %s737, 1
      %s739 = scalar_select %p736, %s737, %s738
      %p742 = pneg %p736
      %p743 = scmp.eq.s32.totalorder %s45, 8
      %p744 = por %p742, %p743
      %p745 = scmp.ne.s32.totalorder %s737, %s740
      %p746 = scmp.eq.s32.totalorder %s45, 0
      %p747 = por %p745, %p746
      %p748 = scmp.ne.s32.totalorder %s737, %s740
      %p749 = scmp.eq.s32.totalorder %s50, 8
      %p750 = por %p748, %p749
      %p751 = scmp.ne.s32.totalorder %s740, %s741
      %p752 = scmp.eq.s32.totalorder %s50, 0
      %p753 = por %p751, %p752
      %p754 = scmp.ne.s32.totalorder %s740, %s741
      %p755 = scmp.eq.s32.totalorder %s51, 8
      %p756 = por %p754, %p755
      %p758 = scmp.ne.s32.totalorder %s741, %s757
      %p759 = scmp.eq.s32.totalorder %s51, 0
      %p760 = por %p758, %p759
      %s762 = sadd.s32 %s761, 1
      %p765 = scmp.eq.s32.totalorder %s45, 8
      %p766 = scmp.ne.s32.totalorder %s761, %s763
      %p767 = scmp.eq.s32.totalorder %s45, 0
      %p768 = por %p766, %p767
      %p769 = scmp.ne.s32.totalorder %s761, %s763
      %p770 = scmp.eq.s32.totalorder %s50, 8
      %p771 = por %p769, %p770
      %p772 = scmp.ne.s32.totalorder %s763, %s764
      %p773 = scmp.eq.s32.totalorder %s50, 0
      %p774 = por %p772, %p773
      %p775 = scmp.ne.s32.totalorder %s763, %s764
      %p776 = scmp.eq.s32.totalorder %s51, 8
      %p777 = por %p775, %p776
      %p779 = scmp.ne.s32.totalorder %s764, %s778
      %p780 = scmp.eq.s32.totalorder %s51, 0
      %p781 = por %p779, %p780
      %s783 = sadd.s32 %s782, 1
      %p786 = scmp.eq.s32.totalorder %s45, 8
      %p787 = scmp.ne.s32.totalorder %s782, %s784
      %p788 = scmp.eq.s32.totalorder %s45, 0
      %p789 = por %p787, %p788
      %p790 = scmp.ne.s32.totalorder %s782, %s784
      %p791 = scmp.eq.s32.totalorder %s50, 8
      %p792 = por %p790, %p791
      %p793 = scmp.ne.s32.totalorder %s784, %s785
      %p794 = scmp.eq.s32.totalorder %s50, 0
      %p795 = por %p793, %p794
      %p796 = scmp.ne.s32.totalorder %s784, %s785
      %p797 = scmp.eq.s32.totalorder %s51, 8
      %p798 = por %p796, %p797
      %p800 = scmp.ne.s32.totalorder %s785, %s799
      %p801 = scmp.eq.s32.totalorder %s51, 0
      %p802 = por %p800, %p801
      %s804 = sadd.s32 %s803, 1
      %p807 = scmp.eq.s32.totalorder %s45, 8
      %p808 = scmp.ne.s32.totalorder %s803, %s805
      %p809 = scmp.eq.s32.totalorder %s45, 0
      %p810 = por %p808, %p809
      %p811 = scmp.ne.s32.totalorder %s803, %s805
      %p812 = scmp.eq.s32.totalorder %s50, 8
      %p813 = por %p811, %p812
      %p814 = scmp.ne.s32.totalorder %s805, %s806
      %p815 = scmp.eq.s32.totalorder %s50, 0
      %p816 = por %p814, %p815
      %p817 = scmp.ne.s32.totalorder %s805, %s806
      %p818 = scmp.eq.s32.totalorder %s51, 8
      %p819 = por %p817, %p818
      %p821 = scmp.ne.s32.totalorder %s806, %s820
      %p822 = scmp.eq.s32.totalorder %s51, 0
      %p823 = por %p821, %p822
      %p824 = scmp.le.s32.totalorder 1, %s45
      %p825 = scmp.lt.s32.totalorder %s45, 10
      %p826 = pnand %p824, %p825
      %p827 = pneg %p826
      // Predicated region
      $region9: #{forward.1} parent=5 // pred_check
        _
      $region10: #{forward.1} parent=5 // pred_check_branch
        %829 = sbr.rel (%p826) target = $region12
      $region11: #{forward.1} parent=5 // pred_region
        %s830 = ssub.s32 %s45, 1
        // Predicated region
        $region13: #{forward.1} parent=11 // pred_check
          %p831 = pneg %p66
        $region14: #{forward.1} parent=11 // pred_check_branch
          %833 = sbr.rel (%p831) target = $region16
        $region15: #{forward.1} parent=11 // pred_region
          _
        $region16: #{forward.1} parent=11 // pred_fallthru
          _
        // Predicated region
        $region17: #{forward.1} parent=11 // pred_check
          %p834 = pneg %p87
        $region18: #{forward.1} parent=11 // pred_check_branch
          %836 = sbr.rel (%p834) target = $region20
        $region19: #{forward.1} parent=11 // pred_region
          _
        $region20: #{forward.1} parent=11 // pred_fallthru
          _
        // Predicated region
        $region21: #{forward.1} parent=11 // pred_check
          %p837 = pneg %p108
        $region22: #{forward.1} parent=11 // pred_check_branch
          %839 = sbr.rel (%p837) target = $region24
        $region23: #{forward.1} parent=11 // pred_region
          _
        $region24: #{forward.1} parent=11 // pred_fallthru
          _
        // Predicated region
        $region25: #{forward.1} parent=11 // pred_check
          %p840 = pneg %p129
        $region26: #{forward.1} parent=11 // pred_check_branch
          %842 = sbr.rel (%p840) target = $region28
        $region27: #{forward.1} parent=11 // pred_region
          _
        $region28: #{forward.1} parent=11 // pred_fallthru
          _
        // Predicated region
        $region29: #{forward.1} parent=11 // pred_check
          %p843 = pneg %p150
        $region30: #{forward.1} parent=11 // pred_check_branch
          %845 = sbr.rel (%p843) target = $region32
        $region31: #{forward.1} parent=11 // pred_region
          _
        $region32: #{forward.1} parent=11 // pred_fallthru
          _
        // Predicated region
        $region33: #{forward.1} parent=11 // pred_check
          %p846 = pneg %p171
        $region34: #{forward.1} parent=11 // pred_check_branch
          %848 = sbr.rel (%p846) target = $region36
        $region35: #{forward.1} parent=11 // pred_region
          _
        $region36: #{forward.1} parent=11 // pred_fallthru
          _
        // Predicated region
        $region37: #{forward.1} parent=11 // pred_check
          %p849 = pneg %p192
        $region38: #{forward.1} parent=11 // pred_check_branch
          %851 = sbr.rel (%p849) target = $region40
        $region39: #{forward.1} parent=11 // pred_region
          %853 = vsyncadd [#allocation6], 0
          %s854 = sshll.u32 %s6, 4
          %s855 = int_to_ptr.hbm [resolvable:$true] %s854
          %s856 = sshll.u32 [#allocation5], 4
          %s857 = int_to_ptr.vmem [resolvable:$true] %s856
          %862 = dma.hbm_to_vmem [thread:$0]  %s855, 9216, %s857, [#allocation6], 576, 576, 36
        $region40: #{forward.1} parent=11 // pred_fallthru
          _
        // Predicated region
        $region41: #{forward.1} parent=11 // pred_check
          %p863 = pneg %p393
        $region42: #{forward.1} parent=11 // pred_check_branch
          %865 = sbr.rel (%p863) target = $region44
        $region43: #{forward.1} parent=11 // pred_region
          %867 = vsyncadd [#allocation18], 0
          %s869 = sshll.u32 %s13, 4
          %s870 = int_to_ptr.hbm [resolvable:$true] %s869
          %s871 = sshll.u32 [#allocation17], 4
          %s872 = int_to_ptr.vmem [resolvable:$true] %s871
          %874 = dma.hbm_to_vmem [thread:$0]  %s870, 16, %s872, [#allocation18]
        $region44: #{forward.1} parent=11 // pred_fallthru
          _
        // Predicated region
        $region45: #{forward.1} parent=11 // pred_check
          %p875 = pneg %p774
        $region46: #{forward.1} parent=11 // pred_check_branch
          %877 = sbr.rel (%p875) target = $region48
        $region47: #{forward.1} parent=11 // pred_region
          %879 = vsyncadd [#allocation9], 0
          %s881 = sshll.u32 %s24, 4
          %s882 = int_to_ptr.hbm [resolvable:$true] %s881
          %s883 = sshll.u32 [#allocation28], 4
          %s884 = int_to_ptr.vmem [resolvable:$true] %s883
          %886 = dma.hbm_to_vmem [thread:$0]  %s882, 16, %s884, [#allocation9]
        $region48: #{forward.1} parent=11 // pred_fallthru
          _
      $region12: #{forward.1} parent=5 // pred_fallthru
        _
      %p887 = scmp.lt.s32.totalorder %s45, 9
      // Predicated region
      $region49: #{forward.1} parent=5 // pred_check
        %p888 = pneg %p887
      $region50: #{forward.1} parent=5 // pred_check_branch
        %890 = sbr.rel (%p888) target = $region52
      $region51: #{forward.1} parent=5 // pred_region
        // Predicated region
        $region53: #{forward.1} parent=51 // pred_check
          %p891 = pneg %p216
        $region54: #{forward.1} parent=51 // pred_check_branch
          %893 = sbr.rel (%p891) target = $region56
        $region55: #{forward.1} parent=51 // pred_region
          %s894 = sand.u32 %s45, 1
          %s895 = scalar_lea.sflag [#allocation9], %s894
          %s896 = sand.u32 %s206, 1
          %s897 = scalar_lea.vmem [#allocation8], %s896
          %p898 = scmp.lt.s32.totalorder %s45, 3
          %s899 = scalar_select %p898, %s45, 3
          %901 = vsyncadd %s895, 0
          %s902 = scalar_lea.hbm %s7, %s899
          %s904 = sshll.u32 %s902, 4
          %s905 = int_to_ptr.hbm [resolvable:$true] %s904
          %s906 = sshll.u32 %s897, 4
          %s907 = int_to_ptr.vmem [resolvable:$true] %s906
          %909 = dma.hbm_to_vmem [thread:$0]  %s905, 16, %s907, %s895
        $region56: #{forward.1} parent=51 // pred_fallthru
          _
        // Predicated region
        $region57: #{forward.1} parent=51 // pred_check
          %p910 = pneg %p246
        $region58: #{forward.1} parent=51 // pred_check_branch
          %912 = sbr.rel (%p910) target = $region60
        $region59: #{forward.1} parent=51 // pred_region
          %s913 = sand.u32 %s45, 1
          %s914 = scalar_lea.sflag [#allocation9], %s913
          %s915 = sand.u32 %s236, 1
          %s916 = smul.addr %s915, 576
          %s917 = scalar_lea.vmem [#allocation10], %s916
          %p918 = scmp.lt.s32.totalorder %s45, 3
          %s919 = scalar_select %p918, %s45, 3
          %921 = vsyncadd %s914, 0
          %s922 = smul.addr %s919, 144
          %s923 = smul.addr %s922, 4
          %s924 = scalar_lea.hbm %s8, %s923
          %s925 = sshll.u32 %s924, 4
          %s926 = int_to_ptr.hbm [resolvable:$true] %s925
          %s927 = sshll.u32 %s917, 4
          %s928 = int_to_ptr.vmem [resolvable:$true] %s927
          %933 = dma.hbm_to_vmem [thread:$0]  %s926, 9216, %s928, %s914, 576, 576, 36
        $region60: #{forward.1} parent=51 // pred_fallthru
          _
        // Predicated region
        $region61: #{forward.1} parent=51 // pred_check
          %p934 = pneg %p276
        $region62: #{forward.1} parent=51 // pred_check_branch
          %936 = sbr.rel (%p934) target = $region64
        $region63: #{forward.1} parent=51 // pred_region
          %s937 = sand.u32 %s45, 1
          %s938 = scalar_lea.sflag [#allocation12], %s937
          %s939 = sand.u32 %s266, 1
          %s940 = smul.addr %s939, 192
          %s941 = scalar_lea.vmem [#allocation11], %s940
          %p942 = scmp.lt.s32.totalorder %s45, 3
          %s943 = scalar_select %p942, %s45, 3
          %945 = vsyncadd %s938, 0
          %s946 = smul.addr %s943, 48
          %s947 = smul.addr %s946, 4
          %s948 = scalar_lea.hbm %s9, %s947
          %s949 = sshll.u32 %s948, 4
          %s950 = int_to_ptr.hbm [resolvable:$true] %s949
          %s951 = sshll.u32 %s941, 4
          %s952 = int_to_ptr.vmem [resolvable:$true] %s951
          %957 = dma.hbm_to_vmem [thread:$0]  %s950, 3072, %s952, %s938, 64, 64, 4
        $region64: #{forward.1} parent=51 // pred_fallthru
          _
        // Predicated region
        $region65: #{forward.1} parent=51 // pred_check
          %p958 = pneg %p306
        $region66: #{forward.1} parent=51 // pred_check_branch
          %960 = sbr.rel (%p958) target = $region68
        $region67: #{forward.1} parent=51 // pred_region
          %s961 = sand.u32 %s45, 1
          %s962 = scalar_lea.sflag [#allocation12], %s961
          %s963 = sand.u32 %s296, 1
          %s964 = scalar_lea.vmem [#allocation13], %s963
          %p965 = scmp.lt.s32.totalorder %s45, 3
          %s966 = scalar_select %p965, %s45, 3
          %968 = vsyncadd %s962, 0
          %s969 = scalar_lea.hbm %s10, %s966
          %s971 = sshll.u32 %s969, 4
          %s972 = int_to_ptr.hbm [resolvable:$true] %s971
          %s973 = sshll.u32 %s964, 4
          %s974 = int_to_ptr.vmem [resolvable:$true] %s973
          %976 = dma.hbm_to_vmem [thread:$0]  %s972, 16, %s974, %s962
        $region68: #{forward.1} parent=51 // pred_fallthru
          _
        // Predicated region
        $region69: #{forward.1} parent=51 // pred_check
          %p977 = pneg %p336
        $region70: #{forward.1} parent=51 // pred_check_branch
          %979 = sbr.rel (%p977) target = $region72
        $region71: #{forward.1} parent=51 // pred_region
          %s980 = sand.u32 %s45, 1
          %s981 = scalar_lea.sflag [#allocation15], %s980
          %s982 = sand.u32 %s326, 1
          %s983 = smul.addr %s982, 512
          %s984 = scalar_lea.vmem [#allocation14], %s983
          %p985 = scmp.lt.s32.totalorder %s45, 3
          %s986 = scalar_select %p985, %s45, 3
          %988 = vsyncadd %s981, 0
          %s989 = smul.addr %s986, 128
          %s990 = smul.addr %s989, 4
          %s991 = scalar_lea.hbm %s11, %s990
          %s992 = sshll.u32 %s991, 4
          %s993 = int_to_ptr.hbm [resolvable:$true] %s992
          %s994 = sshll.u32 %s984, 4
          %s995 = int_to_ptr.vmem [resolvable:$true] %s994
          %1000 = dma.hbm_to_vmem [thread:$0]  %s993, 8192, %s995, %s981, 512, 512, 32
        $region72: #{forward.1} parent=51 // pred_fallthru
          _
        // Predicated region
        $region73: #{forward.1} parent=51 // pred_check
          %p1001 = pneg %p366
        $region74: #{forward.1} parent=51 // pred_check_branch
          %1003 = sbr.rel (%p1001) target = $region76
        $region75: #{forward.1} parent=51 // pred_region
          %s1004 = sand.u32 %s45, 1
          %s1005 = scalar_lea.sflag [#allocation15], %s1004
          %s1006 = sand.u32 %s356, 1
          %s1007 = smul.addr %s1006, 512
          %s1008 = scalar_lea.vmem [#allocation16], %s1007
          %p1009 = scmp.lt.s32.totalorder %s45, 3
          %s1010 = scalar_select %p1009, %s45, 3
          %1012 = vsyncadd %s1005, 0
          %s1013 = smul.addr %s1010, 128
          %s1014 = smul.addr %s1013, 4
          %s1015 = scalar_lea.hbm %s12, %s1014
          %s1016 = sshll.u32 %s1015, 4
          %s1017 = int_to_ptr.hbm [resolvable:$true] %s1016
          %s1018 = sshll.u32 %s1008, 4
          %s1019 = int_to_ptr.vmem [resolvable:$true] %s1018
          %1024 = dma.hbm_to_vmem [thread:$0]  %s1017, 8192, %s1019, %s1005, 64, 64, 4
        $region76: #{forward.1} parent=51 // pred_fallthru
          _
        // Predicated region
        $region77: #{forward.1} parent=51 // pred_check
          %p1025 = pneg %p423
        $region78: #{forward.1} parent=51 // pred_check_branch
          %1027 = sbr.rel (%p1025) target = $region80
        $region79: #{forward.1} parent=51 // pred_region
          %s1028 = sand.u32 %s45, 1
          %s1029 = scalar_lea.sflag [#allocation6], %s1028
          %s1030 = sand.u32 %s413, 1
          %s1031 = scalar_lea.vmem [#allocation19], %s1030
          %s1032 = ssub.s32 %s45, 4
          %p1033 = scmp.gt.s32.totalorder %s1032, 0
          %s1034 = scalar_select %p1033, %s1032, 0
          %p1035 = scmp.lt.s32.totalorder %s1034, 3
          %s1036 = scalar_select %p1035, %s1034, 3
          %1038 = vsyncadd %s1029, 0
          %s1039 = scalar_lea.hbm %s14, %s1036
          %s1041 = sshll.u32 %s1039, 4
          %s1042 = int_to_ptr.hbm [resolvable:$true] %s1041
          %s1043 = sshll.u32 %s1031, 4
          %s1044 = int_to_ptr.vmem [resolvable:$true] %s1043
          %1046 = dma.hbm_to_vmem [thread:$0]  %s1042, 16, %s1044, %s1029
        $region80: #{forward.1} parent=51 // pred_fallthru
          _
        // Predicated region
        $region81: #{forward.1} parent=51 // pred_check
          %p1047 = pneg %p459
        $region82: #{forward.1} parent=51 // pred_check_branch
          %1049 = sbr.rel (%p1047) target = $region84
        $region83: #{forward.1} parent=51 // pred_region
          %s1050 = sand.u32 %s45, 1
          %s1051 = scalar_lea.sflag [#allocation9], %s1050
          %s1052 = sand.u32 %s449, 1
          %s1053 = smul.addr %s1052, 576
          %s1054 = scalar_lea.vmem [#allocation20], %s1053
          %s1055 = ssub.s32 %s45, 4
          %p1056 = scmp.gt.s32.totalorder %s1055, 0
          %s1057 = scalar_select %p1056, %s1055, 0
          %p1058 = scmp.lt.s32.totalorder %s1057, 3
          %s1059 = scalar_select %p1058, %s1057, 3
          %1061 = vsyncadd %s1051, 0
          %s1062 = smul.addr %s1059, 144
          %s1063 = smul.addr %s1062, 4
          %s1064 = scalar_lea.hbm %s15, %s1063
          %s1065 = sshll.u32 %s1064, 4
          %s1066 = int_to_ptr.hbm [resolvable:$true] %s1065
          %s1067 = sshll.u32 %s1054, 4
          %s1068 = int_to_ptr.vmem [resolvable:$true] %s1067
          %1073 = dma.hbm_to_vmem [thread:$0]  %s1066, 9216, %s1068, %s1051, 576, 576, 36
        $region84: #{forward.1} parent=51 // pred_fallthru
          _
        // Predicated region
        $region85: #{forward.1} parent=51 // pred_check
          %p1074 = pneg %p495
        $region86: #{forward.1} parent=51 // pred_check_branch
          %1076 = sbr.rel (%p1074) target = $region88
        $region87: #{forward.1} parent=51 // pred_region
          %s1077 = sand.u32 %s45, 1
          %s1078 = scalar_lea.sflag [#allocation12], %s1077
          %s1079 = sand.u32 %s485, 1
          %s1080 = smul.addr %s1079, 192
          %s1081 = scalar_lea.vmem [#allocation21], %s1080
          %s1082 = ssub.s32 %s45, 4
          %p1083 = scmp.gt.s32.totalorder %s1082, 0
          %s1084 = scalar_select %p1083, %s1082, 0
          %p1085 = scmp.lt.s32.totalorder %s1084, 3
          %s1086 = scalar_select %p1085, %s1084, 3
          %1088 = vsyncadd %s1078, 0
          %s1089 = smul.addr %s1086, 48
          %s1090 = smul.addr %s1089, 4
          %s1091 = scalar_lea.hbm %s16, %s1090
          %s1092 = sshll.u32 %s1091, 4
          %s1093 = int_to_ptr.hbm [resolvable:$true] %s1092
          %s1094 = sshll.u32 %s1081, 4
          %s1095 = int_to_ptr.vmem [resolvable:$true] %s1094
          %1100 = dma.hbm_to_vmem [thread:$0]  %s1093, 3072, %s1095, %s1078, 64, 64, 4
        $region88: #{forward.1} parent=51 // pred_fallthru
          _
        // Predicated region
        $region89: #{forward.1} parent=51 // pred_check
          %p1101 = pneg %p531
        $region90: #{forward.1} parent=51 // pred_check_branch
          %1103 = sbr.rel (%p1101) target = $region92
        $region91: #{forward.1} parent=51 // pred_region
          %s1104 = sand.u32 %s45, 1
          %s1105 = scalar_lea.sflag [#allocation15], %s1104
          %s1106 = sand.u32 %s521, 1
          %s1107 = scalar_lea.vmem [#allocation22], %s1106
          %s1108 = ssub.s32 %s45, 4
          %p1109 = scmp.gt.s32.totalorder %s1108, 0
          %s1110 = scalar_select %p1109, %s1108, 0
          %p1111 = scmp.lt.s32.totalorder %s1110, 3
          %s1112 = scalar_select %p1111, %s1110, 3
          %1114 = vsyncadd %s1105, 0
          %s1115 = scalar_lea.hbm %s17, %s1112
          %s1117 = sshll.u32 %s1115, 4
          %s1118 = int_to_ptr.hbm [resolvable:$true] %s1117
          %s1119 = sshll.u32 %s1107, 4
          %s1120 = int_to_ptr.vmem [resolvable:$true] %s1119
          %1122 = dma.hbm_to_vmem [thread:$0]  %s1118, 16, %s1120, %s1105
        $region92: #{forward.1} parent=51 // pred_fallthru
          _
        // Predicated region
        $region93: #{forward.1} parent=51 // pred_check
          %p1123 = pneg %p567
        $region94: #{forward.1} parent=51 // pred_check_branch
          %1125 = sbr.rel (%p1123) target = $region96
        $region95: #{forward.1} parent=51 // pred_region
          %s1126 = sand.u32 %s45, 1
          %s1127 = scalar_lea.sflag [#allocation6], %s1126
          %s1128 = sand.u32 %s557, 1
          %s1129 = smul.addr %s1128, 192
          %s1130 = scalar_lea.vmem [#allocation23], %s1129
          %s1131 = ssub.s32 %s45, 4
          %p1132 = scmp.gt.s32.totalorder %s1131, 0
          %s1133 = scalar_select %p1132, %s1131, 0
          %p1134 = scmp.lt.s32.totalorder %s1133, 3
          %s1135 = scalar_select %p1134, %s1133, 3
          %1137 = vsyncadd %s1127, 0
          %s1138 = smul.addr %s1135, 48
          %s1139 = smul.addr %s1138, 4
          %s1140 = scalar_lea.hbm %s18, %s1139
          %s1141 = sshll.u32 %s1140, 4
          %s1142 = int_to_ptr.hbm [resolvable:$true] %s1141
          %s1143 = sshll.u32 %s1130, 4
          %s1144 = int_to_ptr.vmem [resolvable:$true] %s1143
          %1149 = dma.hbm_to_vmem [thread:$0]  %s1142, 3072, %s1144, %s1127, 192, 192, 12
        $region96: #{forward.1} parent=51 // pred_fallthru
          _
        // Predicated region
        $region97: #{forward.1} parent=51 // pred_check
          %p1150 = pneg %p603
        $region98: #{forward.1} parent=51 // pred_check_branch
          %1152 = sbr.rel (%p1150) target = $region100
        $region99: #{forward.1} parent=51 // pred_region
          %s1153 = ssub.s32 %s45, 4
          %p1154 = scmp.gt.s32.totalorder %s1153, 0
          %s1155 = scalar_select %p1154, %s1153, 0
          %p1156 = scmp.lt.s32.totalorder %s1155, 3
          %s1157 = scalar_select %p1156, %s1155, 3
          %p1158 = scmp.lt.s32.totalorder %s1157, 3
          %s1159 = scalar_select %p1158, %s1157, 3
          %s1160 = smul.addr %s1159, 96
          %s1161 = smul.addr %s1160, 4
          %s1162 = scalar_lea.vmem %s19, %s1161
          %s1163 = ssub.s32 %s45, 4
          %p1164 = scmp.gt.s32.totalorder %s1163, 0
          %s1165 = scalar_select %p1164, %s1163, 0
          %p1166 = scmp.lt.s32.totalorder %s1165, 3
          %s1167 = scalar_select %p1166, %s1165, 3
        $region100: #{forward.1} parent=51 // pred_fallthru
          _
        // Predicated region
        $region101: #{forward.1} parent=51 // pred_check
          %p1168 = pneg %p639
        $region102: #{forward.1} parent=51 // pred_check_branch
          %1170 = sbr.rel (%p1168) target = $region104
        $region103: #{forward.1} parent=51 // pred_region
          %s1171 = sand.u32 %s45, 1
          %s1172 = scalar_lea.sflag [#allocation9], %s1171
          %s1173 = sand.u32 %s629, 1
          %s1174 = smul.addr %s1173, 192
          %s1175 = scalar_lea.vmem [#allocation24], %s1174
          %s1176 = ssub.s32 %s45, 4
          %p1177 = scmp.gt.s32.totalorder %s1176, 0
          %s1178 = scalar_select %p1177, %s1176, 0
          %p1179 = scmp.lt.s32.totalorder %s1178, 3
          %s1180 = scalar_select %p1179, %s1178, 3
          %1182 = vsyncadd %s1172, 0
          %s1183 = smul.addr %s1180, 48
          %s1184 = smul.addr %s1183, 4
          %s1185 = scalar_lea.hbm %s20, %s1184
          %s1186 = sshll.u32 %s1185, 4
          %s1187 = int_to_ptr.hbm [resolvable:$true] %s1186
          %s1188 = sshll.u32 %s1175, 4
          %s1189 = int_to_ptr.vmem [resolvable:$true] %s1188
          %1194 = dma.hbm_to_vmem [thread:$0]  %s1187, 3072, %s1189, %s1172, 64, 64, 4
        $region104: #{forward.1} parent=51 // pred_fallthru
          _
        // Predicated region
        $region105: #{forward.1} parent=51 // pred_check
          %p1195 = pneg %p675
        $region106: #{forward.1} parent=51 // pred_check_branch
          %1197 = sbr.rel (%p1195) target = $region108
        $region107: #{forward.1} parent=51 // pred_region
          %s1198 = sand.u32 %s45, 1
          %s1199 = scalar_lea.sflag [#allocation12], %s1198
          %s1200 = sand.u32 %s665, 1
          %s1201 = scalar_lea.vmem [#allocation25], %s1200
          %s1202 = ssub.s32 %s45, 4
          %p1203 = scmp.gt.s32.totalorder %s1202, 0
          %s1204 = scalar_select %p1203, %s1202, 0
          %p1205 = scmp.lt.s32.totalorder %s1204, 3
          %s1206 = scalar_select %p1205, %s1204, 3
          %1208 = vsyncadd %s1199, 0
          %s1209 = scalar_lea.hbm %s21, %s1206
          %s1211 = sshll.u32 %s1209, 4
          %s1212 = int_to_ptr.hbm [resolvable:$true] %s1211
          %s1213 = sshll.u32 %s1201, 4
          %s1214 = int_to_ptr.vmem [resolvable:$true] %s1213
          %1216 = dma.hbm_to_vmem [thread:$0]  %s1212, 16, %s1214, %s1199
        $region108: #{forward.1} parent=51 // pred_fallthru
          _
        // Predicated region
        $region109: #{forward.1} parent=51 // pred_check
          %p1217 = pneg %p711
        $region110: #{forward.1} parent=51 // pred_check_branch
          %1219 = sbr.rel (%p1217) target = $region112
        $region111: #{forward.1} parent=51 // pred_region
          %s1220 = sand.u32 %s45, 1
          %s1221 = scalar_lea.sflag [#allocation15], %s1220
          %s1222 = sand.u32 %s701, 1
          %s1223 = smul.addr %s1222, 512
          %s1224 = scalar_lea.vmem [#allocation26], %s1223
          %s1225 = ssub.s32 %s45, 4
          %p1226 = scmp.gt.s32.totalorder %s1225, 0
          %s1227 = scalar_select %p1226, %s1225, 0
          %p1228 = scmp.lt.s32.totalorder %s1227, 3
          %s1229 = scalar_select %p1228, %s1227, 3
          %1231 = vsyncadd %s1221, 0
          %s1232 = smul.addr %s1229, 128
          %s1233 = smul.addr %s1232, 4
          %s1234 = scalar_lea.hbm %s22, %s1233
          %s1235 = sshll.u32 %s1234, 4
          %s1236 = int_to_ptr.hbm [resolvable:$true] %s1235
          %s1237 = sshll.u32 %s1224, 4
          %s1238 = int_to_ptr.vmem [resolvable:$true] %s1237
          %1243 = dma.hbm_to_vmem [thread:$0]  %s1236, 8192, %s1238, %s1221, 512, 512, 32
        $region112: #{forward.1} parent=51 // pred_fallthru
          _
        // Predicated region
        $region113: #{forward.1} parent=51 // pred_check
          %p1244 = pneg %p747
        $region114: #{forward.1} parent=51 // pred_check_branch
          %1246 = sbr.rel (%p1244) target = $region116
        $region115: #{forward.1} parent=51 // pred_region
          %s1247 = sand.u32 %s45, 1
          %s1248 = scalar_lea.sflag [#allocation6], %s1247
          %s1249 = sand.u32 %s737, 1
          %s1250 = smul.addr %s1249, 512
          %s1251 = scalar_lea.vmem [#allocation27], %s1250
          %s1252 = ssub.s32 %s45, 4
          %p1253 = scmp.gt.s32.totalorder %s1252, 0
          %s1254 = scalar_select %p1253, %s1252, 0
          %p1255 = scmp.lt.s32.totalorder %s1254, 3
          %s1256 = scalar_select %p1255, %s1254, 3
          %1258 = vsyncadd %s1248, 0
          %s1259 = smul.addr %s1256, 128
          %s1260 = smul.addr %s1259, 4
          %s1261 = scalar_lea.hbm %s23, %s1260
          %s1262 = sshll.u32 %s1261, 4
          %s1263 = int_to_ptr.hbm [resolvable:$true] %s1262
          %s1264 = sshll.u32 %s1251, 4
          %s1265 = int_to_ptr.vmem [resolvable:$true] %s1264
          %1270 = dma.hbm_to_vmem [thread:$0]  %s1263, 8192, %s1265, %s1248, 64, 64, 4
        $region116: #{forward.1} parent=51 // pred_fallthru
          _
      $region52: #{forward.1} parent=5 // pred_fallthru
        _
      %p1271 = scmp.le.s32.totalorder 1, %s45
      %p1272 = scmp.lt.s32.totalorder %s45, 10
      %p1273 = pnand %p1271, %p1272
      %p1274 = pneg %p1273
      // Predicated region
      $region117: #{forward.1} parent=5 // pred_check
        _
      $region118: #{forward.1} parent=5 // pred_check_branch
        %1276 = sbr.rel (%p1273) target = $region120
      $region119: #{forward.1} parent=5 // pred_region
        %s1277 = ssub.s32 %s45, 1
        // Predicated region
        $region121: #{forward.1} parent=119 // pred_check
          %p1278 = pneg %p192
        $region122: #{forward.1} parent=119 // pred_check_branch
          %1280 = sbr.rel (%p1278) target = $region124
        $region123: #{forward.1} parent=119 // pred_region
          %1282 = dma.done [#allocation6], 9216
        $region124: #{forward.1} parent=119 // pred_fallthru
          _
        %s1283 = sand.u32 %s50, 1
        %s1284 = scalar_lea.sflag [#allocation9], %s1283
        %s1285 = sand.u32 %s209, 1
        %s1286 = scalar_lea.vmem [#allocation8], %s1285
        // Predicated region
        $region125: #{forward.1} parent=119 // pred_check
          %p1287 = pneg %p222
        $region126: #{forward.1} parent=119 // pred_check_branch
          %1289 = sbr.rel (%p1287) target = $region128
        $region127: #{forward.1} parent=119 // pred_region
          %1291 = dma.done %s1284, 16
        $region128: #{forward.1} parent=119 // pred_fallthru
          _
        %s1292 = sand.u32 %s50, 1
        %s1293 = scalar_lea.sflag [#allocation9], %s1292
        %s1294 = sand.u32 %s239, 1
        %s1295 = smul.addr %s1294, 576
        %s1296 = scalar_lea.vmem [#allocation10], %s1295
        // Predicated region
        $region129: #{forward.1} parent=119 // pred_check
          %p1297 = pneg %p252
        $region130: #{forward.1} parent=119 // pred_check_branch
          %1299 = sbr.rel (%p1297) target = $region132
        $region131: #{forward.1} parent=119 // pred_region
          %1301 = dma.done %s1293, 9216
        $region132: #{forward.1} parent=119 // pred_fallthru
          _
        %s1302 = sand.u32 %s50, 1
        %s1303 = scalar_lea.sflag [#allocation12], %s1302
        %s1304 = sand.u32 %s269, 1
        %s1305 = smul.addr %s1304, 192
        %s1306 = scalar_lea.vmem [#allocation11], %s1305
        // Predicated region
        $region133: #{forward.1} parent=119 // pred_check
          %p1307 = pneg %p282
        $region134: #{forward.1} parent=119 // pred_check_branch
          %1309 = sbr.rel (%p1307) target = $region136
        $region135: #{forward.1} parent=119 // pred_region
          %1311 = dma.done %s1303, 3072
        $region136: #{forward.1} parent=119 // pred_fallthru
          _
        %s1312 = sand.u32 %s50, 1
        %s1313 = scalar_lea.sflag [#allocation12], %s1312
        %s1314 = sand.u32 %s299, 1
        %s1315 = scalar_lea.vmem [#allocation13], %s1314
        // Predicated region
        $region137: #{forward.1} parent=119 // pred_check
          %p1316 = pneg %p312
        $region138: #{forward.1} parent=119 // pred_check_branch
          %1318 = sbr.rel (%p1316) target = $region140
        $region139: #{forward.1} parent=119 // pred_region
          %1320 = dma.done %s1313, 16
        $region140: #{forward.1} parent=119 // pred_fallthru
          _
        %s1321 = sand.u32 %s50, 1
        %s1322 = scalar_lea.sflag [#allocation15], %s1321
        %s1323 = sand.u32 %s329, 1
        %s1324 = smul.addr %s1323, 512
        %s1325 = scalar_lea.vmem [#allocation14], %s1324
        // Predicated region
        $region141: #{forward.1} parent=119 // pred_check
          %p1326 = pneg %p342
        $region142: #{forward.1} parent=119 // pred_check_branch
          %1328 = sbr.rel (%p1326) target = $region144
        $region143: #{forward.1} parent=119 // pred_region
          %1330 = dma.done %s1322, 8192
        $region144: #{forward.1} parent=119 // pred_fallthru
          _
        %s1331 = sand.u32 %s50, 1
        %s1332 = scalar_lea.sflag [#allocation15], %s1331
        %s1333 = sand.u32 %s359, 1
        %s1334 = smul.addr %s1333, 512
        %s1335 = scalar_lea.vmem [#allocation16], %s1334
        // Predicated region
        $region145: #{forward.1} parent=119 // pred_check
          %p1336 = pneg %p372
        $region146: #{forward.1} parent=119 // pred_check_branch
          %1338 = sbr.rel (%p1336) target = $region148
        $region147: #{forward.1} parent=119 // pred_region
          %1340 = dma.done %s1332, 8192
        $region148: #{forward.1} parent=119 // pred_fallthru
          _
        // Predicated region
        $region149: #{forward.1} parent=119 // pred_check
          %p1341 = pneg %p393
        $region150: #{forward.1} parent=119 // pred_check_branch
          %1343 = sbr.rel (%p1341) target = $region152
        $region151: #{forward.1} parent=119 // pred_region
          %1345 = dma.done [#allocation18], 16
        $region152: #{forward.1} parent=119 // pred_fallthru
          _
        %s1346 = sand.u32 %s50, 1
        %s1347 = scalar_lea.sflag [#allocation6], %s1346
        %s1348 = sand.u32 %s416, 1
        %s1349 = scalar_lea.vmem [#allocation19], %s1348
        // Predicated region
        $region153: #{forward.1} parent=119 // pred_check
          %p1350 = pneg %p429
        $region154: #{forward.1} parent=119 // pred_check_branch
          %1352 = sbr.rel (%p1350) target = $region156
        $region155: #{forward.1} parent=119 // pred_region
          %1354 = dma.done %s1347, 16
        $region156: #{forward.1} parent=119 // pred_fallthru
          _
        %s1355 = sand.u32 %s50, 1
        %s1356 = scalar_lea.sflag [#allocation9], %s1355
        %s1357 = sand.u32 %s452, 1
        %s1358 = smul.addr %s1357, 576
        %s1359 = scalar_lea.vmem [#allocation20], %s1358
        // Predicated region
        $region157: #{forward.1} parent=119 // pred_check
          %p1360 = pneg %p465
        $region158: #{forward.1} parent=119 // pred_check_branch
          %1362 = sbr.rel (%p1360) target = $region160
        $region159: #{forward.1} parent=119 // pred_region
          %1364 = dma.done %s1356, 9216
        $region160: #{forward.1} parent=119 // pred_fallthru
          _
        %s1365 = sand.u32 %s50, 1
        %s1366 = scalar_lea.sflag [#allocation12], %s1365
        %s1367 = sand.u32 %s488, 1
        %s1368 = smul.addr %s1367, 192
        %s1369 = scalar_lea.vmem [#allocation21], %s1368
        // Predicated region
        $region161: #{forward.1} parent=119 // pred_check
          %p1370 = pneg %p501
        $region162: #{forward.1} parent=119 // pred_check_branch
          %1372 = sbr.rel (%p1370) target = $region164
        $region163: #{forward.1} parent=119 // pred_region
          %1374 = dma.done %s1366, 3072
        $region164: #{forward.1} parent=119 // pred_fallthru
          _
        %s1375 = sand.u32 %s50, 1
        %s1376 = scalar_lea.sflag [#allocation15], %s1375
        %s1377 = sand.u32 %s524, 1
        %s1378 = scalar_lea.vmem [#allocation22], %s1377
        // Predicated region
        $region165: #{forward.1} parent=119 // pred_check
          %p1379 = pneg %p537
        $region166: #{forward.1} parent=119 // pred_check_branch
          %1381 = sbr.rel (%p1379) target = $region168
        $region167: #{forward.1} parent=119 // pred_region
          %1383 = dma.done %s1376, 16
        $region168: #{forward.1} parent=119 // pred_fallthru
          _
        %s1384 = sand.u32 %s50, 1
        %s1385 = scalar_lea.sflag [#allocation6], %s1384
        %s1386 = sand.u32 %s560, 1
        %s1387 = smul.addr %s1386, 192
        %s1388 = scalar_lea.vmem [#allocation23], %s1387
        // Predicated region
        $region169: #{forward.1} parent=119 // pred_check
          %p1389 = pneg %p573
        $region170: #{forward.1} parent=119 // pred_check_branch
          %1391 = sbr.rel (%p1389) target = $region172
        $region171: #{forward.1} parent=119 // pred_region
          %1393 = dma.done %s1385, 3072
        $region172: #{forward.1} parent=119 // pred_fallthru
          _
        %s1394 = sand.u32 %s50, 1
        %s1395 = scalar_lea.sflag [#allocation9], %s1394
        %s1396 = sand.u32 %s632, 1
        %s1397 = smul.addr %s1396, 192
        %s1398 = scalar_lea.vmem [#allocation24], %s1397
        // Predicated region
        $region173: #{forward.1} parent=119 // pred_check
          %p1399 = pneg %p645
        $region174: #{forward.1} parent=119 // pred_check_branch
          %1401 = sbr.rel (%p1399) target = $region176
        $region175: #{forward.1} parent=119 // pred_region
          %1403 = dma.done %s1395, 3072
        $region176: #{forward.1} parent=119 // pred_fallthru
          _
        %s1404 = sand.u32 %s50, 1
        %s1405 = scalar_lea.sflag [#allocation12], %s1404
        %s1406 = sand.u32 %s668, 1
        %s1407 = scalar_lea.vmem [#allocation25], %s1406
        // Predicated region
        $region177: #{forward.1} parent=119 // pred_check
          %p1408 = pneg %p681
        $region178: #{forward.1} parent=119 // pred_check_branch
          %1410 = sbr.rel (%p1408) target = $region180
        $region179: #{forward.1} parent=119 // pred_region
          %1412 = dma.done %s1405, 16
        $region180: #{forward.1} parent=119 // pred_fallthru
          _
        %s1413 = sand.u32 %s50, 1
        %s1414 = scalar_lea.sflag [#allocation15], %s1413
        %s1415 = sand.u32 %s704, 1
        %s1416 = smul.addr %s1415, 512
        %s1417 = scalar_lea.vmem [#allocation26], %s1416
        // Predicated region
        $region181: #{forward.1} parent=119 // pred_check
          %p1418 = pneg %p717
        $region182: #{forward.1} parent=119 // pred_check_branch
          %1420 = sbr.rel (%p1418) target = $region184
        $region183: #{forward.1} parent=119 // pred_region
          %1422 = dma.done %s1414, 8192
        $region184: #{forward.1} parent=119 // pred_fallthru
          _
        %s1423 = sand.u32 %s50, 1
        %s1424 = scalar_lea.sflag [#allocation6], %s1423
        %s1425 = sand.u32 %s740, 1
        %s1426 = smul.addr %s1425, 512
        %s1427 = scalar_lea.vmem [#allocation27], %s1426
        // Predicated region
        $region185: #{forward.1} parent=119 // pred_check
          %p1428 = pneg %p753
        $region186: #{forward.1} parent=119 // pred_check_branch
          %1430 = sbr.rel (%p1428) target = $region188
        $region187: #{forward.1} parent=119 // pred_region
          %1432 = dma.done %s1424, 8192
        $region188: #{forward.1} parent=119 // pred_fallthru
          _
        // Predicated region
        $region189: #{forward.1} parent=119 // pred_check
          %p1433 = pneg %p774
        $region190: #{forward.1} parent=119 // pred_check_branch
          %1435 = sbr.rel (%p1433) target = $region192
        $region191: #{forward.1} parent=119 // pred_region
          %1437 = dma.done [#allocation9], 16
        $region192: #{forward.1} parent=119 // pred_fallthru
          _
        %p1438 = pneg %p66
        %p1439 = pneg %p63
        %p1440 = pneg %p87
        %p1441 = pneg %p84
        %p1442 = pneg %p108
        %p1443 = pneg %p105
        %p1444 = pneg %p129
        %p1445 = pneg %p126
        %p1446 = pneg %p150
        %p1447 = pneg %p147
        %p1448 = pneg %p171
        %p1449 = pneg %p168
        %p1450 = pneg %p192
        %p1451 = pneg %p189
        %s1452 = sand.u32 %s50, 1
        %s1453 = scalar_lea.sflag [#allocation9], %s1452
        %s1454 = sand.u32 %s209, 1
        %s1455 = scalar_lea.vmem [#allocation8], %s1454
        %p1456 = pneg %p222
        %p1457 = pneg %p219
        %s1458 = sand.u32 %s50, 1
        %s1459 = scalar_lea.sflag [#allocation9], %s1458
        %s1460 = sand.u32 %s239, 1
        %s1461 = smul.addr %s1460, 576
        %s1462 = scalar_lea.vmem [#allocation10], %s1461
        %p1463 = pneg %p252
        %p1464 = pneg %p249
        %s1465 = sand.u32 %s50, 1
        %s1466 = scalar_lea.sflag [#allocation12], %s1465
        %s1467 = sand.u32 %s269, 1
        %s1468 = smul.addr %s1467, 192
        %s1469 = scalar_lea.vmem [#allocation11], %s1468
        %p1470 = pneg %p282
        %p1471 = pneg %p279
        %s1472 = sand.u32 %s50, 1
        %s1473 = scalar_lea.sflag [#allocation12], %s1472
        %s1474 = sand.u32 %s299, 1
        %s1475 = scalar_lea.vmem [#allocation13], %s1474
        %p1476 = pneg %p312
        %p1477 = pneg %p309
        %s1478 = sand.u32 %s50, 1
        %s1479 = scalar_lea.sflag [#allocation15], %s1478
        %s1480 = sand.u32 %s329, 1
        %s1481 = smul.addr %s1480, 512
        %s1482 = scalar_lea.vmem [#allocation14], %s1481
        %p1483 = pneg %p342
        %p1484 = pneg %p339
        %s1485 = sand.u32 %s50, 1
        %s1486 = scalar_lea.sflag [#allocation15], %s1485
        %s1487 = sand.u32 %s359, 1
        %s1488 = smul.addr %s1487, 512
        %s1489 = scalar_lea.vmem [#allocation16], %s1488
        %p1490 = pneg %p372
        %p1491 = pneg %p369
        %p1492 = pneg %p393
        %p1493 = pneg %p390
        %s1494 = sand.u32 %s50, 1
        %s1495 = scalar_lea.sflag [#allocation6], %s1494
        %s1496 = sand.u32 %s416, 1
        %s1497 = scalar_lea.vmem [#allocation19], %s1496
        %p1498 = pneg %p429
        %p1499 = pneg %p426
        %s1500 = sand.u32 %s50, 1
        %s1501 = scalar_lea.sflag [#allocation9], %s1500
        %s1502 = sand.u32 %s452, 1
        %s1503 = smul.addr %s1502, 576
        %s1504 = scalar_lea.vmem [#allocation20], %s1503
        %p1505 = pneg %p465
        %p1506 = pneg %p462
        %s1507 = sand.u32 %s50, 1
        %s1508 = scalar_lea.sflag [#allocation12], %s1507
        %s1509 = sand.u32 %s488, 1
        %s1510 = smul.addr %s1509, 192
        %s1511 = scalar_lea.vmem [#allocation21], %s1510
        %p1512 = pneg %p501
        %p1513 = pneg %p498
        %s1514 = sand.u32 %s50, 1
        %s1515 = scalar_lea.sflag [#allocation15], %s1514
        %s1516 = sand.u32 %s524, 1
        %s1517 = scalar_lea.vmem [#allocation22], %s1516
        %p1518 = pneg %p537
        %p1519 = pneg %p534
        %s1520 = sand.u32 %s50, 1
        %s1521 = scalar_lea.sflag [#allocation6], %s1520
        %s1522 = sand.u32 %s560, 1
        %s1523 = smul.addr %s1522, 192
        %s1524 = scalar_lea.vmem [#allocation23], %s1523
        %p1525 = pneg %p573
        %p1526 = pneg %p570
        %s1527 = ssub.s32 %s50, 4
        %p1528 = scmp.gt.s32.totalorder %s1527, 0
        %s1529 = scalar_select %p1528, %s1527, 0
        %p1530 = scmp.lt.s32.totalorder %s1529, 3
        %s1531 = scalar_select %p1530, %s1529, 3
        %p1532 = scmp.lt.s32.totalorder %s1531, 3
        %s1533 = scalar_select %p1532, %s1531, 3
        %s1534 = smul.addr %s1533, 96
        %s1535 = smul.addr %s1534, 4
        %s1536 = scalar_lea.vmem %s19, %s1535
        %p1537 = pneg %p609
        %p1538 = pneg %p606
        %s1539 = sand.u32 %s50, 1
        %s1540 = scalar_lea.sflag [#allocation9], %s1539
        %s1541 = sand.u32 %s632, 1
        %s1542 = smul.addr %s1541, 192
        %s1543 = scalar_lea.vmem [#allocation24], %s1542
        %p1544 = pneg %p645
        %p1545 = pneg %p642
        %s1546 = sand.u32 %s50, 1
        %s1547 = scalar_lea.sflag [#allocation12], %s1546
        %s1548 = sand.u32 %s668, 1
        %s1549 = scalar_lea.vmem [#allocation25], %s1548
        %p1550 = pneg %p681
        %p1551 = pneg %p678
        %s1552 = sand.u32 %s50, 1
        %s1553 = scalar_lea.sflag [#allocation15], %s1552
        %s1554 = sand.u32 %s704, 1
        %s1555 = smul.addr %s1554, 512
        %s1556 = scalar_lea.vmem [#allocation26], %s1555
        %p1557 = pneg %p717
        %p1558 = pneg %p714
        %s1559 = sand.u32 %s50, 1
        %s1560 = scalar_lea.sflag [#allocation6], %s1559
        %s1561 = sand.u32 %s740, 1
        %s1562 = smul.addr %s1561, 512
        %s1563 = scalar_lea.vmem [#allocation27], %s1562
        %p1564 = pneg %p753
        %p1565 = pneg %p750
        %p1566 = pneg %p774
        %p1567 = pneg %p771
        %p1568 = pneg %p795
        %p1569 = pneg %p792
        %p1570 = pneg %p816
        %p1571 = pneg %p813
        %p1572 = scmp.lt.s32.totalorder %s50, 3
        %s1573 = scalar_select %p1572, %s50, 3
        %p1574 = scmp.lt.s32.totalorder %s50, 3
        %s1575 = scalar_select %p1574, %s50, 3
        %p1576 = scmp.lt.s32.totalorder %s50, 3
        %s1577 = scalar_select %p1576, %s50, 3
        %p1578 = scmp.lt.s32.totalorder %s50, 3
        %s1579 = scalar_select %p1578, %s50, 3
        %p1580 = scmp.lt.s32.totalorder %s50, 3
        %s1581 = scalar_select %p1580, %s50, 3
        %p1582 = scmp.lt.s32.totalorder %s50, 3
        %s1583 = scalar_select %p1582, %s50, 3
        %s1584 = ssub.s32 %s50, 4
        %p1585 = scmp.gt.s32.totalorder %s1584, 0
        %s1586 = scalar_select %p1585, %s1584, 0
        %p1587 = scmp.lt.s32.totalorder %s1586, 3
        %s1588 = scalar_select %p1587, %s1586, 3
        %s1589 = ssub.s32 %s50, 4
        %p1590 = scmp.gt.s32.totalorder %s1589, 0
        %s1591 = scalar_select %p1590, %s1589, 0
        %p1592 = scmp.lt.s32.totalorder %s1591, 3
        %s1593 = scalar_select %p1592, %s1591, 3
        %s1594 = ssub.s32 %s50, 4
        %p1595 = scmp.gt.s32.totalorder %s1594, 0
        %s1596 = scalar_select %p1595, %s1594, 0
        %p1597 = scmp.lt.s32.totalorder %s1596, 3
        %s1598 = scalar_select %p1597, %s1596, 3
        %s1599 = ssub.s32 %s50, 4
        %p1600 = scmp.gt.s32.totalorder %s1599, 0
        %s1601 = scalar_select %p1600, %s1599, 0
        %p1602 = scmp.lt.s32.totalorder %s1601, 3
        %s1603 = scalar_select %p1602, %s1601, 3
        %s1604 = ssub.s32 %s50, 4
        %p1605 = scmp.gt.s32.totalorder %s1604, 0
        %s1606 = scalar_select %p1605, %s1604, 0
        %p1607 = scmp.lt.s32.totalorder %s1606, 3
        %s1608 = scalar_select %p1607, %s1606, 3
        %s1609 = ssub.s32 %s50, 4
        %p1610 = scmp.gt.s32.totalorder %s1609, 0
        %s1611 = scalar_select %p1610, %s1609, 0
        %p1612 = scmp.lt.s32.totalorder %s1611, 3
        %s1613 = scalar_select %p1612, %s1611, 3
        %p1614 = scmp.lt.s32.totalorder %s1613, 3
        %s1615 = scalar_select %p1614, %s1613, 3
        %s1616 = smul.addr %s1615, 96
        %s1617 = smul.addr %s1616, 4
        %s1618 = scalar_lea.vmem %s19, %s1617
        %s1619 = ssub.s32 %s50, 4
        %p1620 = scmp.gt.s32.totalorder %s1619, 0
        %s1621 = scalar_select %p1620, %s1619, 0
        %p1622 = scmp.lt.s32.totalorder %s1621, 3
        %s1623 = scalar_select %p1622, %s1621, 3
        %s1624 = ssub.s32 %s50, 4
        %p1625 = scmp.gt.s32.totalorder %s1624, 0
        %s1626 = scalar_select %p1625, %s1624, 0
        %p1627 = scmp.lt.s32.totalorder %s1626, 3
        %s1628 = scalar_select %p1627, %s1626, 3
        %s1629 = ssub.s32 %s50, 4
        %p1630 = scmp.gt.s32.totalorder %s1629, 0
        %s1631 = scalar_select %p1630, %s1629, 0
        %p1632 = scmp.lt.s32.totalorder %s1631, 3
        %s1633 = scalar_select %p1632, %s1631, 3
        %s1634 = ssub.s32 %s50, 4
        %p1635 = scmp.gt.s32.totalorder %s1634, 0
        %s1636 = scalar_select %p1635, %s1634, 0
        %p1637 = scmp.lt.s32.totalorder %s1636, 3
        %s1638 = scalar_select %p1637, %s1636, 3
        %s1639 = ssub.s32 %s50, 4
        %p1640 = scmp.gt.s32.totalorder %s1639, 0
        %s1641 = scalar_select %p1640, %s1639, 0
        %p1642 = scmp.lt.s32.totalorder %s1641, 3
        %s1643 = scalar_select %p1642, %s1641, 3
        %p1645 = scmp.eq.s32.totalorder %s50, 0
        // Predicated region
        $region193: #{forward.1} parent=119 // pred_check
          %p1646 = pneg %p1645
        $region194: #{forward.1} parent=119 // pred_check_branch
          %1648 = sbr.rel (%p1646) target = $region196
        $region195: #{forward.1} parent=119 // pred_region
          %v1649 = vld [vmem:[%s0] sm:$0xff]
          %v1650 = vld [vmem:[%s0 + $0x8] sm:$0xff]
          %1651 = vst [vmem:[#allocation2] sm:$0xff] %v1649
          %1652 = vst [vmem:[#allocation2 + $0x8] sm:$0xff] %v1650
          %v1653 = vld [vmem:[%s1] sm:$0xff]
          %v1654 = vld [vmem:[%s1 + $0x8] sm:$0xff]
          %1655 = vst [vmem:[#allocation3] sm:$0xff] %v1653
          %1656 = vst [vmem:[#allocation3 + $0x8] sm:$0xff] %v1654
        $region196: #{forward.1} parent=119 // pred_fallthru
          _
        %p1657 = scmp.lt.s32.totalorder %s50, 4
        // Predicated region
        $region197: #{forward.1} parent=119 // pred_check
          %p1658 = pneg %p1657
        $region198: #{forward.1} parent=119 // pred_check_branch
          %1660 = sbr.rel (%p1658) target = $region200
        $region199: #{forward.1} parent=119 // pred_region
          %v1661 = vld [vmem:[#allocation2] sm:$0xff]
          %v1662 = vld [vmem:[#allocation2 + $0x8] sm:$0xff]
          %v1663 = vld [vmem:[%s1286] sm:$0x1]
          %v1664 = vmul.f32 %v1661, %v1661
          %v1665 = vmul.f32 %v1662, %v1662
          %1666 = vadd.xlane.f32.xlu0 %v1664
          %v1667 = vpop.xlane.xlu0 %1666
          %1668 = vadd.xlane.f32.xlu0 %v1665
          %v1669 = vpop.xlane.xlu0 %1668
          %v1670 = vrcp.pop 128.0
          %v1671 = vmul.f32 128.0, %v1670
          %v1672 = vsub.f32 1.0, %v1671
          %v1673 = vmul.f32 %v1670, %v1672
          %v1674 = vadd.f32 %v1670, %v1673
          %vm1675 = vweird.f32 %v1670
          %v1676 = vsel %vm1675, %v1670, %v1674
          %v1677 = vmul.f32 %v1667, %v1676
          %v1678 = vmul.f32 %v1669, %v1676
          %v1679 = vadd.f32 %v1677, 1e-06
          %v1680 = vadd.f32 %v1678, 1e-06
          %v1681 = vrsqrt.pop %v1679
          %v1682 = vmul.f32 %v1681, %v1679
          %v1683 = vmul.f32 %v1682, %v1681
          %v1684 = vmul.f32 0.5, %v1683
          %v1685 = vsub.f32 1.5, %v1684
          %v1686 = vmul.f32 %v1681, %v1685
          %vm1687 = vweird.f32 %v1679
          %vm1688 = vweird.f32 %v1681
          %vm1689 = vmor %vm1687, %vm1688
          %v1690 = vsel %vm1689, %v1681, %v1686
          %v1691 = vrsqrt.pop %v1680
          %v1692 = vmul.f32 %v1691, %v1680
          %v1693 = vmul.f32 %v1692, %v1691
          %v1694 = vmul.f32 0.5, %v1693
          %v1695 = vsub.f32 1.5, %v1694
          %v1696 = vmul.f32 %v1691, %v1695
          %vm1697 = vweird.f32 %v1680
          %vm1698 = vweird.f32 %v1691
          %vm1699 = vmor %vm1697, %vm1698
          %v1700 = vsel %vm1699, %v1691, %v1696
          %v1701 = vmul.f32 %v1661, %v1690
          %v1702 = vmul.f32 %v1662, %v1700
          %v1704 = vperm.slane %v1663, 0
          %v1706 = vmul.f32 %v1701, %v1704
          %v1707 = vmul.f32 %v1702, %v1704
          %v1708 = vld [vmem:[%s1296] sm:$0xff]
          %v1709 = vld [vmem:[%s1296 + $0x8] sm:$0xff]
          %v1710 = vld [vmem:[%s1296 + $0x10] sm:$0xff]
          %v1711 = vld [vmem:[%s1296 + $0x18] sm:$0xff]
          %v1712 = vld [vmem:[%s1296 + $0x20] sm:$0xf]
          %v1713 = vld [vmem:[%s1296 + $0x24] sm:$0xff]
          %v1714 = vld [vmem:[%s1296 + $0x2c] sm:$0xff]
          %v1715 = vld [vmem:[%s1296 + $0x34] sm:$0xff]
          %v1716 = vld [vmem:[%s1296 + $0x3c] sm:$0xff]
          %v1717 = vld [vmem:[%s1296 + $0x44] sm:$0xf]
          %v1718 = vld [vmem:[%s1296 + $0x48] sm:$0xff]
          %v1719 = vld [vmem:[%s1296 + $0x50] sm:$0xff]
          %v1720 = vld [vmem:[%s1296 + $0x58] sm:$0xff]
          %v1721 = vld [vmem:[%s1296 + $0x60] sm:$0xff]
          %v1722 = vld [vmem:[%s1296 + $0x68] sm:$0xf]
          %v1723 = vld [vmem:[%s1296 + $0x6c] sm:$0xff]
          %v1724 = vld [vmem:[%s1296 + $0x74] sm:$0xff]
          %v1725 = vld [vmem:[%s1296 + $0x7c] sm:$0xff]
          %v1726 = vld [vmem:[%s1296 + $0x84] sm:$0xff]
          %v1727 = vld [vmem:[%s1296 + $0x8c] sm:$0xf]
          %v1728 = vld [vmem:[%s1296 + $0x90] sm:$0xff]
          %v1729 = vld [vmem:[%s1296 + $0x98] sm:$0xff]
          %v1730 = vld [vmem:[%s1296 + $0xa0] sm:$0xff]
          %v1731 = vld [vmem:[%s1296 + $0xa8] sm:$0xff]
          %v1732 = vld [vmem:[%s1296 + $0xb0] sm:$0xf]
          %v1733 = vld [vmem:[%s1296 + $0xb4] sm:$0xff]
          %v1734 = vld [vmem:[%s1296 + $0xbc] sm:$0xff]
          %v1735 = vld [vmem:[%s1296 + $0xc4] sm:$0xff]
          %v1736 = vld [vmem:[%s1296 + $0xcc] sm:$0xff]
          %v1737 = vld [vmem:[%s1296 + $0xd4] sm:$0xf]
          %v1738 = vld [vmem:[%s1296 + $0xd8] sm:$0xff]
          %v1739 = vld [vmem:[%s1296 + $0xe0] sm:$0xff]
          %v1740 = vld [vmem:[%s1296 + $0xe8] sm:$0xff]
          %v1741 = vld [vmem:[%s1296 + $0xf0] sm:$0xff]
          %v1742 = vld [vmem:[%s1296 + $0xf8] sm:$0xf]
          %v1743 = vld [vmem:[%s1296 + $0xfc] sm:$0xff]
          %v1744 = vld [vmem:[%s1296 + $0x104] sm:$0xff]
          %v1745 = vld [vmem:[%s1296 + $0x10c] sm:$0xff]
          %v1746 = vld [vmem:[%s1296 + $0x114] sm:$0xff]
          %v1747 = vld [vmem:[%s1296 + $0x11c] sm:$0xf]
          %v1748 = vld [vmem:[%s1296 + $0x120] sm:$0xff]
          %v1749 = vld [vmem:[%s1296 + $0x128] sm:$0xff]
          %v1750 = vld [vmem:[%s1296 + $0x130] sm:$0xff]
          %v1751 = vld [vmem:[%s1296 + $0x138] sm:$0xff]
          %v1752 = vld [vmem:[%s1296 + $0x140] sm:$0xf]
          %v1753 = vld [vmem:[%s1296 + $0x144] sm:$0xff]
          %v1754 = vld [vmem:[%s1296 + $0x14c] sm:$0xff]
          %v1755 = vld [vmem:[%s1296 + $0x154] sm:$0xff]
          %v1756 = vld [vmem:[%s1296 + $0x15c] sm:$0xff]
          %v1757 = vld [vmem:[%s1296 + $0x164] sm:$0xf]
          %v1758 = vld [vmem:[%s1296 + $0x168] sm:$0xff]
          %v1759 = vld [vmem:[%s1296 + $0x170] sm:$0xff]
          %v1760 = vld [vmem:[%s1296 + $0x178] sm:$0xff]
          %v1761 = vld [vmem:[%s1296 + $0x180] sm:$0xff]
          %v1762 = vld [vmem:[%s1296 + $0x188] sm:$0xf]
          %v1763 = vld [vmem:[%s1296 + $0x18c] sm:$0xff]
          %v1764 = vld [vmem:[%s1296 + $0x194] sm:$0xff]
          %v1765 = vld [vmem:[%s1296 + $0x19c] sm:$0xff]
          %v1766 = vld [vmem:[%s1296 + $0x1a4] sm:$0xff]
          %v1767 = vld [vmem:[%s1296 + $0x1ac] sm:$0xf]
          %v1768 = vld [vmem:[%s1296 + $0x1b0] sm:$0xff]
          %v1769 = vld [vmem:[%s1296 + $0x1b8] sm:$0xff]
          %v1770 = vld [vmem:[%s1296 + $0x1c0] sm:$0xff]
          %v1771 = vld [vmem:[%s1296 + $0x1c8] sm:$0xff]
          %v1772 = vld [vmem:[%s1296 + $0x1d0] sm:$0xf]
          %v1773 = vld [vmem:[%s1296 + $0x1d4] sm:$0xff]
          %v1774 = vld [vmem:[%s1296 + $0x1dc] sm:$0xff]
          %v1775 = vld [vmem:[%s1296 + $0x1e4] sm:$0xff]
          %v1776 = vld [vmem:[%s1296 + $0x1ec] sm:$0xff]
          %v1777 = vld [vmem:[%s1296 + $0x1f4] sm:$0xf]
          %v1778 = vld [vmem:[%s1296 + $0x1f8] sm:$0xff]
          %v1779 = vld [vmem:[%s1296 + $0x200] sm:$0xff]
          %v1780 = vld [vmem:[%s1296 + $0x208] sm:$0xff]
          %v1781 = vld [vmem:[%s1296 + $0x210] sm:$0xff]
          %v1782 = vld [vmem:[%s1296 + $0x218] sm:$0xf]
          %v1783 = vld [vmem:[%s1296 + $0x21c] sm:$0xff]
          %v1784 = vld [vmem:[%s1296 + $0x224] sm:$0xff]
          %v1785 = vld [vmem:[%s1296 + $0x22c] sm:$0xff]
          %v1786 = vld [vmem:[%s1296 + $0x234] sm:$0xff]
          %v1787 = vld [vmem:[%s1296 + $0x23c] sm:$0xf]
          %v1788 = vpack.c.bf16 %v1707, %v1706
          %v1869 = vunpack.c.l.b16 %v1708
          %v1870 = vunpack.c.h.b16 %v1708
          %v1871 = vunpack.c.l.b16 %v1709
          %v1872 = vunpack.c.h.b16 %v1709
          %v1873 = vunpack.c.l.b16 %v1710
          %v1874 = vunpack.c.h.b16 %v1710
          %v1875 = vunpack.c.l.b16 %v1711
          %v1876 = vunpack.c.h.b16 %v1711
          %v1877 = vunpack.c.l.b16 %v1712
          %v1878 = vunpack.c.l.b16 %v1713
          %v1879 = vunpack.c.h.b16 %v1713
          %v1880 = vunpack.c.l.b16 %v1714
          %v1881 = vunpack.c.h.b16 %v1714
          %v1882 = vunpack.c.l.b16 %v1715
          %v1883 = vunpack.c.h.b16 %v1715
          %v1884 = vunpack.c.l.b16 %v1716
          %v1885 = vunpack.c.h.b16 %v1716
          %v1886 = vunpack.c.l.b16 %v1717
          %v1887 = vunpack.c.l.b16 %v1718
          %v1888 = vunpack.c.h.b16 %v1718
          %v1889 = vunpack.c.l.b16 %v1719
          %v1890 = vunpack.c.h.b16 %v1719
          %v1891 = vunpack.c.l.b16 %v1720
          %v1892 = vunpack.c.h.b16 %v1720
          %v1893 = vunpack.c.l.b16 %v1721
          %v1894 = vunpack.c.h.b16 %v1721
          %v1895 = vunpack.c.l.b16 %v1722
          %v1896 = vunpack.c.l.b16 %v1723
          %v1897 = vunpack.c.h.b16 %v1723
          %v1898 = vunpack.c.l.b16 %v1724
          %v1899 = vunpack.c.h.b16 %v1724
          %v1900 = vunpack.c.l.b16 %v1725
          %v1901 = vunpack.c.h.b16 %v1725
          %v1902 = vunpack.c.l.b16 %v1726
          %v1903 = vunpack.c.h.b16 %v1726
          %v1904 = vunpack.c.l.b16 %v1727
          %v1905 = vunpack.c.l.b16 %v1728
          %v1906 = vunpack.c.h.b16 %v1728
          %v1907 = vunpack.c.l.b16 %v1729
          %v1908 = vunpack.c.h.b16 %v1729
          %v1909 = vunpack.c.l.b16 %v1730
          %v1910 = vunpack.c.h.b16 %v1730
          %v1911 = vunpack.c.l.b16 %v1731
          %v1912 = vunpack.c.h.b16 %v1731
          %v1913 = vunpack.c.l.b16 %v1732
          %v1914 = vunpack.c.l.b16 %v1733
          %v1915 = vunpack.c.h.b16 %v1733
          %v1916 = vunpack.c.l.b16 %v1734
          %v1917 = vunpack.c.h.b16 %v1734
          %v1918 = vunpack.c.l.b16 %v1735
          %v1919 = vunpack.c.h.b16 %v1735
          %v1920 = vunpack.c.l.b16 %v1736
          %v1921 = vunpack.c.h.b16 %v1736
          %v1922 = vunpack.c.l.b16 %v1737
          %v1923 = vunpack.c.l.b16 %v1738
          %v1924 = vunpack.c.h.b16 %v1738
          %v1925 = vunpack.c.l.b16 %v1739
          %v1926 = vunpack.c.h.b16 %v1739
          %v1927 = vunpack.c.l.b16 %v1740
          %v1928 = vunpack.c.h.b16 %v1740
          %v1929 = vunpack.c.l.b16 %v1741
          %v1930 = vunpack.c.h.b16 %v1741
          %v1931 = vunpack.c.l.b16 %v1742
          %v1932 = vunpack.c.l.b16 %v1743
          %v1933 = vunpack.c.h.b16 %v1743
          %v1934 = vunpack.c.l.b16 %v1744
          %v1935 = vunpack.c.h.b16 %v1744
          %v1936 = vunpack.c.l.b16 %v1745
          %v1937 = vunpack.c.h.b16 %v1745
          %v1938 = vunpack.c.l.b16 %v1746
          %v1939 = vunpack.c.h.b16 %v1746
          %v1940 = vunpack.c.l.b16 %v1747
          %v1941 = vunpack.c.l.b16 %v1748
          %v1942 = vunpack.c.h.b16 %v1748
          %v1943 = vunpack.c.l.b16 %v1749
          %v1944 = vunpack.c.h.b16 %v1749
          %v1945 = vunpack.c.l.b16 %v1750
          %v1946 = vunpack.c.h.b16 %v1750
          %v1947 = vunpack.c.l.b16 %v1751
          %v1948 = vunpack.c.h.b16 %v1751
          %v1949 = vunpack.c.l.b16 %v1752
          %v1950 = vunpack.c.l.b16 %v1753
          %v1951 = vunpack.c.h.b16 %v1753
          %v1952 = vunpack.c.l.b16 %v1754
          %v1953 = vunpack.c.h.b16 %v1754
          %v1954 = vunpack.c.l.b16 %v1755
          %v1955 = vunpack.c.h.b16 %v1755
          %v1956 = vunpack.c.l.b16 %v1756
          %v1957 = vunpack.c.h.b16 %v1756
          %v1958 = vunpack.c.l.b16 %v1757
          %v1959 = vunpack.c.l.b16 %v1758
          %v1960 = vunpack.c.h.b16 %v1758
          %v1961 = vunpack.c.l.b16 %v1759
          %v1962 = vunpack.c.h.b16 %v1759
          %v1963 = vunpack.c.l.b16 %v1760
          %v1964 = vunpack.c.h.b16 %v1760
          %v1965 = vunpack.c.l.b16 %v1761
          %v1966 = vunpack.c.h.b16 %v1761
          %v1967 = vunpack.c.l.b16 %v1762
          %v1968 = vunpack.c.l.b16 %v1763
          %v1969 = vunpack.c.h.b16 %v1763
          %v1970 = vunpack.c.l.b16 %v1764
          %v1971 = vunpack.c.h.b16 %v1764
          %v1972 = vunpack.c.l.b16 %v1765
          %v1973 = vunpack.c.h.b16 %v1765
          %v1974 = vunpack.c.l.b16 %v1766
          %v1975 = vunpack.c.h.b16 %v1766
          %v1976 = vunpack.c.l.b16 %v1767
          %v1977 = vunpack.c.l.b16 %v1768
          %v1978 = vunpack.c.h.b16 %v1768
          %v1979 = vunpack.c.l.b16 %v1769
          %v1980 = vunpack.c.h.b16 %v1769
          %v1981 = vunpack.c.l.b16 %v1770
          %v1982 = vunpack.c.h.b16 %v1770
          %v1983 = vunpack.c.l.b16 %v1771
          %v1984 = vunpack.c.h.b16 %v1771
          %v1985 = vunpack.c.l.b16 %v1772
          %v1986 = vunpack.c.l.b16 %v1773
          %v1987 = vunpack.c.h.b16 %v1773
          %v1988 = vunpack.c.l.b16 %v1774
          %v1989 = vunpack.c.h.b16 %v1774
          %v1990 = vunpack.c.l.b16 %v1775
          %v1991 = vunpack.c.h.b16 %v1775
          %v1992 = vunpack.c.l.b16 %v1776
          %v1993 = vunpack.c.h.b16 %v1776
          %v1994 = vunpack.c.l.b16 %v1777
          %v1995 = vunpack.c.l.b16 %v1778
          %v1996 = vunpack.c.h.b16 %v1778
          %v1997 = vunpack.c.l.b16 %v1779
          %v1998 = vunpack.c.h.b16 %v1779
          %v1999 = vunpack.c.l.b16 %v1780
          %v2000 = vunpack.c.h.b16 %v1780
          %v2001 = vunpack.c.l.b16 %v1781
          %v2002 = vunpack.c.h.b16 %v1781
          %v2003 = vunpack.c.l.b16 %v1782
          %v2004 = vunpack.c.l.b16 %v1783
          %v2005 = vunpack.c.h.b16 %v1783
          %v2006 = vunpack.c.l.b16 %v1784
          %v2007 = vunpack.c.h.b16 %v1784
          %v2008 = vunpack.c.l.b16 %v1785
          %v2009 = vunpack.c.h.b16 %v1785
          %v2010 = vunpack.c.l.b16 %v1786
          %v2011 = vunpack.c.h.b16 %v1786
          %v2012 = vunpack.c.l.b16 %v1787
          %v2013 = vpack.c.b16 %v1878, %v1869
          %v2014 = vpack.c.b16 %v1879, %v1870
          %v2015 = vpack.c.b16 %v1880, %v1871
          %v2016 = vpack.c.b16 %v1881, %v1872
          %v2017 = vpack.c.b16 %v1882, %v1873
          %v2018 = vpack.c.b16 %v1883, %v1874
          %v2019 = vpack.c.b16 %v1884, %v1875
          %v2020 = vpack.c.b16 %v1885, %v1876
          %v2021 = vpack.c.b16 %v1886, %v1877
          %v2022 = vpack.c.b16 %v1896, %v1887
          %v2023 = vpack.c.b16 %v1897, %v1888
          %v2024 = vpack.c.b16 %v1898, %v1889
          %v2025 = vpack.c.b16 %v1899, %v1890
          %v2026 = vpack.c.b16 %v1900, %v1891
          %v2027 = vpack.c.b16 %v1901, %v1892
          %v2028 = vpack.c.b16 %v1902, %v1893
          %v2029 = vpack.c.b16 %v1903, %v1894
          %v2030 = vpack.c.b16 %v1904, %v1895
          %v2031 = vpack.c.b16 %v1914, %v1905
          %v2032 = vpack.c.b16 %v1915, %v1906
          %v2033 = vpack.c.b16 %v1916, %v1907
          %v2034 = vpack.c.b16 %v1917, %v1908
          %v2035 = vpack.c.b16 %v1918, %v1909
          %v2036 = vpack.c.b16 %v1919, %v1910
          %v2037 = vpack.c.b16 %v1920, %v1911
          %v2038 = vpack.c.b16 %v1921, %v1912
          %v2039 = vpack.c.b16 %v1922, %v1913
          %v2040 = vpack.c.b16 %v1932, %v1923
          %v2041 = vpack.c.b16 %v1933, %v1924
          %v2042 = vpack.c.b16 %v1934, %v1925
          %v2043 = vpack.c.b16 %v1935, %v1926
          %v2044 = vpack.c.b16 %v1936, %v1927
          %v2045 = vpack.c.b16 %v1937, %v1928
          %v2046 = vpack.c.b16 %v1938, %v1929
          %v2047 = vpack.c.b16 %v1939, %v1930
          %v2048 = vpack.c.b16 %v1940, %v1931
          %v2049 = vpack.c.b16 %v1950, %v1941
          %v2050 = vpack.c.b16 %v1951, %v1942
          %v2051 = vpack.c.b16 %v1952, %v1943
          %v2052 = vpack.c.b16 %v1953, %v1944
          %v2053 = vpack.c.b16 %v1954, %v1945
          %v2054 = vpack.c.b16 %v1955, %v1946
          %v2055 = vpack.c.b16 %v1956, %v1947
          %v2056 = vpack.c.b16 %v1957, %v1948
          %v2057 = vpack.c.b16 %v1958, %v1949
          %v2058 = vpack.c.b16 %v1968, %v1959
          %v2059 = vpack.c.b16 %v1969, %v1960
          %v2060 = vpack.c.b16 %v1970, %v1961
          %v2061 = vpack.c.b16 %v1971, %v1962
          %v2062 = vpack.c.b16 %v1972, %v1963
          %v2063 = vpack.c.b16 %v1973, %v1964
          %v2064 = vpack.c.b16 %v1974, %v1965
          %v2065 = vpack.c.b16 %v1975, %v1966
          %v2066 = vpack.c.b16 %v1976, %v1967
          %v2067 = vpack.c.b16 %v1986, %v1977
          %v2068 = vpack.c.b16 %v1987, %v1978
          %v2069 = vpack.c.b16 %v1988, %v1979
          %v2070 = vpack.c.b16 %v1989, %v1980
          %v2071 = vpack.c.b16 %v1990, %v1981
          %v2072 = vpack.c.b16 %v1991, %v1982
          %v2073 = vpack.c.b16 %v1992, %v1983
          %v2074 = vpack.c.b16 %v1993, %v1984
          %v2075 = vpack.c.b16 %v1994, %v1985
          %v2076 = vpack.c.b16 %v2004, %v1995
          %v2077 = vpack.c.b16 %v2005, %v1996
          %v2078 = vpack.c.b16 %v2006, %v1997
          %v2079 = vpack.c.b16 %v2007, %v1998
          %v2080 = vpack.c.b16 %v2008, %v1999
          %v2081 = vpack.c.b16 %v2009, %v2000
          %v2082 = vpack.c.b16 %v2010, %v2001
          %v2083 = vpack.c.b16 %v2011, %v2002
          %v2084 = vpack.c.b16 %v2012, %v2003
          %2157 = vmatpush.bf16.msra.mxu0 %v2076
          %2158 = vmatpush.bf16.msra.mxu0 %v2067
          %2159 = vmatpush.bf16.msra.mxu0 %v2058
          %2160 = vmatpush.bf16.msra.mxu0 %v2049
          %2161 = vmatpush.bf16.msra.mxu0 %v2040
          %2162 = vmatpush.bf16.msra.mxu0 %v2031
          %2163 = vmatpush.bf16.msra.mxu0 %v2022
          %2164 = vmatpush.bf16.msra.mxu0 %v2013
          %2165 = vmatmul.bf16.gmra.mxu0 %v1788
          %v2166 = vpop.f32.mrf.mxu0
          %v2167 = vadd.f32 0.0, %v2166
          %v2168 = vpop.f32.mrf.mxu0
          %v2169 = vadd.f32 0.0, %v2168
          %2170 = vdwg.mxu0
          %2171 = vmatpush.bf16.msra.mxu0 %v2077
          %2172 = vmatpush.bf16.msra.mxu0 %v2068
          %2173 = vmatpush.bf16.msra.mxu0 %v2059
          %2174 = vmatpush.bf16.msra.mxu0 %v2050
          %2175 = vmatpush.bf16.msra.mxu0 %v2041
          %2176 = vmatpush.bf16.msra.mxu0 %v2032
          %2177 = vmatpush.bf16.msra.mxu0 %v2023
          %2178 = vmatpush.bf16.msra.mxu0 %v2014
          %2179 = vmatmul.bf16.gmra.mxu0 %v1788
          %v2180 = vpop.f32.mrf.mxu0
          %v2181 = vadd.f32 0.0, %v2180
          %v2182 = vpop.f32.mrf.mxu0
          %v2183 = vadd.f32 0.0, %v2182
          %2184 = vdwg.mxu0
          %2185 = vmatpush.bf16.msra.mxu0 %v2078
          %2186 = vmatpush.bf16.msra.mxu0 %v2069
          %2187 = vmatpush.bf16.msra.mxu0 %v2060
          %2188 = vmatpush.bf16.msra.mxu0 %v2051
          %2189 = vmatpush.bf16.msra.mxu0 %v2042
          %2190 = vmatpush.bf16.msra.mxu0 %v2033
          %2191 = vmatpush.bf16.msra.mxu0 %v2024
          %2192 = vmatpush.bf16.msra.mxu0 %v2015
          %2193 = vmatmul.bf16.gmra.mxu0 %v1788
          %v2194 = vpop.f32.mrf.mxu0
          %v2195 = vadd.f32 0.0, %v2194
          %v2196 = vpop.f32.mrf.mxu0
          %v2197 = vadd.f32 0.0, %v2196
          %2198 = vdwg.mxu0
          %2199 = vmatpush.bf16.msra.mxu0 %v2079
          %2200 = vmatpush.bf16.msra.mxu0 %v2070
          %2201 = vmatpush.bf16.msra.mxu0 %v2061
          %2202 = vmatpush.bf16.msra.mxu0 %v2052
          %2203 = vmatpush.bf16.msra.mxu0 %v2043
          %2204 = vmatpush.bf16.msra.mxu0 %v2034
          %2205 = vmatpush.bf16.msra.mxu0 %v2025
          %2206 = vmatpush.bf16.msra.mxu0 %v2016
          %2207 = vmatmul.bf16.gmra.mxu0 %v1788
          %v2208 = vpop.f32.mrf.mxu0
          %v2209 = vadd.f32 0.0, %v2208
          %v2210 = vpop.f32.mrf.mxu0
          %v2211 = vadd.f32 0.0, %v2210
          %2212 = vdwg.mxu0
          %2213 = vmatpush.bf16.msra.mxu0 %v2080
          %2214 = vmatpush.bf16.msra.mxu0 %v2071
          %2215 = vmatpush.bf16.msra.mxu0 %v2062
          %2216 = vmatpush.bf16.msra.mxu0 %v2053
          %2217 = vmatpush.bf16.msra.mxu0 %v2044
          %2218 = vmatpush.bf16.msra.mxu0 %v2035
          %2219 = vmatpush.bf16.msra.mxu0 %v2026
          %2220 = vmatpush.bf16.msra.mxu0 %v2017
          %2221 = vmatmul.bf16.gmra.mxu0 %v1788
          %v2222 = vpop.f32.mrf.mxu0
          %v2223 = vadd.f32 0.0, %v2222
          %v2224 = vpop.f32.mrf.mxu0
          %v2225 = vadd.f32 0.0, %v2224
          %2226 = vdwg.mxu0
          %2227 = vmatpush.bf16.msra.mxu0 %v2081
          %2228 = vmatpush.bf16.msra.mxu0 %v2072
          %2229 = vmatpush.bf16.msra.mxu0 %v2063
          %2230 = vmatpush.bf16.msra.mxu0 %v2054
          %2231 = vmatpush.bf16.msra.mxu0 %v2045
          %2232 = vmatpush.bf16.msra.mxu0 %v2036
          %2233 = vmatpush.bf16.msra.mxu0 %v2027
          %2234 = vmatpush.bf16.msra.mxu0 %v2018
          %2235 = vmatmul.bf16.gmra.mxu0 %v1788
          %v2236 = vpop.f32.mrf.mxu0
          %v2237 = vadd.f32 0.0, %v2236
          %v2238 = vpop.f32.mrf.mxu0
          %v2239 = vadd.f32 0.0, %v2238
          %2240 = vdwg.mxu0
          %2241 = vmatpush.bf16.msra.mxu0 %v2082
          %2242 = vmatpush.bf16.msra.mxu0 %v2073
          %2243 = vmatpush.bf16.msra.mxu0 %v2064
          %2244 = vmatpush.bf16.msra.mxu0 %v2055
          %2245 = vmatpush.bf16.msra.mxu0 %v2046
          %2246 = vmatpush.bf16.msra.mxu0 %v2037
          %2247 = vmatpush.bf16.msra.mxu0 %v2028
          %2248 = vmatpush.bf16.msra.mxu0 %v2019
          %2249 = vmatmul.bf16.gmra.mxu0 %v1788
          %v2250 = vpop.f32.mrf.mxu0
          %v2251 = vadd.f32 0.0, %v2250
          %v2252 = vpop.f32.mrf.mxu0
          %v2253 = vadd.f32 0.0, %v2252
          %2254 = vdwg.mxu0
          %2255 = vmatpush.bf16.msra.mxu0 %v2083
          %2256 = vmatpush.bf16.msra.mxu0 %v2074
          %2257 = vmatpush.bf16.msra.mxu0 %v2065
          %2258 = vmatpush.bf16.msra.mxu0 %v2056
          %2259 = vmatpush.bf16.msra.mxu0 %v2047
          %2260 = vmatpush.bf16.msra.mxu0 %v2038
          %2261 = vmatpush.bf16.msra.mxu0 %v2029
          %2262 = vmatpush.bf16.msra.mxu0 %v2020
          %2263 = vmatmul.bf16.gmra.mxu0 %v1788
          %v2264 = vpop.f32.mrf.mxu0
          %v2265 = vadd.f32 0.0, %v2264
          %v2266 = vpop.f32.mrf.mxu0
          %v2267 = vadd.f32 0.0, %v2266
          %2268 = vdwg.mxu0
          %2269 = vmatpush.bf16.msra.mxu0 %v2084
          %2270 = vmatpush.bf16.msra.mxu0 %v2075
          %2271 = vmatpush.bf16.msra.mxu0 %v2066
          %2272 = vmatpush.bf16.msra.mxu0 %v2057
          %2273 = vmatpush.bf16.msra.mxu0 %v2048
          %2274 = vmatpush.bf16.msra.mxu0 %v2039
          %2275 = vmatpush.bf16.msra.mxu0 %v2030
          %2276 = vmatpush.bf16.msra.mxu0 %v2021
          %2277 = vmatmul.bf16.gmra.mxu0 %v1788
          %v2278 = vpop.f32.mrf.mxu0
          %v2279 = vadd.f32 0.0, %v2278
          %v2280 = vpop.f32.mrf.mxu0
          %v2281 = vadd.f32 0.0, %v2280
          %2282 = vdwg.mxu0
          %v2283 = vld [vmem:[%s3] sm:$0xff]
          %v2284 = vld [vmem:[%s3 + $0x8] sm:$0xff]
          %v2285 = vld [vmem:[%s3 + $0x10] sm:$0xff]
          %v2286 = vld [vmem:[%s3 + $0x18] sm:$0xff]
          %v2287 = vld [vmem:[%s3 + $0x20] sm:$0xff]
          %v2288 = vld [vmem:[%s3 + $0x28] sm:$0xff]
          %v2289 = vld [vmem:[%s2] sm:$0x1]
          %v2290 = vld [vmem:[%s2 + $0x1] sm:$0x1]
          %v2291 = vld [vmem:[%s1306] sm:$0xf]
          %v2292 = vld [vmem:[%s1306 + $0x4] sm:$0xf]
          %v2293 = vld [vmem:[%s1306 + $0x8] sm:$0xf]
          %v2294 = vld [vmem:[%s1306 + $0xc] sm:$0xf]
          %v2295 = vld [vmem:[%s1306 + $0x10] sm:$0xf]
          %v2296 = vld [vmem:[%s1306 + $0x14] sm:$0xf]
          %v2297 = vld [vmem:[%s1306 + $0x18] sm:$0xf]
          %v2298 = vld [vmem:[%s1306 + $0x1c] sm:$0xf]
          %v2299 = vld [vmem:[%s1306 + $0x20] sm:$0xf]
          %v2300 = vld [vmem:[%s1306 + $0x24] sm:$0xf]
          %v2301 = vld [vmem:[%s1306 + $0x28] sm:$0xf]
          %v2302 = vld [vmem:[%s1306 + $0x2c] sm:$0xf]
          %v2303 = vld [vmem:[%s1306 + $0x30] sm:$0xf]
          %v2304 = vld [vmem:[%s1306 + $0x34] sm:$0xf]
          %v2305 = vld [vmem:[%s1306 + $0x38] sm:$0xf]
          %v2306 = vld [vmem:[%s1306 + $0x3c] sm:$0xf]
          %v2307 = vld [vmem:[%s1306 + $0x40] sm:$0xf]
          %v2308 = vld [vmem:[%s1306 + $0x44] sm:$0xf]
          %v2309 = vld [vmem:[%s1306 + $0x48] sm:$0xf]
          %v2310 = vld [vmem:[%s1306 + $0x4c] sm:$0xf]
          %v2311 = vld [vmem:[%s1306 + $0x50] sm:$0xf]
          %v2312 = vld [vmem:[%s1306 + $0x54] sm:$0xf]
          %v2313 = vld [vmem:[%s1306 + $0x58] sm:$0xf]
          %v2314 = vld [vmem:[%s1306 + $0x5c] sm:$0xf]
          %v2315 = vld [vmem:[%s1306 + $0x60] sm:$0xf]
          %v2316 = vld [vmem:[%s1306 + $0x64] sm:$0xf]
          %v2317 = vld [vmem:[%s1306 + $0x68] sm:$0xf]
          %v2318 = vld [vmem:[%s1306 + $0x6c] sm:$0xf]
          %v2319 = vld [vmem:[%s1306 + $0x70] sm:$0xf]
          %v2320 = vld [vmem:[%s1306 + $0x74] sm:$0xf]
          %v2321 = vld [vmem:[%s1306 + $0x78] sm:$0xf]
          %v2322 = vld [vmem:[%s1306 + $0x7c] sm:$0xf]
          %v2323 = vld [vmem:[%s1306 + $0x80] sm:$0xf]
          %v2324 = vld [vmem:[%s1306 + $0x84] sm:$0xf]
          %v2325 = vld [vmem:[%s1306 + $0x88] sm:$0xf]
          %v2326 = vld [vmem:[%s1306 + $0x8c] sm:$0xf]
          %v2327 = vld [vmem:[%s1306 + $0x90] sm:$0xf]
          %v2328 = vld [vmem:[%s1306 + $0x94] sm:$0xf]
          %v2329 = vld [vmem:[%s1306 + $0x98] sm:$0xf]
          %v2330 = vld [vmem:[%s1306 + $0x9c] sm:$0xf]
          %v2331 = vld [vmem:[%s1306 + $0xa0] sm:$0xf]
          %v2332 = vld [vmem:[%s1306 + $0xa4] sm:$0xf]
          %v2333 = vld [vmem:[%s1306 + $0xa8] sm:$0xf]
          %v2334 = vld [vmem:[%s1306 + $0xac] sm:$0xf]
          %v2335 = vld [vmem:[%s1306 + $0xb0] sm:$0xf]
          %v2336 = vld [vmem:[%s1306 + $0xb4] sm:$0xf]
          %v2337 = vld [vmem:[%s1306 + $0xb8] sm:$0xf]
          %v2338 = vld [vmem:[%s1306 + $0xbc] sm:$0xf]
          %2341 = vrot.lane.b32.xlu0 %v2167, 64
          %v2342 = vpop.permute.xlu0 %2341
          %2343 = vrot.lane.b32.xlu0 %v2169, 64
          %v2344 = vpop.permute.xlu0 %2343
          %2349 = vrot.lane.b32.xlu0 %v2181, 64
          %v2350 = vpop.permute.xlu0 %2349
          %2351 = vrot.lane.b32.xlu0 %v2183, 64
          %v2352 = vpop.permute.xlu0 %2351
          %2357 = vrot.lane.b32.xlu0 %v2195, 64
          %v2358 = vpop.permute.xlu0 %2357
          %2359 = vrot.lane.b32.xlu0 %v2197, 64
          %v2360 = vpop.permute.xlu0 %2359
          %v2363 = vpack.c.bf16 %v2167, %v2167
          %v2364 = vpack.c.bf16 %v2169, %v2169
          %v2365 = vpack.c.bf16 %v2342, %v2342
          %v2366 = vpack.c.bf16 %v2344, %v2344
          %v2367 = vpack.c.bf16 %v2181, %v2181
          %v2368 = vpack.c.bf16 %v2183, %v2183
          %v2369 = vpack.c.bf16 %v2350, %v2350
          %v2370 = vpack.c.bf16 %v2352, %v2352
          %v2371 = vpack.c.bf16 %v2195, %v2195
          %v2372 = vpack.c.bf16 %v2197, %v2197
          %v2373 = vpack.c.bf16 %v2358, %v2358
          %v2374 = vpack.c.bf16 %v2360, %v2360
          %2377 = vrot.lane.b32.xlu0 %v2209, 64
          %v2378 = vpop.permute.xlu0 %2377
          %2379 = vrot.lane.b32.xlu0 %v2211, 64
          %v2380 = vpop.permute.xlu0 %2379
          %2385 = vrot.lane.b32.xlu0 %v2223, 64
          %v2386 = vpop.permute.xlu0 %2385
          %2387 = vrot.lane.b32.xlu0 %v2225, 64
          %v2388 = vpop.permute.xlu0 %2387
          %2393 = vrot.lane.b32.xlu0 %v2237, 64
          %v2394 = vpop.permute.xlu0 %2393
          %2395 = vrot.lane.b32.xlu0 %v2239, 64
          %v2396 = vpop.permute.xlu0 %2395
          %v2399 = vpack.c.bf16 %v2209, %v2209
          %v2400 = vpack.c.bf16 %v2211, %v2211
          %v2401 = vpack.c.bf16 %v2378, %v2378
          %v2402 = vpack.c.bf16 %v2380, %v2380
          %v2403 = vpack.c.bf16 %v2223, %v2223
          %v2404 = vpack.c.bf16 %v2225, %v2225
          %v2405 = vpack.c.bf16 %v2386, %v2386
          %v2406 = vpack.c.bf16 %v2388, %v2388
          %v2407 = vpack.c.bf16 %v2237, %v2237
          %v2408 = vpack.c.bf16 %v2239, %v2239
          %v2409 = vpack.c.bf16 %v2394, %v2394
          %v2410 = vpack.c.bf16 %v2396, %v2396
          %2413 = vrot.lane.b32.xlu0 %v2251, 64
          %v2414 = vpop.permute.xlu0 %2413
          %2415 = vrot.lane.b32.xlu0 %v2253, 64
          %v2416 = vpop.permute.xlu0 %2415
          %2421 = vrot.lane.b32.xlu0 %v2265, 64
          %v2422 = vpop.permute.xlu0 %2421
          %2423 = vrot.lane.b32.xlu0 %v2267, 64
          %v2424 = vpop.permute.xlu0 %2423
          %2429 = vrot.lane.b32.xlu0 %v2279, 64
          %v2430 = vpop.permute.xlu0 %2429
          %2431 = vrot.lane.b32.xlu0 %v2281, 64
          %v2432 = vpop.permute.xlu0 %2431
          %v2435 = vpack.c.bf16 %v2251, %v2251
          %v2436 = vpack.c.bf16 %v2253, %v2253
          %v2437 = vpack.c.bf16 %v2414, %v2414
          %v2438 = vpack.c.bf16 %v2416, %v2416
          %v2439 = vpack.c.bf16 %v2265, %v2265
          %v2440 = vpack.c.bf16 %v2267, %v2267
          %v2441 = vpack.c.bf16 %v2422, %v2422
          %v2442 = vpack.c.bf16 %v2424, %v2424
          %v2443 = vpack.c.bf16 %v2279, %v2279
          %v2444 = vpack.c.bf16 %v2281, %v2281
          %v2445 = vpack.c.bf16 %v2430, %v2430
          %v2446 = vpack.c.bf16 %v2432, %v2432
          %vm2447 = vcmask 523264
          %v2449 = vsel %vm2447, %v2363, 0
          %v2452 = vsel %vm2447, %v2399, 0
          %2454 = vmatpush.bf16.xpose.msra.mxu0 0
          %2455 = vmatpush.bf16.xpose.msra.mxu0 0
          %2456 = vmatpush.bf16.xpose.msra.mxu0 0
          %2457 = vmatpush.bf16.xpose.msra.mxu0 0
          %2458 = vmatpush.bf16.xpose.msra.mxu0 0
          %2459 = vmatpush.bf16.xpose.msra.mxu0 0
          %2460 = vmatpush.bf16.xpose.msra.mxu0 0
          %2461 = vmatpush.bf16.xpose.msra.mxu0 %v2452
          %2462 = vmatmul.bf16.gmra.mxu0 %v2449
          %v2463 = vpop.f32.mrf.mxu0
          %v2464 = vadd.f32 0.0, %v2463
          %v2465 = vpop.f32.mrf.mxu0
          %2466 = vdwg.mxu0
          %v2468 = vsel %vm2447, %v2364, 0
          %v2471 = vsel %vm2447, %v2400, 0
          %2473 = vmatpush.bf16.xpose.msra.mxu0 0
          %2474 = vmatpush.bf16.xpose.msra.mxu0 0
          %2475 = vmatpush.bf16.xpose.msra.mxu0 0
          %2476 = vmatpush.bf16.xpose.msra.mxu0 0
          %2477 = vmatpush.bf16.xpose.msra.mxu0 0
          %2478 = vmatpush.bf16.xpose.msra.mxu0 0
          %2479 = vmatpush.bf16.xpose.msra.mxu0 0
          %2480 = vmatpush.bf16.xpose.msra.mxu0 %v2471
          %2481 = vmatmul.bf16.gmra.mxu0 %v2468
          %v2482 = vpop.f32.mrf.mxu0
          %v2483 = vadd.f32 0.0, %v2482
          %v2484 = vpop.f32.mrf.mxu0
          %2485 = vdwg.mxu0
          %v2487 = vsel %vm2447, %v2365, 0
          %v2490 = vsel %vm2447, %v2401, 0
          %2492 = vmatpush.bf16.xpose.msra.mxu0 0
          %2493 = vmatpush.bf16.xpose.msra.mxu0 0
          %2494 = vmatpush.bf16.xpose.msra.mxu0 0
          %2495 = vmatpush.bf16.xpose.msra.mxu0 0
          %2496 = vmatpush.bf16.xpose.msra.mxu0 0
          %2497 = vmatpush.bf16.xpose.msra.mxu0 0
          %2498 = vmatpush.bf16.xpose.msra.mxu0 0
          %2499 = vmatpush.bf16.xpose.msra.mxu0 %v2490
          %2500 = vmatmul.bf16.gmra.mxu0 %v2487
          %v2501 = vpop.f32.mrf.mxu0
          %v2502 = vadd.f32 0.0, %v2501
          %v2503 = vpop.f32.mrf.mxu0
          %2504 = vdwg.mxu0
          %v2506 = vsel %vm2447, %v2366, 0
          %v2509 = vsel %vm2447, %v2402, 0
          %2511 = vmatpush.bf16.xpose.msra.mxu0 0
          %2512 = vmatpush.bf16.xpose.msra.mxu0 0
          %2513 = vmatpush.bf16.xpose.msra.mxu0 0
          %2514 = vmatpush.bf16.xpose.msra.mxu0 0
          %2515 = vmatpush.bf16.xpose.msra.mxu0 0
          %2516 = vmatpush.bf16.xpose.msra.mxu0 0
          %2517 = vmatpush.bf16.xpose.msra.mxu0 0
          %2518 = vmatpush.bf16.xpose.msra.mxu0 %v2509
          %2519 = vmatmul.bf16.gmra.mxu0 %v2506
          %v2520 = vpop.f32.mrf.mxu0
          %v2521 = vadd.f32 0.0, %v2520
          %v2522 = vpop.f32.mrf.mxu0
          %2523 = vdwg.mxu0
          %v2525 = vsel %vm2447, %v2367, 0
          %v2528 = vsel %vm2447, %v2403, 0
          %2530 = vmatpush.bf16.xpose.msra.mxu0 0
          %2531 = vmatpush.bf16.xpose.msra.mxu0 0
          %2532 = vmatpush.bf16.xpose.msra.mxu0 0
          %2533 = vmatpush.bf16.xpose.msra.mxu0 0
          %2534 = vmatpush.bf16.xpose.msra.mxu0 0
          %2535 = vmatpush.bf16.xpose.msra.mxu0 0
          %2536 = vmatpush.bf16.xpose.msra.mxu0 0
          %2537 = vmatpush.bf16.xpose.msra.mxu0 %v2528
          %2538 = vmatmul.bf16.gmra.mxu0 %v2525
          %v2539 = vpop.f32.mrf.mxu0
          %v2540 = vadd.f32 0.0, %v2539
          %v2541 = vpop.f32.mrf.mxu0
          %2542 = vdwg.mxu0
          %v2544 = vsel %vm2447, %v2368, 0
          %v2547 = vsel %vm2447, %v2404, 0
          %2549 = vmatpush.bf16.xpose.msra.mxu0 0
          %2550 = vmatpush.bf16.xpose.msra.mxu0 0
          %2551 = vmatpush.bf16.xpose.msra.mxu0 0
          %2552 = vmatpush.bf16.xpose.msra.mxu0 0
          %2553 = vmatpush.bf16.xpose.msra.mxu0 0
          %2554 = vmatpush.bf16.xpose.msra.mxu0 0
          %2555 = vmatpush.bf16.xpose.msra.mxu0 0
          %2556 = vmatpush.bf16.xpose.msra.mxu0 %v2547
          %2557 = vmatmul.bf16.gmra.mxu0 %v2544
          %v2558 = vpop.f32.mrf.mxu0
          %v2559 = vadd.f32 0.0, %v2558
          %v2560 = vpop.f32.mrf.mxu0
          %2561 = vdwg.mxu0
          %v2563 = vsel %vm2447, %v2369, 0
          %v2566 = vsel %vm2447, %v2405, 0
          %2568 = vmatpush.bf16.xpose.msra.mxu0 0
          %2569 = vmatpush.bf16.xpose.msra.mxu0 0
          %2570 = vmatpush.bf16.xpose.msra.mxu0 0
          %2571 = vmatpush.bf16.xpose.msra.mxu0 0
          %2572 = vmatpush.bf16.xpose.msra.mxu0 0
          %2573 = vmatpush.bf16.xpose.msra.mxu0 0
          %2574 = vmatpush.bf16.xpose.msra.mxu0 0
          %2575 = vmatpush.bf16.xpose.msra.mxu0 %v2566
          %2576 = vmatmul.bf16.gmra.mxu0 %v2563
          %v2577 = vpop.f32.mrf.mxu0
          %v2578 = vadd.f32 0.0, %v2577
          %v2579 = vpop.f32.mrf.mxu0
          %2580 = vdwg.mxu0
          %v2582 = vsel %vm2447, %v2370, 0
          %v2585 = vsel %vm2447, %v2406, 0
          %2587 = vmatpush.bf16.xpose.msra.mxu0 0
          %2588 = vmatpush.bf16.xpose.msra.mxu0 0
          %2589 = vmatpush.bf16.xpose.msra.mxu0 0
          %2590 = vmatpush.bf16.xpose.msra.mxu0 0
          %2591 = vmatpush.bf16.xpose.msra.mxu0 0
          %2592 = vmatpush.bf16.xpose.msra.mxu0 0
          %2593 = vmatpush.bf16.xpose.msra.mxu0 0
          %2594 = vmatpush.bf16.xpose.msra.mxu0 %v2585
          %2595 = vmatmul.bf16.gmra.mxu0 %v2582
          %v2596 = vpop.f32.mrf.mxu0
          %v2597 = vadd.f32 0.0, %v2596
          %v2598 = vpop.f32.mrf.mxu0
          %2599 = vdwg.mxu0
          %v2601 = vsel %vm2447, %v2371, 0
          %v2604 = vsel %vm2447, %v2407, 0
          %2606 = vmatpush.bf16.xpose.msra.mxu0 0
          %2607 = vmatpush.bf16.xpose.msra.mxu0 0
          %2608 = vmatpush.bf16.xpose.msra.mxu0 0
          %2609 = vmatpush.bf16.xpose.msra.mxu0 0
          %2610 = vmatpush.bf16.xpose.msra.mxu0 0
          %2611 = vmatpush.bf16.xpose.msra.mxu0 0
          %2612 = vmatpush.bf16.xpose.msra.mxu0 0
          %2613 = vmatpush.bf16.xpose.msra.mxu0 %v2604
          %2614 = vmatmul.bf16.gmra.mxu0 %v2601
          %v2615 = vpop.f32.mrf.mxu0
          %v2616 = vadd.f32 0.0, %v2615
          %v2617 = vpop.f32.mrf.mxu0
          %2618 = vdwg.mxu0
          %v2620 = vsel %vm2447, %v2372, 0
          %v2623 = vsel %vm2447, %v2408, 0
          %2625 = vmatpush.bf16.xpose.msra.mxu0 0
          %2626 = vmatpush.bf16.xpose.msra.mxu0 0
          %2627 = vmatpush.bf16.xpose.msra.mxu0 0
          %2628 = vmatpush.bf16.xpose.msra.mxu0 0
          %2629 = vmatpush.bf16.xpose.msra.mxu0 0
          %2630 = vmatpush.bf16.xpose.msra.mxu0 0
          %2631 = vmatpush.bf16.xpose.msra.mxu0 0
          %2632 = vmatpush.bf16.xpose.msra.mxu0 %v2623
          %2633 = vmatmul.bf16.gmra.mxu0 %v2620
          %v2634 = vpop.f32.mrf.mxu0
          %v2635 = vadd.f32 0.0, %v2634
          %v2636 = vpop.f32.mrf.mxu0
          %2637 = vdwg.mxu0
          %v2639 = vsel %vm2447, %v2373, 0
          %v2642 = vsel %vm2447, %v2409, 0
          %2644 = vmatpush.bf16.xpose.msra.mxu0 0
          %2645 = vmatpush.bf16.xpose.msra.mxu0 0
          %2646 = vmatpush.bf16.xpose.msra.mxu0 0
          %2647 = vmatpush.bf16.xpose.msra.mxu0 0
          %2648 = vmatpush.bf16.xpose.msra.mxu0 0
          %2649 = vmatpush.bf16.xpose.msra.mxu0 0
          %2650 = vmatpush.bf16.xpose.msra.mxu0 0
          %2651 = vmatpush.bf16.xpose.msra.mxu0 %v2642
          %2652 = vmatmul.bf16.gmra.mxu0 %v2639
          %v2653 = vpop.f32.mrf.mxu0
          %v2654 = vadd.f32 0.0, %v2653
          %v2655 = vpop.f32.mrf.mxu0
          %2656 = vdwg.mxu0
          %v2658 = vsel %vm2447, %v2374, 0
          %v2661 = vsel %vm2447, %v2410, 0
          %2663 = vmatpush.bf16.xpose.msra.mxu0 0
          %2664 = vmatpush.bf16.xpose.msra.mxu0 0
          %2665 = vmatpush.bf16.xpose.msra.mxu0 0
          %2666 = vmatpush.bf16.xpose.msra.mxu0 0
          %2667 = vmatpush.bf16.xpose.msra.mxu0 0
          %2668 = vmatpush.bf16.xpose.msra.mxu0 0
          %2669 = vmatpush.bf16.xpose.msra.mxu0 0
          %2670 = vmatpush.bf16.xpose.msra.mxu0 %v2661
          %2671 = vmatmul.bf16.gmra.mxu0 %v2658
          %v2672 = vpop.f32.mrf.mxu0
          %v2673 = vadd.f32 0.0, %v2672
          %v2674 = vpop.f32.mrf.mxu0
          %2675 = vdwg.mxu0
          %v2676 = vadd.f32 %v2464, %v2283
          %v2677 = vadd.f32 %v2483, %v2283
          %v2678 = vadd.f32 %v2502, %v2284
          %v2679 = vadd.f32 %v2521, %v2284
          %v2680 = vadd.f32 %v2540, %v2285
          %v2681 = vadd.f32 %v2559, %v2285
          %v2682 = vadd.f32 %v2578, %v2286
          %v2683 = vadd.f32 %v2597, %v2286
          %v2684 = vadd.f32 %v2616, %v2287
          %v2685 = vadd.f32 %v2635, %v2287
          %v2686 = vadd.f32 %v2654, %v2288
          %v2687 = vadd.f32 %v2673, %v2288
          %v2690 = vperm.slane %v2289, 0
          %v2691 = vperm.slane %v2290, 0
          %v2694 = vadd.f32 %v2676, %v2690
          %v2695 = vadd.f32 %v2677, %v2691
          %v2696 = vadd.f32 %v2678, %v2690
          %v2697 = vadd.f32 %v2679, %v2691
          %v2698 = vadd.f32 %v2680, %v2690
          %v2699 = vadd.f32 %v2681, %v2691
          %v2700 = vadd.f32 %v2682, %v2690
          %v2701 = vadd.f32 %v2683, %v2691
          %v2702 = vadd.f32 %v2684, %v2690
          %v2703 = vadd.f32 %v2685, %v2691
          %v2704 = vadd.f32 %v2686, %v2690
          %v2705 = vadd.f32 %v2687, %v2691
          %vm2706 = vcmask 64512
          %v2707 = vsel %vm2706, %v2694, -inf
          %2708 = vmax.xlane.f32.xlu0 %v2707
          %v2709 = vpop.xlane.xlu0 %2708
          %v2710 = vsel %vm2706, %v2695, -inf
          %2711 = vmax.xlane.f32.xlu0 %v2710
          %v2712 = vpop.xlane.xlu0 %2711
          %v2713 = vsel %vm2706, %v2696, -inf
          %2714 = vmax.xlane.f32.xlu0 %v2713
          %v2715 = vpop.xlane.xlu0 %2714
          %v2716 = vsel %vm2706, %v2697, -inf
          %2717 = vmax.xlane.f32.xlu0 %v2716
          %v2718 = vpop.xlane.xlu0 %2717
          %v2719 = vsel %vm2706, %v2698, -inf
          %2720 = vmax.xlane.f32.xlu0 %v2719
          %v2721 = vpop.xlane.xlu0 %2720
          %v2722 = vsel %vm2706, %v2699, -inf
          %2723 = vmax.xlane.f32.xlu0 %v2722
          %v2724 = vpop.xlane.xlu0 %2723
          %v2725 = vsel %vm2706, %v2700, -inf
          %2726 = vmax.xlane.f32.xlu0 %v2725
          %v2727 = vpop.xlane.xlu0 %2726
          %v2728 = vsel %vm2706, %v2701, -inf
          %2729 = vmax.xlane.f32.xlu0 %v2728
          %v2730 = vpop.xlane.xlu0 %2729
          %v2731 = vsel %vm2706, %v2702, -inf
          %2732 = vmax.xlane.f32.xlu0 %v2731
          %v2733 = vpop.xlane.xlu0 %2732
          %v2734 = vsel %vm2706, %v2703, -inf
          %2735 = vmax.xlane.f32.xlu0 %v2734
          %v2736 = vpop.xlane.xlu0 %2735
          %v2737 = vsel %vm2706, %v2704, -inf
          %2738 = vmax.xlane.f32.xlu0 %v2737
          %v2739 = vpop.xlane.xlu0 %2738
          %v2740 = vsel %vm2706, %v2705, -inf
          %2741 = vmax.xlane.f32.xlu0 %v2740
          %v2742 = vpop.xlane.xlu0 %2741
          %v2743 = vsub.f32 %v2694, %v2709
          %v2744 = vsub.f32 %v2695, %v2712
          %v2745 = vsub.f32 %v2696, %v2715
          %v2746 = vsub.f32 %v2697, %v2718
          %v2747 = vsub.f32 %v2698, %v2721
          %v2748 = vsub.f32 %v2699, %v2724
          %v2749 = vsub.f32 %v2700, %v2727
          %v2750 = vsub.f32 %v2701, %v2730
          %v2751 = vsub.f32 %v2702, %v2733
          %v2752 = vsub.f32 %v2703, %v2736
          %v2753 = vsub.f32 %v2704, %v2739
          %v2754 = vsub.f32 %v2705, %v2742
          %v2755 = vmul.f32 %v2743, 1.442695
          %v2756 = vpow.pop %v2755
          %v2757 = vmul.f32 %v2744, 1.442695
          %v2758 = vpow.pop %v2757
          %v2759 = vmul.f32 %v2745, 1.442695
          %v2760 = vpow.pop %v2759
          %v2761 = vmul.f32 %v2746, 1.442695
          %v2762 = vpow.pop %v2761
          %v2763 = vmul.f32 %v2747, 1.442695
          %v2764 = vpow.pop %v2763
          %v2765 = vmul.f32 %v2748, 1.442695
          %v2766 = vpow.pop %v2765
          %v2767 = vmul.f32 %v2749, 1.442695
          %v2768 = vpow.pop %v2767
          %v2769 = vmul.f32 %v2750, 1.442695
          %v2770 = vpow.pop %v2769
          %v2771 = vmul.f32 %v2751, 1.442695
          %v2772 = vpow.pop %v2771
          %v2773 = vmul.f32 %v2752, 1.442695
          %v2774 = vpow.pop %v2773
          %v2775 = vmul.f32 %v2753, 1.442695
          %v2776 = vpow.pop %v2775
          %v2777 = vmul.f32 %v2754, 1.442695
          %v2778 = vpow.pop %v2777
          %v2779 = vsel %vm2706, %v2756, 0.0
          %2780 = vadd.xlane.f32.xlu0 %v2779
          %v2781 = vpop.xlane.xlu0 %2780
          %v2782 = vsel %vm2706, %v2758, 0.0
          %2783 = vadd.xlane.f32.xlu0 %v2782
          %v2784 = vpop.xlane.xlu0 %2783
          %v2785 = vsel %vm2706, %v2760, 0.0
          %2786 = vadd.xlane.f32.xlu0 %v2785
          %v2787 = vpop.xlane.xlu0 %2786
          %v2788 = vsel %vm2706, %v2762, 0.0
          %2789 = vadd.xlane.f32.xlu0 %v2788
          %v2790 = vpop.xlane.xlu0 %2789
          %v2791 = vsel %vm2706, %v2764, 0.0
          %2792 = vadd.xlane.f32.xlu0 %v2791
          %v2793 = vpop.xlane.xlu0 %2792
          %v2794 = vsel %vm2706, %v2766, 0.0
          %2795 = vadd.xlane.f32.xlu0 %v2794
          %v2796 = vpop.xlane.xlu0 %2795
          %v2797 = vsel %vm2706, %v2768, 0.0
          %2798 = vadd.xlane.f32.xlu0 %v2797
          %v2799 = vpop.xlane.xlu0 %2798
          %v2800 = vsel %vm2706, %v2770, 0.0
          %2801 = vadd.xlane.f32.xlu0 %v2800
          %v2802 = vpop.xlane.xlu0 %2801
          %v2803 = vsel %vm2706, %v2772, 0.0
          %2804 = vadd.xlane.f32.xlu0 %v2803
          %v2805 = vpop.xlane.xlu0 %2804
          %v2806 = vsel %vm2706, %v2774, 0.0
          %2807 = vadd.xlane.f32.xlu0 %v2806
          %v2808 = vpop.xlane.xlu0 %2807
          %v2809 = vsel %vm2706, %v2776, 0.0
          %2810 = vadd.xlane.f32.xlu0 %v2809
          %v2811 = vpop.xlane.xlu0 %2810
          %v2812 = vsel %vm2706, %v2778, 0.0
          %2813 = vadd.xlane.f32.xlu0 %v2812
          %v2814 = vpop.xlane.xlu0 %2813
          %v2815 = vrcp.pop %v2781
          %v2816 = vrcp.pop %v2784
          %v2817 = vrcp.pop %v2787
          %v2818 = vrcp.pop %v2790
          %v2819 = vrcp.pop %v2793
          %v2820 = vrcp.pop %v2796
          %v2821 = vrcp.pop %v2799
          %v2822 = vrcp.pop %v2802
          %v2823 = vrcp.pop %v2805
          %v2824 = vrcp.pop %v2808
          %v2825 = vrcp.pop %v2811
          %v2826 = vrcp.pop %v2814
          %v2827 = vmul.f32 %v2756, %v2815
          %v2828 = vmul.f32 %v2758, %v2816
          %v2829 = vmul.f32 %v2760, %v2817
          %v2830 = vmul.f32 %v2762, %v2818
          %v2831 = vmul.f32 %v2764, %v2819
          %v2832 = vmul.f32 %v2766, %v2820
          %v2833 = vmul.f32 %v2768, %v2821
          %v2834 = vmul.f32 %v2770, %v2822
          %v2835 = vmul.f32 %v2772, %v2823
          %v2836 = vmul.f32 %v2774, %v2824
          %v2837 = vmul.f32 %v2776, %v2825
          %v2838 = vmul.f32 %v2778, %v2826
          %v2839 = vpack.c.bf16 %v2827, %v2827
          %v2840 = vpack.c.bf16 %v2828, %v2828
          %v2841 = vpack.c.bf16 %v2829, %v2829
          %v2842 = vpack.c.bf16 %v2830, %v2830
          %v2843 = vpack.c.bf16 %v2831, %v2831
          %v2844 = vpack.c.bf16 %v2832, %v2832
          %v2845 = vpack.c.bf16 %v2833, %v2833
          %v2846 = vpack.c.bf16 %v2834, %v2834
          %v2847 = vpack.c.bf16 %v2835, %v2835
          %v2848 = vpack.c.bf16 %v2836, %v2836
          %v2849 = vpack.c.bf16 %v2837, %v2837
          %v2850 = vpack.c.bf16 %v2838, %v2838
          %v2852 = vsel %vm2706, %v2839, 0
          %vm2854 = vcmask 1043456
          %v2856 = vsel %vm2854, %v2435, 0
          %2858 = vmatpush.bf16.msra.mxu0 0
          %2859 = vmatpush.bf16.msra.mxu0 0
          %2860 = vmatpush.bf16.msra.mxu0 0
          %2861 = vmatpush.bf16.msra.mxu0 0
          %2862 = vmatpush.bf16.msra.mxu0 0
          %2863 = vmatpush.bf16.msra.mxu0 0
          %2864 = vmatpush.bf16.msra.mxu0 0
          %2865 = vmatpush.bf16.msra.mxu0 %v2856
          %2866 = vmatmul.bf16.gmra.mxu0 %v2852
          %v2867 = vpop.f32.mrf.mxu0
          %v2868 = vadd.f32 0.0, %v2867
          %v2869 = vpop.f32.mrf.mxu0
          %2870 = vdwg.mxu0
          %v2872 = vsel %vm2706, %v2840, 0
          %v2875 = vsel %vm2854, %v2436, 0
          %2877 = vmatpush.bf16.msra.mxu0 0
          %2878 = vmatpush.bf16.msra.mxu0 0
          %2879 = vmatpush.bf16.msra.mxu0 0
          %2880 = vmatpush.bf16.msra.mxu0 0
          %2881 = vmatpush.bf16.msra.mxu0 0
          %2882 = vmatpush.bf16.msra.mxu0 0
          %2883 = vmatpush.bf16.msra.mxu0 0
          %2884 = vmatpush.bf16.msra.mxu0 %v2875
          %2885 = vmatmul.bf16.gmra.mxu0 %v2872
          %v2886 = vpop.f32.mrf.mxu0
          %v2887 = vadd.f32 0.0, %v2886
          %v2888 = vpop.f32.mrf.mxu0
          %2889 = vdwg.mxu0
          %v2891 = vsel %vm2706, %v2841, 0
          %v2894 = vsel %vm2854, %v2437, 0
          %2896 = vmatpush.bf16.msra.mxu0 0
          %2897 = vmatpush.bf16.msra.mxu0 0
          %2898 = vmatpush.bf16.msra.mxu0 0
          %2899 = vmatpush.bf16.msra.mxu0 0
          %2900 = vmatpush.bf16.msra.mxu0 0
          %2901 = vmatpush.bf16.msra.mxu0 0
          %2902 = vmatpush.bf16.msra.mxu0 0
          %2903 = vmatpush.bf16.msra.mxu0 %v2894
          %2904 = vmatmul.bf16.gmra.mxu0 %v2891
          %v2905 = vpop.f32.mrf.mxu0
          %v2906 = vadd.f32 0.0, %v2905
          %v2907 = vpop.f32.mrf.mxu0
          %2908 = vdwg.mxu0
          %v2910 = vsel %vm2706, %v2842, 0
          %v2913 = vsel %vm2854, %v2438, 0
          %2915 = vmatpush.bf16.msra.mxu0 0
          %2916 = vmatpush.bf16.msra.mxu0 0
          %2917 = vmatpush.bf16.msra.mxu0 0
          %2918 = vmatpush.bf16.msra.mxu0 0
          %2919 = vmatpush.bf16.msra.mxu0 0
          %2920 = vmatpush.bf16.msra.mxu0 0
          %2921 = vmatpush.bf16.msra.mxu0 0
          %2922 = vmatpush.bf16.msra.mxu0 %v2913
          %2923 = vmatmul.bf16.gmra.mxu0 %v2910
          %v2924 = vpop.f32.mrf.mxu0
          %v2925 = vadd.f32 0.0, %v2924
          %v2926 = vpop.f32.mrf.mxu0
          %2927 = vdwg.mxu0
          %v2929 = vsel %vm2706, %v2843, 0
          %v2932 = vsel %vm2854, %v2439, 0
          %2934 = vmatpush.bf16.msra.mxu0 0
          %2935 = vmatpush.bf16.msra.mxu0 0
          %2936 = vmatpush.bf16.msra.mxu0 0
          %2937 = vmatpush.bf16.msra.mxu0 0
          %2938 = vmatpush.bf16.msra.mxu0 0
          %2939 = vmatpush.bf16.msra.mxu0 0
          %2940 = vmatpush.bf16.msra.mxu0 0
          %2941 = vmatpush.bf16.msra.mxu0 %v2932
          %2942 = vmatmul.bf16.gmra.mxu0 %v2929
          %v2943 = vpop.f32.mrf.mxu0
          %v2944 = vadd.f32 0.0, %v2943
          %v2945 = vpop.f32.mrf.mxu0
          %2946 = vdwg.mxu0
          %v2948 = vsel %vm2706, %v2844, 0
          %v2951 = vsel %vm2854, %v2440, 0
          %2953 = vmatpush.bf16.msra.mxu0 0
          %2954 = vmatpush.bf16.msra.mxu0 0
          %2955 = vmatpush.bf16.msra.mxu0 0
          %2956 = vmatpush.bf16.msra.mxu0 0
          %2957 = vmatpush.bf16.msra.mxu0 0
          %2958 = vmatpush.bf16.msra.mxu0 0
          %2959 = vmatpush.bf16.msra.mxu0 0
          %2960 = vmatpush.bf16.msra.mxu0 %v2951
          %2961 = vmatmul.bf16.gmra.mxu0 %v2948
          %v2962 = vpop.f32.mrf.mxu0
          %v2963 = vadd.f32 0.0, %v2962
          %v2964 = vpop.f32.mrf.mxu0
          %2965 = vdwg.mxu0
          %v2967 = vsel %vm2706, %v2845, 0
          %v2970 = vsel %vm2854, %v2441, 0
          %2972 = vmatpush.bf16.msra.mxu0 0
          %2973 = vmatpush.bf16.msra.mxu0 0
          %2974 = vmatpush.bf16.msra.mxu0 0
          %2975 = vmatpush.bf16.msra.mxu0 0
          %2976 = vmatpush.bf16.msra.mxu0 0
          %2977 = vmatpush.bf16.msra.mxu0 0
          %2978 = vmatpush.bf16.msra.mxu0 0
          %2979 = vmatpush.bf16.msra.mxu0 %v2970
          %2980 = vmatmul.bf16.gmra.mxu0 %v2967
          %v2981 = vpop.f32.mrf.mxu0
          %v2982 = vadd.f32 0.0, %v2981
          %v2983 = vpop.f32.mrf.mxu0
          %2984 = vdwg.mxu0
          %v2986 = vsel %vm2706, %v2846, 0
          %v2989 = vsel %vm2854, %v2442, 0
          %2991 = vmatpush.bf16.msra.mxu0 0
          %2992 = vmatpush.bf16.msra.mxu0 0
          %2993 = vmatpush.bf16.msra.mxu0 0
          %2994 = vmatpush.bf16.msra.mxu0 0
          %2995 = vmatpush.bf16.msra.mxu0 0
          %2996 = vmatpush.bf16.msra.mxu0 0
          %2997 = vmatpush.bf16.msra.mxu0 0
          %2998 = vmatpush.bf16.msra.mxu0 %v2989
          %2999 = vmatmul.bf16.gmra.mxu0 %v2986
          %v3000 = vpop.f32.mrf.mxu0
          %v3001 = vadd.f32 0.0, %v3000
          %v3002 = vpop.f32.mrf.mxu0
          %3003 = vdwg.mxu0
          %v3005 = vsel %vm2706, %v2847, 0
          %v3008 = vsel %vm2854, %v2443, 0
          %3010 = vmatpush.bf16.msra.mxu0 0
          %3011 = vmatpush.bf16.msra.mxu0 0
          %3012 = vmatpush.bf16.msra.mxu0 0
          %3013 = vmatpush.bf16.msra.mxu0 0
          %3014 = vmatpush.bf16.msra.mxu0 0
          %3015 = vmatpush.bf16.msra.mxu0 0
          %3016 = vmatpush.bf16.msra.mxu0 0
          %3017 = vmatpush.bf16.msra.mxu0 %v3008
          %3018 = vmatmul.bf16.gmra.mxu0 %v3005
          %v3019 = vpop.f32.mrf.mxu0
          %v3020 = vadd.f32 0.0, %v3019
          %v3021 = vpop.f32.mrf.mxu0
          %3022 = vdwg.mxu0
          %v3024 = vsel %vm2706, %v2848, 0
          %v3027 = vsel %vm2854, %v2444, 0
          %3029 = vmatpush.bf16.msra.mxu0 0
          %3030 = vmatpush.bf16.msra.mxu0 0
          %3031 = vmatpush.bf16.msra.mxu0 0
          %3032 = vmatpush.bf16.msra.mxu0 0
          %3033 = vmatpush.bf16.msra.mxu0 0
          %3034 = vmatpush.bf16.msra.mxu0 0
          %3035 = vmatpush.bf16.msra.mxu0 0
          %3036 = vmatpush.bf16.msra.mxu0 %v3027
          %3037 = vmatmul.bf16.gmra.mxu0 %v3024
          %v3038 = vpop.f32.mrf.mxu0
          %v3039 = vadd.f32 0.0, %v3038
          %v3040 = vpop.f32.mrf.mxu0
          %3041 = vdwg.mxu0
          %v3043 = vsel %vm2706, %v2849, 0
          %v3046 = vsel %vm2854, %v2445, 0
          %3048 = vmatpush.bf16.msra.mxu0 0
          %3049 = vmatpush.bf16.msra.mxu0 0
          %3050 = vmatpush.bf16.msra.mxu0 0
          %3051 = vmatpush.bf16.msra.mxu0 0
          %3052 = vmatpush.bf16.msra.mxu0 0
          %3053 = vmatpush.bf16.msra.mxu0 0
          %3054 = vmatpush.bf16.msra.mxu0 0
          %3055 = vmatpush.bf16.msra.mxu0 %v3046
          %3056 = vmatmul.bf16.gmra.mxu0 %v3043
          %v3057 = vpop.f32.mrf.mxu0
          %v3058 = vadd.f32 0.0, %v3057
          %v3059 = vpop.f32.mrf.mxu0
          %3060 = vdwg.mxu0
          %v3062 = vsel %vm2706, %v2850, 0
          %v3065 = vsel %vm2854, %v2446, 0
          %3067 = vmatpush.bf16.msra.mxu0 0
          %3068 = vmatpush.bf16.msra.mxu0 0
          %3069 = vmatpush.bf16.msra.mxu0 0
          %3070 = vmatpush.bf16.msra.mxu0 0
          %3071 = vmatpush.bf16.msra.mxu0 0
          %3072 = vmatpush.bf16.msra.mxu0 0
          %3073 = vmatpush.bf16.msra.mxu0 0
          %3074 = vmatpush.bf16.msra.mxu0 %v3065
          %3075 = vmatmul.bf16.gmra.mxu0 %v3062
          %v3076 = vpop.f32.mrf.mxu0
          %v3077 = vadd.f32 0.0, %v3076
          %v3078 = vpop.f32.mrf.mxu0
          %3079 = vdwg.mxu0
          %3082 = vrot.lane.b32.xlu0 %v2906, 64
          %v3083 = vpop.permute.xlu0 %3082
          %3084 = vrot.lane.b32.xlu0 %v2925, 64
          %v3085 = vpop.permute.xlu0 %3084
          %3090 = vrot.lane.b32.xlu0 %v2982, 64
          %v3091 = vpop.permute.xlu0 %3090
          %3092 = vrot.lane.b32.xlu0 %v3001, 64
          %v3093 = vpop.permute.xlu0 %3092
          %3098 = vrot.lane.b32.xlu0 %v3058, 64
          %v3099 = vpop.permute.xlu0 %3098
          %3100 = vrot.lane.b32.xlu0 %v3077, 64
          %v3101 = vpop.permute.xlu0 %3100
          %v3104 = vsel %vm2447, %v2868, %v3083
          %v3105 = vsel %vm2447, %v2887, %v3085
          %v3106 = vsel %vm2447, %v2944, %v3091
          %v3107 = vsel %vm2447, %v2963, %v3093
          %v3108 = vsel %vm2447, %v3020, %v3099
          %v3109 = vsel %vm2447, %v3039, %v3101
          %v3110 = vpack.c.bf16 %v3105, %v3104
          %v3111 = vpack.c.bf16 %v3107, %v3106
          %v3112 = vpack.c.bf16 %v3109, %v3108
          %v3161 = vunpack.c.l.b16 %v2291
          %v3162 = vunpack.c.l.b16 %v2292
          %v3163 = vunpack.c.l.b16 %v2293
          %v3164 = vunpack.c.l.b16 %v2294
          %v3165 = vunpack.c.l.b16 %v2295
          %v3166 = vunpack.c.l.b16 %v2296
          %v3167 = vunpack.c.l.b16 %v2297
          %v3168 = vunpack.c.l.b16 %v2298
          %v3169 = vunpack.c.l.b16 %v2299
          %v3170 = vunpack.c.l.b16 %v2300
          %v3171 = vunpack.c.l.b16 %v2301
          %v3172 = vunpack.c.l.b16 %v2302
          %v3173 = vunpack.c.l.b16 %v2303
          %v3174 = vunpack.c.l.b16 %v2304
          %v3175 = vunpack.c.l.b16 %v2305
          %v3176 = vunpack.c.l.b16 %v2306
          %v3177 = vunpack.c.l.b16 %v2307
          %v3178 = vunpack.c.l.b16 %v2308
          %v3179 = vunpack.c.l.b16 %v2309
          %v3180 = vunpack.c.l.b16 %v2310
          %v3181 = vunpack.c.l.b16 %v2311
          %v3182 = vunpack.c.l.b16 %v2312
          %v3183 = vunpack.c.l.b16 %v2313
          %v3184 = vunpack.c.l.b16 %v2314
          %v3185 = vunpack.c.l.b16 %v2315
          %v3186 = vunpack.c.l.b16 %v2316
          %v3187 = vunpack.c.l.b16 %v2317
          %v3188 = vunpack.c.l.b16 %v2318
          %v3189 = vunpack.c.l.b16 %v2319
          %v3190 = vunpack.c.l.b16 %v2320
          %v3191 = vunpack.c.l.b16 %v2321
          %v3192 = vunpack.c.l.b16 %v2322
          %v3193 = vunpack.c.l.b16 %v2323
          %v3194 = vunpack.c.l.b16 %v2324
          %v3195 = vunpack.c.l.b16 %v2325
          %v3196 = vunpack.c.l.b16 %v2326
          %v3197 = vunpack.c.l.b16 %v2327
          %v3198 = vunpack.c.l.b16 %v2328
          %v3199 = vunpack.c.l.b16 %v2329
          %v3200 = vunpack.c.l.b16 %v2330
          %v3201 = vunpack.c.l.b16 %v2331
          %v3202 = vunpack.c.l.b16 %v2332
          %v3203 = vunpack.c.l.b16 %v2333
          %v3204 = vunpack.c.l.b16 %v2334
          %v3205 = vunpack.c.l.b16 %v2335
          %v3206 = vunpack.c.l.b16 %v2336
          %v3207 = vunpack.c.l.b16 %v2337
          %v3208 = vunpack.c.l.b16 %v2338
          %v3209 = vpack.c.b16 %v3162, %v3161
          %v3210 = vpack.c.b16 %v3164, %v3163
          %v3211 = vpack.c.b16 %v3166, %v3165
          %v3212 = vpack.c.b16 %v3168, %v3167
          %v3213 = vpack.c.b16 %v3170, %v3169
          %v3214 = vpack.c.b16 %v3172, %v3171
          %v3215 = vpack.c.b16 %v3174, %v3173
          %v3216 = vpack.c.b16 %v3176, %v3175
          %v3217 = vpack.c.b16 %v3178, %v3177
          %v3218 = vpack.c.b16 %v3180, %v3179
          %v3219 = vpack.c.b16 %v3182, %v3181
          %v3220 = vpack.c.b16 %v3184, %v3183
          %v3221 = vpack.c.b16 %v3186, %v3185
          %v3222 = vpack.c.b16 %v3188, %v3187
          %v3223 = vpack.c.b16 %v3190, %v3189
          %v3224 = vpack.c.b16 %v3192, %v3191
          %v3225 = vpack.c.b16 %v3194, %v3193
          %v3226 = vpack.c.b16 %v3196, %v3195
          %v3227 = vpack.c.b16 %v3198, %v3197
          %v3228 = vpack.c.b16 %v3200, %v3199
          %v3229 = vpack.c.b16 %v3202, %v3201
          %v3230 = vpack.c.b16 %v3204, %v3203
          %v3231 = vpack.c.b16 %v3206, %v3205
          %v3232 = vpack.c.b16 %v3208, %v3207
          %3257 = vmatpush.bf16.msra.mxu0 %v3216
          %3258 = vmatpush.bf16.msra.mxu0 %v3215
          %3259 = vmatpush.bf16.msra.mxu0 %v3214
          %3260 = vmatpush.bf16.msra.mxu0 %v3213
          %3261 = vmatpush.bf16.msra.mxu0 %v3212
          %3262 = vmatpush.bf16.msra.mxu0 %v3211
          %3263 = vmatpush.bf16.msra.mxu0 %v3210
          %3264 = vmatpush.bf16.msra.mxu0 %v3209
          %3265 = vmatmul.bf16.gmra.mxu0 %v3110
          %v3266 = vpop.f32.mrf.mxu0
          %v3267 = vadd.f32 0.0, %v3266
          %v3268 = vpop.f32.mrf.mxu0
          %v3269 = vadd.f32 0.0, %v3268
          %3270 = vdwg.mxu0
          %3271 = vmatpush.bf16.msra.mxu0 %v3224
          %3272 = vmatpush.bf16.msra.mxu0 %v3223
          %3273 = vmatpush.bf16.msra.mxu0 %v3222
          %3274 = vmatpush.bf16.msra.mxu0 %v3221
          %3275 = vmatpush.bf16.msra.mxu0 %v3220
          %3276 = vmatpush.bf16.msra.mxu0 %v3219
          %3277 = vmatpush.bf16.msra.mxu0 %v3218
          %3278 = vmatpush.bf16.msra.mxu0 %v3217
          %3279 = vmatmul.bf16.gmra.mxu0 %v3111
          %v3280 = vpop.f32.mrf.mxu0
          %v3281 = vadd.f32 %v3267, %v3280
          %v3282 = vpop.f32.mrf.mxu0
          %v3283 = vadd.f32 %v3269, %v3282
          %3284 = vdwg.mxu0
          %3285 = vmatpush.bf16.msra.mxu0 %v3232
          %3286 = vmatpush.bf16.msra.mxu0 %v3231
          %3287 = vmatpush.bf16.msra.mxu0 %v3230
          %3288 = vmatpush.bf16.msra.mxu0 %v3229
          %3289 = vmatpush.bf16.msra.mxu0 %v3228
          %3290 = vmatpush.bf16.msra.mxu0 %v3227
          %3291 = vmatpush.bf16.msra.mxu0 %v3226
          %3292 = vmatpush.bf16.msra.mxu0 %v3225
          %3293 = vmatmul.bf16.gmra.mxu0 %v3112
          %v3294 = vpop.f32.mrf.mxu0
          %v3295 = vadd.f32 %v3281, %v3294
          %v3296 = vpop.f32.mrf.mxu0
          %v3297 = vadd.f32 %v3283, %v3296
          %3298 = vdwg.mxu0
          %v3299 = vadd.f32 %v1661, %v3295
          %v3300 = vadd.f32 %v1662, %v3297
          %v3301 = vld [vmem:[%s1315] sm:$0x1]
          %v3302 = vmul.f32 %v3299, %v3299
          %v3303 = vmul.f32 %v3300, %v3300
          %3304 = vadd.xlane.f32.xlu0 %v3302
          %v3305 = vpop.xlane.xlu0 %3304
          %3306 = vadd.xlane.f32.xlu0 %v3303
          %v3307 = vpop.xlane.xlu0 %3306
          %v3308 = vmul.f32 %v3305, %v1676
          %v3309 = vmul.f32 %v3307, %v1676
          %v3310 = vadd.f32 %v3308, 1e-06
          %v3311 = vadd.f32 %v3309, 1e-06
          %v3312 = vrsqrt.pop %v3310
          %v3313 = vmul.f32 %v3312, %v3310
          %v3314 = vmul.f32 %v3313, %v3312
          %v3315 = vmul.f32 0.5, %v3314
          %v3316 = vsub.f32 1.5, %v3315
          %v3317 = vmul.f32 %v3312, %v3316
          %vm3318 = vweird.f32 %v3310
          %vm3319 = vweird.f32 %v3312
          %vm3320 = vmor %vm3318, %vm3319
          %v3321 = vsel %vm3320, %v3312, %v3317
          %v3322 = vrsqrt.pop %v3311
          %v3323 = vmul.f32 %v3322, %v3311
          %v3324 = vmul.f32 %v3323, %v3322
          %v3325 = vmul.f32 0.5, %v3324
          %v3326 = vsub.f32 1.5, %v3325
          %v3327 = vmul.f32 %v3322, %v3326
          %vm3328 = vweird.f32 %v3311
          %vm3329 = vweird.f32 %v3322
          %vm3330 = vmor %vm3328, %vm3329
          %v3331 = vsel %vm3330, %v3322, %v3327
          %v3332 = vmul.f32 %v3299, %v3321
          %v3333 = vmul.f32 %v3300, %v3331
          %v3335 = vperm.slane %v3301, 0
          %v3337 = vmul.f32 %v3332, %v3335
          %v3338 = vmul.f32 %v3333, %v3335
          %v3339 = vld [vmem:[%s1325] sm:$0xff]
          %v3340 = vld [vmem:[%s1325 + $0x8] sm:$0xff]
          %v3341 = vld [vmem:[%s1325 + $0x10] sm:$0xff]
          %v3342 = vld [vmem:[%s1325 + $0x18] sm:$0xff]
          %v3343 = vld [vmem:[%s1325 + $0x20] sm:$0xff]
          %v3344 = vld [vmem:[%s1325 + $0x28] sm:$0xff]
          %v3345 = vld [vmem:[%s1325 + $0x30] sm:$0xff]
          %v3346 = vld [vmem:[%s1325 + $0x38] sm:$0xff]
          %v3347 = vld [vmem:[%s1325 + $0x40] sm:$0xff]
          %v3348 = vld [vmem:[%s1325 + $0x48] sm:$0xff]
          %v3349 = vld [vmem:[%s1325 + $0x50] sm:$0xff]
          %v3350 = vld [vmem:[%s1325 + $0x58] sm:$0xff]
          %v3351 = vld [vmem:[%s1325 + $0x60] sm:$0xff]
          %v3352 = vld [vmem:[%s1325 + $0x68] sm:$0xff]
          %v3353 = vld [vmem:[%s1325 + $0x70] sm:$0xff]
          %v3354 = vld [vmem:[%s1325 + $0x78] sm:$0xff]
          %v3355 = vld [vmem:[%s1325 + $0x80] sm:$0xff]
          %v3356 = vld [vmem:[%s1325 + $0x88] sm:$0xff]
          %v3357 = vld [vmem:[%s1325 + $0x90] sm:$0xff]
          %v3358 = vld [vmem:[%s1325 + $0x98] sm:$0xff]
          %v3359 = vld [vmem:[%s1325 + $0xa0] sm:$0xff]
          %v3360 = vld [vmem:[%s1325 + $0xa8] sm:$0xff]
          %v3361 = vld [vmem:[%s1325 + $0xb0] sm:$0xff]
          %v3362 = vld [vmem:[%s1325 + $0xb8] sm:$0xff]
          %v3363 = vld [vmem:[%s1325 + $0xc0] sm:$0xff]
          %v3364 = vld [vmem:[%s1325 + $0xc8] sm:$0xff]
          %v3365 = vld [vmem:[%s1325 + $0xd0] sm:$0xff]
          %v3366 = vld [vmem:[%s1325 + $0xd8] sm:$0xff]
          %v3367 = vld [vmem:[%s1325 + $0xe0] sm:$0xff]
          %v3368 = vld [vmem:[%s1325 + $0xe8] sm:$0xff]
          %v3369 = vld [vmem:[%s1325 + $0xf0] sm:$0xff]
          %v3370 = vld [vmem:[%s1325 + $0xf8] sm:$0xff]
          %v3371 = vld [vmem:[%s1325 + $0x100] sm:$0xff]
          %v3372 = vld [vmem:[%s1325 + $0x108] sm:$0xff]
          %v3373 = vld [vmem:[%s1325 + $0x110] sm:$0xff]
          %v3374 = vld [vmem:[%s1325 + $0x118] sm:$0xff]
          %v3375 = vld [vmem:[%s1325 + $0x120] sm:$0xff]
          %v3376 = vld [vmem:[%s1325 + $0x128] sm:$0xff]
          %v3377 = vld [vmem:[%s1325 + $0x130] sm:$0xff]
          %v3378 = vld [vmem:[%s1325 + $0x138] sm:$0xff]
          %v3379 = vld [vmem:[%s1325 + $0x140] sm:$0xff]
          %v3380 = vld [vmem:[%s1325 + $0x148] sm:$0xff]
          %v3381 = vld [vmem:[%s1325 + $0x150] sm:$0xff]
          %v3382 = vld [vmem:[%s1325 + $0x158] sm:$0xff]
          %v3383 = vld [vmem:[%s1325 + $0x160] sm:$0xff]
          %v3384 = vld [vmem:[%s1325 + $0x168] sm:$0xff]
          %v3385 = vld [vmem:[%s1325 + $0x170] sm:$0xff]
          %v3386 = vld [vmem:[%s1325 + $0x178] sm:$0xff]
          %v3387 = vld [vmem:[%s1325 + $0x180] sm:$0xff]
          %v3388 = vld [vmem:[%s1325 + $0x188] sm:$0xff]
          %v3389 = vld [vmem:[%s1325 + $0x190] sm:$0xff]
          %v3390 = vld [vmem:[%s1325 + $0x198] sm:$0xff]
          %v3391 = vld [vmem:[%s1325 + $0x1a0] sm:$0xff]
          %v3392 = vld [vmem:[%s1325 + $0x1a8] sm:$0xff]
          %v3393 = vld [vmem:[%s1325 + $0x1b0] sm:$0xff]
          %v3394 = vld [vmem:[%s1325 + $0x1b8] sm:$0xff]
          %v3395 = vld [vmem:[%s1325 + $0x1c0] sm:$0xff]
          %v3396 = vld [vmem:[%s1325 + $0x1c8] sm:$0xff]
          %v3397 = vld [vmem:[%s1325 + $0x1d0] sm:$0xff]
          %v3398 = vld [vmem:[%s1325 + $0x1d8] sm:$0xff]
          %v3399 = vld [vmem:[%s1325 + $0x1e0] sm:$0xff]
          %v3400 = vld [vmem:[%s1325 + $0x1e8] sm:$0xff]
          %v3401 = vld [vmem:[%s1325 + $0x1f0] sm:$0xff]
          %v3402 = vld [vmem:[%s1325 + $0x1f8] sm:$0xff]
          %v3403 = vpack.c.bf16 %v3338, %v3337
          %v3468 = vunpack.c.l.b16 %v3339
          %v3469 = vunpack.c.h.b16 %v3339
          %v3470 = vunpack.c.l.b16 %v3340
          %v3471 = vunpack.c.h.b16 %v3340
          %v3472 = vunpack.c.l.b16 %v3341
          %v3473 = vunpack.c.h.b16 %v3341
          %v3474 = vunpack.c.l.b16 %v3342
          %v3475 = vunpack.c.h.b16 %v3342
          %v3476 = vunpack.c.l.b16 %v3343
          %v3477 = vunpack.c.h.b16 %v3343
          %v3478 = vunpack.c.l.b16 %v3344
          %v3479 = vunpack.c.h.b16 %v3344
          %v3480 = vunpack.c.l.b16 %v3345
          %v3481 = vunpack.c.h.b16 %v3345
          %v3482 = vunpack.c.l.b16 %v3346
          %v3483 = vunpack.c.h.b16 %v3346
          %v3484 = vunpack.c.l.b16 %v3347
          %v3485 = vunpack.c.h.b16 %v3347
          %v3486 = vunpack.c.l.b16 %v3348
          %v3487 = vunpack.c.h.b16 %v3348
          %v3488 = vunpack.c.l.b16 %v3349
          %v3489 = vunpack.c.h.b16 %v3349
          %v3490 = vunpack.c.l.b16 %v3350
          %v3491 = vunpack.c.h.b16 %v3350
          %v3492 = vunpack.c.l.b16 %v3351
          %v3493 = vunpack.c.h.b16 %v3351
          %v3494 = vunpack.c.l.b16 %v3352
          %v3495 = vunpack.c.h.b16 %v3352
          %v3496 = vunpack.c.l.b16 %v3353
          %v3497 = vunpack.c.h.b16 %v3353
          %v3498 = vunpack.c.l.b16 %v3354
          %v3499 = vunpack.c.h.b16 %v3354
          %v3500 = vunpack.c.l.b16 %v3355
          %v3501 = vunpack.c.h.b16 %v3355
          %v3502 = vunpack.c.l.b16 %v3356
          %v3503 = vunpack.c.h.b16 %v3356
          %v3504 = vunpack.c.l.b16 %v3357
          %v3505 = vunpack.c.h.b16 %v3357
          %v3506 = vunpack.c.l.b16 %v3358
          %v3507 = vunpack.c.h.b16 %v3358
          %v3508 = vunpack.c.l.b16 %v3359
          %v3509 = vunpack.c.h.b16 %v3359
          %v3510 = vunpack.c.l.b16 %v3360
          %v3511 = vunpack.c.h.b16 %v3360
          %v3512 = vunpack.c.l.b16 %v3361
          %v3513 = vunpack.c.h.b16 %v3361
          %v3514 = vunpack.c.l.b16 %v3362
          %v3515 = vunpack.c.h.b16 %v3362
          %v3516 = vunpack.c.l.b16 %v3363
          %v3517 = vunpack.c.h.b16 %v3363
          %v3518 = vunpack.c.l.b16 %v3364
          %v3519 = vunpack.c.h.b16 %v3364
          %v3520 = vunpack.c.l.b16 %v3365
          %v3521 = vunpack.c.h.b16 %v3365
          %v3522 = vunpack.c.l.b16 %v3366
          %v3523 = vunpack.c.h.b16 %v3366
          %v3524 = vunpack.c.l.b16 %v3367
          %v3525 = vunpack.c.h.b16 %v3367
          %v3526 = vunpack.c.l.b16 %v3368
          %v3527 = vunpack.c.h.b16 %v3368
          %v3528 = vunpack.c.l.b16 %v3369
          %v3529 = vunpack.c.h.b16 %v3369
          %v3530 = vunpack.c.l.b16 %v3370
          %v3531 = vunpack.c.h.b16 %v3370
          %v3532 = vunpack.c.l.b16 %v3371
          %v3533 = vunpack.c.h.b16 %v3371
          %v3534 = vunpack.c.l.b16 %v3372
          %v3535 = vunpack.c.h.b16 %v3372
          %v3536 = vunpack.c.l.b16 %v3373
          %v3537 = vunpack.c.h.b16 %v3373
          %v3538 = vunpack.c.l.b16 %v3374
          %v3539 = vunpack.c.h.b16 %v3374
          %v3540 = vunpack.c.l.b16 %v3375
          %v3541 = vunpack.c.h.b16 %v3375
          %v3542 = vunpack.c.l.b16 %v3376
          %v3543 = vunpack.c.h.b16 %v3376
          %v3544 = vunpack.c.l.b16 %v3377
          %v3545 = vunpack.c.h.b16 %v3377
          %v3546 = vunpack.c.l.b16 %v3378
          %v3547 = vunpack.c.h.b16 %v3378
          %v3548 = vunpack.c.l.b16 %v3379
          %v3549 = vunpack.c.h.b16 %v3379
          %v3550 = vunpack.c.l.b16 %v3380
          %v3551 = vunpack.c.h.b16 %v3380
          %v3552 = vunpack.c.l.b16 %v3381
          %v3553 = vunpack.c.h.b16 %v3381
          %v3554 = vunpack.c.l.b16 %v3382
          %v3555 = vunpack.c.h.b16 %v3382
          %v3556 = vunpack.c.l.b16 %v3383
          %v3557 = vunpack.c.h.b16 %v3383
          %v3558 = vunpack.c.l.b16 %v3384
          %v3559 = vunpack.c.h.b16 %v3384
          %v3560 = vunpack.c.l.b16 %v3385
          %v3561 = vunpack.c.h.b16 %v3385
          %v3562 = vunpack.c.l.b16 %v3386
          %v3563 = vunpack.c.h.b16 %v3386
          %v3564 = vunpack.c.l.b16 %v3387
          %v3565 = vunpack.c.h.b16 %v3387
          %v3566 = vunpack.c.l.b16 %v3388
          %v3567 = vunpack.c.h.b16 %v3388
          %v3568 = vunpack.c.l.b16 %v3389
          %v3569 = vunpack.c.h.b16 %v3389
          %v3570 = vunpack.c.l.b16 %v3390
          %v3571 = vunpack.c.h.b16 %v3390
          %v3572 = vunpack.c.l.b16 %v3391
          %v3573 = vunpack.c.h.b16 %v3391
          %v3574 = vunpack.c.l.b16 %v3392
          %v3575 = vunpack.c.h.b16 %v3392
          %v3576 = vunpack.c.l.b16 %v3393
          %v3577 = vunpack.c.h.b16 %v3393
          %v3578 = vunpack.c.l.b16 %v3394
          %v3579 = vunpack.c.h.b16 %v3394
          %v3580 = vunpack.c.l.b16 %v3395
          %v3581 = vunpack.c.h.b16 %v3395
          %v3582 = vunpack.c.l.b16 %v3396
          %v3583 = vunpack.c.h.b16 %v3396
          %v3584 = vunpack.c.l.b16 %v3397
          %v3585 = vunpack.c.h.b16 %v3397
          %v3586 = vunpack.c.l.b16 %v3398
          %v3587 = vunpack.c.h.b16 %v3398
          %v3588 = vunpack.c.l.b16 %v3399
          %v3589 = vunpack.c.h.b16 %v3399
          %v3590 = vunpack.c.l.b16 %v3400
          %v3591 = vunpack.c.h.b16 %v3400
          %v3592 = vunpack.c.l.b16 %v3401
          %v3593 = vunpack.c.h.b16 %v3401
          %v3594 = vunpack.c.l.b16 %v3402
          %v3595 = vunpack.c.h.b16 %v3402
          %v3596 = vpack.c.b16 %v3476, %v3468
          %v3597 = vpack.c.b16 %v3477, %v3469
          %v3598 = vpack.c.b16 %v3478, %v3470
          %v3599 = vpack.c.b16 %v3479, %v3471
          %v3600 = vpack.c.b16 %v3480, %v3472
          %v3601 = vpack.c.b16 %v3481, %v3473
          %v3602 = vpack.c.b16 %v3482, %v3474
          %v3603 = vpack.c.b16 %v3483, %v3475
          %v3604 = vpack.c.b16 %v3492, %v3484
          %v3605 = vpack.c.b16 %v3493, %v3485
          %v3606 = vpack.c.b16 %v3494, %v3486
          %v3607 = vpack.c.b16 %v3495, %v3487
          %v3608 = vpack.c.b16 %v3496, %v3488
          %v3609 = vpack.c.b16 %v3497, %v3489
          %v3610 = vpack.c.b16 %v3498, %v3490
          %v3611 = vpack.c.b16 %v3499, %v3491
          %v3612 = vpack.c.b16 %v3508, %v3500
          %v3613 = vpack.c.b16 %v3509, %v3501
          %v3614 = vpack.c.b16 %v3510, %v3502
          %v3615 = vpack.c.b16 %v3511, %v3503
          %v3616 = vpack.c.b16 %v3512, %v3504
          %v3617 = vpack.c.b16 %v3513, %v3505
          %v3618 = vpack.c.b16 %v3514, %v3506
          %v3619 = vpack.c.b16 %v3515, %v3507
          %v3620 = vpack.c.b16 %v3524, %v3516
          %v3621 = vpack.c.b16 %v3525, %v3517
          %v3622 = vpack.c.b16 %v3526, %v3518
          %v3623 = vpack.c.b16 %v3527, %v3519
          %v3624 = vpack.c.b16 %v3528, %v3520
          %v3625 = vpack.c.b16 %v3529, %v3521
          %v3626 = vpack.c.b16 %v3530, %v3522
          %v3627 = vpack.c.b16 %v3531, %v3523
          %v3628 = vpack.c.b16 %v3540, %v3532
          %v3629 = vpack.c.b16 %v3541, %v3533
          %v3630 = vpack.c.b16 %v3542, %v3534
          %v3631 = vpack.c.b16 %v3543, %v3535
          %v3632 = vpack.c.b16 %v3544, %v3536
          %v3633 = vpack.c.b16 %v3545, %v3537
          %v3634 = vpack.c.b16 %v3546, %v3538
          %v3635 = vpack.c.b16 %v3547, %v3539
          %v3636 = vpack.c.b16 %v3556, %v3548
          %v3637 = vpack.c.b16 %v3557, %v3549
          %v3638 = vpack.c.b16 %v3558, %v3550
          %v3639 = vpack.c.b16 %v3559, %v3551
          %v3640 = vpack.c.b16 %v3560, %v3552
          %v3641 = vpack.c.b16 %v3561, %v3553
          %v3642 = vpack.c.b16 %v3562, %v3554
          %v3643 = vpack.c.b16 %v3563, %v3555
          %v3644 = vpack.c.b16 %v3572, %v3564
          %v3645 = vpack.c.b16 %v3573, %v3565
          %v3646 = vpack.c.b16 %v3574, %v3566
          %v3647 = vpack.c.b16 %v3575, %v3567
          %v3648 = vpack.c.b16 %v3576, %v3568
          %v3649 = vpack.c.b16 %v3577, %v3569
          %v3650 = vpack.c.b16 %v3578, %v3570
          %v3651 = vpack.c.b16 %v3579, %v3571
          %v3652 = vpack.c.b16 %v3588, %v3580
          %v3653 = vpack.c.b16 %v3589, %v3581
          %v3654 = vpack.c.b16 %v3590, %v3582
          %v3655 = vpack.c.b16 %v3591, %v3583
          %v3656 = vpack.c.b16 %v3592, %v3584
          %v3657 = vpack.c.b16 %v3593, %v3585
          %v3658 = vpack.c.b16 %v3594, %v3586
          %v3659 = vpack.c.b16 %v3595, %v3587
          %3724 = vmatpush.bf16.msra.mxu0 %v3652
          %3725 = vmatpush.bf16.msra.mxu0 %v3644
          %3726 = vmatpush.bf16.msra.mxu0 %v3636
          %3727 = vmatpush.bf16.msra.mxu0 %v3628
          %3728 = vmatpush.bf16.msra.mxu0 %v3620
          %3729 = vmatpush.bf16.msra.mxu0 %v3612
          %3730 = vmatpush.bf16.msra.mxu0 %v3604
          %3731 = vmatpush.bf16.msra.mxu0 %v3596
          %3732 = vmatmul.bf16.gmra.mxu0 %v3403
          %v3733 = vpop.f32.mrf.mxu0
          %v3734 = vadd.f32 0.0, %v3733
          %v3735 = vpop.f32.mrf.mxu0
          %v3736 = vadd.f32 0.0, %v3735
          %3737 = vdwg.mxu0
          %3738 = vmatpush.bf16.msra.mxu0 %v3653
          %3739 = vmatpush.bf16.msra.mxu0 %v3645
          %3740 = vmatpush.bf16.msra.mxu0 %v3637
          %3741 = vmatpush.bf16.msra.mxu0 %v3629
          %3742 = vmatpush.bf16.msra.mxu0 %v3621
          %3743 = vmatpush.bf16.msra.mxu0 %v3613
          %3744 = vmatpush.bf16.msra.mxu0 %v3605
          %3745 = vmatpush.bf16.msra.mxu0 %v3597
          %3746 = vmatmul.bf16.gmra.mxu0 %v3403
          %v3747 = vpop.f32.mrf.mxu0
          %v3748 = vadd.f32 0.0, %v3747
          %v3749 = vpop.f32.mrf.mxu0
          %v3750 = vadd.f32 0.0, %v3749
          %3751 = vdwg.mxu0
          %3752 = vmatpush.bf16.msra.mxu0 %v3654
          %3753 = vmatpush.bf16.msra.mxu0 %v3646
          %3754 = vmatpush.bf16.msra.mxu0 %v3638
          %3755 = vmatpush.bf16.msra.mxu0 %v3630
          %3756 = vmatpush.bf16.msra.mxu0 %v3622
          %3757 = vmatpush.bf16.msra.mxu0 %v3614
          %3758 = vmatpush.bf16.msra.mxu0 %v3606
          %3759 = vmatpush.bf16.msra.mxu0 %v3598
          %3760 = vmatmul.bf16.gmra.mxu0 %v3403
          %v3761 = vpop.f32.mrf.mxu0
          %v3762 = vadd.f32 0.0, %v3761
          %v3763 = vpop.f32.mrf.mxu0
          %v3764 = vadd.f32 0.0, %v3763
          %3765 = vdwg.mxu0
          %3766 = vmatpush.bf16.msra.mxu0 %v3655
          %3767 = vmatpush.bf16.msra.mxu0 %v3647
          %3768 = vmatpush.bf16.msra.mxu0 %v3639
          %3769 = vmatpush.bf16.msra.mxu0 %v3631
          %3770 = vmatpush.bf16.msra.mxu0 %v3623
          %3771 = vmatpush.bf16.msra.mxu0 %v3615
          %3772 = vmatpush.bf16.msra.mxu0 %v3607
          %3773 = vmatpush.bf16.msra.mxu0 %v3599
          %3774 = vmatmul.bf16.gmra.mxu0 %v3403
          %v3775 = vpop.f32.mrf.mxu0
          %v3776 = vadd.f32 0.0, %v3775
          %v3777 = vpop.f32.mrf.mxu0
          %v3778 = vadd.f32 0.0, %v3777
          %3779 = vdwg.mxu0
          %3780 = vmatpush.bf16.msra.mxu0 %v3656
          %3781 = vmatpush.bf16.msra.mxu0 %v3648
          %3782 = vmatpush.bf16.msra.mxu0 %v3640
          %3783 = vmatpush.bf16.msra.mxu0 %v3632
          %3784 = vmatpush.bf16.msra.mxu0 %v3624
          %3785 = vmatpush.bf16.msra.mxu0 %v3616
          %3786 = vmatpush.bf16.msra.mxu0 %v3608
          %3787 = vmatpush.bf16.msra.mxu0 %v3600
          %3788 = vmatmul.bf16.gmra.mxu0 %v3403
          %v3789 = vpop.f32.mrf.mxu0
          %v3790 = vadd.f32 0.0, %v3789
          %v3791 = vpop.f32.mrf.mxu0
          %v3792 = vadd.f32 0.0, %v3791
          %3793 = vdwg.mxu0
          %3794 = vmatpush.bf16.msra.mxu0 %v3657
          %3795 = vmatpush.bf16.msra.mxu0 %v3649
          %3796 = vmatpush.bf16.msra.mxu0 %v3641
          %3797 = vmatpush.bf16.msra.mxu0 %v3633
          %3798 = vmatpush.bf16.msra.mxu0 %v3625
          %3799 = vmatpush.bf16.msra.mxu0 %v3617
          %3800 = vmatpush.bf16.msra.mxu0 %v3609
          %3801 = vmatpush.bf16.msra.mxu0 %v3601
          %3802 = vmatmul.bf16.gmra.mxu0 %v3403
          %v3803 = vpop.f32.mrf.mxu0
          %v3804 = vadd.f32 0.0, %v3803
          %v3805 = vpop.f32.mrf.mxu0
          %v3806 = vadd.f32 0.0, %v3805
          %3807 = vdwg.mxu0
          %3808 = vmatpush.bf16.msra.mxu0 %v3658
          %3809 = vmatpush.bf16.msra.mxu0 %v3650
          %3810 = vmatpush.bf16.msra.mxu0 %v3642
          %3811 = vmatpush.bf16.msra.mxu0 %v3634
          %3812 = vmatpush.bf16.msra.mxu0 %v3626
          %3813 = vmatpush.bf16.msra.mxu0 %v3618
          %3814 = vmatpush.bf16.msra.mxu0 %v3610
          %3815 = vmatpush.bf16.msra.mxu0 %v3602
          %3816 = vmatmul.bf16.gmra.mxu0 %v3403
          %v3817 = vpop.f32.mrf.mxu0
          %v3818 = vadd.f32 0.0, %v3817
          %v3819 = vpop.f32.mrf.mxu0
          %v3820 = vadd.f32 0.0, %v3819
          %3821 = vdwg.mxu0
          %3822 = vmatpush.bf16.msra.mxu0 %v3659
          %3823 = vmatpush.bf16.msra.mxu0 %v3651
          %3824 = vmatpush.bf16.msra.mxu0 %v3643
          %3825 = vmatpush.bf16.msra.mxu0 %v3635
          %3826 = vmatpush.bf16.msra.mxu0 %v3627
          %3827 = vmatpush.bf16.msra.mxu0 %v3619
          %3828 = vmatpush.bf16.msra.mxu0 %v3611
          %3829 = vmatpush.bf16.msra.mxu0 %v3603
          %3830 = vmatmul.bf16.gmra.mxu0 %v3403
          %v3831 = vpop.f32.mrf.mxu0
          %v3832 = vadd.f32 0.0, %v3831
          %v3833 = vpop.f32.mrf.mxu0
          %v3834 = vadd.f32 0.0, %v3833
          %3835 = vdwg.mxu0
          %v3836 = vmax.f32 %v3734, 0.0
          %v3837 = vmax.f32 %v3748, 0.0
          %v3838 = vmax.f32 %v3762, 0.0
          %v3839 = vmax.f32 %v3776, 0.0
          %v3840 = vmax.f32 %v3790, 0.0
          %v3841 = vmax.f32 %v3804, 0.0
          %v3842 = vmax.f32 %v3818, 0.0
          %v3843 = vmax.f32 %v3832, 0.0
          %v3844 = vmax.f32 %v3736, 0.0
          %v3845 = vmax.f32 %v3750, 0.0
          %v3846 = vmax.f32 %v3764, 0.0
          %v3847 = vmax.f32 %v3778, 0.0
          %v3848 = vmax.f32 %v3792, 0.0
          %v3849 = vmax.f32 %v3806, 0.0
          %v3850 = vmax.f32 %v3820, 0.0
          %v3851 = vmax.f32 %v3834, 0.0
          %v3852 = vld [vmem:[%s1335] sm:$0xf]
          %v3853 = vld [vmem:[%s1335 + $0x4] sm:$0xf]
          %v3854 = vld [vmem:[%s1335 + $0x8] sm:$0xf]
          %v3855 = vld [vmem:[%s1335 + $0xc] sm:$0xf]
          %v3856 = vld [vmem:[%s1335 + $0x10] sm:$0xf]
          %v3857 = vld [vmem:[%s1335 + $0x14] sm:$0xf]
          %v3858 = vld [vmem:[%s1335 + $0x18] sm:$0xf]
          %v3859 = vld [vmem:[%s1335 + $0x1c] sm:$0xf]
          %v3860 = vld [vmem:[%s1335 + $0x20] sm:$0xf]
          %v3861 = vld [vmem:[%s1335 + $0x24] sm:$0xf]
          %v3862 = vld [vmem:[%s1335 + $0x28] sm:$0xf]
          %v3863 = vld [vmem:[%s1335 + $0x2c] sm:$0xf]
          %v3864 = vld [vmem:[%s1335 + $0x30] sm:$0xf]
          %v3865 = vld [vmem:[%s1335 + $0x34] sm:$0xf]
          %v3866 = vld [vmem:[%s1335 + $0x38] sm:$0xf]
          %v3867 = vld [vmem:[%s1335 + $0x3c] sm:$0xf]
          %v3868 = vld [vmem:[%s1335 + $0x40] sm:$0xf]
          %v3869 = vld [vmem:[%s1335 + $0x44] sm:$0xf]
          %v3870 = vld [vmem:[%s1335 + $0x48] sm:$0xf]
          %v3871 = vld [vmem:[%s1335 + $0x4c] sm:$0xf]
          %v3872 = vld [vmem:[%s1335 + $0x50] sm:$0xf]
          %v3873 = vld [vmem:[%s1335 + $0x54] sm:$0xf]
          %v3874 = vld [vmem:[%s1335 + $0x58] sm:$0xf]
          %v3875 = vld [vmem:[%s1335 + $0x5c] sm:$0xf]
          %v3876 = vld [vmem:[%s1335 + $0x60] sm:$0xf]
          %v3877 = vld [vmem:[%s1335 + $0x64] sm:$0xf]
          %v3878 = vld [vmem:[%s1335 + $0x68] sm:$0xf]
          %v3879 = vld [vmem:[%s1335 + $0x6c] sm:$0xf]
          %v3880 = vld [vmem:[%s1335 + $0x70] sm:$0xf]
          %v3881 = vld [vmem:[%s1335 + $0x74] sm:$0xf]
          %v3882 = vld [vmem:[%s1335 + $0x78] sm:$0xf]
          %v3883 = vld [vmem:[%s1335 + $0x7c] sm:$0xf]
          %v3884 = vld [vmem:[%s1335 + $0x80] sm:$0xf]
          %v3885 = vld [vmem:[%s1335 + $0x84] sm:$0xf]
          %v3886 = vld [vmem:[%s1335 + $0x88] sm:$0xf]
          %v3887 = vld [vmem:[%s1335 + $0x8c] sm:$0xf]
          %v3888 = vld [vmem:[%s1335 + $0x90] sm:$0xf]
          %v3889 = vld [vmem:[%s1335 + $0x94] sm:$0xf]
          %v3890 = vld [vmem:[%s1335 + $0x98] sm:$0xf]
          %v3891 = vld [vmem:[%s1335 + $0x9c] sm:$0xf]
          %v3892 = vld [vmem:[%s1335 + $0xa0] sm:$0xf]
          %v3893 = vld [vmem:[%s1335 + $0xa4] sm:$0xf]
          %v3894 = vld [vmem:[%s1335 + $0xa8] sm:$0xf]
          %v3895 = vld [vmem:[%s1335 + $0xac] sm:$0xf]
          %v3896 = vld [vmem:[%s1335 + $0xb0] sm:$0xf]
          %v3897 = vld [vmem:[%s1335 + $0xb4] sm:$0xf]
          %v3898 = vld [vmem:[%s1335 + $0xb8] sm:$0xf]
          %v3899 = vld [vmem:[%s1335 + $0xbc] sm:$0xf]
          %v3900 = vld [vmem:[%s1335 + $0xc0] sm:$0xf]
          %v3901 = vld [vmem:[%s1335 + $0xc4] sm:$0xf]
          %v3902 = vld [vmem:[%s1335 + $0xc8] sm:$0xf]
          %v3903 = vld [vmem:[%s1335 + $0xcc] sm:$0xf]
          %v3904 = vld [vmem:[%s1335 + $0xd0] sm:$0xf]
          %v3905 = vld [vmem:[%s1335 + $0xd4] sm:$0xf]
          %v3906 = vld [vmem:[%s1335 + $0xd8] sm:$0xf]
          %v3907 = vld [vmem:[%s1335 + $0xdc] sm:$0xf]
          %v3908 = vld [vmem:[%s1335 + $0xe0] sm:$0xf]
          %v3909 = vld [vmem:[%s1335 + $0xe4] sm:$0xf]
          %v3910 = vld [vmem:[%s1335 + $0xe8] sm:$0xf]
          %v3911 = vld [vmem:[%s1335 + $0xec] sm:$0xf]
          %v3912 = vld [vmem:[%s1335 + $0xf0] sm:$0xf]
          %v3913 = vld [vmem:[%s1335 + $0xf4] sm:$0xf]
          %v3914 = vld [vmem:[%s1335 + $0xf8] sm:$0xf]
          %v3915 = vld [vmem:[%s1335 + $0xfc] sm:$0xf]
          %v3916 = vld [vmem:[%s1335 + $0x100] sm:$0xf]
          %v3917 = vld [vmem:[%s1335 + $0x104] sm:$0xf]
          %v3918 = vld [vmem:[%s1335 + $0x108] sm:$0xf]
          %v3919 = vld [vmem:[%s1335 + $0x10c] sm:$0xf]
          %v3920 = vld [vmem:[%s1335 + $0x110] sm:$0xf]
          %v3921 = vld [vmem:[%s1335 + $0x114] sm:$0xf]
          %v3922 = vld [vmem:[%s1335 + $0x118] sm:$0xf]
          %v3923 = vld [vmem:[%s1335 + $0x11c] sm:$0xf]
          %v3924 = vld [vmem:[%s1335 + $0x120] sm:$0xf]
          %v3925 = vld [vmem:[%s1335 + $0x124] sm:$0xf]
          %v3926 = vld [vmem:[%s1335 + $0x128] sm:$0xf]
          %v3927 = vld [vmem:[%s1335 + $0x12c] sm:$0xf]
          %v3928 = vld [vmem:[%s1335 + $0x130] sm:$0xf]
          %v3929 = vld [vmem:[%s1335 + $0x134] sm:$0xf]
          %v3930 = vld [vmem:[%s1335 + $0x138] sm:$0xf]
          %v3931 = vld [vmem:[%s1335 + $0x13c] sm:$0xf]
          %v3932 = vld [vmem:[%s1335 + $0x140] sm:$0xf]
          %v3933 = vld [vmem:[%s1335 + $0x144] sm:$0xf]
          %v3934 = vld [vmem:[%s1335 + $0x148] sm:$0xf]
          %v3935 = vld [vmem:[%s1335 + $0x14c] sm:$0xf]
          %v3936 = vld [vmem:[%s1335 + $0x150] sm:$0xf]
          %v3937 = vld [vmem:[%s1335 + $0x154] sm:$0xf]
          %v3938 = vld [vmem:[%s1335 + $0x158] sm:$0xf]
          %v3939 = vld [vmem:[%s1335 + $0x15c] sm:$0xf]
          %v3940 = vld [vmem:[%s1335 + $0x160] sm:$0xf]
          %v3941 = vld [vmem:[%s1335 + $0x164] sm:$0xf]
          %v3942 = vld [vmem:[%s1335 + $0x168] sm:$0xf]
          %v3943 = vld [vmem:[%s1335 + $0x16c] sm:$0xf]
          %v3944 = vld [vmem:[%s1335 + $0x170] sm:$0xf]
          %v3945 = vld [vmem:[%s1335 + $0x174] sm:$0xf]
          %v3946 = vld [vmem:[%s1335 + $0x178] sm:$0xf]
          %v3947 = vld [vmem:[%s1335 + $0x17c] sm:$0xf]
          %v3948 = vld [vmem:[%s1335 + $0x180] sm:$0xf]
          %v3949 = vld [vmem:[%s1335 + $0x184] sm:$0xf]
          %v3950 = vld [vmem:[%s1335 + $0x188] sm:$0xf]
          %v3951 = vld [vmem:[%s1335 + $0x18c] sm:$0xf]
          %v3952 = vld [vmem:[%s1335 + $0x190] sm:$0xf]
          %v3953 = vld [vmem:[%s1335 + $0x194] sm:$0xf]
          %v3954 = vld [vmem:[%s1335 + $0x198] sm:$0xf]
          %v3955 = vld [vmem:[%s1335 + $0x19c] sm:$0xf]
          %v3956 = vld [vmem:[%s1335 + $0x1a0] sm:$0xf]
          %v3957 = vld [vmem:[%s1335 + $0x1a4] sm:$0xf]
          %v3958 = vld [vmem:[%s1335 + $0x1a8] sm:$0xf]
          %v3959 = vld [vmem:[%s1335 + $0x1ac] sm:$0xf]
          %v3960 = vld [vmem:[%s1335 + $0x1b0] sm:$0xf]
          %v3961 = vld [vmem:[%s1335 + $0x1b4] sm:$0xf]
          %v3962 = vld [vmem:[%s1335 + $0x1b8] sm:$0xf]
          %v3963 = vld [vmem:[%s1335 + $0x1bc] sm:$0xf]
          %v3964 = vld [vmem:[%s1335 + $0x1c0] sm:$0xf]
          %v3965 = vld [vmem:[%s1335 + $0x1c4] sm:$0xf]
          %v3966 = vld [vmem:[%s1335 + $0x1c8] sm:$0xf]
          %v3967 = vld [vmem:[%s1335 + $0x1cc] sm:$0xf]
          %v3968 = vld [vmem:[%s1335 + $0x1d0] sm:$0xf]
          %v3969 = vld [vmem:[%s1335 + $0x1d4] sm:$0xf]
          %v3970 = vld [vmem:[%s1335 + $0x1d8] sm:$0xf]
          %v3971 = vld [vmem:[%s1335 + $0x1dc] sm:$0xf]
          %v3972 = vld [vmem:[%s1335 + $0x1e0] sm:$0xf]
          %v3973 = vld [vmem:[%s1335 + $0x1e4] sm:$0xf]
          %v3974 = vld [vmem:[%s1335 + $0x1e8] sm:$0xf]
          %v3975 = vld [vmem:[%s1335 + $0x1ec] sm:$0xf]
          %v3976 = vld [vmem:[%s1335 + $0x1f0] sm:$0xf]
          %v3977 = vld [vmem:[%s1335 + $0x1f4] sm:$0xf]
          %v3978 = vld [vmem:[%s1335 + $0x1f8] sm:$0xf]
          %v3979 = vld [vmem:[%s1335 + $0x1fc] sm:$0xf]
          %v3980 = vpack.c.bf16 %v3844, %v3836
          %v3981 = vpack.c.bf16 %v3845, %v3837
          %v3982 = vpack.c.bf16 %v3846, %v3838
          %v3983 = vpack.c.bf16 %v3847, %v3839
          %v3984 = vpack.c.bf16 %v3848, %v3840
          %v3985 = vpack.c.bf16 %v3849, %v3841
          %v3986 = vpack.c.bf16 %v3850, %v3842
          %v3987 = vpack.c.bf16 %v3851, %v3843
          %v4116 = vunpack.c.l.b16 %v3852
          %v4117 = vunpack.c.l.b16 %v3853
          %v4118 = vunpack.c.l.b16 %v3854
          %v4119 = vunpack.c.l.b16 %v3855
          %v4120 = vunpack.c.l.b16 %v3856
          %v4121 = vunpack.c.l.b16 %v3857
          %v4122 = vunpack.c.l.b16 %v3858
          %v4123 = vunpack.c.l.b16 %v3859
          %v4124 = vunpack.c.l.b16 %v3860
          %v4125 = vunpack.c.l.b16 %v3861
          %v4126 = vunpack.c.l.b16 %v3862
          %v4127 = vunpack.c.l.b16 %v3863
          %v4128 = vunpack.c.l.b16 %v3864
          %v4129 = vunpack.c.l.b16 %v3865
          %v4130 = vunpack.c.l.b16 %v3866
          %v4131 = vunpack.c.l.b16 %v3867
          %v4132 = vunpack.c.l.b16 %v3868
          %v4133 = vunpack.c.l.b16 %v3869
          %v4134 = vunpack.c.l.b16 %v3870
          %v4135 = vunpack.c.l.b16 %v3871
          %v4136 = vunpack.c.l.b16 %v3872
          %v4137 = vunpack.c.l.b16 %v3873
          %v4138 = vunpack.c.l.b16 %v3874
          %v4139 = vunpack.c.l.b16 %v3875
          %v4140 = vunpack.c.l.b16 %v3876
          %v4141 = vunpack.c.l.b16 %v3877
          %v4142 = vunpack.c.l.b16 %v3878
          %v4143 = vunpack.c.l.b16 %v3879
          %v4144 = vunpack.c.l.b16 %v3880
          %v4145 = vunpack.c.l.b16 %v3881
          %v4146 = vunpack.c.l.b16 %v3882
          %v4147 = vunpack.c.l.b16 %v3883
          %v4148 = vunpack.c.l.b16 %v3884
          %v4149 = vunpack.c.l.b16 %v3885
          %v4150 = vunpack.c.l.b16 %v3886
          %v4151 = vunpack.c.l.b16 %v3887
          %v4152 = vunpack.c.l.b16 %v3888
          %v4153 = vunpack.c.l.b16 %v3889
          %v4154 = vunpack.c.l.b16 %v3890
          %v4155 = vunpack.c.l.b16 %v3891
          %v4156 = vunpack.c.l.b16 %v3892
          %v4157 = vunpack.c.l.b16 %v3893
          %v4158 = vunpack.c.l.b16 %v3894
          %v4159 = vunpack.c.l.b16 %v3895
          %v4160 = vunpack.c.l.b16 %v3896
          %v4161 = vunpack.c.l.b16 %v3897
          %v4162 = vunpack.c.l.b16 %v3898
          %v4163 = vunpack.c.l.b16 %v3899
          %v4164 = vunpack.c.l.b16 %v3900
          %v4165 = vunpack.c.l.b16 %v3901
          %v4166 = vunpack.c.l.b16 %v3902
          %v4167 = vunpack.c.l.b16 %v3903
          %v4168 = vunpack.c.l.b16 %v3904
          %v4169 = vunpack.c.l.b16 %v3905
          %v4170 = vunpack.c.l.b16 %v3906
          %v4171 = vunpack.c.l.b16 %v3907
          %v4172 = vunpack.c.l.b16 %v3908
          %v4173 = vunpack.c.l.b16 %v3909
          %v4174 = vunpack.c.l.b16 %v3910
          %v4175 = vunpack.c.l.b16 %v3911
          %v4176 = vunpack.c.l.b16 %v3912
          %v4177 = vunpack.c.l.b16 %v3913
          %v4178 = vunpack.c.l.b16 %v3914
          %v4179 = vunpack.c.l.b16 %v3915
          %v4180 = vunpack.c.l.b16 %v3916
          %v4181 = vunpack.c.l.b16 %v3917
          %v4182 = vunpack.c.l.b16 %v3918
          %v4183 = vunpack.c.l.b16 %v3919
          %v4184 = vunpack.c.l.b16 %v3920
          %v4185 = vunpack.c.l.b16 %v3921
          %v4186 = vunpack.c.l.b16 %v3922
          %v4187 = vunpack.c.l.b16 %v3923
          %v4188 = vunpack.c.l.b16 %v3924
          %v4189 = vunpack.c.l.b16 %v3925
          %v4190 = vunpack.c.l.b16 %v3926
          %v4191 = vunpack.c.l.b16 %v3927
          %v4192 = vunpack.c.l.b16 %v3928
          %v4193 = vunpack.c.l.b16 %v3929
          %v4194 = vunpack.c.l.b16 %v3930
          %v4195 = vunpack.c.l.b16 %v3931
          %v4196 = vunpack.c.l.b16 %v3932
          %v4197 = vunpack.c.l.b16 %v3933
          %v4198 = vunpack.c.l.b16 %v3934
          %v4199 = vunpack.c.l.b16 %v3935
          %v4200 = vunpack.c.l.b16 %v3936
          %v4201 = vunpack.c.l.b16 %v3937
          %v4202 = vunpack.c.l.b16 %v3938
          %v4203 = vunpack.c.l.b16 %v3939
          %v4204 = vunpack.c.l.b16 %v3940
          %v4205 = vunpack.c.l.b16 %v3941
          %v4206 = vunpack.c.l.b16 %v3942
          %v4207 = vunpack.c.l.b16 %v3943
          %v4208 = vunpack.c.l.b16 %v3944
          %v4209 = vunpack.c.l.b16 %v3945
          %v4210 = vunpack.c.l.b16 %v3946
          %v4211 = vunpack.c.l.b16 %v3947
          %v4212 = vunpack.c.l.b16 %v3948
          %v4213 = vunpack.c.l.b16 %v3949
          %v4214 = vunpack.c.l.b16 %v3950
          %v4215 = vunpack.c.l.b16 %v3951
          %v4216 = vunpack.c.l.b16 %v3952
          %v4217 = vunpack.c.l.b16 %v3953
          %v4218 = vunpack.c.l.b16 %v3954
          %v4219 = vunpack.c.l.b16 %v3955
          %v4220 = vunpack.c.l.b16 %v3956
          %v4221 = vunpack.c.l.b16 %v3957
          %v4222 = vunpack.c.l.b16 %v3958
          %v4223 = vunpack.c.l.b16 %v3959
          %v4224 = vunpack.c.l.b16 %v3960
          %v4225 = vunpack.c.l.b16 %v3961
          %v4226 = vunpack.c.l.b16 %v3962
          %v4227 = vunpack.c.l.b16 %v3963
          %v4228 = vunpack.c.l.b16 %v3964
          %v4229 = vunpack.c.l.b16 %v3965
          %v4230 = vunpack.c.l.b16 %v3966
          %v4231 = vunpack.c.l.b16 %v3967
          %v4232 = vunpack.c.l.b16 %v3968
          %v4233 = vunpack.c.l.b16 %v3969
          %v4234 = vunpack.c.l.b16 %v3970
          %v4235 = vunpack.c.l.b16 %v3971
          %v4236 = vunpack.c.l.b16 %v3972
          %v4237 = vunpack.c.l.b16 %v3973
          %v4238 = vunpack.c.l.b16 %v3974
          %v4239 = vunpack.c.l.b16 %v3975
          %v4240 = vunpack.c.l.b16 %v3976
          %v4241 = vunpack.c.l.b16 %v3977
          %v4242 = vunpack.c.l.b16 %v3978
          %v4243 = vunpack.c.l.b16 %v3979
          %v4244 = vpack.c.b16 %v4117, %v4116
          %v4245 = vpack.c.b16 %v4119, %v4118
          %v4246 = vpack.c.b16 %v4121, %v4120
          %v4247 = vpack.c.b16 %v4123, %v4122
          %v4248 = vpack.c.b16 %v4125, %v4124
          %v4249 = vpack.c.b16 %v4127, %v4126
          %v4250 = vpack.c.b16 %v4129, %v4128
          %v4251 = vpack.c.b16 %v4131, %v4130
          %v4252 = vpack.c.b16 %v4133, %v4132
          %v4253 = vpack.c.b16 %v4135, %v4134
          %v4254 = vpack.c.b16 %v4137, %v4136
          %v4255 = vpack.c.b16 %v4139, %v4138
          %v4256 = vpack.c.b16 %v4141, %v4140
          %v4257 = vpack.c.b16 %v4143, %v4142
          %v4258 = vpack.c.b16 %v4145, %v4144
          %v4259 = vpack.c.b16 %v4147, %v4146
          %v4260 = vpack.c.b16 %v4149, %v4148
          %v4261 = vpack.c.b16 %v4151, %v4150
          %v4262 = vpack.c.b16 %v4153, %v4152
          %v4263 = vpack.c.b16 %v4155, %v4154
          %v4264 = vpack.c.b16 %v4157, %v4156
          %v4265 = vpack.c.b16 %v4159, %v4158
          %v4266 = vpack.c.b16 %v4161, %v4160
          %v4267 = vpack.c.b16 %v4163, %v4162
          %v4268 = vpack.c.b16 %v4165, %v4164
          %v4269 = vpack.c.b16 %v4167, %v4166
          %v4270 = vpack.c.b16 %v4169, %v4168
          %v4271 = vpack.c.b16 %v4171, %v4170
          %v4272 = vpack.c.b16 %v4173, %v4172
          %v4273 = vpack.c.b16 %v4175, %v4174
          %v4274 = vpack.c.b16 %v4177, %v4176
          %v4275 = vpack.c.b16 %v4179, %v4178
          %v4276 = vpack.c.b16 %v4181, %v4180
          %v4277 = vpack.c.b16 %v4183, %v4182
          %v4278 = vpack.c.b16 %v4185, %v4184
          %v4279 = vpack.c.b16 %v4187, %v4186
          %v4280 = vpack.c.b16 %v4189, %v4188
          %v4281 = vpack.c.b16 %v4191, %v4190
          %v4282 = vpack.c.b16 %v4193, %v4192
          %v4283 = vpack.c.b16 %v4195, %v4194
          %v4284 = vpack.c.b16 %v4197, %v4196
          %v4285 = vpack.c.b16 %v4199, %v4198
          %v4286 = vpack.c.b16 %v4201, %v4200
          %v4287 = vpack.c.b16 %v4203, %v4202
          %v4288 = vpack.c.b16 %v4205, %v4204
          %v4289 = vpack.c.b16 %v4207, %v4206
          %v4290 = vpack.c.b16 %v4209, %v4208
          %v4291 = vpack.c.b16 %v4211, %v4210
          %v4292 = vpack.c.b16 %v4213, %v4212
          %v4293 = vpack.c.b16 %v4215, %v4214
          %v4294 = vpack.c.b16 %v4217, %v4216
          %v4295 = vpack.c.b16 %v4219, %v4218
          %v4296 = vpack.c.b16 %v4221, %v4220
          %v4297 = vpack.c.b16 %v4223, %v4222
          %v4298 = vpack.c.b16 %v4225, %v4224
          %v4299 = vpack.c.b16 %v4227, %v4226
          %v4300 = vpack.c.b16 %v4229, %v4228
          %v4301 = vpack.c.b16 %v4231, %v4230
          %v4302 = vpack.c.b16 %v4233, %v4232
          %v4303 = vpack.c.b16 %v4235, %v4234
          %v4304 = vpack.c.b16 %v4237, %v4236
          %v4305 = vpack.c.b16 %v4239, %v4238
          %v4306 = vpack.c.b16 %v4241, %v4240
          %v4307 = vpack.c.b16 %v4243, %v4242
          %4372 = vmatpush.bf16.msra.mxu0 %v4251
          %4373 = vmatpush.bf16.msra.mxu0 %v4250
          %4374 = vmatpush.bf16.msra.mxu0 %v4249
          %4375 = vmatpush.bf16.msra.mxu0 %v4248
          %4376 = vmatpush.bf16.msra.mxu0 %v4247
          %4377 = vmatpush.bf16.msra.mxu0 %v4246
          %4378 = vmatpush.bf16.msra.mxu0 %v4245
          %4379 = vmatpush.bf16.msra.mxu0 %v4244
          %4380 = vmatmul.bf16.gmra.mxu0 %v3980
          %v4381 = vpop.f32.mrf.mxu0
          %v4382 = vadd.f32 0.0, %v4381
          %v4383 = vpop.f32.mrf.mxu0
          %v4384 = vadd.f32 0.0, %v4383
          %4385 = vdwg.mxu0
          %4386 = vmatpush.bf16.msra.mxu0 %v4259
          %4387 = vmatpush.bf16.msra.mxu0 %v4258
          %4388 = vmatpush.bf16.msra.mxu0 %v4257
          %4389 = vmatpush.bf16.msra.mxu0 %v4256
          %4390 = vmatpush.bf16.msra.mxu0 %v4255
          %4391 = vmatpush.bf16.msra.mxu0 %v4254
          %4392 = vmatpush.bf16.msra.mxu0 %v4253
          %4393 = vmatpush.bf16.msra.mxu0 %v4252
          %4394 = vmatmul.bf16.gmra.mxu0 %v3981
          %v4395 = vpop.f32.mrf.mxu0
          %v4396 = vadd.f32 %v4382, %v4395
          %v4397 = vpop.f32.mrf.mxu0
          %v4398 = vadd.f32 %v4384, %v4397
          %4399 = vdwg.mxu0
          %4400 = vmatpush.bf16.msra.mxu0 %v4267
          %4401 = vmatpush.bf16.msra.mxu0 %v4266
          %4402 = vmatpush.bf16.msra.mxu0 %v4265
          %4403 = vmatpush.bf16.msra.mxu0 %v4264
          %4404 = vmatpush.bf16.msra.mxu0 %v4263
          %4405 = vmatpush.bf16.msra.mxu0 %v4262
          %4406 = vmatpush.bf16.msra.mxu0 %v4261
          %4407 = vmatpush.bf16.msra.mxu0 %v4260
          %4408 = vmatmul.bf16.gmra.mxu0 %v3982
          %v4409 = vpop.f32.mrf.mxu0
          %v4410 = vadd.f32 %v4396, %v4409
          %v4411 = vpop.f32.mrf.mxu0
          %v4412 = vadd.f32 %v4398, %v4411
          %4413 = vdwg.mxu0
          %4414 = vmatpush.bf16.msra.mxu0 %v4275
          %4415 = vmatpush.bf16.msra.mxu0 %v4274
          %4416 = vmatpush.bf16.msra.mxu0 %v4273
          %4417 = vmatpush.bf16.msra.mxu0 %v4272
          %4418 = vmatpush.bf16.msra.mxu0 %v4271
          %4419 = vmatpush.bf16.msra.mxu0 %v4270
          %4420 = vmatpush.bf16.msra.mxu0 %v4269
          %4421 = vmatpush.bf16.msra.mxu0 %v4268
          %4422 = vmatmul.bf16.gmra.mxu0 %v3983
          %v4423 = vpop.f32.mrf.mxu0
          %v4424 = vadd.f32 %v4410, %v4423
          %v4425 = vpop.f32.mrf.mxu0
          %v4426 = vadd.f32 %v4412, %v4425
          %4427 = vdwg.mxu0
          %4428 = vmatpush.bf16.msra.mxu0 %v4283
          %4429 = vmatpush.bf16.msra.mxu0 %v4282
          %4430 = vmatpush.bf16.msra.mxu0 %v4281
          %4431 = vmatpush.bf16.msra.mxu0 %v4280
          %4432 = vmatpush.bf16.msra.mxu0 %v4279
          %4433 = vmatpush.bf16.msra.mxu0 %v4278
          %4434 = vmatpush.bf16.msra.mxu0 %v4277
          %4435 = vmatpush.bf16.msra.mxu0 %v4276
          %4436 = vmatmul.bf16.gmra.mxu0 %v3984
          %v4437 = vpop.f32.mrf.mxu0
          %v4438 = vadd.f32 %v4424, %v4437
          %v4439 = vpop.f32.mrf.mxu0
          %v4440 = vadd.f32 %v4426, %v4439
          %4441 = vdwg.mxu0
          %4442 = vmatpush.bf16.msra.mxu0 %v4291
          %4443 = vmatpush.bf16.msra.mxu0 %v4290
          %4444 = vmatpush.bf16.msra.mxu0 %v4289
          %4445 = vmatpush.bf16.msra.mxu0 %v4288
          %4446 = vmatpush.bf16.msra.mxu0 %v4287
          %4447 = vmatpush.bf16.msra.mxu0 %v4286
          %4448 = vmatpush.bf16.msra.mxu0 %v4285
          %4449 = vmatpush.bf16.msra.mxu0 %v4284
          %4450 = vmatmul.bf16.gmra.mxu0 %v3985
          %v4451 = vpop.f32.mrf.mxu0
          %v4452 = vadd.f32 %v4438, %v4451
          %v4453 = vpop.f32.mrf.mxu0
          %v4454 = vadd.f32 %v4440, %v4453
          %4455 = vdwg.mxu0
          %4456 = vmatpush.bf16.msra.mxu0 %v4299
          %4457 = vmatpush.bf16.msra.mxu0 %v4298
          %4458 = vmatpush.bf16.msra.mxu0 %v4297
          %4459 = vmatpush.bf16.msra.mxu0 %v4296
          %4460 = vmatpush.bf16.msra.mxu0 %v4295
          %4461 = vmatpush.bf16.msra.mxu0 %v4294
          %4462 = vmatpush.bf16.msra.mxu0 %v4293
          %4463 = vmatpush.bf16.msra.mxu0 %v4292
          %4464 = vmatmul.bf16.gmra.mxu0 %v3986
          %v4465 = vpop.f32.mrf.mxu0
          %v4466 = vadd.f32 %v4452, %v4465
          %v4467 = vpop.f32.mrf.mxu0
          %v4468 = vadd.f32 %v4454, %v4467
          %4469 = vdwg.mxu0
          %4470 = vmatpush.bf16.msra.mxu0 %v4307
          %4471 = vmatpush.bf16.msra.mxu0 %v4306
          %4472 = vmatpush.bf16.msra.mxu0 %v4305
          %4473 = vmatpush.bf16.msra.mxu0 %v4304
          %4474 = vmatpush.bf16.msra.mxu0 %v4303
          %4475 = vmatpush.bf16.msra.mxu0 %v4302
          %4476 = vmatpush.bf16.msra.mxu0 %v4301
          %4477 = vmatpush.bf16.msra.mxu0 %v4300
          %4478 = vmatmul.bf16.gmra.mxu0 %v3987
          %v4479 = vpop.f32.mrf.mxu0
          %v4480 = vadd.f32 %v4466, %v4479
          %v4481 = vpop.f32.mrf.mxu0
          %v4482 = vadd.f32 %v4468, %v4481
          %4483 = vdwg.mxu0
          %v4484 = vadd.f32 %v3299, %v4480
          %v4485 = vadd.f32 %v3300, %v4482
          %4486 = vst [vmem:[#allocation2] sm:$0xff] %v4484
          %4487 = vst [vmem:[#allocation2 + $0x8] sm:$0xff] %v4485
        $region200: #{forward.1} parent=119 // pred_fallthru
          _
        %p4488 = scmp.eq.s32.totalorder %s50, 3
        // Predicated region
        $region201: #{forward.1} parent=119 // pred_check
          %p4489 = pneg %p4488
        $region202: #{forward.1} parent=119 // pred_check_branch
          %4491 = sbr.rel (%p4489) target = $region204
        $region203: #{forward.1} parent=119 // pred_region
          %v4492 = vld [vmem:[#allocation2] sm:$0xff]
          %v4493 = vld [vmem:[#allocation2 + $0x8] sm:$0xff]
          %v4494 = vld [vmem:[#allocation17] sm:$0x1]
          %v4495 = vmul.f32 %v4492, %v4492
          %v4496 = vmul.f32 %v4493, %v4493
          %4497 = vadd.xlane.f32.xlu0 %v4495
          %v4498 = vpop.xlane.xlu0 %4497
          %4499 = vadd.xlane.f32.xlu0 %v4496
          %v4500 = vpop.xlane.xlu0 %4499
          %v4501 = vrcp.pop 128.0
          %v4502 = vmul.f32 128.0, %v4501
          %v4503 = vsub.f32 1.0, %v4502
          %v4504 = vmul.f32 %v4501, %v4503
          %v4505 = vadd.f32 %v4501, %v4504
          %vm4506 = vweird.f32 %v4501
          %v4507 = vsel %vm4506, %v4501, %v4505
          %v4508 = vmul.f32 %v4498, %v4507
          %v4509 = vmul.f32 %v4500, %v4507
          %v4510 = vadd.f32 %v4508, 1e-06
          %v4511 = vadd.f32 %v4509, 1e-06
          %v4512 = vrsqrt.pop %v4510
          %v4513 = vmul.f32 %v4512, %v4510
          %v4514 = vmul.f32 %v4513, %v4512
          %v4515 = vmul.f32 0.5, %v4514
          %v4516 = vsub.f32 1.5, %v4515
          %v4517 = vmul.f32 %v4512, %v4516
          %vm4518 = vweird.f32 %v4510
          %vm4519 = vweird.f32 %v4512
          %vm4520 = vmor %vm4518, %vm4519
          %v4521 = vsel %vm4520, %v4512, %v4517
          %v4522 = vrsqrt.pop %v4511
          %v4523 = vmul.f32 %v4522, %v4511
          %v4524 = vmul.f32 %v4523, %v4522
          %v4525 = vmul.f32 0.5, %v4524
          %v4526 = vsub.f32 1.5, %v4525
          %v4527 = vmul.f32 %v4522, %v4526
          %vm4528 = vweird.f32 %v4511
          %vm4529 = vweird.f32 %v4522
          %vm4530 = vmor %vm4528, %vm4529
          %v4531 = vsel %vm4530, %v4522, %v4527
          %v4532 = vmul.f32 %v4492, %v4521
          %v4533 = vmul.f32 %v4493, %v4531
          %v4535 = vperm.slane %v4494, 0
          %v4537 = vmul.f32 %v4532, %v4535
          %v4538 = vmul.f32 %v4533, %v4535
          %v4539 = vpack.c.bf16 %v4537, %v4537
          %v4540 = vpack.c.bf16 %v4538, %v4538
          %4541 = vst [vmem:[#allocation4] sm:$0xf] %v4539
          %4542 = vst [vmem:[#allocation4 + $0x4] sm:$0xf] %v4540
        $region204: #{forward.1} parent=119 // pred_fallthru
          _
        %p4543 = scmp.ge.s32.totalorder %s50, 4
        %p4544 = scmp.lt.s32.totalorder %s50, 8
        %p4545 = pnand %p4543, %p4544
        %p4546 = pneg %p4545
        // Predicated region
        $region205: #{forward.1} parent=119 // pred_check
          _
        $region206: #{forward.1} parent=119 // pred_check_branch
          %4548 = sbr.rel (%p4545) target = $region208
        $region207: #{forward.1} parent=119 // pred_region
          %v4549 = vld [vmem:[#allocation3] sm:$0xff]
          %v4550 = vld [vmem:[#allocation3 + $0x8] sm:$0xff]
          %v4551 = vld [vmem:[%s1349] sm:$0x1]
          %v4552 = vmul.f32 %v4549, %v4549
          %v4553 = vmul.f32 %v4550, %v4550
          %4554 = vadd.xlane.f32.xlu0 %v4552
          %v4555 = vpop.xlane.xlu0 %4554
          %4556 = vadd.xlane.f32.xlu0 %v4553
          %v4557 = vpop.xlane.xlu0 %4556
          %v4558 = vrcp.pop 128.0
          %v4559 = vmul.f32 128.0, %v4558
          %v4560 = vsub.f32 1.0, %v4559
          %v4561 = vmul.f32 %v4558, %v4560
          %v4562 = vadd.f32 %v4558, %v4561
          %vm4563 = vweird.f32 %v4558
          %v4564 = vsel %vm4563, %v4558, %v4562
          %v4565 = vmul.f32 %v4555, %v4564
          %v4566 = vmul.f32 %v4557, %v4564
          %v4567 = vadd.f32 %v4565, 1e-06
          %v4568 = vadd.f32 %v4566, 1e-06
          %v4569 = vrsqrt.pop %v4567
          %v4570 = vmul.f32 %v4569, %v4567
          %v4571 = vmul.f32 %v4570, %v4569
          %v4572 = vmul.f32 0.5, %v4571
          %v4573 = vsub.f32 1.5, %v4572
          %v4574 = vmul.f32 %v4569, %v4573
          %vm4575 = vweird.f32 %v4567
          %vm4576 = vweird.f32 %v4569
          %vm4577 = vmor %vm4575, %vm4576
          %v4578 = vsel %vm4577, %v4569, %v4574
          %v4579 = vrsqrt.pop %v4568
          %v4580 = vmul.f32 %v4579, %v4568
          %v4581 = vmul.f32 %v4580, %v4579
          %v4582 = vmul.f32 0.5, %v4581
          %v4583 = vsub.f32 1.5, %v4582
          %v4584 = vmul.f32 %v4579, %v4583
          %vm4585 = vweird.f32 %v4568
          %vm4586 = vweird.f32 %v4579
          %vm4587 = vmor %vm4585, %vm4586
          %v4588 = vsel %vm4587, %v4579, %v4584
          %v4589 = vmul.f32 %v4549, %v4578
          %v4590 = vmul.f32 %v4550, %v4588
          %v4592 = vperm.slane %v4551, 0
          %v4594 = vmul.f32 %v4589, %v4592
          %v4595 = vmul.f32 %v4590, %v4592
          %v4596 = vld [vmem:[%s1359] sm:$0xff]
          %v4597 = vld [vmem:[%s1359 + $0x8] sm:$0xff]
          %v4598 = vld [vmem:[%s1359 + $0x10] sm:$0xff]
          %v4599 = vld [vmem:[%s1359 + $0x18] sm:$0xff]
          %v4600 = vld [vmem:[%s1359 + $0x20] sm:$0xf]
          %v4601 = vld [vmem:[%s1359 + $0x24] sm:$0xff]
          %v4602 = vld [vmem:[%s1359 + $0x2c] sm:$0xff]
          %v4603 = vld [vmem:[%s1359 + $0x34] sm:$0xff]
          %v4604 = vld [vmem:[%s1359 + $0x3c] sm:$0xff]
          %v4605 = vld [vmem:[%s1359 + $0x44] sm:$0xf]
          %v4606 = vld [vmem:[%s1359 + $0x48] sm:$0xff]
          %v4607 = vld [vmem:[%s1359 + $0x50] sm:$0xff]
          %v4608 = vld [vmem:[%s1359 + $0x58] sm:$0xff]
          %v4609 = vld [vmem:[%s1359 + $0x60] sm:$0xff]
          %v4610 = vld [vmem:[%s1359 + $0x68] sm:$0xf]
          %v4611 = vld [vmem:[%s1359 + $0x6c] sm:$0xff]
          %v4612 = vld [vmem:[%s1359 + $0x74] sm:$0xff]
          %v4613 = vld [vmem:[%s1359 + $0x7c] sm:$0xff]
          %v4614 = vld [vmem:[%s1359 + $0x84] sm:$0xff]
          %v4615 = vld [vmem:[%s1359 + $0x8c] sm:$0xf]
          %v4616 = vld [vmem:[%s1359 + $0x90] sm:$0xff]
          %v4617 = vld [vmem:[%s1359 + $0x98] sm:$0xff]
          %v4618 = vld [vmem:[%s1359 + $0xa0] sm:$0xff]
          %v4619 = vld [vmem:[%s1359 + $0xa8] sm:$0xff]
          %v4620 = vld [vmem:[%s1359 + $0xb0] sm:$0xf]
          %v4621 = vld [vmem:[%s1359 + $0xb4] sm:$0xff]
          %v4622 = vld [vmem:[%s1359 + $0xbc] sm:$0xff]
          %v4623 = vld [vmem:[%s1359 + $0xc4] sm:$0xff]
          %v4624 = vld [vmem:[%s1359 + $0xcc] sm:$0xff]
          %v4625 = vld [vmem:[%s1359 + $0xd4] sm:$0xf]
          %v4626 = vld [vmem:[%s1359 + $0xd8] sm:$0xff]
          %v4627 = vld [vmem:[%s1359 + $0xe0] sm:$0xff]
          %v4628 = vld [vmem:[%s1359 + $0xe8] sm:$0xff]
          %v4629 = vld [vmem:[%s1359 + $0xf0] sm:$0xff]
          %v4630 = vld [vmem:[%s1359 + $0xf8] sm:$0xf]
          %v4631 = vld [vmem:[%s1359 + $0xfc] sm:$0xff]
          %v4632 = vld [vmem:[%s1359 + $0x104] sm:$0xff]
          %v4633 = vld [vmem:[%s1359 + $0x10c] sm:$0xff]
          %v4634 = vld [vmem:[%s1359 + $0x114] sm:$0xff]
          %v4635 = vld [vmem:[%s1359 + $0x11c] sm:$0xf]
          %v4636 = vld [vmem:[%s1359 + $0x120] sm:$0xff]
          %v4637 = vld [vmem:[%s1359 + $0x128] sm:$0xff]
          %v4638 = vld [vmem:[%s1359 + $0x130] sm:$0xff]
          %v4639 = vld [vmem:[%s1359 + $0x138] sm:$0xff]
          %v4640 = vld [vmem:[%s1359 + $0x140] sm:$0xf]
          %v4641 = vld [vmem:[%s1359 + $0x144] sm:$0xff]
          %v4642 = vld [vmem:[%s1359 + $0x14c] sm:$0xff]
          %v4643 = vld [vmem:[%s1359 + $0x154] sm:$0xff]
          %v4644 = vld [vmem:[%s1359 + $0x15c] sm:$0xff]
          %v4645 = vld [vmem:[%s1359 + $0x164] sm:$0xf]
          %v4646 = vld [vmem:[%s1359 + $0x168] sm:$0xff]
          %v4647 = vld [vmem:[%s1359 + $0x170] sm:$0xff]
          %v4648 = vld [vmem:[%s1359 + $0x178] sm:$0xff]
          %v4649 = vld [vmem:[%s1359 + $0x180] sm:$0xff]
          %v4650 = vld [vmem:[%s1359 + $0x188] sm:$0xf]
          %v4651 = vld [vmem:[%s1359 + $0x18c] sm:$0xff]
          %v4652 = vld [vmem:[%s1359 + $0x194] sm:$0xff]
          %v4653 = vld [vmem:[%s1359 + $0x19c] sm:$0xff]
          %v4654 = vld [vmem:[%s1359 + $0x1a4] sm:$0xff]
          %v4655 = vld [vmem:[%s1359 + $0x1ac] sm:$0xf]
          %v4656 = vld [vmem:[%s1359 + $0x1b0] sm:$0xff]
          %v4657 = vld [vmem:[%s1359 + $0x1b8] sm:$0xff]
          %v4658 = vld [vmem:[%s1359 + $0x1c0] sm:$0xff]
          %v4659 = vld [vmem:[%s1359 + $0x1c8] sm:$0xff]
          %v4660 = vld [vmem:[%s1359 + $0x1d0] sm:$0xf]
          %v4661 = vld [vmem:[%s1359 + $0x1d4] sm:$0xff]
          %v4662 = vld [vmem:[%s1359 + $0x1dc] sm:$0xff]
          %v4663 = vld [vmem:[%s1359 + $0x1e4] sm:$0xff]
          %v4664 = vld [vmem:[%s1359 + $0x1ec] sm:$0xff]
          %v4665 = vld [vmem:[%s1359 + $0x1f4] sm:$0xf]
          %v4666 = vld [vmem:[%s1359 + $0x1f8] sm:$0xff]
          %v4667 = vld [vmem:[%s1359 + $0x200] sm:$0xff]
          %v4668 = vld [vmem:[%s1359 + $0x208] sm:$0xff]
          %v4669 = vld [vmem:[%s1359 + $0x210] sm:$0xff]
          %v4670 = vld [vmem:[%s1359 + $0x218] sm:$0xf]
          %v4671 = vld [vmem:[%s1359 + $0x21c] sm:$0xff]
          %v4672 = vld [vmem:[%s1359 + $0x224] sm:$0xff]
          %v4673 = vld [vmem:[%s1359 + $0x22c] sm:$0xff]
          %v4674 = vld [vmem:[%s1359 + $0x234] sm:$0xff]
          %v4675 = vld [vmem:[%s1359 + $0x23c] sm:$0xf]
          %v4676 = vpack.c.bf16 %v4595, %v4594
          %v4757 = vunpack.c.l.b16 %v4596
          %v4758 = vunpack.c.h.b16 %v4596
          %v4759 = vunpack.c.l.b16 %v4597
          %v4760 = vunpack.c.h.b16 %v4597
          %v4761 = vunpack.c.l.b16 %v4598
          %v4762 = vunpack.c.h.b16 %v4598
          %v4763 = vunpack.c.l.b16 %v4599
          %v4764 = vunpack.c.h.b16 %v4599
          %v4765 = vunpack.c.l.b16 %v4600
          %v4766 = vunpack.c.l.b16 %v4601
          %v4767 = vunpack.c.h.b16 %v4601
          %v4768 = vunpack.c.l.b16 %v4602
          %v4769 = vunpack.c.h.b16 %v4602
          %v4770 = vunpack.c.l.b16 %v4603
          %v4771 = vunpack.c.h.b16 %v4603
          %v4772 = vunpack.c.l.b16 %v4604
          %v4773 = vunpack.c.h.b16 %v4604
          %v4774 = vunpack.c.l.b16 %v4605
          %v4775 = vunpack.c.l.b16 %v4606
          %v4776 = vunpack.c.h.b16 %v4606
          %v4777 = vunpack.c.l.b16 %v4607
          %v4778 = vunpack.c.h.b16 %v4607
          %v4779 = vunpack.c.l.b16 %v4608
          %v4780 = vunpack.c.h.b16 %v4608
          %v4781 = vunpack.c.l.b16 %v4609
          %v4782 = vunpack.c.h.b16 %v4609
          %v4783 = vunpack.c.l.b16 %v4610
          %v4784 = vunpack.c.l.b16 %v4611
          %v4785 = vunpack.c.h.b16 %v4611
          %v4786 = vunpack.c.l.b16 %v4612
          %v4787 = vunpack.c.h.b16 %v4612
          %v4788 = vunpack.c.l.b16 %v4613
          %v4789 = vunpack.c.h.b16 %v4613
          %v4790 = vunpack.c.l.b16 %v4614
          %v4791 = vunpack.c.h.b16 %v4614
          %v4792 = vunpack.c.l.b16 %v4615
          %v4793 = vunpack.c.l.b16 %v4616
          %v4794 = vunpack.c.h.b16 %v4616
          %v4795 = vunpack.c.l.b16 %v4617
          %v4796 = vunpack.c.h.b16 %v4617
          %v4797 = vunpack.c.l.b16 %v4618
          %v4798 = vunpack.c.h.b16 %v4618
          %v4799 = vunpack.c.l.b16 %v4619
          %v4800 = vunpack.c.h.b16 %v4619
          %v4801 = vunpack.c.l.b16 %v4620
          %v4802 = vunpack.c.l.b16 %v4621
          %v4803 = vunpack.c.h.b16 %v4621
          %v4804 = vunpack.c.l.b16 %v4622
          %v4805 = vunpack.c.h.b16 %v4622
          %v4806 = vunpack.c.l.b16 %v4623
          %v4807 = vunpack.c.h.b16 %v4623
          %v4808 = vunpack.c.l.b16 %v4624
          %v4809 = vunpack.c.h.b16 %v4624
          %v4810 = vunpack.c.l.b16 %v4625
          %v4811 = vunpack.c.l.b16 %v4626
          %v4812 = vunpack.c.h.b16 %v4626
          %v4813 = vunpack.c.l.b16 %v4627
          %v4814 = vunpack.c.h.b16 %v4627
          %v4815 = vunpack.c.l.b16 %v4628
          %v4816 = vunpack.c.h.b16 %v4628
          %v4817 = vunpack.c.l.b16 %v4629
          %v4818 = vunpack.c.h.b16 %v4629
          %v4819 = vunpack.c.l.b16 %v4630
          %v4820 = vunpack.c.l.b16 %v4631
          %v4821 = vunpack.c.h.b16 %v4631
          %v4822 = vunpack.c.l.b16 %v4632
          %v4823 = vunpack.c.h.b16 %v4632
          %v4824 = vunpack.c.l.b16 %v4633
          %v4825 = vunpack.c.h.b16 %v4633
          %v4826 = vunpack.c.l.b16 %v4634
          %v4827 = vunpack.c.h.b16 %v4634
          %v4828 = vunpack.c.l.b16 %v4635
          %v4829 = vunpack.c.l.b16 %v4636
          %v4830 = vunpack.c.h.b16 %v4636
          %v4831 = vunpack.c.l.b16 %v4637
          %v4832 = vunpack.c.h.b16 %v4637
          %v4833 = vunpack.c.l.b16 %v4638
          %v4834 = vunpack.c.h.b16 %v4638
          %v4835 = vunpack.c.l.b16 %v4639
          %v4836 = vunpack.c.h.b16 %v4639
          %v4837 = vunpack.c.l.b16 %v4640
          %v4838 = vunpack.c.l.b16 %v4641
          %v4839 = vunpack.c.h.b16 %v4641
          %v4840 = vunpack.c.l.b16 %v4642
          %v4841 = vunpack.c.h.b16 %v4642
          %v4842 = vunpack.c.l.b16 %v4643
          %v4843 = vunpack.c.h.b16 %v4643
          %v4844 = vunpack.c.l.b16 %v4644
          %v4845 = vunpack.c.h.b16 %v4644
          %v4846 = vunpack.c.l.b16 %v4645
          %v4847 = vunpack.c.l.b16 %v4646
          %v4848 = vunpack.c.h.b16 %v4646
          %v4849 = vunpack.c.l.b16 %v4647
          %v4850 = vunpack.c.h.b16 %v4647
          %v4851 = vunpack.c.l.b16 %v4648
          %v4852 = vunpack.c.h.b16 %v4648
          %v4853 = vunpack.c.l.b16 %v4649
          %v4854 = vunpack.c.h.b16 %v4649
          %v4855 = vunpack.c.l.b16 %v4650
          %v4856 = vunpack.c.l.b16 %v4651
          %v4857 = vunpack.c.h.b16 %v4651
          %v4858 = vunpack.c.l.b16 %v4652
          %v4859 = vunpack.c.h.b16 %v4652
          %v4860 = vunpack.c.l.b16 %v4653
          %v4861 = vunpack.c.h.b16 %v4653
          %v4862 = vunpack.c.l.b16 %v4654
          %v4863 = vunpack.c.h.b16 %v4654
          %v4864 = vunpack.c.l.b16 %v4655
          %v4865 = vunpack.c.l.b16 %v4656
          %v4866 = vunpack.c.h.b16 %v4656
          %v4867 = vunpack.c.l.b16 %v4657
          %v4868 = vunpack.c.h.b16 %v4657
          %v4869 = vunpack.c.l.b16 %v4658
          %v4870 = vunpack.c.h.b16 %v4658
          %v4871 = vunpack.c.l.b16 %v4659
          %v4872 = vunpack.c.h.b16 %v4659
          %v4873 = vunpack.c.l.b16 %v4660
          %v4874 = vunpack.c.l.b16 %v4661
          %v4875 = vunpack.c.h.b16 %v4661
          %v4876 = vunpack.c.l.b16 %v4662
          %v4877 = vunpack.c.h.b16 %v4662
          %v4878 = vunpack.c.l.b16 %v4663
          %v4879 = vunpack.c.h.b16 %v4663
          %v4880 = vunpack.c.l.b16 %v4664
          %v4881 = vunpack.c.h.b16 %v4664
          %v4882 = vunpack.c.l.b16 %v4665
          %v4883 = vunpack.c.l.b16 %v4666
          %v4884 = vunpack.c.h.b16 %v4666
          %v4885 = vunpack.c.l.b16 %v4667
          %v4886 = vunpack.c.h.b16 %v4667
          %v4887 = vunpack.c.l.b16 %v4668
          %v4888 = vunpack.c.h.b16 %v4668
          %v4889 = vunpack.c.l.b16 %v4669
          %v4890 = vunpack.c.h.b16 %v4669
          %v4891 = vunpack.c.l.b16 %v4670
          %v4892 = vunpack.c.l.b16 %v4671
          %v4893 = vunpack.c.h.b16 %v4671
          %v4894 = vunpack.c.l.b16 %v4672
          %v4895 = vunpack.c.h.b16 %v4672
          %v4896 = vunpack.c.l.b16 %v4673
          %v4897 = vunpack.c.h.b16 %v4673
          %v4898 = vunpack.c.l.b16 %v4674
          %v4899 = vunpack.c.h.b16 %v4674
          %v4900 = vunpack.c.l.b16 %v4675
          %v4901 = vpack.c.b16 %v4766, %v4757
          %v4902 = vpack.c.b16 %v4767, %v4758
          %v4903 = vpack.c.b16 %v4768, %v4759
          %v4904 = vpack.c.b16 %v4769, %v4760
          %v4905 = vpack.c.b16 %v4770, %v4761
          %v4906 = vpack.c.b16 %v4771, %v4762
          %v4907 = vpack.c.b16 %v4772, %v4763
          %v4908 = vpack.c.b16 %v4773, %v4764
          %v4909 = vpack.c.b16 %v4774, %v4765
          %v4910 = vpack.c.b16 %v4784, %v4775
          %v4911 = vpack.c.b16 %v4785, %v4776
          %v4912 = vpack.c.b16 %v4786, %v4777
          %v4913 = vpack.c.b16 %v4787, %v4778
          %v4914 = vpack.c.b16 %v4788, %v4779
          %v4915 = vpack.c.b16 %v4789, %v4780
          %v4916 = vpack.c.b16 %v4790, %v4781
          %v4917 = vpack.c.b16 %v4791, %v4782
          %v4918 = vpack.c.b16 %v4792, %v4783
          %v4919 = vpack.c.b16 %v4802, %v4793
          %v4920 = vpack.c.b16 %v4803, %v4794
          %v4921 = vpack.c.b16 %v4804, %v4795
          %v4922 = vpack.c.b16 %v4805, %v4796
          %v4923 = vpack.c.b16 %v4806, %v4797
          %v4924 = vpack.c.b16 %v4807, %v4798
          %v4925 = vpack.c.b16 %v4808, %v4799
          %v4926 = vpack.c.b16 %v4809, %v4800
          %v4927 = vpack.c.b16 %v4810, %v4801
          %v4928 = vpack.c.b16 %v4820, %v4811
          %v4929 = vpack.c.b16 %v4821, %v4812
          %v4930 = vpack.c.b16 %v4822, %v4813
          %v4931 = vpack.c.b16 %v4823, %v4814
          %v4932 = vpack.c.b16 %v4824, %v4815
          %v4933 = vpack.c.b16 %v4825, %v4816
          %v4934 = vpack.c.b16 %v4826, %v4817
          %v4935 = vpack.c.b16 %v4827, %v4818
          %v4936 = vpack.c.b16 %v4828, %v4819
          %v4937 = vpack.c.b16 %v4838, %v4829
          %v4938 = vpack.c.b16 %v4839, %v4830
          %v4939 = vpack.c.b16 %v4840, %v4831
          %v4940 = vpack.c.b16 %v4841, %v4832
          %v4941 = vpack.c.b16 %v4842, %v4833
          %v4942 = vpack.c.b16 %v4843, %v4834
          %v4943 = vpack.c.b16 %v4844, %v4835
          %v4944 = vpack.c.b16 %v4845, %v4836
          %v4945 = vpack.c.b16 %v4846, %v4837
          %v4946 = vpack.c.b16 %v4856, %v4847
          %v4947 = vpack.c.b16 %v4857, %v4848
          %v4948 = vpack.c.b16 %v4858, %v4849
          %v4949 = vpack.c.b16 %v4859, %v4850
          %v4950 = vpack.c.b16 %v4860, %v4851
          %v4951 = vpack.c.b16 %v4861, %v4852
          %v4952 = vpack.c.b16 %v4862, %v4853
          %v4953 = vpack.c.b16 %v4863, %v4854
          %v4954 = vpack.c.b16 %v4864, %v4855
          %v4955 = vpack.c.b16 %v4874, %v4865
          %v4956 = vpack.c.b16 %v4875, %v4866
          %v4957 = vpack.c.b16 %v4876, %v4867
          %v4958 = vpack.c.b16 %v4877, %v4868
          %v4959 = vpack.c.b16 %v4878, %v4869
          %v4960 = vpack.c.b16 %v4879, %v4870
          %v4961 = vpack.c.b16 %v4880, %v4871
          %v4962 = vpack.c.b16 %v4881, %v4872
          %v4963 = vpack.c.b16 %v4882, %v4873
          %v4964 = vpack.c.b16 %v4892, %v4883
          %v4965 = vpack.c.b16 %v4893, %v4884
          %v4966 = vpack.c.b16 %v4894, %v4885
          %v4967 = vpack.c.b16 %v4895, %v4886
          %v4968 = vpack.c.b16 %v4896, %v4887
          %v4969 = vpack.c.b16 %v4897, %v4888
          %v4970 = vpack.c.b16 %v4898, %v4889
          %v4971 = vpack.c.b16 %v4899, %v4890
          %v4972 = vpack.c.b16 %v4900, %v4891
          %5045 = vmatpush.bf16.msra.mxu0 %v4964
          %5046 = vmatpush.bf16.msra.mxu0 %v4955
          %5047 = vmatpush.bf16.msra.mxu0 %v4946
          %5048 = vmatpush.bf16.msra.mxu0 %v4937
          %5049 = vmatpush.bf16.msra.mxu0 %v4928
          %5050 = vmatpush.bf16.msra.mxu0 %v4919
          %5051 = vmatpush.bf16.msra.mxu0 %v4910
          %5052 = vmatpush.bf16.msra.mxu0 %v4901
          %5053 = vmatmul.bf16.gmra.mxu0 %v4676
          %v5054 = vpop.f32.mrf.mxu0
          %v5055 = vadd.f32 0.0, %v5054
          %v5056 = vpop.f32.mrf.mxu0
          %v5057 = vadd.f32 0.0, %v5056
          %5058 = vdwg.mxu0
          %5059 = vmatpush.bf16.msra.mxu0 %v4965
          %5060 = vmatpush.bf16.msra.mxu0 %v4956
          %5061 = vmatpush.bf16.msra.mxu0 %v4947
          %5062 = vmatpush.bf16.msra.mxu0 %v4938
          %5063 = vmatpush.bf16.msra.mxu0 %v4929
          %5064 = vmatpush.bf16.msra.mxu0 %v4920
          %5065 = vmatpush.bf16.msra.mxu0 %v4911
          %5066 = vmatpush.bf16.msra.mxu0 %v4902
          %5067 = vmatmul.bf16.gmra.mxu0 %v4676
          %v5068 = vpop.f32.mrf.mxu0
          %v5069 = vadd.f32 0.0, %v5068
          %v5070 = vpop.f32.mrf.mxu0
          %v5071 = vadd.f32 0.0, %v5070
          %5072 = vdwg.mxu0
          %5073 = vmatpush.bf16.msra.mxu0 %v4966
          %5074 = vmatpush.bf16.msra.mxu0 %v4957
          %5075 = vmatpush.bf16.msra.mxu0 %v4948
          %5076 = vmatpush.bf16.msra.mxu0 %v4939
          %5077 = vmatpush.bf16.msra.mxu0 %v4930
          %5078 = vmatpush.bf16.msra.mxu0 %v4921
          %5079 = vmatpush.bf16.msra.mxu0 %v4912
          %5080 = vmatpush.bf16.msra.mxu0 %v4903
          %5081 = vmatmul.bf16.gmra.mxu0 %v4676
          %v5082 = vpop.f32.mrf.mxu0
          %v5083 = vadd.f32 0.0, %v5082
          %v5084 = vpop.f32.mrf.mxu0
          %v5085 = vadd.f32 0.0, %v5084
          %5086 = vdwg.mxu0
          %5087 = vmatpush.bf16.msra.mxu0 %v4967
          %5088 = vmatpush.bf16.msra.mxu0 %v4958
          %5089 = vmatpush.bf16.msra.mxu0 %v4949
          %5090 = vmatpush.bf16.msra.mxu0 %v4940
          %5091 = vmatpush.bf16.msra.mxu0 %v4931
          %5092 = vmatpush.bf16.msra.mxu0 %v4922
          %5093 = vmatpush.bf16.msra.mxu0 %v4913
          %5094 = vmatpush.bf16.msra.mxu0 %v4904
          %5095 = vmatmul.bf16.gmra.mxu0 %v4676
          %v5096 = vpop.f32.mrf.mxu0
          %v5097 = vadd.f32 0.0, %v5096
          %v5098 = vpop.f32.mrf.mxu0
          %v5099 = vadd.f32 0.0, %v5098
          %5100 = vdwg.mxu0
          %5101 = vmatpush.bf16.msra.mxu0 %v4968
          %5102 = vmatpush.bf16.msra.mxu0 %v4959
          %5103 = vmatpush.bf16.msra.mxu0 %v4950
          %5104 = vmatpush.bf16.msra.mxu0 %v4941
          %5105 = vmatpush.bf16.msra.mxu0 %v4932
          %5106 = vmatpush.bf16.msra.mxu0 %v4923
          %5107 = vmatpush.bf16.msra.mxu0 %v4914
          %5108 = vmatpush.bf16.msra.mxu0 %v4905
          %5109 = vmatmul.bf16.gmra.mxu0 %v4676
          %v5110 = vpop.f32.mrf.mxu0
          %v5111 = vadd.f32 0.0, %v5110
          %v5112 = vpop.f32.mrf.mxu0
          %v5113 = vadd.f32 0.0, %v5112
          %5114 = vdwg.mxu0
          %5115 = vmatpush.bf16.msra.mxu0 %v4969
          %5116 = vmatpush.bf16.msra.mxu0 %v4960
          %5117 = vmatpush.bf16.msra.mxu0 %v4951
          %5118 = vmatpush.bf16.msra.mxu0 %v4942
          %5119 = vmatpush.bf16.msra.mxu0 %v4933
          %5120 = vmatpush.bf16.msra.mxu0 %v4924
          %5121 = vmatpush.bf16.msra.mxu0 %v4915
          %5122 = vmatpush.bf16.msra.mxu0 %v4906
          %5123 = vmatmul.bf16.gmra.mxu0 %v4676
          %v5124 = vpop.f32.mrf.mxu0
          %v5125 = vadd.f32 0.0, %v5124
          %v5126 = vpop.f32.mrf.mxu0
          %v5127 = vadd.f32 0.0, %v5126
          %5128 = vdwg.mxu0
          %5129 = vmatpush.bf16.msra.mxu0 %v4970
          %5130 = vmatpush.bf16.msra.mxu0 %v4961
          %5131 = vmatpush.bf16.msra.mxu0 %v4952
          %5132 = vmatpush.bf16.msra.mxu0 %v4943
          %5133 = vmatpush.bf16.msra.mxu0 %v4934
          %5134 = vmatpush.bf16.msra.mxu0 %v4925
          %5135 = vmatpush.bf16.msra.mxu0 %v4916
          %5136 = vmatpush.bf16.msra.mxu0 %v4907
          %5137 = vmatmul.bf16.gmra.mxu0 %v4676
          %v5138 = vpop.f32.mrf.mxu0
          %v5139 = vadd.f32 0.0, %v5138
          %v5140 = vpop.f32.mrf.mxu0
          %v5141 = vadd.f32 0.0, %v5140
          %5142 = vdwg.mxu0
          %5143 = vmatpush.bf16.msra.mxu0 %v4971
          %5144 = vmatpush.bf16.msra.mxu0 %v4962
          %5145 = vmatpush.bf16.msra.mxu0 %v4953
          %5146 = vmatpush.bf16.msra.mxu0 %v4944
          %5147 = vmatpush.bf16.msra.mxu0 %v4935
          %5148 = vmatpush.bf16.msra.mxu0 %v4926
          %5149 = vmatpush.bf16.msra.mxu0 %v4917
          %5150 = vmatpush.bf16.msra.mxu0 %v4908
          %5151 = vmatmul.bf16.gmra.mxu0 %v4676
          %v5152 = vpop.f32.mrf.mxu0
          %v5153 = vadd.f32 0.0, %v5152
          %v5154 = vpop.f32.mrf.mxu0
          %v5155 = vadd.f32 0.0, %v5154
          %5156 = vdwg.mxu0
          %5157 = vmatpush.bf16.msra.mxu0 %v4972
          %5158 = vmatpush.bf16.msra.mxu0 %v4963
          %5159 = vmatpush.bf16.msra.mxu0 %v4954
          %5160 = vmatpush.bf16.msra.mxu0 %v4945
          %5161 = vmatpush.bf16.msra.mxu0 %v4936
          %5162 = vmatpush.bf16.msra.mxu0 %v4927
          %5163 = vmatpush.bf16.msra.mxu0 %v4918
          %5164 = vmatpush.bf16.msra.mxu0 %v4909
          %5165 = vmatmul.bf16.gmra.mxu0 %v4676
          %v5166 = vpop.f32.mrf.mxu0
          %v5167 = vadd.f32 0.0, %v5166
          %v5168 = vpop.f32.mrf.mxu0
          %v5169 = vadd.f32 0.0, %v5168
          %5170 = vdwg.mxu0
          %v5171 = vld [vmem:[%s4] sm:$0xff]
          %v5172 = vld [vmem:[%s4 + $0x8] sm:$0xff]
          %v5173 = vld [vmem:[%s4 + $0x10] sm:$0xff]
          %v5174 = vld [vmem:[%s4 + $0x18] sm:$0xff]
          %v5175 = vld [vmem:[%s4 + $0x20] sm:$0xff]
          %v5176 = vld [vmem:[%s4 + $0x28] sm:$0xff]
          %v5177 = vld [vmem:[%s1369] sm:$0xf]
          %v5178 = vld [vmem:[%s1369 + $0x4] sm:$0xf]
          %v5179 = vld [vmem:[%s1369 + $0x8] sm:$0xf]
          %v5180 = vld [vmem:[%s1369 + $0xc] sm:$0xf]
          %v5181 = vld [vmem:[%s1369 + $0x10] sm:$0xf]
          %v5182 = vld [vmem:[%s1369 + $0x14] sm:$0xf]
          %v5183 = vld [vmem:[%s1369 + $0x18] sm:$0xf]
          %v5184 = vld [vmem:[%s1369 + $0x1c] sm:$0xf]
          %v5185 = vld [vmem:[%s1369 + $0x20] sm:$0xf]
          %v5186 = vld [vmem:[%s1369 + $0x24] sm:$0xf]
          %v5187 = vld [vmem:[%s1369 + $0x28] sm:$0xf]
          %v5188 = vld [vmem:[%s1369 + $0x2c] sm:$0xf]
          %v5189 = vld [vmem:[%s1369 + $0x30] sm:$0xf]
          %v5190 = vld [vmem:[%s1369 + $0x34] sm:$0xf]
          %v5191 = vld [vmem:[%s1369 + $0x38] sm:$0xf]
          %v5192 = vld [vmem:[%s1369 + $0x3c] sm:$0xf]
          %v5193 = vld [vmem:[%s1369 + $0x40] sm:$0xf]
          %v5194 = vld [vmem:[%s1369 + $0x44] sm:$0xf]
          %v5195 = vld [vmem:[%s1369 + $0x48] sm:$0xf]
          %v5196 = vld [vmem:[%s1369 + $0x4c] sm:$0xf]
          %v5197 = vld [vmem:[%s1369 + $0x50] sm:$0xf]
          %v5198 = vld [vmem:[%s1369 + $0x54] sm:$0xf]
          %v5199 = vld [vmem:[%s1369 + $0x58] sm:$0xf]
          %v5200 = vld [vmem:[%s1369 + $0x5c] sm:$0xf]
          %v5201 = vld [vmem:[%s1369 + $0x60] sm:$0xf]
          %v5202 = vld [vmem:[%s1369 + $0x64] sm:$0xf]
          %v5203 = vld [vmem:[%s1369 + $0x68] sm:$0xf]
          %v5204 = vld [vmem:[%s1369 + $0x6c] sm:$0xf]
          %v5205 = vld [vmem:[%s1369 + $0x70] sm:$0xf]
          %v5206 = vld [vmem:[%s1369 + $0x74] sm:$0xf]
          %v5207 = vld [vmem:[%s1369 + $0x78] sm:$0xf]
          %v5208 = vld [vmem:[%s1369 + $0x7c] sm:$0xf]
          %v5209 = vld [vmem:[%s1369 + $0x80] sm:$0xf]
          %v5210 = vld [vmem:[%s1369 + $0x84] sm:$0xf]
          %v5211 = vld [vmem:[%s1369 + $0x88] sm:$0xf]
          %v5212 = vld [vmem:[%s1369 + $0x8c] sm:$0xf]
          %v5213 = vld [vmem:[%s1369 + $0x90] sm:$0xf]
          %v5214 = vld [vmem:[%s1369 + $0x94] sm:$0xf]
          %v5215 = vld [vmem:[%s1369 + $0x98] sm:$0xf]
          %v5216 = vld [vmem:[%s1369 + $0x9c] sm:$0xf]
          %v5217 = vld [vmem:[%s1369 + $0xa0] sm:$0xf]
          %v5218 = vld [vmem:[%s1369 + $0xa4] sm:$0xf]
          %v5219 = vld [vmem:[%s1369 + $0xa8] sm:$0xf]
          %v5220 = vld [vmem:[%s1369 + $0xac] sm:$0xf]
          %v5221 = vld [vmem:[%s1369 + $0xb0] sm:$0xf]
          %v5222 = vld [vmem:[%s1369 + $0xb4] sm:$0xf]
          %v5223 = vld [vmem:[%s1369 + $0xb8] sm:$0xf]
          %v5224 = vld [vmem:[%s1369 + $0xbc] sm:$0xf]
          %5227 = vrot.lane.b32.xlu0 %v5055, 64
          %v5228 = vpop.permute.xlu0 %5227
          %5229 = vrot.lane.b32.xlu0 %v5057, 64
          %v5230 = vpop.permute.xlu0 %5229
          %5235 = vrot.lane.b32.xlu0 %v5069, 64
          %v5236 = vpop.permute.xlu0 %5235
          %5237 = vrot.lane.b32.xlu0 %v5071, 64
          %v5238 = vpop.permute.xlu0 %5237
          %5243 = vrot.lane.b32.xlu0 %v5083, 64
          %v5244 = vpop.permute.xlu0 %5243
          %5245 = vrot.lane.b32.xlu0 %v5085, 64
          %v5246 = vpop.permute.xlu0 %5245
          %v5249 = vpack.c.bf16 %v5055, %v5055
          %v5250 = vpack.c.bf16 %v5057, %v5057
          %v5251 = vpack.c.bf16 %v5228, %v5228
          %v5252 = vpack.c.bf16 %v5230, %v5230
          %v5253 = vpack.c.bf16 %v5069, %v5069
          %v5254 = vpack.c.bf16 %v5071, %v5071
          %v5255 = vpack.c.bf16 %v5236, %v5236
          %v5256 = vpack.c.bf16 %v5238, %v5238
          %v5257 = vpack.c.bf16 %v5083, %v5083
          %v5258 = vpack.c.bf16 %v5085, %v5085
          %v5259 = vpack.c.bf16 %v5244, %v5244
          %v5260 = vpack.c.bf16 %v5246, %v5246
          %5263 = vrot.lane.b32.xlu0 %v5097, 64
          %v5264 = vpop.permute.xlu0 %5263
          %5265 = vrot.lane.b32.xlu0 %v5099, 64
          %v5266 = vpop.permute.xlu0 %5265
          %5271 = vrot.lane.b32.xlu0 %v5111, 64
          %v5272 = vpop.permute.xlu0 %5271
          %5273 = vrot.lane.b32.xlu0 %v5113, 64
          %v5274 = vpop.permute.xlu0 %5273
          %5279 = vrot.lane.b32.xlu0 %v5125, 64
          %v5280 = vpop.permute.xlu0 %5279
          %5281 = vrot.lane.b32.xlu0 %v5127, 64
          %v5282 = vpop.permute.xlu0 %5281
          %v5285 = vpack.c.bf16 %v5097, %v5097
          %v5286 = vpack.c.bf16 %v5099, %v5099
          %v5287 = vpack.c.bf16 %v5264, %v5264
          %v5288 = vpack.c.bf16 %v5266, %v5266
          %v5289 = vpack.c.bf16 %v5111, %v5111
          %v5290 = vpack.c.bf16 %v5113, %v5113
          %v5291 = vpack.c.bf16 %v5272, %v5272
          %v5292 = vpack.c.bf16 %v5274, %v5274
          %v5293 = vpack.c.bf16 %v5125, %v5125
          %v5294 = vpack.c.bf16 %v5127, %v5127
          %v5295 = vpack.c.bf16 %v5280, %v5280
          %v5296 = vpack.c.bf16 %v5282, %v5282
          %5299 = vrot.lane.b32.xlu0 %v5139, 64
          %v5300 = vpop.permute.xlu0 %5299
          %5301 = vrot.lane.b32.xlu0 %v5141, 64
          %v5302 = vpop.permute.xlu0 %5301
          %5307 = vrot.lane.b32.xlu0 %v5153, 64
          %v5308 = vpop.permute.xlu0 %5307
          %5309 = vrot.lane.b32.xlu0 %v5155, 64
          %v5310 = vpop.permute.xlu0 %5309
          %5315 = vrot.lane.b32.xlu0 %v5167, 64
          %v5316 = vpop.permute.xlu0 %5315
          %5317 = vrot.lane.b32.xlu0 %v5169, 64
          %v5318 = vpop.permute.xlu0 %5317
          %v5321 = vpack.c.bf16 %v5139, %v5139
          %v5322 = vpack.c.bf16 %v5141, %v5141
          %v5323 = vpack.c.bf16 %v5300, %v5300
          %v5324 = vpack.c.bf16 %v5302, %v5302
          %v5325 = vpack.c.bf16 %v5153, %v5153
          %v5326 = vpack.c.bf16 %v5155, %v5155
          %v5327 = vpack.c.bf16 %v5308, %v5308
          %v5328 = vpack.c.bf16 %v5310, %v5310
          %v5329 = vpack.c.bf16 %v5167, %v5167
          %v5330 = vpack.c.bf16 %v5169, %v5169
          %v5331 = vpack.c.bf16 %v5316, %v5316
          %v5332 = vpack.c.bf16 %v5318, %v5318
          %vm5333 = vcmask 523264
          %v5335 = vsel %vm5333, %v5249, 0
          %v5338 = vsel %vm5333, %v5285, 0
          %5340 = vmatpush.bf16.xpose.msra.mxu0 0
          %5341 = vmatpush.bf16.xpose.msra.mxu0 0
          %5342 = vmatpush.bf16.xpose.msra.mxu0 0
          %5343 = vmatpush.bf16.xpose.msra.mxu0 0
          %5344 = vmatpush.bf16.xpose.msra.mxu0 0
          %5345 = vmatpush.bf16.xpose.msra.mxu0 0
          %5346 = vmatpush.bf16.xpose.msra.mxu0 0
          %5347 = vmatpush.bf16.xpose.msra.mxu0 %v5338
          %5348 = vmatmul.bf16.gmra.mxu0 %v5335
          %v5349 = vpop.f32.mrf.mxu0
          %v5350 = vadd.f32 0.0, %v5349
          %v5351 = vpop.f32.mrf.mxu0
          %5352 = vdwg.mxu0
          %v5354 = vsel %vm5333, %v5250, 0
          %v5357 = vsel %vm5333, %v5286, 0
          %5359 = vmatpush.bf16.xpose.msra.mxu0 0
          %5360 = vmatpush.bf16.xpose.msra.mxu0 0
          %5361 = vmatpush.bf16.xpose.msra.mxu0 0
          %5362 = vmatpush.bf16.xpose.msra.mxu0 0
          %5363 = vmatpush.bf16.xpose.msra.mxu0 0
          %5364 = vmatpush.bf16.xpose.msra.mxu0 0
          %5365 = vmatpush.bf16.xpose.msra.mxu0 0
          %5366 = vmatpush.bf16.xpose.msra.mxu0 %v5357
          %5367 = vmatmul.bf16.gmra.mxu0 %v5354
          %v5368 = vpop.f32.mrf.mxu0
          %v5369 = vadd.f32 0.0, %v5368
          %v5370 = vpop.f32.mrf.mxu0
          %5371 = vdwg.mxu0
          %v5373 = vsel %vm5333, %v5251, 0
          %v5376 = vsel %vm5333, %v5287, 0
          %5378 = vmatpush.bf16.xpose.msra.mxu0 0
          %5379 = vmatpush.bf16.xpose.msra.mxu0 0
          %5380 = vmatpush.bf16.xpose.msra.mxu0 0
          %5381 = vmatpush.bf16.xpose.msra.mxu0 0
          %5382 = vmatpush.bf16.xpose.msra.mxu0 0
          %5383 = vmatpush.bf16.xpose.msra.mxu0 0
          %5384 = vmatpush.bf16.xpose.msra.mxu0 0
          %5385 = vmatpush.bf16.xpose.msra.mxu0 %v5376
          %5386 = vmatmul.bf16.gmra.mxu0 %v5373
          %v5387 = vpop.f32.mrf.mxu0
          %v5388 = vadd.f32 0.0, %v5387
          %v5389 = vpop.f32.mrf.mxu0
          %5390 = vdwg.mxu0
          %v5392 = vsel %vm5333, %v5252, 0
          %v5395 = vsel %vm5333, %v5288, 0
          %5397 = vmatpush.bf16.xpose.msra.mxu0 0
          %5398 = vmatpush.bf16.xpose.msra.mxu0 0
          %5399 = vmatpush.bf16.xpose.msra.mxu0 0
          %5400 = vmatpush.bf16.xpose.msra.mxu0 0
          %5401 = vmatpush.bf16.xpose.msra.mxu0 0
          %5402 = vmatpush.bf16.xpose.msra.mxu0 0
          %5403 = vmatpush.bf16.xpose.msra.mxu0 0
          %5404 = vmatpush.bf16.xpose.msra.mxu0 %v5395
          %5405 = vmatmul.bf16.gmra.mxu0 %v5392
          %v5406 = vpop.f32.mrf.mxu0
          %v5407 = vadd.f32 0.0, %v5406
          %v5408 = vpop.f32.mrf.mxu0
          %5409 = vdwg.mxu0
          %v5411 = vsel %vm5333, %v5253, 0
          %v5414 = vsel %vm5333, %v5289, 0
          %5416 = vmatpush.bf16.xpose.msra.mxu0 0
          %5417 = vmatpush.bf16.xpose.msra.mxu0 0
          %5418 = vmatpush.bf16.xpose.msra.mxu0 0
          %5419 = vmatpush.bf16.xpose.msra.mxu0 0
          %5420 = vmatpush.bf16.xpose.msra.mxu0 0
          %5421 = vmatpush.bf16.xpose.msra.mxu0 0
          %5422 = vmatpush.bf16.xpose.msra.mxu0 0
          %5423 = vmatpush.bf16.xpose.msra.mxu0 %v5414
          %5424 = vmatmul.bf16.gmra.mxu0 %v5411
          %v5425 = vpop.f32.mrf.mxu0
          %v5426 = vadd.f32 0.0, %v5425
          %v5427 = vpop.f32.mrf.mxu0
          %5428 = vdwg.mxu0
          %v5430 = vsel %vm5333, %v5254, 0
          %v5433 = vsel %vm5333, %v5290, 0
          %5435 = vmatpush.bf16.xpose.msra.mxu0 0
          %5436 = vmatpush.bf16.xpose.msra.mxu0 0
          %5437 = vmatpush.bf16.xpose.msra.mxu0 0
          %5438 = vmatpush.bf16.xpose.msra.mxu0 0
          %5439 = vmatpush.bf16.xpose.msra.mxu0 0
          %5440 = vmatpush.bf16.xpose.msra.mxu0 0
          %5441 = vmatpush.bf16.xpose.msra.mxu0 0
          %5442 = vmatpush.bf16.xpose.msra.mxu0 %v5433
          %5443 = vmatmul.bf16.gmra.mxu0 %v5430
          %v5444 = vpop.f32.mrf.mxu0
          %v5445 = vadd.f32 0.0, %v5444
          %v5446 = vpop.f32.mrf.mxu0
          %5447 = vdwg.mxu0
          %v5449 = vsel %vm5333, %v5255, 0
          %v5452 = vsel %vm5333, %v5291, 0
          %5454 = vmatpush.bf16.xpose.msra.mxu0 0
          %5455 = vmatpush.bf16.xpose.msra.mxu0 0
          %5456 = vmatpush.bf16.xpose.msra.mxu0 0
          %5457 = vmatpush.bf16.xpose.msra.mxu0 0
          %5458 = vmatpush.bf16.xpose.msra.mxu0 0
          %5459 = vmatpush.bf16.xpose.msra.mxu0 0
          %5460 = vmatpush.bf16.xpose.msra.mxu0 0
          %5461 = vmatpush.bf16.xpose.msra.mxu0 %v5452
          %5462 = vmatmul.bf16.gmra.mxu0 %v5449
          %v5463 = vpop.f32.mrf.mxu0
          %v5464 = vadd.f32 0.0, %v5463
          %v5465 = vpop.f32.mrf.mxu0
          %5466 = vdwg.mxu0
          %v5468 = vsel %vm5333, %v5256, 0
          %v5471 = vsel %vm5333, %v5292, 0
          %5473 = vmatpush.bf16.xpose.msra.mxu0 0
          %5474 = vmatpush.bf16.xpose.msra.mxu0 0
          %5475 = vmatpush.bf16.xpose.msra.mxu0 0
          %5476 = vmatpush.bf16.xpose.msra.mxu0 0
          %5477 = vmatpush.bf16.xpose.msra.mxu0 0
          %5478 = vmatpush.bf16.xpose.msra.mxu0 0
          %5479 = vmatpush.bf16.xpose.msra.mxu0 0
          %5480 = vmatpush.bf16.xpose.msra.mxu0 %v5471
          %5481 = vmatmul.bf16.gmra.mxu0 %v5468
          %v5482 = vpop.f32.mrf.mxu0
          %v5483 = vadd.f32 0.0, %v5482
          %v5484 = vpop.f32.mrf.mxu0
          %5485 = vdwg.mxu0
          %v5487 = vsel %vm5333, %v5257, 0
          %v5490 = vsel %vm5333, %v5293, 0
          %5492 = vmatpush.bf16.xpose.msra.mxu0 0
          %5493 = vmatpush.bf16.xpose.msra.mxu0 0
          %5494 = vmatpush.bf16.xpose.msra.mxu0 0
          %5495 = vmatpush.bf16.xpose.msra.mxu0 0
          %5496 = vmatpush.bf16.xpose.msra.mxu0 0
          %5497 = vmatpush.bf16.xpose.msra.mxu0 0
          %5498 = vmatpush.bf16.xpose.msra.mxu0 0
          %5499 = vmatpush.bf16.xpose.msra.mxu0 %v5490
          %5500 = vmatmul.bf16.gmra.mxu0 %v5487
          %v5501 = vpop.f32.mrf.mxu0
          %v5502 = vadd.f32 0.0, %v5501
          %v5503 = vpop.f32.mrf.mxu0
          %5504 = vdwg.mxu0
          %v5506 = vsel %vm5333, %v5258, 0
          %v5509 = vsel %vm5333, %v5294, 0
          %5511 = vmatpush.bf16.xpose.msra.mxu0 0
          %5512 = vmatpush.bf16.xpose.msra.mxu0 0
          %5513 = vmatpush.bf16.xpose.msra.mxu0 0
          %5514 = vmatpush.bf16.xpose.msra.mxu0 0
          %5515 = vmatpush.bf16.xpose.msra.mxu0 0
          %5516 = vmatpush.bf16.xpose.msra.mxu0 0
          %5517 = vmatpush.bf16.xpose.msra.mxu0 0
          %5518 = vmatpush.bf16.xpose.msra.mxu0 %v5509
          %5519 = vmatmul.bf16.gmra.mxu0 %v5506
          %v5520 = vpop.f32.mrf.mxu0
          %v5521 = vadd.f32 0.0, %v5520
          %v5522 = vpop.f32.mrf.mxu0
          %5523 = vdwg.mxu0
          %v5525 = vsel %vm5333, %v5259, 0
          %v5528 = vsel %vm5333, %v5295, 0
          %5530 = vmatpush.bf16.xpose.msra.mxu0 0
          %5531 = vmatpush.bf16.xpose.msra.mxu0 0
          %5532 = vmatpush.bf16.xpose.msra.mxu0 0
          %5533 = vmatpush.bf16.xpose.msra.mxu0 0
          %5534 = vmatpush.bf16.xpose.msra.mxu0 0
          %5535 = vmatpush.bf16.xpose.msra.mxu0 0
          %5536 = vmatpush.bf16.xpose.msra.mxu0 0
          %5537 = vmatpush.bf16.xpose.msra.mxu0 %v5528
          %5538 = vmatmul.bf16.gmra.mxu0 %v5525
          %v5539 = vpop.f32.mrf.mxu0
          %v5540 = vadd.f32 0.0, %v5539
          %v5541 = vpop.f32.mrf.mxu0
          %5542 = vdwg.mxu0
          %v5544 = vsel %vm5333, %v5260, 0
          %v5547 = vsel %vm5333, %v5296, 0
          %5549 = vmatpush.bf16.xpose.msra.mxu0 0
          %5550 = vmatpush.bf16.xpose.msra.mxu0 0
          %5551 = vmatpush.bf16.xpose.msra.mxu0 0
          %5552 = vmatpush.bf16.xpose.msra.mxu0 0
          %5553 = vmatpush.bf16.xpose.msra.mxu0 0
          %5554 = vmatpush.bf16.xpose.msra.mxu0 0
          %5555 = vmatpush.bf16.xpose.msra.mxu0 0
          %5556 = vmatpush.bf16.xpose.msra.mxu0 %v5547
          %5557 = vmatmul.bf16.gmra.mxu0 %v5544
          %v5558 = vpop.f32.mrf.mxu0
          %v5559 = vadd.f32 0.0, %v5558
          %v5560 = vpop.f32.mrf.mxu0
          %5561 = vdwg.mxu0
          %v5562 = vadd.f32 %v5350, %v5171
          %v5563 = vadd.f32 %v5369, %v5171
          %v5564 = vadd.f32 %v5388, %v5172
          %v5565 = vadd.f32 %v5407, %v5172
          %v5566 = vadd.f32 %v5426, %v5173
          %v5567 = vadd.f32 %v5445, %v5173
          %v5568 = vadd.f32 %v5464, %v5174
          %v5569 = vadd.f32 %v5483, %v5174
          %v5570 = vadd.f32 %v5502, %v5175
          %v5571 = vadd.f32 %v5521, %v5175
          %v5572 = vadd.f32 %v5540, %v5176
          %v5573 = vadd.f32 %v5559, %v5176
          %vm5574 = vcmask 64512
          %v5575 = vsel %vm5574, %v5562, -inf
          %5576 = vmax.xlane.f32.xlu0 %v5575
          %v5577 = vpop.xlane.xlu0 %5576
          %v5578 = vsel %vm5574, %v5563, -inf
          %5579 = vmax.xlane.f32.xlu0 %v5578
          %v5580 = vpop.xlane.xlu0 %5579
          %v5581 = vsel %vm5574, %v5564, -inf
          %5582 = vmax.xlane.f32.xlu0 %v5581
          %v5583 = vpop.xlane.xlu0 %5582
          %v5584 = vsel %vm5574, %v5565, -inf
          %5585 = vmax.xlane.f32.xlu0 %v5584
          %v5586 = vpop.xlane.xlu0 %5585
          %v5587 = vsel %vm5574, %v5566, -inf
          %5588 = vmax.xlane.f32.xlu0 %v5587
          %v5589 = vpop.xlane.xlu0 %5588
          %v5590 = vsel %vm5574, %v5567, -inf
          %5591 = vmax.xlane.f32.xlu0 %v5590
          %v5592 = vpop.xlane.xlu0 %5591
          %v5593 = vsel %vm5574, %v5568, -inf
          %5594 = vmax.xlane.f32.xlu0 %v5593
          %v5595 = vpop.xlane.xlu0 %5594
          %v5596 = vsel %vm5574, %v5569, -inf
          %5597 = vmax.xlane.f32.xlu0 %v5596
          %v5598 = vpop.xlane.xlu0 %5597
          %v5599 = vsel %vm5574, %v5570, -inf
          %5600 = vmax.xlane.f32.xlu0 %v5599
          %v5601 = vpop.xlane.xlu0 %5600
          %v5602 = vsel %vm5574, %v5571, -inf
          %5603 = vmax.xlane.f32.xlu0 %v5602
          %v5604 = vpop.xlane.xlu0 %5603
          %v5605 = vsel %vm5574, %v5572, -inf
          %5606 = vmax.xlane.f32.xlu0 %v5605
          %v5607 = vpop.xlane.xlu0 %5606
          %v5608 = vsel %vm5574, %v5573, -inf
          %5609 = vmax.xlane.f32.xlu0 %v5608
          %v5610 = vpop.xlane.xlu0 %5609
          %v5611 = vsub.f32 %v5562, %v5577
          %v5612 = vsub.f32 %v5563, %v5580
          %v5613 = vsub.f32 %v5564, %v5583
          %v5614 = vsub.f32 %v5565, %v5586
          %v5615 = vsub.f32 %v5566, %v5589
          %v5616 = vsub.f32 %v5567, %v5592
          %v5617 = vsub.f32 %v5568, %v5595
          %v5618 = vsub.f32 %v5569, %v5598
          %v5619 = vsub.f32 %v5570, %v5601
          %v5620 = vsub.f32 %v5571, %v5604
          %v5621 = vsub.f32 %v5572, %v5607
          %v5622 = vsub.f32 %v5573, %v5610
          %v5623 = vmul.f32 %v5611, 1.442695
          %v5624 = vpow.pop %v5623
          %v5625 = vmul.f32 %v5612, 1.442695
          %v5626 = vpow.pop %v5625
          %v5627 = vmul.f32 %v5613, 1.442695
          %v5628 = vpow.pop %v5627
          %v5629 = vmul.f32 %v5614, 1.442695
          %v5630 = vpow.pop %v5629
          %v5631 = vmul.f32 %v5615, 1.442695
          %v5632 = vpow.pop %v5631
          %v5633 = vmul.f32 %v5616, 1.442695
          %v5634 = vpow.pop %v5633
          %v5635 = vmul.f32 %v5617, 1.442695
          %v5636 = vpow.pop %v5635
          %v5637 = vmul.f32 %v5618, 1.442695
          %v5638 = vpow.pop %v5637
          %v5639 = vmul.f32 %v5619, 1.442695
          %v5640 = vpow.pop %v5639
          %v5641 = vmul.f32 %v5620, 1.442695
          %v5642 = vpow.pop %v5641
          %v5643 = vmul.f32 %v5621, 1.442695
          %v5644 = vpow.pop %v5643
          %v5645 = vmul.f32 %v5622, 1.442695
          %v5646 = vpow.pop %v5645
          %v5647 = vsel %vm5574, %v5624, 0.0
          %5648 = vadd.xlane.f32.xlu0 %v5647
          %v5649 = vpop.xlane.xlu0 %5648
          %v5650 = vsel %vm5574, %v5626, 0.0
          %5651 = vadd.xlane.f32.xlu0 %v5650
          %v5652 = vpop.xlane.xlu0 %5651
          %v5653 = vsel %vm5574, %v5628, 0.0
          %5654 = vadd.xlane.f32.xlu0 %v5653
          %v5655 = vpop.xlane.xlu0 %5654
          %v5656 = vsel %vm5574, %v5630, 0.0
          %5657 = vadd.xlane.f32.xlu0 %v5656
          %v5658 = vpop.xlane.xlu0 %5657
          %v5659 = vsel %vm5574, %v5632, 0.0
          %5660 = vadd.xlane.f32.xlu0 %v5659
          %v5661 = vpop.xlane.xlu0 %5660
          %v5662 = vsel %vm5574, %v5634, 0.0
          %5663 = vadd.xlane.f32.xlu0 %v5662
          %v5664 = vpop.xlane.xlu0 %5663
          %v5665 = vsel %vm5574, %v5636, 0.0
          %5666 = vadd.xlane.f32.xlu0 %v5665
          %v5667 = vpop.xlane.xlu0 %5666
          %v5668 = vsel %vm5574, %v5638, 0.0
          %5669 = vadd.xlane.f32.xlu0 %v5668
          %v5670 = vpop.xlane.xlu0 %5669
          %v5671 = vsel %vm5574, %v5640, 0.0
          %5672 = vadd.xlane.f32.xlu0 %v5671
          %v5673 = vpop.xlane.xlu0 %5672
          %v5674 = vsel %vm5574, %v5642, 0.0
          %5675 = vadd.xlane.f32.xlu0 %v5674
          %v5676 = vpop.xlane.xlu0 %5675
          %v5677 = vsel %vm5574, %v5644, 0.0
          %5678 = vadd.xlane.f32.xlu0 %v5677
          %v5679 = vpop.xlane.xlu0 %5678
          %v5680 = vsel %vm5574, %v5646, 0.0
          %5681 = vadd.xlane.f32.xlu0 %v5680
          %v5682 = vpop.xlane.xlu0 %5681
          %v5683 = vrcp.pop %v5649
          %v5684 = vrcp.pop %v5652
          %v5685 = vrcp.pop %v5655
          %v5686 = vrcp.pop %v5658
          %v5687 = vrcp.pop %v5661
          %v5688 = vrcp.pop %v5664
          %v5689 = vrcp.pop %v5667
          %v5690 = vrcp.pop %v5670
          %v5691 = vrcp.pop %v5673
          %v5692 = vrcp.pop %v5676
          %v5693 = vrcp.pop %v5679
          %v5694 = vrcp.pop %v5682
          %v5695 = vmul.f32 %v5624, %v5683
          %v5696 = vmul.f32 %v5626, %v5684
          %v5697 = vmul.f32 %v5628, %v5685
          %v5698 = vmul.f32 %v5630, %v5686
          %v5699 = vmul.f32 %v5632, %v5687
          %v5700 = vmul.f32 %v5634, %v5688
          %v5701 = vmul.f32 %v5636, %v5689
          %v5702 = vmul.f32 %v5638, %v5690
          %v5703 = vmul.f32 %v5640, %v5691
          %v5704 = vmul.f32 %v5642, %v5692
          %v5705 = vmul.f32 %v5644, %v5693
          %v5706 = vmul.f32 %v5646, %v5694
          %v5707 = vpack.c.bf16 %v5695, %v5695
          %v5708 = vpack.c.bf16 %v5696, %v5696
          %v5709 = vpack.c.bf16 %v5697, %v5697
          %v5710 = vpack.c.bf16 %v5698, %v5698
          %v5711 = vpack.c.bf16 %v5699, %v5699
          %v5712 = vpack.c.bf16 %v5700, %v5700
          %v5713 = vpack.c.bf16 %v5701, %v5701
          %v5714 = vpack.c.bf16 %v5702, %v5702
          %v5715 = vpack.c.bf16 %v5703, %v5703
          %v5716 = vpack.c.bf16 %v5704, %v5704
          %v5717 = vpack.c.bf16 %v5705, %v5705
          %v5718 = vpack.c.bf16 %v5706, %v5706
          %v5720 = vsel %vm5574, %v5707, 0
          %vm5722 = vcmask 1043456
          %v5724 = vsel %vm5722, %v5321, 0
          %5726 = vmatpush.bf16.msra.mxu0 0
          %5727 = vmatpush.bf16.msra.mxu0 0
          %5728 = vmatpush.bf16.msra.mxu0 0
          %5729 = vmatpush.bf16.msra.mxu0 0
          %5730 = vmatpush.bf16.msra.mxu0 0
          %5731 = vmatpush.bf16.msra.mxu0 0
          %5732 = vmatpush.bf16.msra.mxu0 0
          %5733 = vmatpush.bf16.msra.mxu0 %v5724
          %5734 = vmatmul.bf16.gmra.mxu0 %v5720
          %v5735 = vpop.f32.mrf.mxu0
          %v5736 = vadd.f32 0.0, %v5735
          %v5737 = vpop.f32.mrf.mxu0
          %5738 = vdwg.mxu0
          %v5740 = vsel %vm5574, %v5708, 0
          %v5743 = vsel %vm5722, %v5322, 0
          %5745 = vmatpush.bf16.msra.mxu0 0
          %5746 = vmatpush.bf16.msra.mxu0 0
          %5747 = vmatpush.bf16.msra.mxu0 0
          %5748 = vmatpush.bf16.msra.mxu0 0
          %5749 = vmatpush.bf16.msra.mxu0 0
          %5750 = vmatpush.bf16.msra.mxu0 0
          %5751 = vmatpush.bf16.msra.mxu0 0
          %5752 = vmatpush.bf16.msra.mxu0 %v5743
          %5753 = vmatmul.bf16.gmra.mxu0 %v5740
          %v5754 = vpop.f32.mrf.mxu0
          %v5755 = vadd.f32 0.0, %v5754
          %v5756 = vpop.f32.mrf.mxu0
          %5757 = vdwg.mxu0
          %v5759 = vsel %vm5574, %v5709, 0
          %v5762 = vsel %vm5722, %v5323, 0
          %5764 = vmatpush.bf16.msra.mxu0 0
          %5765 = vmatpush.bf16.msra.mxu0 0
          %5766 = vmatpush.bf16.msra.mxu0 0
          %5767 = vmatpush.bf16.msra.mxu0 0
          %5768 = vmatpush.bf16.msra.mxu0 0
          %5769 = vmatpush.bf16.msra.mxu0 0
          %5770 = vmatpush.bf16.msra.mxu0 0
          %5771 = vmatpush.bf16.msra.mxu0 %v5762
          %5772 = vmatmul.bf16.gmra.mxu0 %v5759
          %v5773 = vpop.f32.mrf.mxu0
          %v5774 = vadd.f32 0.0, %v5773
          %v5775 = vpop.f32.mrf.mxu0
          %5776 = vdwg.mxu0
          %v5778 = vsel %vm5574, %v5710, 0
          %v5781 = vsel %vm5722, %v5324, 0
          %5783 = vmatpush.bf16.msra.mxu0 0
          %5784 = vmatpush.bf16.msra.mxu0 0
          %5785 = vmatpush.bf16.msra.mxu0 0
          %5786 = vmatpush.bf16.msra.mxu0 0
          %5787 = vmatpush.bf16.msra.mxu0 0
          %5788 = vmatpush.bf16.msra.mxu0 0
          %5789 = vmatpush.bf16.msra.mxu0 0
          %5790 = vmatpush.bf16.msra.mxu0 %v5781
          %5791 = vmatmul.bf16.gmra.mxu0 %v5778
          %v5792 = vpop.f32.mrf.mxu0
          %v5793 = vadd.f32 0.0, %v5792
          %v5794 = vpop.f32.mrf.mxu0
          %5795 = vdwg.mxu0
          %v5797 = vsel %vm5574, %v5711, 0
          %v5800 = vsel %vm5722, %v5325, 0
          %5802 = vmatpush.bf16.msra.mxu0 0
          %5803 = vmatpush.bf16.msra.mxu0 0
          %5804 = vmatpush.bf16.msra.mxu0 0
          %5805 = vmatpush.bf16.msra.mxu0 0
          %5806 = vmatpush.bf16.msra.mxu0 0
          %5807 = vmatpush.bf16.msra.mxu0 0
          %5808 = vmatpush.bf16.msra.mxu0 0
          %5809 = vmatpush.bf16.msra.mxu0 %v5800
          %5810 = vmatmul.bf16.gmra.mxu0 %v5797
          %v5811 = vpop.f32.mrf.mxu0
          %v5812 = vadd.f32 0.0, %v5811
          %v5813 = vpop.f32.mrf.mxu0
          %5814 = vdwg.mxu0
          %v5816 = vsel %vm5574, %v5712, 0
          %v5819 = vsel %vm5722, %v5326, 0
          %5821 = vmatpush.bf16.msra.mxu0 0
          %5822 = vmatpush.bf16.msra.mxu0 0
          %5823 = vmatpush.bf16.msra.mxu0 0
          %5824 = vmatpush.bf16.msra.mxu0 0
          %5825 = vmatpush.bf16.msra.mxu0 0
          %5826 = vmatpush.bf16.msra.mxu0 0
          %5827 = vmatpush.bf16.msra.mxu0 0
          %5828 = vmatpush.bf16.msra.mxu0 %v5819
          %5829 = vmatmul.bf16.gmra.mxu0 %v5816
          %v5830 = vpop.f32.mrf.mxu0
          %v5831 = vadd.f32 0.0, %v5830
          %v5832 = vpop.f32.mrf.mxu0
          %5833 = vdwg.mxu0
          %v5835 = vsel %vm5574, %v5713, 0
          %v5838 = vsel %vm5722, %v5327, 0
          %5840 = vmatpush.bf16.msra.mxu0 0
          %5841 = vmatpush.bf16.msra.mxu0 0
          %5842 = vmatpush.bf16.msra.mxu0 0
          %5843 = vmatpush.bf16.msra.mxu0 0
          %5844 = vmatpush.bf16.msra.mxu0 0
          %5845 = vmatpush.bf16.msra.mxu0 0
          %5846 = vmatpush.bf16.msra.mxu0 0
          %5847 = vmatpush.bf16.msra.mxu0 %v5838
          %5848 = vmatmul.bf16.gmra.mxu0 %v5835
          %v5849 = vpop.f32.mrf.mxu0
          %v5850 = vadd.f32 0.0, %v5849
          %v5851 = vpop.f32.mrf.mxu0
          %5852 = vdwg.mxu0
          %v5854 = vsel %vm5574, %v5714, 0
          %v5857 = vsel %vm5722, %v5328, 0
          %5859 = vmatpush.bf16.msra.mxu0 0
          %5860 = vmatpush.bf16.msra.mxu0 0
          %5861 = vmatpush.bf16.msra.mxu0 0
          %5862 = vmatpush.bf16.msra.mxu0 0
          %5863 = vmatpush.bf16.msra.mxu0 0
          %5864 = vmatpush.bf16.msra.mxu0 0
          %5865 = vmatpush.bf16.msra.mxu0 0
          %5866 = vmatpush.bf16.msra.mxu0 %v5857
          %5867 = vmatmul.bf16.gmra.mxu0 %v5854
          %v5868 = vpop.f32.mrf.mxu0
          %v5869 = vadd.f32 0.0, %v5868
          %v5870 = vpop.f32.mrf.mxu0
          %5871 = vdwg.mxu0
          %v5873 = vsel %vm5574, %v5715, 0
          %v5876 = vsel %vm5722, %v5329, 0
          %5878 = vmatpush.bf16.msra.mxu0 0
          %5879 = vmatpush.bf16.msra.mxu0 0
          %5880 = vmatpush.bf16.msra.mxu0 0
          %5881 = vmatpush.bf16.msra.mxu0 0
          %5882 = vmatpush.bf16.msra.mxu0 0
          %5883 = vmatpush.bf16.msra.mxu0 0
          %5884 = vmatpush.bf16.msra.mxu0 0
          %5885 = vmatpush.bf16.msra.mxu0 %v5876
          %5886 = vmatmul.bf16.gmra.mxu0 %v5873
          %v5887 = vpop.f32.mrf.mxu0
          %v5888 = vadd.f32 0.0, %v5887
          %v5889 = vpop.f32.mrf.mxu0
          %5890 = vdwg.mxu0
          %v5892 = vsel %vm5574, %v5716, 0
          %v5895 = vsel %vm5722, %v5330, 0
          %5897 = vmatpush.bf16.msra.mxu0 0
          %5898 = vmatpush.bf16.msra.mxu0 0
          %5899 = vmatpush.bf16.msra.mxu0 0
          %5900 = vmatpush.bf16.msra.mxu0 0
          %5901 = vmatpush.bf16.msra.mxu0 0
          %5902 = vmatpush.bf16.msra.mxu0 0
          %5903 = vmatpush.bf16.msra.mxu0 0
          %5904 = vmatpush.bf16.msra.mxu0 %v5895
          %5905 = vmatmul.bf16.gmra.mxu0 %v5892
          %v5906 = vpop.f32.mrf.mxu0
          %v5907 = vadd.f32 0.0, %v5906
          %v5908 = vpop.f32.mrf.mxu0
          %5909 = vdwg.mxu0
          %v5911 = vsel %vm5574, %v5717, 0
          %v5914 = vsel %vm5722, %v5331, 0
          %5916 = vmatpush.bf16.msra.mxu0 0
          %5917 = vmatpush.bf16.msra.mxu0 0
          %5918 = vmatpush.bf16.msra.mxu0 0
          %5919 = vmatpush.bf16.msra.mxu0 0
          %5920 = vmatpush.bf16.msra.mxu0 0
          %5921 = vmatpush.bf16.msra.mxu0 0
          %5922 = vmatpush.bf16.msra.mxu0 0
          %5923 = vmatpush.bf16.msra.mxu0 %v5914
          %5924 = vmatmul.bf16.gmra.mxu0 %v5911
          %v5925 = vpop.f32.mrf.mxu0
          %v5926 = vadd.f32 0.0, %v5925
          %v5927 = vpop.f32.mrf.mxu0
          %5928 = vdwg.mxu0
          %v5930 = vsel %vm5574, %v5718, 0
          %v5933 = vsel %vm5722, %v5332, 0
          %5935 = vmatpush.bf16.msra.mxu0 0
          %5936 = vmatpush.bf16.msra.mxu0 0
          %5937 = vmatpush.bf16.msra.mxu0 0
          %5938 = vmatpush.bf16.msra.mxu0 0
          %5939 = vmatpush.bf16.msra.mxu0 0
          %5940 = vmatpush.bf16.msra.mxu0 0
          %5941 = vmatpush.bf16.msra.mxu0 0
          %5942 = vmatpush.bf16.msra.mxu0 %v5933
          %5943 = vmatmul.bf16.gmra.mxu0 %v5930
          %v5944 = vpop.f32.mrf.mxu0
          %v5945 = vadd.f32 0.0, %v5944
          %v5946 = vpop.f32.mrf.mxu0
          %5947 = vdwg.mxu0
          %5950 = vrot.lane.b32.xlu0 %v5774, 64
          %v5951 = vpop.permute.xlu0 %5950
          %5952 = vrot.lane.b32.xlu0 %v5793, 64
          %v5953 = vpop.permute.xlu0 %5952
          %5958 = vrot.lane.b32.xlu0 %v5850, 64
          %v5959 = vpop.permute.xlu0 %5958
          %5960 = vrot.lane.b32.xlu0 %v5869, 64
          %v5961 = vpop.permute.xlu0 %5960
          %5966 = vrot.lane.b32.xlu0 %v5926, 64
          %v5967 = vpop.permute.xlu0 %5966
          %5968 = vrot.lane.b32.xlu0 %v5945, 64
          %v5969 = vpop.permute.xlu0 %5968
          %v5972 = vsel %vm5333, %v5736, %v5951
          %v5973 = vsel %vm5333, %v5755, %v5953
          %v5974 = vsel %vm5333, %v5812, %v5959
          %v5975 = vsel %vm5333, %v5831, %v5961
          %v5976 = vsel %vm5333, %v5888, %v5967
          %v5977 = vsel %vm5333, %v5907, %v5969
          %v5978 = vpack.c.bf16 %v5973, %v5972
          %v5979 = vpack.c.bf16 %v5975, %v5974
          %v5980 = vpack.c.bf16 %v5977, %v5976
          %v6029 = vunpack.c.l.b16 %v5177
          %v6030 = vunpack.c.l.b16 %v5178
          %v6031 = vunpack.c.l.b16 %v5179
          %v6032 = vunpack.c.l.b16 %v5180
          %v6033 = vunpack.c.l.b16 %v5181
          %v6034 = vunpack.c.l.b16 %v5182
          %v6035 = vunpack.c.l.b16 %v5183
          %v6036 = vunpack.c.l.b16 %v5184
          %v6037 = vunpack.c.l.b16 %v5185
          %v6038 = vunpack.c.l.b16 %v5186
          %v6039 = vunpack.c.l.b16 %v5187
          %v6040 = vunpack.c.l.b16 %v5188
          %v6041 = vunpack.c.l.b16 %v5189
          %v6042 = vunpack.c.l.b16 %v5190
          %v6043 = vunpack.c.l.b16 %v5191
          %v6044 = vunpack.c.l.b16 %v5192
          %v6045 = vunpack.c.l.b16 %v5193
          %v6046 = vunpack.c.l.b16 %v5194
          %v6047 = vunpack.c.l.b16 %v5195
          %v6048 = vunpack.c.l.b16 %v5196
          %v6049 = vunpack.c.l.b16 %v5197
          %v6050 = vunpack.c.l.b16 %v5198
          %v6051 = vunpack.c.l.b16 %v5199
          %v6052 = vunpack.c.l.b16 %v5200
          %v6053 = vunpack.c.l.b16 %v5201
          %v6054 = vunpack.c.l.b16 %v5202
          %v6055 = vunpack.c.l.b16 %v5203
          %v6056 = vunpack.c.l.b16 %v5204
          %v6057 = vunpack.c.l.b16 %v5205
          %v6058 = vunpack.c.l.b16 %v5206
          %v6059 = vunpack.c.l.b16 %v5207
          %v6060 = vunpack.c.l.b16 %v5208
          %v6061 = vunpack.c.l.b16 %v5209
          %v6062 = vunpack.c.l.b16 %v5210
          %v6063 = vunpack.c.l.b16 %v5211
          %v6064 = vunpack.c.l.b16 %v5212
          %v6065 = vunpack.c.l.b16 %v5213
          %v6066 = vunpack.c.l.b16 %v5214
          %v6067 = vunpack.c.l.b16 %v5215
          %v6068 = vunpack.c.l.b16 %v5216
          %v6069 = vunpack.c.l.b16 %v5217
          %v6070 = vunpack.c.l.b16 %v5218
          %v6071 = vunpack.c.l.b16 %v5219
          %v6072 = vunpack.c.l.b16 %v5220
          %v6073 = vunpack.c.l.b16 %v5221
          %v6074 = vunpack.c.l.b16 %v5222
          %v6075 = vunpack.c.l.b16 %v5223
          %v6076 = vunpack.c.l.b16 %v5224
          %v6077 = vpack.c.b16 %v6030, %v6029
          %v6078 = vpack.c.b16 %v6032, %v6031
          %v6079 = vpack.c.b16 %v6034, %v6033
          %v6080 = vpack.c.b16 %v6036, %v6035
          %v6081 = vpack.c.b16 %v6038, %v6037
          %v6082 = vpack.c.b16 %v6040, %v6039
          %v6083 = vpack.c.b16 %v6042, %v6041
          %v6084 = vpack.c.b16 %v6044, %v6043
          %v6085 = vpack.c.b16 %v6046, %v6045
          %v6086 = vpack.c.b16 %v6048, %v6047
          %v6087 = vpack.c.b16 %v6050, %v6049
          %v6088 = vpack.c.b16 %v6052, %v6051
          %v6089 = vpack.c.b16 %v6054, %v6053
          %v6090 = vpack.c.b16 %v6056, %v6055
          %v6091 = vpack.c.b16 %v6058, %v6057
          %v6092 = vpack.c.b16 %v6060, %v6059
          %v6093 = vpack.c.b16 %v6062, %v6061
          %v6094 = vpack.c.b16 %v6064, %v6063
          %v6095 = vpack.c.b16 %v6066, %v6065
          %v6096 = vpack.c.b16 %v6068, %v6067
          %v6097 = vpack.c.b16 %v6070, %v6069
          %v6098 = vpack.c.b16 %v6072, %v6071
          %v6099 = vpack.c.b16 %v6074, %v6073
          %v6100 = vpack.c.b16 %v6076, %v6075
          %6125 = vmatpush.bf16.msra.mxu0 %v6084
          %6126 = vmatpush.bf16.msra.mxu0 %v6083
          %6127 = vmatpush.bf16.msra.mxu0 %v6082
          %6128 = vmatpush.bf16.msra.mxu0 %v6081
          %6129 = vmatpush.bf16.msra.mxu0 %v6080
          %6130 = vmatpush.bf16.msra.mxu0 %v6079
          %6131 = vmatpush.bf16.msra.mxu0 %v6078
          %6132 = vmatpush.bf16.msra.mxu0 %v6077
          %6133 = vmatmul.bf16.gmra.mxu0 %v5978
          %v6134 = vpop.f32.mrf.mxu0
          %v6135 = vadd.f32 0.0, %v6134
          %v6136 = vpop.f32.mrf.mxu0
          %v6137 = vadd.f32 0.0, %v6136
          %6138 = vdwg.mxu0
          %6139 = vmatpush.bf16.msra.mxu0 %v6092
          %6140 = vmatpush.bf16.msra.mxu0 %v6091
          %6141 = vmatpush.bf16.msra.mxu0 %v6090
          %6142 = vmatpush.bf16.msra.mxu0 %v6089
          %6143 = vmatpush.bf16.msra.mxu0 %v6088
          %6144 = vmatpush.bf16.msra.mxu0 %v6087
          %6145 = vmatpush.bf16.msra.mxu0 %v6086
          %6146 = vmatpush.bf16.msra.mxu0 %v6085
          %6147 = vmatmul.bf16.gmra.mxu0 %v5979
          %v6148 = vpop.f32.mrf.mxu0
          %v6149 = vadd.f32 %v6135, %v6148
          %v6150 = vpop.f32.mrf.mxu0
          %v6151 = vadd.f32 %v6137, %v6150
          %6152 = vdwg.mxu0
          %6153 = vmatpush.bf16.msra.mxu0 %v6100
          %6154 = vmatpush.bf16.msra.mxu0 %v6099
          %6155 = vmatpush.bf16.msra.mxu0 %v6098
          %6156 = vmatpush.bf16.msra.mxu0 %v6097
          %6157 = vmatpush.bf16.msra.mxu0 %v6096
          %6158 = vmatpush.bf16.msra.mxu0 %v6095
          %6159 = vmatpush.bf16.msra.mxu0 %v6094
          %6160 = vmatpush.bf16.msra.mxu0 %v6093
          %6161 = vmatmul.bf16.gmra.mxu0 %v5980
          %v6162 = vpop.f32.mrf.mxu0
          %v6163 = vadd.f32 %v6149, %v6162
          %v6164 = vpop.f32.mrf.mxu0
          %v6165 = vadd.f32 %v6151, %v6164
          %6166 = vdwg.mxu0
          %v6167 = vadd.f32 %v4549, %v6163
          %v6168 = vadd.f32 %v4550, %v6165
          %v6169 = vld [vmem:[%s1378] sm:$0x1]
          %v6170 = vmul.f32 %v6167, %v6167
          %v6171 = vmul.f32 %v6168, %v6168
          %6172 = vadd.xlane.f32.xlu0 %v6170
          %v6173 = vpop.xlane.xlu0 %6172
          %6174 = vadd.xlane.f32.xlu0 %v6171
          %v6175 = vpop.xlane.xlu0 %6174
          %v6176 = vmul.f32 %v6173, %v4564
          %v6177 = vmul.f32 %v6175, %v4564
          %v6178 = vadd.f32 %v6176, 1e-06
          %v6179 = vadd.f32 %v6177, 1e-06
          %v6180 = vrsqrt.pop %v6178
          %v6181 = vmul.f32 %v6180, %v6178
          %v6182 = vmul.f32 %v6181, %v6180
          %v6183 = vmul.f32 0.5, %v6182
          %v6184 = vsub.f32 1.5, %v6183
          %v6185 = vmul.f32 %v6180, %v6184
          %vm6186 = vweird.f32 %v6178
          %vm6187 = vweird.f32 %v6180
          %vm6188 = vmor %vm6186, %vm6187
          %v6189 = vsel %vm6188, %v6180, %v6185
          %v6190 = vrsqrt.pop %v6179
          %v6191 = vmul.f32 %v6190, %v6179
          %v6192 = vmul.f32 %v6191, %v6190
          %v6193 = vmul.f32 0.5, %v6192
          %v6194 = vsub.f32 1.5, %v6193
          %v6195 = vmul.f32 %v6190, %v6194
          %vm6196 = vweird.f32 %v6179
          %vm6197 = vweird.f32 %v6190
          %vm6198 = vmor %vm6196, %vm6197
          %v6199 = vsel %vm6198, %v6190, %v6195
          %v6200 = vmul.f32 %v6167, %v6189
          %v6201 = vmul.f32 %v6168, %v6199
          %v6203 = vperm.slane %v6169, 0
          %v6205 = vmul.f32 %v6200, %v6203
          %v6206 = vmul.f32 %v6201, %v6203
          %v6207 = vld [vmem:[%s1388] sm:$0xff]
          %v6208 = vld [vmem:[%s1388 + $0x8] sm:$0xf]
          %v6209 = vld [vmem:[%s1388 + $0xc] sm:$0xff]
          %v6210 = vld [vmem:[%s1388 + $0x14] sm:$0xf]
          %v6211 = vld [vmem:[%s1388 + $0x18] sm:$0xff]
          %v6212 = vld [vmem:[%s1388 + $0x20] sm:$0xf]
          %v6213 = vld [vmem:[%s1388 + $0x24] sm:$0xff]
          %v6214 = vld [vmem:[%s1388 + $0x2c] sm:$0xf]
          %v6215 = vld [vmem:[%s1388 + $0x30] sm:$0xff]
          %v6216 = vld [vmem:[%s1388 + $0x38] sm:$0xf]
          %v6217 = vld [vmem:[%s1388 + $0x3c] sm:$0xff]
          %v6218 = vld [vmem:[%s1388 + $0x44] sm:$0xf]
          %v6219 = vld [vmem:[%s1388 + $0x48] sm:$0xff]
          %v6220 = vld [vmem:[%s1388 + $0x50] sm:$0xf]
          %v6221 = vld [vmem:[%s1388 + $0x54] sm:$0xff]
          %v6222 = vld [vmem:[%s1388 + $0x5c] sm:$0xf]
          %v6223 = vld [vmem:[%s1388 + $0x60] sm:$0xff]
          %v6224 = vld [vmem:[%s1388 + $0x68] sm:$0xf]
          %v6225 = vld [vmem:[%s1388 + $0x6c] sm:$0xff]
          %v6226 = vld [vmem:[%s1388 + $0x74] sm:$0xf]
          %v6227 = vld [vmem:[%s1388 + $0x78] sm:$0xff]
          %v6228 = vld [vmem:[%s1388 + $0x80] sm:$0xf]
          %v6229 = vld [vmem:[%s1388 + $0x84] sm:$0xff]
          %v6230 = vld [vmem:[%s1388 + $0x8c] sm:$0xf]
          %v6231 = vld [vmem:[%s1388 + $0x90] sm:$0xff]
          %v6232 = vld [vmem:[%s1388 + $0x98] sm:$0xf]
          %v6233 = vld [vmem:[%s1388 + $0x9c] sm:$0xff]
          %v6234 = vld [vmem:[%s1388 + $0xa4] sm:$0xf]
          %v6235 = vld [vmem:[%s1388 + $0xa8] sm:$0xff]
          %v6236 = vld [vmem:[%s1388 + $0xb0] sm:$0xf]
          %v6237 = vld [vmem:[%s1388 + $0xb4] sm:$0xff]
          %v6238 = vld [vmem:[%s1388 + $0xbc] sm:$0xf]
          %v6239 = vpack.c.bf16 %v6206, %v6205
          %v6272 = vunpack.c.l.b16 %v6207
          %v6273 = vunpack.c.h.b16 %v6207
          %v6274 = vunpack.c.l.b16 %v6208
          %v6275 = vunpack.c.l.b16 %v6209
          %v6276 = vunpack.c.h.b16 %v6209
          %v6277 = vunpack.c.l.b16 %v6210
          %v6278 = vunpack.c.l.b16 %v6211
          %v6279 = vunpack.c.h.b16 %v6211
          %v6280 = vunpack.c.l.b16 %v6212
          %v6281 = vunpack.c.l.b16 %v6213
          %v6282 = vunpack.c.h.b16 %v6213
          %v6283 = vunpack.c.l.b16 %v6214
          %v6284 = vunpack.c.l.b16 %v6215
          %v6285 = vunpack.c.h.b16 %v6215
          %v6286 = vunpack.c.l.b16 %v6216
          %v6287 = vunpack.c.l.b16 %v6217
          %v6288 = vunpack.c.h.b16 %v6217
          %v6289 = vunpack.c.l.b16 %v6218
          %v6290 = vunpack.c.l.b16 %v6219
          %v6291 = vunpack.c.h.b16 %v6219
          %v6292 = vunpack.c.l.b16 %v6220
          %v6293 = vunpack.c.l.b16 %v6221
          %v6294 = vunpack.c.h.b16 %v6221
          %v6295 = vunpack.c.l.b16 %v6222
          %v6296 = vunpack.c.l.b16 %v6223
          %v6297 = vunpack.c.h.b16 %v6223
          %v6298 = vunpack.c.l.b16 %v6224
          %v6299 = vunpack.c.l.b16 %v6225
          %v6300 = vunpack.c.h.b16 %v6225
          %v6301 = vunpack.c.l.b16 %v6226
          %v6302 = vunpack.c.l.b16 %v6227
          %v6303 = vunpack.c.h.b16 %v6227
          %v6304 = vunpack.c.l.b16 %v6228
          %v6305 = vunpack.c.l.b16 %v6229
          %v6306 = vunpack.c.h.b16 %v6229
          %v6307 = vunpack.c.l.b16 %v6230
          %v6308 = vunpack.c.l.b16 %v6231
          %v6309 = vunpack.c.h.b16 %v6231
          %v6310 = vunpack.c.l.b16 %v6232
          %v6311 = vunpack.c.l.b16 %v6233
          %v6312 = vunpack.c.h.b16 %v6233
          %v6313 = vunpack.c.l.b16 %v6234
          %v6314 = vunpack.c.l.b16 %v6235
          %v6315 = vunpack.c.h.b16 %v6235
          %v6316 = vunpack.c.l.b16 %v6236
          %v6317 = vunpack.c.l.b16 %v6237
          %v6318 = vunpack.c.h.b16 %v6237
          %v6319 = vunpack.c.l.b16 %v6238
          %v6320 = vpack.c.b16 %v6275, %v6272
          %v6321 = vpack.c.b16 %v6276, %v6273
          %v6322 = vpack.c.b16 %v6277, %v6274
          %v6323 = vpack.c.b16 %v6281, %v6278
          %v6324 = vpack.c.b16 %v6282, %v6279
          %v6325 = vpack.c.b16 %v6283, %v6280
          %v6326 = vpack.c.b16 %v6287, %v6284
          %v6327 = vpack.c.b16 %v6288, %v6285
          %v6328 = vpack.c.b16 %v6289, %v6286
          %v6329 = vpack.c.b16 %v6293, %v6290
          %v6330 = vpack.c.b16 %v6294, %v6291
          %v6331 = vpack.c.b16 %v6295, %v6292
          %v6332 = vpack.c.b16 %v6299, %v6296
          %v6333 = vpack.c.b16 %v6300, %v6297
          %v6334 = vpack.c.b16 %v6301, %v6298
          %v6335 = vpack.c.b16 %v6305, %v6302
          %v6336 = vpack.c.b16 %v6306, %v6303
          %v6337 = vpack.c.b16 %v6307, %v6304
          %v6338 = vpack.c.b16 %v6311, %v6308
          %v6339 = vpack.c.b16 %v6312, %v6309
          %v6340 = vpack.c.b16 %v6313, %v6310
          %v6341 = vpack.c.b16 %v6317, %v6314
          %v6342 = vpack.c.b16 %v6318, %v6315
          %v6343 = vpack.c.b16 %v6319, %v6316
          %6368 = vmatpush.bf16.msra.mxu0 %v6341
          %6369 = vmatpush.bf16.msra.mxu0 %v6338
          %6370 = vmatpush.bf16.msra.mxu0 %v6335
          %6371 = vmatpush.bf16.msra.mxu0 %v6332
          %6372 = vmatpush.bf16.msra.mxu0 %v6329
          %6373 = vmatpush.bf16.msra.mxu0 %v6326
          %6374 = vmatpush.bf16.msra.mxu0 %v6323
          %6375 = vmatpush.bf16.msra.mxu0 %v6320
          %6376 = vmatmul.bf16.gmra.mxu0 %v6239
          %v6377 = vpop.f32.mrf.mxu0
          %v6378 = vadd.f32 0.0, %v6377
          %v6379 = vpop.f32.mrf.mxu0
          %v6380 = vadd.f32 0.0, %v6379
          %6381 = vdwg.mxu0
          %6382 = vmatpush.bf16.msra.mxu0 %v6342
          %6383 = vmatpush.bf16.msra.mxu0 %v6339
          %6384 = vmatpush.bf16.msra.mxu0 %v6336
          %6385 = vmatpush.bf16.msra.mxu0 %v6333
          %6386 = vmatpush.bf16.msra.mxu0 %v6330
          %6387 = vmatpush.bf16.msra.mxu0 %v6327
          %6388 = vmatpush.bf16.msra.mxu0 %v6324
          %6389 = vmatpush.bf16.msra.mxu0 %v6321
          %6390 = vmatmul.bf16.gmra.mxu0 %v6239
          %v6391 = vpop.f32.mrf.mxu0
          %v6392 = vadd.f32 0.0, %v6391
          %v6393 = vpop.f32.mrf.mxu0
          %v6394 = vadd.f32 0.0, %v6393
          %6395 = vdwg.mxu0
          %6396 = vmatpush.bf16.msra.mxu0 %v6343
          %6397 = vmatpush.bf16.msra.mxu0 %v6340
          %6398 = vmatpush.bf16.msra.mxu0 %v6337
          %6399 = vmatpush.bf16.msra.mxu0 %v6334
          %6400 = vmatpush.bf16.msra.mxu0 %v6331
          %6401 = vmatpush.bf16.msra.mxu0 %v6328
          %6402 = vmatpush.bf16.msra.mxu0 %v6325
          %6403 = vmatpush.bf16.msra.mxu0 %v6322
          %6404 = vmatmul.bf16.gmra.mxu0 %v6239
          %v6405 = vpop.f32.mrf.mxu0
          %v6406 = vadd.f32 0.0, %v6405
          %v6407 = vpop.f32.mrf.mxu0
          %v6408 = vadd.f32 0.0, %v6407
          %6409 = vdwg.mxu0
          %v6410 = vld [vmem:[#allocation4] sm:$0xf]
          %v6411 = vld [vmem:[#allocation4 + $0x4] sm:$0xf]
          %v6412 = vld [vmem:[%s1618] sm:$0xff]
          %v6413 = vld [vmem:[%s1618 + $0x8] sm:$0xff]
          %v6414 = vld [vmem:[%s1618 + $0x10] sm:$0xff]
          %v6415 = vld [vmem:[%s1618 + $0x18] sm:$0xff]
          %v6416 = vld [vmem:[%s1618 + $0x20] sm:$0xff]
          %v6417 = vld [vmem:[%s1618 + $0x28] sm:$0xff]
          %v6418 = vld [vmem:[%s1618 + $0x30] sm:$0xff]
          %v6419 = vld [vmem:[%s1618 + $0x38] sm:$0xff]
          %v6420 = vld [vmem:[%s1618 + $0x40] sm:$0xff]
          %v6421 = vld [vmem:[%s1618 + $0x48] sm:$0xff]
          %v6422 = vld [vmem:[%s1618 + $0x50] sm:$0xff]
          %v6423 = vld [vmem:[%s1618 + $0x58] sm:$0xff]
          %v6424 = vld [vmem:[%s1618 + $0x60] sm:$0xff]
          %v6425 = vld [vmem:[%s1618 + $0x68] sm:$0xff]
          %v6426 = vld [vmem:[%s1618 + $0x70] sm:$0xff]
          %v6427 = vld [vmem:[%s1618 + $0x78] sm:$0xff]
          %v6428 = vld [vmem:[%s1618 + $0x80] sm:$0xff]
          %v6429 = vld [vmem:[%s1618 + $0x88] sm:$0xff]
          %v6430 = vld [vmem:[%s1618 + $0x90] sm:$0xff]
          %v6431 = vld [vmem:[%s1618 + $0x98] sm:$0xff]
          %v6432 = vld [vmem:[%s1618 + $0xa0] sm:$0xff]
          %v6433 = vld [vmem:[%s1618 + $0xa8] sm:$0xff]
          %v6434 = vld [vmem:[%s1618 + $0xb0] sm:$0xff]
          %v6435 = vld [vmem:[%s1618 + $0xb8] sm:$0xff]
          %v6436 = vld [vmem:[%s1618 + $0xc0] sm:$0xff]
          %v6437 = vld [vmem:[%s1618 + $0xc8] sm:$0xff]
          %v6438 = vld [vmem:[%s1618 + $0xd0] sm:$0xff]
          %v6439 = vld [vmem:[%s1618 + $0xd8] sm:$0xff]
          %v6440 = vld [vmem:[%s1618 + $0xe0] sm:$0xff]
          %v6441 = vld [vmem:[%s1618 + $0xe8] sm:$0xff]
          %v6442 = vld [vmem:[%s1618 + $0xf0] sm:$0xff]
          %v6443 = vld [vmem:[%s1618 + $0xf8] sm:$0xff]
          %v6444 = vld [vmem:[%s1618 + $0x100] sm:$0xff]
          %v6445 = vld [vmem:[%s1618 + $0x108] sm:$0xff]
          %v6446 = vld [vmem:[%s1618 + $0x110] sm:$0xff]
          %v6447 = vld [vmem:[%s1618 + $0x118] sm:$0xff]
          %v6448 = vld [vmem:[%s1618 + $0x120] sm:$0xff]
          %v6449 = vld [vmem:[%s1618 + $0x128] sm:$0xff]
          %v6450 = vld [vmem:[%s1618 + $0x130] sm:$0xff]
          %v6451 = vld [vmem:[%s1618 + $0x138] sm:$0xff]
          %v6452 = vld [vmem:[%s1618 + $0x140] sm:$0xff]
          %v6453 = vld [vmem:[%s1618 + $0x148] sm:$0xff]
          %v6454 = vld [vmem:[%s1618 + $0x150] sm:$0xff]
          %v6455 = vld [vmem:[%s1618 + $0x158] sm:$0xff]
          %v6456 = vld [vmem:[%s1618 + $0x160] sm:$0xff]
          %v6457 = vld [vmem:[%s1618 + $0x168] sm:$0xff]
          %v6458 = vld [vmem:[%s1618 + $0x170] sm:$0xff]
          %v6459 = vld [vmem:[%s1618 + $0x178] sm:$0xff]
          %v6462 = vunpack.c.l.b16 %v6410
          %v6463 = vunpack.c.l.b16 %v6411
          %v6464 = vpack.c.b16 %v6463, %v6462
          %v6514 = vunpack.c.l.b16 %v6412
          %v6515 = vunpack.c.h.b16 %v6412
          %v6516 = vunpack.c.l.b16 %v6413
          %v6517 = vunpack.c.h.b16 %v6413
          %v6518 = vunpack.c.l.b16 %v6414
          %v6519 = vunpack.c.h.b16 %v6414
          %v6520 = vunpack.c.l.b16 %v6415
          %v6521 = vunpack.c.h.b16 %v6415
          %v6522 = vunpack.c.l.b16 %v6416
          %v6523 = vunpack.c.h.b16 %v6416
          %v6524 = vunpack.c.l.b16 %v6417
          %v6525 = vunpack.c.h.b16 %v6417
          %v6526 = vunpack.c.l.b16 %v6418
          %v6527 = vunpack.c.h.b16 %v6418
          %v6528 = vunpack.c.l.b16 %v6419
          %v6529 = vunpack.c.h.b16 %v6419
          %v6530 = vunpack.c.l.b16 %v6420
          %v6531 = vunpack.c.h.b16 %v6420
          %v6532 = vunpack.c.l.b16 %v6421
          %v6533 = vunpack.c.h.b16 %v6421
          %v6534 = vunpack.c.l.b16 %v6422
          %v6535 = vunpack.c.h.b16 %v6422
          %v6536 = vunpack.c.l.b16 %v6423
          %v6537 = vunpack.c.h.b16 %v6423
          %v6538 = vunpack.c.l.b16 %v6424
          %v6539 = vunpack.c.h.b16 %v6424
          %v6540 = vunpack.c.l.b16 %v6425
          %v6541 = vunpack.c.h.b16 %v6425
          %v6542 = vunpack.c.l.b16 %v6426
          %v6543 = vunpack.c.h.b16 %v6426
          %v6544 = vunpack.c.l.b16 %v6427
          %v6545 = vunpack.c.h.b16 %v6427
          %v6546 = vunpack.c.l.b16 %v6428
          %v6547 = vunpack.c.h.b16 %v6428
          %v6548 = vunpack.c.l.b16 %v6429
          %v6549 = vunpack.c.h.b16 %v6429
          %v6550 = vunpack.c.l.b16 %v6430
          %v6551 = vunpack.c.h.b16 %v6430
          %v6552 = vunpack.c.l.b16 %v6431
          %v6553 = vunpack.c.h.b16 %v6431
          %v6554 = vunpack.c.l.b16 %v6432
          %v6555 = vunpack.c.h.b16 %v6432
          %v6556 = vunpack.c.l.b16 %v6433
          %v6557 = vunpack.c.h.b16 %v6433
          %v6558 = vunpack.c.l.b16 %v6434
          %v6559 = vunpack.c.h.b16 %v6434
          %v6560 = vunpack.c.l.b16 %v6435
          %v6561 = vunpack.c.h.b16 %v6435
          %v6562 = vunpack.c.l.b16 %v6436
          %v6563 = vunpack.c.h.b16 %v6436
          %v6564 = vunpack.c.l.b16 %v6437
          %v6565 = vunpack.c.h.b16 %v6437
          %v6566 = vunpack.c.l.b16 %v6438
          %v6567 = vunpack.c.h.b16 %v6438
          %v6568 = vunpack.c.l.b16 %v6439
          %v6569 = vunpack.c.h.b16 %v6439
          %v6570 = vunpack.c.l.b16 %v6440
          %v6571 = vunpack.c.h.b16 %v6440
          %v6572 = vunpack.c.l.b16 %v6441
          %v6573 = vunpack.c.h.b16 %v6441
          %v6574 = vunpack.c.l.b16 %v6442
          %v6575 = vunpack.c.h.b16 %v6442
          %v6576 = vunpack.c.l.b16 %v6443
          %v6577 = vunpack.c.h.b16 %v6443
          %v6578 = vunpack.c.l.b16 %v6444
          %v6579 = vunpack.c.h.b16 %v6444
          %v6580 = vunpack.c.l.b16 %v6445
          %v6581 = vunpack.c.h.b16 %v6445
          %v6582 = vunpack.c.l.b16 %v6446
          %v6583 = vunpack.c.h.b16 %v6446
          %v6584 = vunpack.c.l.b16 %v6447
          %v6585 = vunpack.c.h.b16 %v6447
          %v6586 = vunpack.c.l.b16 %v6448
          %v6587 = vunpack.c.h.b16 %v6448
          %v6588 = vunpack.c.l.b16 %v6449
          %v6589 = vunpack.c.h.b16 %v6449
          %v6590 = vunpack.c.l.b16 %v6450
          %v6591 = vunpack.c.h.b16 %v6450
          %v6592 = vunpack.c.l.b16 %v6451
          %v6593 = vunpack.c.h.b16 %v6451
          %v6594 = vunpack.c.l.b16 %v6452
          %v6595 = vunpack.c.h.b16 %v6452
          %v6596 = vunpack.c.l.b16 %v6453
          %v6597 = vunpack.c.h.b16 %v6453
          %v6598 = vunpack.c.l.b16 %v6454
          %v6599 = vunpack.c.h.b16 %v6454
          %v6600 = vunpack.c.l.b16 %v6455
          %v6601 = vunpack.c.h.b16 %v6455
          %v6602 = vunpack.c.l.b16 %v6456
          %v6603 = vunpack.c.h.b16 %v6456
          %v6604 = vunpack.c.l.b16 %v6457
          %v6605 = vunpack.c.h.b16 %v6457
          %v6606 = vunpack.c.l.b16 %v6458
          %v6607 = vunpack.c.h.b16 %v6458
          %v6608 = vunpack.c.l.b16 %v6459
          %v6609 = vunpack.c.h.b16 %v6459
          %v6610 = vpack.c.b16 %v6520, %v6514
          %v6611 = vpack.c.b16 %v6521, %v6515
          %v6612 = vpack.c.b16 %v6522, %v6516
          %v6613 = vpack.c.b16 %v6523, %v6517
          %v6614 = vpack.c.b16 %v6524, %v6518
          %v6615 = vpack.c.b16 %v6525, %v6519
          %v6616 = vpack.c.b16 %v6532, %v6526
          %v6617 = vpack.c.b16 %v6533, %v6527
          %v6618 = vpack.c.b16 %v6534, %v6528
          %v6619 = vpack.c.b16 %v6535, %v6529
          %v6620 = vpack.c.b16 %v6536, %v6530
          %v6621 = vpack.c.b16 %v6537, %v6531
          %v6622 = vpack.c.b16 %v6544, %v6538
          %v6623 = vpack.c.b16 %v6545, %v6539
          %v6624 = vpack.c.b16 %v6546, %v6540
          %v6625 = vpack.c.b16 %v6547, %v6541
          %v6626 = vpack.c.b16 %v6548, %v6542
          %v6627 = vpack.c.b16 %v6549, %v6543
          %v6628 = vpack.c.b16 %v6556, %v6550
          %v6629 = vpack.c.b16 %v6557, %v6551
          %v6630 = vpack.c.b16 %v6558, %v6552
          %v6631 = vpack.c.b16 %v6559, %v6553
          %v6632 = vpack.c.b16 %v6560, %v6554
          %v6633 = vpack.c.b16 %v6561, %v6555
          %v6634 = vpack.c.b16 %v6568, %v6562
          %v6635 = vpack.c.b16 %v6569, %v6563
          %v6636 = vpack.c.b16 %v6570, %v6564
          %v6637 = vpack.c.b16 %v6571, %v6565
          %v6638 = vpack.c.b16 %v6572, %v6566
          %v6639 = vpack.c.b16 %v6573, %v6567
          %v6640 = vpack.c.b16 %v6580, %v6574
          %v6641 = vpack.c.b16 %v6581, %v6575
          %v6642 = vpack.c.b16 %v6582, %v6576
          %v6643 = vpack.c.b16 %v6583, %v6577
          %v6644 = vpack.c.b16 %v6584, %v6578
          %v6645 = vpack.c.b16 %v6585, %v6579
          %v6646 = vpack.c.b16 %v6592, %v6586
          %v6647 = vpack.c.b16 %v6593, %v6587
          %v6648 = vpack.c.b16 %v6594, %v6588
          %v6649 = vpack.c.b16 %v6595, %v6589
          %v6650 = vpack.c.b16 %v6596, %v6590
          %v6651 = vpack.c.b16 %v6597, %v6591
          %v6652 = vpack.c.b16 %v6604, %v6598
          %v6653 = vpack.c.b16 %v6605, %v6599
          %v6654 = vpack.c.b16 %v6606, %v6600
          %v6655 = vpack.c.b16 %v6607, %v6601
          %v6656 = vpack.c.b16 %v6608, %v6602
          %v6657 = vpack.c.b16 %v6609, %v6603
          %6706 = vmatpush.bf16.msra.mxu0 %v6652
          %6707 = vmatpush.bf16.msra.mxu0 %v6646
          %6708 = vmatpush.bf16.msra.mxu0 %v6640
          %6709 = vmatpush.bf16.msra.mxu0 %v6634
          %6710 = vmatpush.bf16.msra.mxu0 %v6628
          %6711 = vmatpush.bf16.msra.mxu0 %v6622
          %6712 = vmatpush.bf16.msra.mxu0 %v6616
          %6713 = vmatpush.bf16.msra.mxu0 %v6610
          %6714 = vmatmul.bf16.gmra.mxu0 %v6464
          %v6715 = vpop.f32.mrf.mxu0
          %v6716 = vadd.f32 0.0, %v6715
          %v6717 = vpop.f32.mrf.mxu0
          %v6718 = vadd.f32 0.0, %v6717
          %6719 = vdwg.mxu0
          %6720 = vmatpush.bf16.msra.mxu0 %v6653
          %6721 = vmatpush.bf16.msra.mxu0 %v6647
          %6722 = vmatpush.bf16.msra.mxu0 %v6641
          %6723 = vmatpush.bf16.msra.mxu0 %v6635
          %6724 = vmatpush.bf16.msra.mxu0 %v6629
          %6725 = vmatpush.bf16.msra.mxu0 %v6623
          %6726 = vmatpush.bf16.msra.mxu0 %v6617
          %6727 = vmatpush.bf16.msra.mxu0 %v6611
          %6728 = vmatmul.bf16.gmra.mxu0 %v6464
          %v6729 = vpop.f32.mrf.mxu0
          %v6730 = vadd.f32 0.0, %v6729
          %v6731 = vpop.f32.mrf.mxu0
          %v6732 = vadd.f32 0.0, %v6731
          %6733 = vdwg.mxu0
          %6734 = vmatpush.bf16.msra.mxu0 %v6654
          %6735 = vmatpush.bf16.msra.mxu0 %v6648
          %6736 = vmatpush.bf16.msra.mxu0 %v6642
          %6737 = vmatpush.bf16.msra.mxu0 %v6636
          %6738 = vmatpush.bf16.msra.mxu0 %v6630
          %6739 = vmatpush.bf16.msra.mxu0 %v6624
          %6740 = vmatpush.bf16.msra.mxu0 %v6618
          %6741 = vmatpush.bf16.msra.mxu0 %v6612
          %6742 = vmatmul.bf16.gmra.mxu0 %v6464
          %v6743 = vpop.f32.mrf.mxu0
          %v6744 = vadd.f32 0.0, %v6743
          %v6745 = vpop.f32.mrf.mxu0
          %v6746 = vadd.f32 0.0, %v6745
          %6747 = vdwg.mxu0
          %6748 = vmatpush.bf16.msra.mxu0 %v6655
          %6749 = vmatpush.bf16.msra.mxu0 %v6649
          %6750 = vmatpush.bf16.msra.mxu0 %v6643
          %6751 = vmatpush.bf16.msra.mxu0 %v6637
          %6752 = vmatpush.bf16.msra.mxu0 %v6631
          %6753 = vmatpush.bf16.msra.mxu0 %v6625
          %6754 = vmatpush.bf16.msra.mxu0 %v6619
          %6755 = vmatpush.bf16.msra.mxu0 %v6613
          %6756 = vmatmul.bf16.gmra.mxu0 %v6464
          %v6757 = vpop.f32.mrf.mxu0
          %v6758 = vadd.f32 0.0, %v6757
          %v6759 = vpop.f32.mrf.mxu0
          %v6760 = vadd.f32 0.0, %v6759
          %6761 = vdwg.mxu0
          %6762 = vmatpush.bf16.msra.mxu0 %v6656
          %6763 = vmatpush.bf16.msra.mxu0 %v6650
          %6764 = vmatpush.bf16.msra.mxu0 %v6644
          %6765 = vmatpush.bf16.msra.mxu0 %v6638
          %6766 = vmatpush.bf16.msra.mxu0 %v6632
          %6767 = vmatpush.bf16.msra.mxu0 %v6626
          %6768 = vmatpush.bf16.msra.mxu0 %v6620
          %6769 = vmatpush.bf16.msra.mxu0 %v6614
          %6770 = vmatmul.bf16.gmra.mxu0 %v6464
          %v6771 = vpop.f32.mrf.mxu0
          %v6772 = vadd.f32 0.0, %v6771
          %v6773 = vpop.f32.mrf.mxu0
          %v6774 = vadd.f32 0.0, %v6773
          %6775 = vdwg.mxu0
          %6776 = vmatpush.bf16.msra.mxu0 %v6657
          %6777 = vmatpush.bf16.msra.mxu0 %v6651
          %6778 = vmatpush.bf16.msra.mxu0 %v6645
          %6779 = vmatpush.bf16.msra.mxu0 %v6639
          %6780 = vmatpush.bf16.msra.mxu0 %v6633
          %6781 = vmatpush.bf16.msra.mxu0 %v6627
          %6782 = vmatpush.bf16.msra.mxu0 %v6621
          %6783 = vmatpush.bf16.msra.mxu0 %v6615
          %6784 = vmatmul.bf16.gmra.mxu0 %v6464
          %v6785 = vpop.f32.mrf.mxu0
          %v6786 = vadd.f32 0.0, %v6785
          %v6787 = vpop.f32.mrf.mxu0
          %v6788 = vadd.f32 0.0, %v6787
          %6789 = vdwg.mxu0
          %v6790 = vld [vmem:[%s2] sm:$0x1]
          %v6791 = vld [vmem:[%s2 + $0x1] sm:$0x1]
          %v6792 = vld [vmem:[%s1398] sm:$0xf]
          %v6793 = vld [vmem:[%s1398 + $0x4] sm:$0xf]
          %v6794 = vld [vmem:[%s1398 + $0x8] sm:$0xf]
          %v6795 = vld [vmem:[%s1398 + $0xc] sm:$0xf]
          %v6796 = vld [vmem:[%s1398 + $0x10] sm:$0xf]
          %v6797 = vld [vmem:[%s1398 + $0x14] sm:$0xf]
          %v6798 = vld [vmem:[%s1398 + $0x18] sm:$0xf]
          %v6799 = vld [vmem:[%s1398 + $0x1c] sm:$0xf]
          %v6800 = vld [vmem:[%s1398 + $0x20] sm:$0xf]
          %v6801 = vld [vmem:[%s1398 + $0x24] sm:$0xf]
          %v6802 = vld [vmem:[%s1398 + $0x28] sm:$0xf]
          %v6803 = vld [vmem:[%s1398 + $0x2c] sm:$0xf]
          %v6804 = vld [vmem:[%s1398 + $0x30] sm:$0xf]
          %v6805 = vld [vmem:[%s1398 + $0x34] sm:$0xf]
          %v6806 = vld [vmem:[%s1398 + $0x38] sm:$0xf]
          %v6807 = vld [vmem:[%s1398 + $0x3c] sm:$0xf]
          %v6808 = vld [vmem:[%s1398 + $0x40] sm:$0xf]
          %v6809 = vld [vmem:[%s1398 + $0x44] sm:$0xf]
          %v6810 = vld [vmem:[%s1398 + $0x48] sm:$0xf]
          %v6811 = vld [vmem:[%s1398 + $0x4c] sm:$0xf]
          %v6812 = vld [vmem:[%s1398 + $0x50] sm:$0xf]
          %v6813 = vld [vmem:[%s1398 + $0x54] sm:$0xf]
          %v6814 = vld [vmem:[%s1398 + $0x58] sm:$0xf]
          %v6815 = vld [vmem:[%s1398 + $0x5c] sm:$0xf]
          %v6816 = vld [vmem:[%s1398 + $0x60] sm:$0xf]
          %v6817 = vld [vmem:[%s1398 + $0x64] sm:$0xf]
          %v6818 = vld [vmem:[%s1398 + $0x68] sm:$0xf]
          %v6819 = vld [vmem:[%s1398 + $0x6c] sm:$0xf]
          %v6820 = vld [vmem:[%s1398 + $0x70] sm:$0xf]
          %v6821 = vld [vmem:[%s1398 + $0x74] sm:$0xf]
          %v6822 = vld [vmem:[%s1398 + $0x78] sm:$0xf]
          %v6823 = vld [vmem:[%s1398 + $0x7c] sm:$0xf]
          %v6824 = vld [vmem:[%s1398 + $0x80] sm:$0xf]
          %v6825 = vld [vmem:[%s1398 + $0x84] sm:$0xf]
          %v6826 = vld [vmem:[%s1398 + $0x88] sm:$0xf]
          %v6827 = vld [vmem:[%s1398 + $0x8c] sm:$0xf]
          %v6828 = vld [vmem:[%s1398 + $0x90] sm:$0xf]
          %v6829 = vld [vmem:[%s1398 + $0x94] sm:$0xf]
          %v6830 = vld [vmem:[%s1398 + $0x98] sm:$0xf]
          %v6831 = vld [vmem:[%s1398 + $0x9c] sm:$0xf]
          %v6832 = vld [vmem:[%s1398 + $0xa0] sm:$0xf]
          %v6833 = vld [vmem:[%s1398 + $0xa4] sm:$0xf]
          %v6834 = vld [vmem:[%s1398 + $0xa8] sm:$0xf]
          %v6835 = vld [vmem:[%s1398 + $0xac] sm:$0xf]
          %v6836 = vld [vmem:[%s1398 + $0xb0] sm:$0xf]
          %v6837 = vld [vmem:[%s1398 + $0xb4] sm:$0xf]
          %v6838 = vld [vmem:[%s1398 + $0xb8] sm:$0xf]
          %v6839 = vld [vmem:[%s1398 + $0xbc] sm:$0xf]
          %6842 = vrot.lane.b32.xlu0 %v6378, 64
          %v6843 = vpop.permute.xlu0 %6842
          %6844 = vrot.lane.b32.xlu0 %v6380, 64
          %v6845 = vpop.permute.xlu0 %6844
          %6850 = vrot.lane.b32.xlu0 %v6392, 64
          %v6851 = vpop.permute.xlu0 %6850
          %6852 = vrot.lane.b32.xlu0 %v6394, 64
          %v6853 = vpop.permute.xlu0 %6852
          %6858 = vrot.lane.b32.xlu0 %v6406, 64
          %v6859 = vpop.permute.xlu0 %6858
          %6860 = vrot.lane.b32.xlu0 %v6408, 64
          %v6861 = vpop.permute.xlu0 %6860
          %v6864 = vpack.c.bf16 %v6378, %v6378
          %v6865 = vpack.c.bf16 %v6380, %v6380
          %v6866 = vpack.c.bf16 %v6843, %v6843
          %v6867 = vpack.c.bf16 %v6845, %v6845
          %v6868 = vpack.c.bf16 %v6392, %v6392
          %v6869 = vpack.c.bf16 %v6394, %v6394
          %v6870 = vpack.c.bf16 %v6851, %v6851
          %v6871 = vpack.c.bf16 %v6853, %v6853
          %v6872 = vpack.c.bf16 %v6406, %v6406
          %v6873 = vpack.c.bf16 %v6408, %v6408
          %v6874 = vpack.c.bf16 %v6859, %v6859
          %v6875 = vpack.c.bf16 %v6861, %v6861
          %6878 = vrot.lane.b32.xlu0 %v6716, 64
          %v6879 = vpop.permute.xlu0 %6878
          %6880 = vrot.lane.b32.xlu0 %v6718, 64
          %v6881 = vpop.permute.xlu0 %6880
          %6886 = vrot.lane.b32.xlu0 %v6730, 64
          %v6887 = vpop.permute.xlu0 %6886
          %6888 = vrot.lane.b32.xlu0 %v6732, 64
          %v6889 = vpop.permute.xlu0 %6888
          %6894 = vrot.lane.b32.xlu0 %v6744, 64
          %v6895 = vpop.permute.xlu0 %6894
          %6896 = vrot.lane.b32.xlu0 %v6746, 64
          %v6897 = vpop.permute.xlu0 %6896
          %v6900 = vpack.c.bf16 %v6716, %v6716
          %v6901 = vpack.c.bf16 %v6718, %v6718
          %v6902 = vpack.c.bf16 %v6879, %v6879
          %v6903 = vpack.c.bf16 %v6881, %v6881
          %v6904 = vpack.c.bf16 %v6730, %v6730
          %v6905 = vpack.c.bf16 %v6732, %v6732
          %v6906 = vpack.c.bf16 %v6887, %v6887
          %v6907 = vpack.c.bf16 %v6889, %v6889
          %v6908 = vpack.c.bf16 %v6744, %v6744
          %v6909 = vpack.c.bf16 %v6746, %v6746
          %v6910 = vpack.c.bf16 %v6895, %v6895
          %v6911 = vpack.c.bf16 %v6897, %v6897
          %6914 = vrot.lane.b32.xlu0 %v6758, 64
          %v6915 = vpop.permute.xlu0 %6914
          %6916 = vrot.lane.b32.xlu0 %v6760, 64
          %v6917 = vpop.permute.xlu0 %6916
          %6922 = vrot.lane.b32.xlu0 %v6772, 64
          %v6923 = vpop.permute.xlu0 %6922
          %6924 = vrot.lane.b32.xlu0 %v6774, 64
          %v6925 = vpop.permute.xlu0 %6924
          %6930 = vrot.lane.b32.xlu0 %v6786, 64
          %v6931 = vpop.permute.xlu0 %6930
          %6932 = vrot.lane.b32.xlu0 %v6788, 64
          %v6933 = vpop.permute.xlu0 %6932
          %v6936 = vpack.c.bf16 %v6758, %v6758
          %v6937 = vpack.c.bf16 %v6760, %v6760
          %v6938 = vpack.c.bf16 %v6915, %v6915
          %v6939 = vpack.c.bf16 %v6917, %v6917
          %v6940 = vpack.c.bf16 %v6772, %v6772
          %v6941 = vpack.c.bf16 %v6774, %v6774
          %v6942 = vpack.c.bf16 %v6923, %v6923
          %v6943 = vpack.c.bf16 %v6925, %v6925
          %v6944 = vpack.c.bf16 %v6786, %v6786
          %v6945 = vpack.c.bf16 %v6788, %v6788
          %v6946 = vpack.c.bf16 %v6931, %v6931
          %v6947 = vpack.c.bf16 %v6933, %v6933
          %v6949 = vsel %vm5333, %v6864, 0
          %v6952 = vsel %vm5333, %v6900, 0
          %6954 = vmatpush.bf16.xpose.msra.mxu0 0
          %6955 = vmatpush.bf16.xpose.msra.mxu0 0
          %6956 = vmatpush.bf16.xpose.msra.mxu0 0
          %6957 = vmatpush.bf16.xpose.msra.mxu0 0
          %6958 = vmatpush.bf16.xpose.msra.mxu0 0
          %6959 = vmatpush.bf16.xpose.msra.mxu0 0
          %6960 = vmatpush.bf16.xpose.msra.mxu0 0
          %6961 = vmatpush.bf16.xpose.msra.mxu0 %v6952
          %6962 = vmatmul.bf16.gmra.mxu0 %v6949
          %v6963 = vpop.f32.mrf.mxu0
          %v6964 = vadd.f32 0.0, %v6963
          %v6965 = vpop.f32.mrf.mxu0
          %6966 = vdwg.mxu0
          %v6968 = vsel %vm5333, %v6865, 0
          %v6971 = vsel %vm5333, %v6901, 0
          %6973 = vmatpush.bf16.xpose.msra.mxu0 0
          %6974 = vmatpush.bf16.xpose.msra.mxu0 0
          %6975 = vmatpush.bf16.xpose.msra.mxu0 0
          %6976 = vmatpush.bf16.xpose.msra.mxu0 0
          %6977 = vmatpush.bf16.xpose.msra.mxu0 0
          %6978 = vmatpush.bf16.xpose.msra.mxu0 0
          %6979 = vmatpush.bf16.xpose.msra.mxu0 0
          %6980 = vmatpush.bf16.xpose.msra.mxu0 %v6971
          %6981 = vmatmul.bf16.gmra.mxu0 %v6968
          %v6982 = vpop.f32.mrf.mxu0
          %v6983 = vadd.f32 0.0, %v6982
          %v6984 = vpop.f32.mrf.mxu0
          %6985 = vdwg.mxu0
          %v6987 = vsel %vm5333, %v6866, 0
          %v6990 = vsel %vm5333, %v6902, 0
          %6992 = vmatpush.bf16.xpose.msra.mxu0 0
          %6993 = vmatpush.bf16.xpose.msra.mxu0 0
          %6994 = vmatpush.bf16.xpose.msra.mxu0 0
          %6995 = vmatpush.bf16.xpose.msra.mxu0 0
          %6996 = vmatpush.bf16.xpose.msra.mxu0 0
          %6997 = vmatpush.bf16.xpose.msra.mxu0 0
          %6998 = vmatpush.bf16.xpose.msra.mxu0 0
          %6999 = vmatpush.bf16.xpose.msra.mxu0 %v6990
          %7000 = vmatmul.bf16.gmra.mxu0 %v6987
          %v7001 = vpop.f32.mrf.mxu0
          %v7002 = vadd.f32 0.0, %v7001
          %v7003 = vpop.f32.mrf.mxu0
          %7004 = vdwg.mxu0
          %v7006 = vsel %vm5333, %v6867, 0
          %v7009 = vsel %vm5333, %v6903, 0
          %7011 = vmatpush.bf16.xpose.msra.mxu0 0
          %7012 = vmatpush.bf16.xpose.msra.mxu0 0
          %7013 = vmatpush.bf16.xpose.msra.mxu0 0
          %7014 = vmatpush.bf16.xpose.msra.mxu0 0
          %7015 = vmatpush.bf16.xpose.msra.mxu0 0
          %7016 = vmatpush.bf16.xpose.msra.mxu0 0
          %7017 = vmatpush.bf16.xpose.msra.mxu0 0
          %7018 = vmatpush.bf16.xpose.msra.mxu0 %v7009
          %7019 = vmatmul.bf16.gmra.mxu0 %v7006
          %v7020 = vpop.f32.mrf.mxu0
          %v7021 = vadd.f32 0.0, %v7020
          %v7022 = vpop.f32.mrf.mxu0
          %7023 = vdwg.mxu0
          %v7025 = vsel %vm5333, %v6868, 0
          %v7028 = vsel %vm5333, %v6904, 0
          %7030 = vmatpush.bf16.xpose.msra.mxu0 0
          %7031 = vmatpush.bf16.xpose.msra.mxu0 0
          %7032 = vmatpush.bf16.xpose.msra.mxu0 0
          %7033 = vmatpush.bf16.xpose.msra.mxu0 0
          %7034 = vmatpush.bf16.xpose.msra.mxu0 0
          %7035 = vmatpush.bf16.xpose.msra.mxu0 0
          %7036 = vmatpush.bf16.xpose.msra.mxu0 0
          %7037 = vmatpush.bf16.xpose.msra.mxu0 %v7028
          %7038 = vmatmul.bf16.gmra.mxu0 %v7025
          %v7039 = vpop.f32.mrf.mxu0
          %v7040 = vadd.f32 0.0, %v7039
          %v7041 = vpop.f32.mrf.mxu0
          %7042 = vdwg.mxu0
          %v7044 = vsel %vm5333, %v6869, 0
          %v7047 = vsel %vm5333, %v6905, 0
          %7049 = vmatpush.bf16.xpose.msra.mxu0 0
          %7050 = vmatpush.bf16.xpose.msra.mxu0 0
          %7051 = vmatpush.bf16.xpose.msra.mxu0 0
          %7052 = vmatpush.bf16.xpose.msra.mxu0 0
          %7053 = vmatpush.bf16.xpose.msra.mxu0 0
          %7054 = vmatpush.bf16.xpose.msra.mxu0 0
          %7055 = vmatpush.bf16.xpose.msra.mxu0 0
          %7056 = vmatpush.bf16.xpose.msra.mxu0 %v7047
          %7057 = vmatmul.bf16.gmra.mxu0 %v7044
          %v7058 = vpop.f32.mrf.mxu0
          %v7059 = vadd.f32 0.0, %v7058
          %v7060 = vpop.f32.mrf.mxu0
          %7061 = vdwg.mxu0
          %v7063 = vsel %vm5333, %v6870, 0
          %v7066 = vsel %vm5333, %v6906, 0
          %7068 = vmatpush.bf16.xpose.msra.mxu0 0
          %7069 = vmatpush.bf16.xpose.msra.mxu0 0
          %7070 = vmatpush.bf16.xpose.msra.mxu0 0
          %7071 = vmatpush.bf16.xpose.msra.mxu0 0
          %7072 = vmatpush.bf16.xpose.msra.mxu0 0
          %7073 = vmatpush.bf16.xpose.msra.mxu0 0
          %7074 = vmatpush.bf16.xpose.msra.mxu0 0
          %7075 = vmatpush.bf16.xpose.msra.mxu0 %v7066
          %7076 = vmatmul.bf16.gmra.mxu0 %v7063
          %v7077 = vpop.f32.mrf.mxu0
          %v7078 = vadd.f32 0.0, %v7077
          %v7079 = vpop.f32.mrf.mxu0
          %7080 = vdwg.mxu0
          %v7082 = vsel %vm5333, %v6871, 0
          %v7085 = vsel %vm5333, %v6907, 0
          %7087 = vmatpush.bf16.xpose.msra.mxu0 0
          %7088 = vmatpush.bf16.xpose.msra.mxu0 0
          %7089 = vmatpush.bf16.xpose.msra.mxu0 0
          %7090 = vmatpush.bf16.xpose.msra.mxu0 0
          %7091 = vmatpush.bf16.xpose.msra.mxu0 0
          %7092 = vmatpush.bf16.xpose.msra.mxu0 0
          %7093 = vmatpush.bf16.xpose.msra.mxu0 0
          %7094 = vmatpush.bf16.xpose.msra.mxu0 %v7085
          %7095 = vmatmul.bf16.gmra.mxu0 %v7082
          %v7096 = vpop.f32.mrf.mxu0
          %v7097 = vadd.f32 0.0, %v7096
          %v7098 = vpop.f32.mrf.mxu0
          %7099 = vdwg.mxu0
          %v7101 = vsel %vm5333, %v6872, 0
          %v7104 = vsel %vm5333, %v6908, 0
          %7106 = vmatpush.bf16.xpose.msra.mxu0 0
          %7107 = vmatpush.bf16.xpose.msra.mxu0 0
          %7108 = vmatpush.bf16.xpose.msra.mxu0 0
          %7109 = vmatpush.bf16.xpose.msra.mxu0 0
          %7110 = vmatpush.bf16.xpose.msra.mxu0 0
          %7111 = vmatpush.bf16.xpose.msra.mxu0 0
          %7112 = vmatpush.bf16.xpose.msra.mxu0 0
          %7113 = vmatpush.bf16.xpose.msra.mxu0 %v7104
          %7114 = vmatmul.bf16.gmra.mxu0 %v7101
          %v7115 = vpop.f32.mrf.mxu0
          %v7116 = vadd.f32 0.0, %v7115
          %v7117 = vpop.f32.mrf.mxu0
          %7118 = vdwg.mxu0
          %v7120 = vsel %vm5333, %v6873, 0
          %v7123 = vsel %vm5333, %v6909, 0
          %7125 = vmatpush.bf16.xpose.msra.mxu0 0
          %7126 = vmatpush.bf16.xpose.msra.mxu0 0
          %7127 = vmatpush.bf16.xpose.msra.mxu0 0
          %7128 = vmatpush.bf16.xpose.msra.mxu0 0
          %7129 = vmatpush.bf16.xpose.msra.mxu0 0
          %7130 = vmatpush.bf16.xpose.msra.mxu0 0
          %7131 = vmatpush.bf16.xpose.msra.mxu0 0
          %7132 = vmatpush.bf16.xpose.msra.mxu0 %v7123
          %7133 = vmatmul.bf16.gmra.mxu0 %v7120
          %v7134 = vpop.f32.mrf.mxu0
          %v7135 = vadd.f32 0.0, %v7134
          %v7136 = vpop.f32.mrf.mxu0
          %7137 = vdwg.mxu0
          %v7139 = vsel %vm5333, %v6874, 0
          %v7142 = vsel %vm5333, %v6910, 0
          %7144 = vmatpush.bf16.xpose.msra.mxu0 0
          %7145 = vmatpush.bf16.xpose.msra.mxu0 0
          %7146 = vmatpush.bf16.xpose.msra.mxu0 0
          %7147 = vmatpush.bf16.xpose.msra.mxu0 0
          %7148 = vmatpush.bf16.xpose.msra.mxu0 0
          %7149 = vmatpush.bf16.xpose.msra.mxu0 0
          %7150 = vmatpush.bf16.xpose.msra.mxu0 0
          %7151 = vmatpush.bf16.xpose.msra.mxu0 %v7142
          %7152 = vmatmul.bf16.gmra.mxu0 %v7139
          %v7153 = vpop.f32.mrf.mxu0
          %v7154 = vadd.f32 0.0, %v7153
          %v7155 = vpop.f32.mrf.mxu0
          %7156 = vdwg.mxu0
          %v7158 = vsel %vm5333, %v6875, 0
          %v7161 = vsel %vm5333, %v6911, 0
          %7163 = vmatpush.bf16.xpose.msra.mxu0 0
          %7164 = vmatpush.bf16.xpose.msra.mxu0 0
          %7165 = vmatpush.bf16.xpose.msra.mxu0 0
          %7166 = vmatpush.bf16.xpose.msra.mxu0 0
          %7167 = vmatpush.bf16.xpose.msra.mxu0 0
          %7168 = vmatpush.bf16.xpose.msra.mxu0 0
          %7169 = vmatpush.bf16.xpose.msra.mxu0 0
          %7170 = vmatpush.bf16.xpose.msra.mxu0 %v7161
          %7171 = vmatmul.bf16.gmra.mxu0 %v7158
          %v7172 = vpop.f32.mrf.mxu0
          %v7173 = vadd.f32 0.0, %v7172
          %v7174 = vpop.f32.mrf.mxu0
          %7175 = vdwg.mxu0
          %v7178 = vperm.slane %v6790, 0
          %v7179 = vperm.slane %v6791, 0
          %v7182 = vadd.f32 %v6964, %v7178
          %v7183 = vadd.f32 %v6983, %v7179
          %v7184 = vadd.f32 %v7002, %v7178
          %v7185 = vadd.f32 %v7021, %v7179
          %v7186 = vadd.f32 %v7040, %v7178
          %v7187 = vadd.f32 %v7059, %v7179
          %v7188 = vadd.f32 %v7078, %v7178
          %v7189 = vadd.f32 %v7097, %v7179
          %v7190 = vadd.f32 %v7116, %v7178
          %v7191 = vadd.f32 %v7135, %v7179
          %v7192 = vadd.f32 %v7154, %v7178
          %v7193 = vadd.f32 %v7173, %v7179
          %v7194 = vsel %vm5574, %v7182, -inf
          %7195 = vmax.xlane.f32.xlu0 %v7194
          %v7196 = vpop.xlane.xlu0 %7195
          %v7197 = vsel %vm5574, %v7183, -inf
          %7198 = vmax.xlane.f32.xlu0 %v7197
          %v7199 = vpop.xlane.xlu0 %7198
          %v7200 = vsel %vm5574, %v7184, -inf
          %7201 = vmax.xlane.f32.xlu0 %v7200
          %v7202 = vpop.xlane.xlu0 %7201
          %v7203 = vsel %vm5574, %v7185, -inf
          %7204 = vmax.xlane.f32.xlu0 %v7203
          %v7205 = vpop.xlane.xlu0 %7204
          %v7206 = vsel %vm5574, %v7186, -inf
          %7207 = vmax.xlane.f32.xlu0 %v7206
          %v7208 = vpop.xlane.xlu0 %7207
          %v7209 = vsel %vm5574, %v7187, -inf
          %7210 = vmax.xlane.f32.xlu0 %v7209
          %v7211 = vpop.xlane.xlu0 %7210
          %v7212 = vsel %vm5574, %v7188, -inf
          %7213 = vmax.xlane.f32.xlu0 %v7212
          %v7214 = vpop.xlane.xlu0 %7213
          %v7215 = vsel %vm5574, %v7189, -inf
          %7216 = vmax.xlane.f32.xlu0 %v7215
          %v7217 = vpop.xlane.xlu0 %7216
          %v7218 = vsel %vm5574, %v7190, -inf
          %7219 = vmax.xlane.f32.xlu0 %v7218
          %v7220 = vpop.xlane.xlu0 %7219
          %v7221 = vsel %vm5574, %v7191, -inf
          %7222 = vmax.xlane.f32.xlu0 %v7221
          %v7223 = vpop.xlane.xlu0 %7222
          %v7224 = vsel %vm5574, %v7192, -inf
          %7225 = vmax.xlane.f32.xlu0 %v7224
          %v7226 = vpop.xlane.xlu0 %7225
          %v7227 = vsel %vm5574, %v7193, -inf
          %7228 = vmax.xlane.f32.xlu0 %v7227
          %v7229 = vpop.xlane.xlu0 %7228
          %v7230 = vsub.f32 %v7182, %v7196
          %v7231 = vsub.f32 %v7183, %v7199
          %v7232 = vsub.f32 %v7184, %v7202
          %v7233 = vsub.f32 %v7185, %v7205
          %v7234 = vsub.f32 %v7186, %v7208
          %v7235 = vsub.f32 %v7187, %v7211
          %v7236 = vsub.f32 %v7188, %v7214
          %v7237 = vsub.f32 %v7189, %v7217
          %v7238 = vsub.f32 %v7190, %v7220
          %v7239 = vsub.f32 %v7191, %v7223
          %v7240 = vsub.f32 %v7192, %v7226
          %v7241 = vsub.f32 %v7193, %v7229
          %v7242 = vmul.f32 %v7230, 1.442695
          %v7243 = vpow.pop %v7242
          %v7244 = vmul.f32 %v7231, 1.442695
          %v7245 = vpow.pop %v7244
          %v7246 = vmul.f32 %v7232, 1.442695
          %v7247 = vpow.pop %v7246
          %v7248 = vmul.f32 %v7233, 1.442695
          %v7249 = vpow.pop %v7248
          %v7250 = vmul.f32 %v7234, 1.442695
          %v7251 = vpow.pop %v7250
          %v7252 = vmul.f32 %v7235, 1.442695
          %v7253 = vpow.pop %v7252
          %v7254 = vmul.f32 %v7236, 1.442695
          %v7255 = vpow.pop %v7254
          %v7256 = vmul.f32 %v7237, 1.442695
          %v7257 = vpow.pop %v7256
          %v7258 = vmul.f32 %v7238, 1.442695
          %v7259 = vpow.pop %v7258
          %v7260 = vmul.f32 %v7239, 1.442695
          %v7261 = vpow.pop %v7260
          %v7262 = vmul.f32 %v7240, 1.442695
          %v7263 = vpow.pop %v7262
          %v7264 = vmul.f32 %v7241, 1.442695
          %v7265 = vpow.pop %v7264
          %v7266 = vsel %vm5574, %v7243, 0.0
          %7267 = vadd.xlane.f32.xlu0 %v7266
          %v7268 = vpop.xlane.xlu0 %7267
          %v7269 = vsel %vm5574, %v7245, 0.0
          %7270 = vadd.xlane.f32.xlu0 %v7269
          %v7271 = vpop.xlane.xlu0 %7270
          %v7272 = vsel %vm5574, %v7247, 0.0
          %7273 = vadd.xlane.f32.xlu0 %v7272
          %v7274 = vpop.xlane.xlu0 %7273
          %v7275 = vsel %vm5574, %v7249, 0.0
          %7276 = vadd.xlane.f32.xlu0 %v7275
          %v7277 = vpop.xlane.xlu0 %7276
          %v7278 = vsel %vm5574, %v7251, 0.0
          %7279 = vadd.xlane.f32.xlu0 %v7278
          %v7280 = vpop.xlane.xlu0 %7279
          %v7281 = vsel %vm5574, %v7253, 0.0
          %7282 = vadd.xlane.f32.xlu0 %v7281
          %v7283 = vpop.xlane.xlu0 %7282
          %v7284 = vsel %vm5574, %v7255, 0.0
          %7285 = vadd.xlane.f32.xlu0 %v7284
          %v7286 = vpop.xlane.xlu0 %7285
          %v7287 = vsel %vm5574, %v7257, 0.0
          %7288 = vadd.xlane.f32.xlu0 %v7287
          %v7289 = vpop.xlane.xlu0 %7288
          %v7290 = vsel %vm5574, %v7259, 0.0
          %7291 = vadd.xlane.f32.xlu0 %v7290
          %v7292 = vpop.xlane.xlu0 %7291
          %v7293 = vsel %vm5574, %v7261, 0.0
          %7294 = vadd.xlane.f32.xlu0 %v7293
          %v7295 = vpop.xlane.xlu0 %7294
          %v7296 = vsel %vm5574, %v7263, 0.0
          %7297 = vadd.xlane.f32.xlu0 %v7296
          %v7298 = vpop.xlane.xlu0 %7297
          %v7299 = vsel %vm5574, %v7265, 0.0
          %7300 = vadd.xlane.f32.xlu0 %v7299
          %v7301 = vpop.xlane.xlu0 %7300
          %v7302 = vrcp.pop %v7268
          %v7303 = vrcp.pop %v7271
          %v7304 = vrcp.pop %v7274
          %v7305 = vrcp.pop %v7277
          %v7306 = vrcp.pop %v7280
          %v7307 = vrcp.pop %v7283
          %v7308 = vrcp.pop %v7286
          %v7309 = vrcp.pop %v7289
          %v7310 = vrcp.pop %v7292
          %v7311 = vrcp.pop %v7295
          %v7312 = vrcp.pop %v7298
          %v7313 = vrcp.pop %v7301
          %v7314 = vmul.f32 %v7243, %v7302
          %v7315 = vmul.f32 %v7245, %v7303
          %v7316 = vmul.f32 %v7247, %v7304
          %v7317 = vmul.f32 %v7249, %v7305
          %v7318 = vmul.f32 %v7251, %v7306
          %v7319 = vmul.f32 %v7253, %v7307
          %v7320 = vmul.f32 %v7255, %v7308
          %v7321 = vmul.f32 %v7257, %v7309
          %v7322 = vmul.f32 %v7259, %v7310
          %v7323 = vmul.f32 %v7261, %v7311
          %v7324 = vmul.f32 %v7263, %v7312
          %v7325 = vmul.f32 %v7265, %v7313
          %v7326 = vpack.c.bf16 %v7314, %v7314
          %v7327 = vpack.c.bf16 %v7315, %v7315
          %v7328 = vpack.c.bf16 %v7316, %v7316
          %v7329 = vpack.c.bf16 %v7317, %v7317
          %v7330 = vpack.c.bf16 %v7318, %v7318
          %v7331 = vpack.c.bf16 %v7319, %v7319
          %v7332 = vpack.c.bf16 %v7320, %v7320
          %v7333 = vpack.c.bf16 %v7321, %v7321
          %v7334 = vpack.c.bf16 %v7322, %v7322
          %v7335 = vpack.c.bf16 %v7323, %v7323
          %v7336 = vpack.c.bf16 %v7324, %v7324
          %v7337 = vpack.c.bf16 %v7325, %v7325
          %v7339 = vsel %vm5574, %v7326, 0
          %v7342 = vsel %vm5722, %v6936, 0
          %7344 = vmatpush.bf16.msra.mxu0 0
          %7345 = vmatpush.bf16.msra.mxu0 0
          %7346 = vmatpush.bf16.msra.mxu0 0
          %7347 = vmatpush.bf16.msra.mxu0 0
          %7348 = vmatpush.bf16.msra.mxu0 0
          %7349 = vmatpush.bf16.msra.mxu0 0
          %7350 = vmatpush.bf16.msra.mxu0 0
          %7351 = vmatpush.bf16.msra.mxu0 %v7342
          %7352 = vmatmul.bf16.gmra.mxu0 %v7339
          %v7353 = vpop.f32.mrf.mxu0
          %v7354 = vadd.f32 0.0, %v7353
          %v7355 = vpop.f32.mrf.mxu0
          %7356 = vdwg.mxu0
          %v7358 = vsel %vm5574, %v7327, 0
          %v7361 = vsel %vm5722, %v6937, 0
          %7363 = vmatpush.bf16.msra.mxu0 0
          %7364 = vmatpush.bf16.msra.mxu0 0
          %7365 = vmatpush.bf16.msra.mxu0 0
          %7366 = vmatpush.bf16.msra.mxu0 0
          %7367 = vmatpush.bf16.msra.mxu0 0
          %7368 = vmatpush.bf16.msra.mxu0 0
          %7369 = vmatpush.bf16.msra.mxu0 0
          %7370 = vmatpush.bf16.msra.mxu0 %v7361
          %7371 = vmatmul.bf16.gmra.mxu0 %v7358
          %v7372 = vpop.f32.mrf.mxu0
          %v7373 = vadd.f32 0.0, %v7372
          %v7374 = vpop.f32.mrf.mxu0
          %7375 = vdwg.mxu0
          %v7377 = vsel %vm5574, %v7328, 0
          %v7380 = vsel %vm5722, %v6938, 0
          %7382 = vmatpush.bf16.msra.mxu0 0
          %7383 = vmatpush.bf16.msra.mxu0 0
          %7384 = vmatpush.bf16.msra.mxu0 0
          %7385 = vmatpush.bf16.msra.mxu0 0
          %7386 = vmatpush.bf16.msra.mxu0 0
          %7387 = vmatpush.bf16.msra.mxu0 0
          %7388 = vmatpush.bf16.msra.mxu0 0
          %7389 = vmatpush.bf16.msra.mxu0 %v7380
          %7390 = vmatmul.bf16.gmra.mxu0 %v7377
          %v7391 = vpop.f32.mrf.mxu0
          %v7392 = vadd.f32 0.0, %v7391
          %v7393 = vpop.f32.mrf.mxu0
          %7394 = vdwg.mxu0
          %v7396 = vsel %vm5574, %v7329, 0
          %v7399 = vsel %vm5722, %v6939, 0
          %7401 = vmatpush.bf16.msra.mxu0 0
          %7402 = vmatpush.bf16.msra.mxu0 0
          %7403 = vmatpush.bf16.msra.mxu0 0
          %7404 = vmatpush.bf16.msra.mxu0 0
          %7405 = vmatpush.bf16.msra.mxu0 0
          %7406 = vmatpush.bf16.msra.mxu0 0
          %7407 = vmatpush.bf16.msra.mxu0 0
          %7408 = vmatpush.bf16.msra.mxu0 %v7399
          %7409 = vmatmul.bf16.gmra.mxu0 %v7396
          %v7410 = vpop.f32.mrf.mxu0
          %v7411 = vadd.f32 0.0, %v7410
          %v7412 = vpop.f32.mrf.mxu0
          %7413 = vdwg.mxu0
          %v7415 = vsel %vm5574, %v7330, 0
          %v7418 = vsel %vm5722, %v6940, 0
          %7420 = vmatpush.bf16.msra.mxu0 0
          %7421 = vmatpush.bf16.msra.mxu0 0
          %7422 = vmatpush.bf16.msra.mxu0 0
          %7423 = vmatpush.bf16.msra.mxu0 0
          %7424 = vmatpush.bf16.msra.mxu0 0
          %7425 = vmatpush.bf16.msra.mxu0 0
          %7426 = vmatpush.bf16.msra.mxu0 0
          %7427 = vmatpush.bf16.msra.mxu0 %v7418
          %7428 = vmatmul.bf16.gmra.mxu0 %v7415
          %v7429 = vpop.f32.mrf.mxu0
          %v7430 = vadd.f32 0.0, %v7429
          %v7431 = vpop.f32.mrf.mxu0
          %7432 = vdwg.mxu0
          %v7434 = vsel %vm5574, %v7331, 0
          %v7437 = vsel %vm5722, %v6941, 0
          %7439 = vmatpush.bf16.msra.mxu0 0
          %7440 = vmatpush.bf16.msra.mxu0 0
          %7441 = vmatpush.bf16.msra.mxu0 0
          %7442 = vmatpush.bf16.msra.mxu0 0
          %7443 = vmatpush.bf16.msra.mxu0 0
          %7444 = vmatpush.bf16.msra.mxu0 0
          %7445 = vmatpush.bf16.msra.mxu0 0
          %7446 = vmatpush.bf16.msra.mxu0 %v7437
          %7447 = vmatmul.bf16.gmra.mxu0 %v7434
          %v7448 = vpop.f32.mrf.mxu0
          %v7449 = vadd.f32 0.0, %v7448
          %v7450 = vpop.f32.mrf.mxu0
          %7451 = vdwg.mxu0
          %v7453 = vsel %vm5574, %v7332, 0
          %v7456 = vsel %vm5722, %v6942, 0
          %7458 = vmatpush.bf16.msra.mxu0 0
          %7459 = vmatpush.bf16.msra.mxu0 0
          %7460 = vmatpush.bf16.msra.mxu0 0
          %7461 = vmatpush.bf16.msra.mxu0 0
          %7462 = vmatpush.bf16.msra.mxu0 0
          %7463 = vmatpush.bf16.msra.mxu0 0
          %7464 = vmatpush.bf16.msra.mxu0 0
          %7465 = vmatpush.bf16.msra.mxu0 %v7456
          %7466 = vmatmul.bf16.gmra.mxu0 %v7453
          %v7467 = vpop.f32.mrf.mxu0
          %v7468 = vadd.f32 0.0, %v7467
          %v7469 = vpop.f32.mrf.mxu0
          %7470 = vdwg.mxu0
          %v7472 = vsel %vm5574, %v7333, 0
          %v7475 = vsel %vm5722, %v6943, 0
          %7477 = vmatpush.bf16.msra.mxu0 0
          %7478 = vmatpush.bf16.msra.mxu0 0
          %7479 = vmatpush.bf16.msra.mxu0 0
          %7480 = vmatpush.bf16.msra.mxu0 0
          %7481 = vmatpush.bf16.msra.mxu0 0
          %7482 = vmatpush.bf16.msra.mxu0 0
          %7483 = vmatpush.bf16.msra.mxu0 0
          %7484 = vmatpush.bf16.msra.mxu0 %v7475
          %7485 = vmatmul.bf16.gmra.mxu0 %v7472
          %v7486 = vpop.f32.mrf.mxu0
          %v7487 = vadd.f32 0.0, %v7486
          %v7488 = vpop.f32.mrf.mxu0
          %7489 = vdwg.mxu0
          %v7491 = vsel %vm5574, %v7334, 0
          %v7494 = vsel %vm5722, %v6944, 0
          %7496 = vmatpush.bf16.msra.mxu0 0
          %7497 = vmatpush.bf16.msra.mxu0 0
          %7498 = vmatpush.bf16.msra.mxu0 0
          %7499 = vmatpush.bf16.msra.mxu0 0
          %7500 = vmatpush.bf16.msra.mxu0 0
          %7501 = vmatpush.bf16.msra.mxu0 0
          %7502 = vmatpush.bf16.msra.mxu0 0
          %7503 = vmatpush.bf16.msra.mxu0 %v7494
          %7504 = vmatmul.bf16.gmra.mxu0 %v7491
          %v7505 = vpop.f32.mrf.mxu0
          %v7506 = vadd.f32 0.0, %v7505
          %v7507 = vpop.f32.mrf.mxu0
          %7508 = vdwg.mxu0
          %v7510 = vsel %vm5574, %v7335, 0
          %v7513 = vsel %vm5722, %v6945, 0
          %7515 = vmatpush.bf16.msra.mxu0 0
          %7516 = vmatpush.bf16.msra.mxu0 0
          %7517 = vmatpush.bf16.msra.mxu0 0
          %7518 = vmatpush.bf16.msra.mxu0 0
          %7519 = vmatpush.bf16.msra.mxu0 0
          %7520 = vmatpush.bf16.msra.mxu0 0
          %7521 = vmatpush.bf16.msra.mxu0 0
          %7522 = vmatpush.bf16.msra.mxu0 %v7513
          %7523 = vmatmul.bf16.gmra.mxu0 %v7510
          %v7524 = vpop.f32.mrf.mxu0
          %v7525 = vadd.f32 0.0, %v7524
          %v7526 = vpop.f32.mrf.mxu0
          %7527 = vdwg.mxu0
          %v7529 = vsel %vm5574, %v7336, 0
          %v7532 = vsel %vm5722, %v6946, 0
          %7534 = vmatpush.bf16.msra.mxu0 0
          %7535 = vmatpush.bf16.msra.mxu0 0
          %7536 = vmatpush.bf16.msra.mxu0 0
          %7537 = vmatpush.bf16.msra.mxu0 0
          %7538 = vmatpush.bf16.msra.mxu0 0
          %7539 = vmatpush.bf16.msra.mxu0 0
          %7540 = vmatpush.bf16.msra.mxu0 0
          %7541 = vmatpush.bf16.msra.mxu0 %v7532
          %7542 = vmatmul.bf16.gmra.mxu0 %v7529
          %v7543 = vpop.f32.mrf.mxu0
          %v7544 = vadd.f32 0.0, %v7543
          %v7545 = vpop.f32.mrf.mxu0
          %7546 = vdwg.mxu0
          %v7548 = vsel %vm5574, %v7337, 0
          %v7551 = vsel %vm5722, %v6947, 0
          %7553 = vmatpush.bf16.msra.mxu0 0
          %7554 = vmatpush.bf16.msra.mxu0 0
          %7555 = vmatpush.bf16.msra.mxu0 0
          %7556 = vmatpush.bf16.msra.mxu0 0
          %7557 = vmatpush.bf16.msra.mxu0 0
          %7558 = vmatpush.bf16.msra.mxu0 0
          %7559 = vmatpush.bf16.msra.mxu0 0
          %7560 = vmatpush.bf16.msra.mxu0 %v7551
          %7561 = vmatmul.bf16.gmra.mxu0 %v7548
          %v7562 = vpop.f32.mrf.mxu0
          %v7563 = vadd.f32 0.0, %v7562
          %v7564 = vpop.f32.mrf.mxu0
          %7565 = vdwg.mxu0
          %7568 = vrot.lane.b32.xlu0 %v7392, 64
          %v7569 = vpop.permute.xlu0 %7568
          %7570 = vrot.lane.b32.xlu0 %v7411, 64
          %v7571 = vpop.permute.xlu0 %7570
          %7576 = vrot.lane.b32.xlu0 %v7468, 64
          %v7577 = vpop.permute.xlu0 %7576
          %7578 = vrot.lane.b32.xlu0 %v7487, 64
          %v7579 = vpop.permute.xlu0 %7578
          %7584 = vrot.lane.b32.xlu0 %v7544, 64
          %v7585 = vpop.permute.xlu0 %7584
          %7586 = vrot.lane.b32.xlu0 %v7563, 64
          %v7587 = vpop.permute.xlu0 %7586
          %v7590 = vsel %vm5333, %v7354, %v7569
          %v7591 = vsel %vm5333, %v7373, %v7571
          %v7592 = vsel %vm5333, %v7430, %v7577
          %v7593 = vsel %vm5333, %v7449, %v7579
          %v7594 = vsel %vm5333, %v7506, %v7585
          %v7595 = vsel %vm5333, %v7525, %v7587
          %v7596 = vpack.c.bf16 %v7591, %v7590
          %v7597 = vpack.c.bf16 %v7593, %v7592
          %v7598 = vpack.c.bf16 %v7595, %v7594
          %v7647 = vunpack.c.l.b16 %v6792
          %v7648 = vunpack.c.l.b16 %v6793
          %v7649 = vunpack.c.l.b16 %v6794
          %v7650 = vunpack.c.l.b16 %v6795
          %v7651 = vunpack.c.l.b16 %v6796
          %v7652 = vunpack.c.l.b16 %v6797
          %v7653 = vunpack.c.l.b16 %v6798
          %v7654 = vunpack.c.l.b16 %v6799
          %v7655 = vunpack.c.l.b16 %v6800
          %v7656 = vunpack.c.l.b16 %v6801
          %v7657 = vunpack.c.l.b16 %v6802
          %v7658 = vunpack.c.l.b16 %v6803
          %v7659 = vunpack.c.l.b16 %v6804
          %v7660 = vunpack.c.l.b16 %v6805
          %v7661 = vunpack.c.l.b16 %v6806
          %v7662 = vunpack.c.l.b16 %v6807
          %v7663 = vunpack.c.l.b16 %v6808
          %v7664 = vunpack.c.l.b16 %v6809
          %v7665 = vunpack.c.l.b16 %v6810
          %v7666 = vunpack.c.l.b16 %v6811
          %v7667 = vunpack.c.l.b16 %v6812
          %v7668 = vunpack.c.l.b16 %v6813
          %v7669 = vunpack.c.l.b16 %v6814
          %v7670 = vunpack.c.l.b16 %v6815
          %v7671 = vunpack.c.l.b16 %v6816
          %v7672 = vunpack.c.l.b16 %v6817
          %v7673 = vunpack.c.l.b16 %v6818
          %v7674 = vunpack.c.l.b16 %v6819
          %v7675 = vunpack.c.l.b16 %v6820
          %v7676 = vunpack.c.l.b16 %v6821
          %v7677 = vunpack.c.l.b16 %v6822
          %v7678 = vunpack.c.l.b16 %v6823
          %v7679 = vunpack.c.l.b16 %v6824
          %v7680 = vunpack.c.l.b16 %v6825
          %v7681 = vunpack.c.l.b16 %v6826
          %v7682 = vunpack.c.l.b16 %v6827
          %v7683 = vunpack.c.l.b16 %v6828
          %v7684 = vunpack.c.l.b16 %v6829
          %v7685 = vunpack.c.l.b16 %v6830
          %v7686 = vunpack.c.l.b16 %v6831
          %v7687 = vunpack.c.l.b16 %v6832
          %v7688 = vunpack.c.l.b16 %v6833
          %v7689 = vunpack.c.l.b16 %v6834
          %v7690 = vunpack.c.l.b16 %v6835
          %v7691 = vunpack.c.l.b16 %v6836
          %v7692 = vunpack.c.l.b16 %v6837
          %v7693 = vunpack.c.l.b16 %v6838
          %v7694 = vunpack.c.l.b16 %v6839
          %v7695 = vpack.c.b16 %v7648, %v7647
          %v7696 = vpack.c.b16 %v7650, %v7649
          %v7697 = vpack.c.b16 %v7652, %v7651
          %v7698 = vpack.c.b16 %v7654, %v7653
          %v7699 = vpack.c.b16 %v7656, %v7655
          %v7700 = vpack.c.b16 %v7658, %v7657
          %v7701 = vpack.c.b16 %v7660, %v7659
          %v7702 = vpack.c.b16 %v7662, %v7661
          %v7703 = vpack.c.b16 %v7664, %v7663
          %v7704 = vpack.c.b16 %v7666, %v7665
          %v7705 = vpack.c.b16 %v7668, %v7667
          %v7706 = vpack.c.b16 %v7670, %v7669
          %v7707 = vpack.c.b16 %v7672, %v7671
          %v7708 = vpack.c.b16 %v7674, %v7673
          %v7709 = vpack.c.b16 %v7676, %v7675
          %v7710 = vpack.c.b16 %v7678, %v7677
          %v7711 = vpack.c.b16 %v7680, %v7679
          %v7712 = vpack.c.b16 %v7682, %v7681
          %v7713 = vpack.c.b16 %v7684, %v7683
          %v7714 = vpack.c.b16 %v7686, %v7685
          %v7715 = vpack.c.b16 %v7688, %v7687
          %v7716 = vpack.c.b16 %v7690, %v7689
          %v7717 = vpack.c.b16 %v7692, %v7691
          %v7718 = vpack.c.b16 %v7694, %v7693
          %7743 = vmatpush.bf16.msra.mxu0 %v7702
          %7744 = vmatpush.bf16.msra.mxu0 %v7701
          %7745 = vmatpush.bf16.msra.mxu0 %v7700
          %7746 = vmatpush.bf16.msra.mxu0 %v7699
          %7747 = vmatpush.bf16.msra.mxu0 %v7698
          %7748 = vmatpush.bf16.msra.mxu0 %v7697
          %7749 = vmatpush.bf16.msra.mxu0 %v7696
          %7750 = vmatpush.bf16.msra.mxu0 %v7695
          %7751 = vmatmul.bf16.gmra.mxu0 %v7596
          %v7752 = vpop.f32.mrf.mxu0
          %v7753 = vadd.f32 0.0, %v7752
          %v7754 = vpop.f32.mrf.mxu0
          %v7755 = vadd.f32 0.0, %v7754
          %7756 = vdwg.mxu0
          %7757 = vmatpush.bf16.msra.mxu0 %v7710
          %7758 = vmatpush.bf16.msra.mxu0 %v7709
          %7759 = vmatpush.bf16.msra.mxu0 %v7708
          %7760 = vmatpush.bf16.msra.mxu0 %v7707
          %7761 = vmatpush.bf16.msra.mxu0 %v7706
          %7762 = vmatpush.bf16.msra.mxu0 %v7705
          %7763 = vmatpush.bf16.msra.mxu0 %v7704
          %7764 = vmatpush.bf16.msra.mxu0 %v7703
          %7765 = vmatmul.bf16.gmra.mxu0 %v7597
          %v7766 = vpop.f32.mrf.mxu0
          %v7767 = vadd.f32 %v7753, %v7766
          %v7768 = vpop.f32.mrf.mxu0
          %v7769 = vadd.f32 %v7755, %v7768
          %7770 = vdwg.mxu0
          %7771 = vmatpush.bf16.msra.mxu0 %v7718
          %7772 = vmatpush.bf16.msra.mxu0 %v7717
          %7773 = vmatpush.bf16.msra.mxu0 %v7716
          %7774 = vmatpush.bf16.msra.mxu0 %v7715
          %7775 = vmatpush.bf16.msra.mxu0 %v7714
          %7776 = vmatpush.bf16.msra.mxu0 %v7713
          %7777 = vmatpush.bf16.msra.mxu0 %v7712
          %7778 = vmatpush.bf16.msra.mxu0 %v7711
          %7779 = vmatmul.bf16.gmra.mxu0 %v7598
          %v7780 = vpop.f32.mrf.mxu0
          %v7781 = vadd.f32 %v7767, %v7780
          %v7782 = vpop.f32.mrf.mxu0
          %v7783 = vadd.f32 %v7769, %v7782
          %7784 = vdwg.mxu0
          %v7785 = vadd.f32 %v6167, %v7781
          %v7786 = vadd.f32 %v6168, %v7783
          %v7787 = vld [vmem:[%s1407] sm:$0x1]
          %v7788 = vmul.f32 %v7785, %v7785
          %v7789 = vmul.f32 %v7786, %v7786
          %7790 = vadd.xlane.f32.xlu0 %v7788
          %v7791 = vpop.xlane.xlu0 %7790
          %7792 = vadd.xlane.f32.xlu0 %v7789
          %v7793 = vpop.xlane.xlu0 %7792
          %v7794 = vmul.f32 %v7791, %v4564
          %v7795 = vmul.f32 %v7793, %v4564
          %v7796 = vadd.f32 %v7794, 1e-06
          %v7797 = vadd.f32 %v7795, 1e-06
          %v7798 = vrsqrt.pop %v7796
          %v7799 = vmul.f32 %v7798, %v7796
          %v7800 = vmul.f32 %v7799, %v7798
          %v7801 = vmul.f32 0.5, %v7800
          %v7802 = vsub.f32 1.5, %v7801
          %v7803 = vmul.f32 %v7798, %v7802
          %vm7804 = vweird.f32 %v7796
          %vm7805 = vweird.f32 %v7798
          %vm7806 = vmor %vm7804, %vm7805
          %v7807 = vsel %vm7806, %v7798, %v7803
          %v7808 = vrsqrt.pop %v7797
          %v7809 = vmul.f32 %v7808, %v7797
          %v7810 = vmul.f32 %v7809, %v7808
          %v7811 = vmul.f32 0.5, %v7810
          %v7812 = vsub.f32 1.5, %v7811
          %v7813 = vmul.f32 %v7808, %v7812
          %vm7814 = vweird.f32 %v7797
          %vm7815 = vweird.f32 %v7808
          %vm7816 = vmor %vm7814, %vm7815
          %v7817 = vsel %vm7816, %v7808, %v7813
          %v7818 = vmul.f32 %v7785, %v7807
          %v7819 = vmul.f32 %v7786, %v7817
          %v7821 = vperm.slane %v7787, 0
          %v7823 = vmul.f32 %v7818, %v7821
          %v7824 = vmul.f32 %v7819, %v7821
          %v7825 = vld [vmem:[%s1417] sm:$0xff]
          %v7826 = vld [vmem:[%s1417 + $0x8] sm:$0xff]
          %v7827 = vld [vmem:[%s1417 + $0x10] sm:$0xff]
          %v7828 = vld [vmem:[%s1417 + $0x18] sm:$0xff]
          %v7829 = vld [vmem:[%s1417 + $0x20] sm:$0xff]
          %v7830 = vld [vmem:[%s1417 + $0x28] sm:$0xff]
          %v7831 = vld [vmem:[%s1417 + $0x30] sm:$0xff]
          %v7832 = vld [vmem:[%s1417 + $0x38] sm:$0xff]
          %v7833 = vld [vmem:[%s1417 + $0x40] sm:$0xff]
          %v7834 = vld [vmem:[%s1417 + $0x48] sm:$0xff]
          %v7835 = vld [vmem:[%s1417 + $0x50] sm:$0xff]
          %v7836 = vld [vmem:[%s1417 + $0x58] sm:$0xff]
          %v7837 = vld [vmem:[%s1417 + $0x60] sm:$0xff]
          %v7838 = vld [vmem:[%s1417 + $0x68] sm:$0xff]
          %v7839 = vld [vmem:[%s1417 + $0x70] sm:$0xff]
          %v7840 = vld [vmem:[%s1417 + $0x78] sm:$0xff]
          %v7841 = vld [vmem:[%s1417 + $0x80] sm:$0xff]
          %v7842 = vld [vmem:[%s1417 + $0x88] sm:$0xff]
          %v7843 = vld [vmem:[%s1417 + $0x90] sm:$0xff]
          %v7844 = vld [vmem:[%s1417 + $0x98] sm:$0xff]
          %v7845 = vld [vmem:[%s1417 + $0xa0] sm:$0xff]
          %v7846 = vld [vmem:[%s1417 + $0xa8] sm:$0xff]
          %v7847 = vld [vmem:[%s1417 + $0xb0] sm:$0xff]
          %v7848 = vld [vmem:[%s1417 + $0xb8] sm:$0xff]
          %v7849 = vld [vmem:[%s1417 + $0xc0] sm:$0xff]
          %v7850 = vld [vmem:[%s1417 + $0xc8] sm:$0xff]
          %v7851 = vld [vmem:[%s1417 + $0xd0] sm:$0xff]
          %v7852 = vld [vmem:[%s1417 + $0xd8] sm:$0xff]
          %v7853 = vld [vmem:[%s1417 + $0xe0] sm:$0xff]
          %v7854 = vld [vmem:[%s1417 + $0xe8] sm:$0xff]
          %v7855 = vld [vmem:[%s1417 + $0xf0] sm:$0xff]
          %v7856 = vld [vmem:[%s1417 + $0xf8] sm:$0xff]
          %v7857 = vld [vmem:[%s1417 + $0x100] sm:$0xff]
          %v7858 = vld [vmem:[%s1417 + $0x108] sm:$0xff]
          %v7859 = vld [vmem:[%s1417 + $0x110] sm:$0xff]
          %v7860 = vld [vmem:[%s1417 + $0x118] sm:$0xff]
          %v7861 = vld [vmem:[%s1417 + $0x120] sm:$0xff]
          %v7862 = vld [vmem:[%s1417 + $0x128] sm:$0xff]
          %v7863 = vld [vmem:[%s1417 + $0x130] sm:$0xff]
          %v7864 = vld [vmem:[%s1417 + $0x138] sm:$0xff]
          %v7865 = vld [vmem:[%s1417 + $0x140] sm:$0xff]
          %v7866 = vld [vmem:[%s1417 + $0x148] sm:$0xff]
          %v7867 = vld [vmem:[%s1417 + $0x150] sm:$0xff]
          %v7868 = vld [vmem:[%s1417 + $0x158] sm:$0xff]
          %v7869 = vld [vmem:[%s1417 + $0x160] sm:$0xff]
          %v7870 = vld [vmem:[%s1417 + $0x168] sm:$0xff]
          %v7871 = vld [vmem:[%s1417 + $0x170] sm:$0xff]
          %v7872 = vld [vmem:[%s1417 + $0x178] sm:$0xff]
          %v7873 = vld [vmem:[%s1417 + $0x180] sm:$0xff]
          %v7874 = vld [vmem:[%s1417 + $0x188] sm:$0xff]
          %v7875 = vld [vmem:[%s1417 + $0x190] sm:$0xff]
          %v7876 = vld [vmem:[%s1417 + $0x198] sm:$0xff]
          %v7877 = vld [vmem:[%s1417 + $0x1a0] sm:$0xff]
          %v7878 = vld [vmem:[%s1417 + $0x1a8] sm:$0xff]
          %v7879 = vld [vmem:[%s1417 + $0x1b0] sm:$0xff]
          %v7880 = vld [vmem:[%s1417 + $0x1b8] sm:$0xff]
          %v7881 = vld [vmem:[%s1417 + $0x1c0] sm:$0xff]
          %v7882 = vld [vmem:[%s1417 + $0x1c8] sm:$0xff]
          %v7883 = vld [vmem:[%s1417 + $0x1d0] sm:$0xff]
          %v7884 = vld [vmem:[%s1417 + $0x1d8] sm:$0xff]
          %v7885 = vld [vmem:[%s1417 + $0x1e0] sm:$0xff]
          %v7886 = vld [vmem:[%s1417 + $0x1e8] sm:$0xff]
          %v7887 = vld [vmem:[%s1417 + $0x1f0] sm:$0xff]
          %v7888 = vld [vmem:[%s1417 + $0x1f8] sm:$0xff]
          %v7889 = vpack.c.bf16 %v7824, %v7823
          %v7954 = vunpack.c.l.b16 %v7825
          %v7955 = vunpack.c.h.b16 %v7825
          %v7956 = vunpack.c.l.b16 %v7826
          %v7957 = vunpack.c.h.b16 %v7826
          %v7958 = vunpack.c.l.b16 %v7827
          %v7959 = vunpack.c.h.b16 %v7827
          %v7960 = vunpack.c.l.b16 %v7828
          %v7961 = vunpack.c.h.b16 %v7828
          %v7962 = vunpack.c.l.b16 %v7829
          %v7963 = vunpack.c.h.b16 %v7829
          %v7964 = vunpack.c.l.b16 %v7830
          %v7965 = vunpack.c.h.b16 %v7830
          %v7966 = vunpack.c.l.b16 %v7831
          %v7967 = vunpack.c.h.b16 %v7831
          %v7968 = vunpack.c.l.b16 %v7832
          %v7969 = vunpack.c.h.b16 %v7832
          %v7970 = vunpack.c.l.b16 %v7833
          %v7971 = vunpack.c.h.b16 %v7833
          %v7972 = vunpack.c.l.b16 %v7834
          %v7973 = vunpack.c.h.b16 %v7834
          %v7974 = vunpack.c.l.b16 %v7835
          %v7975 = vunpack.c.h.b16 %v7835
          %v7976 = vunpack.c.l.b16 %v7836
          %v7977 = vunpack.c.h.b16 %v7836
          %v7978 = vunpack.c.l.b16 %v7837
          %v7979 = vunpack.c.h.b16 %v7837
          %v7980 = vunpack.c.l.b16 %v7838
          %v7981 = vunpack.c.h.b16 %v7838
          %v7982 = vunpack.c.l.b16 %v7839
          %v7983 = vunpack.c.h.b16 %v7839
          %v7984 = vunpack.c.l.b16 %v7840
          %v7985 = vunpack.c.h.b16 %v7840
          %v7986 = vunpack.c.l.b16 %v7841
          %v7987 = vunpack.c.h.b16 %v7841
          %v7988 = vunpack.c.l.b16 %v7842
          %v7989 = vunpack.c.h.b16 %v7842
          %v7990 = vunpack.c.l.b16 %v7843
          %v7991 = vunpack.c.h.b16 %v7843
          %v7992 = vunpack.c.l.b16 %v7844
          %v7993 = vunpack.c.h.b16 %v7844
          %v7994 = vunpack.c.l.b16 %v7845
          %v7995 = vunpack.c.h.b16 %v7845
          %v7996 = vunpack.c.l.b16 %v7846
          %v7997 = vunpack.c.h.b16 %v7846
          %v7998 = vunpack.c.l.b16 %v7847
          %v7999 = vunpack.c.h.b16 %v7847
          %v8000 = vunpack.c.l.b16 %v7848
          %v8001 = vunpack.c.h.b16 %v7848
          %v8002 = vunpack.c.l.b16 %v7849
          %v8003 = vunpack.c.h.b16 %v7849
          %v8004 = vunpack.c.l.b16 %v7850
          %v8005 = vunpack.c.h.b16 %v7850
          %v8006 = vunpack.c.l.b16 %v7851
          %v8007 = vunpack.c.h.b16 %v7851
          %v8008 = vunpack.c.l.b16 %v7852
          %v8009 = vunpack.c.h.b16 %v7852
          %v8010 = vunpack.c.l.b16 %v7853
          %v8011 = vunpack.c.h.b16 %v7853
          %v8012 = vunpack.c.l.b16 %v7854
          %v8013 = vunpack.c.h.b16 %v7854
          %v8014 = vunpack.c.l.b16 %v7855
          %v8015 = vunpack.c.h.b16 %v7855
          %v8016 = vunpack.c.l.b16 %v7856
          %v8017 = vunpack.c.h.b16 %v7856
          %v8018 = vunpack.c.l.b16 %v7857
          %v8019 = vunpack.c.h.b16 %v7857
          %v8020 = vunpack.c.l.b16 %v7858
          %v8021 = vunpack.c.h.b16 %v7858
          %v8022 = vunpack.c.l.b16 %v7859
          %v8023 = vunpack.c.h.b16 %v7859
          %v8024 = vunpack.c.l.b16 %v7860
          %v8025 = vunpack.c.h.b16 %v7860
          %v8026 = vunpack.c.l.b16 %v7861
          %v8027 = vunpack.c.h.b16 %v7861
          %v8028 = vunpack.c.l.b16 %v7862
          %v8029 = vunpack.c.h.b16 %v7862
          %v8030 = vunpack.c.l.b16 %v7863
          %v8031 = vunpack.c.h.b16 %v7863
          %v8032 = vunpack.c.l.b16 %v7864
          %v8033 = vunpack.c.h.b16 %v7864
          %v8034 = vunpack.c.l.b16 %v7865
          %v8035 = vunpack.c.h.b16 %v7865
          %v8036 = vunpack.c.l.b16 %v7866
          %v8037 = vunpack.c.h.b16 %v7866
          %v8038 = vunpack.c.l.b16 %v7867
          %v8039 = vunpack.c.h.b16 %v7867
          %v8040 = vunpack.c.l.b16 %v7868
          %v8041 = vunpack.c.h.b16 %v7868
          %v8042 = vunpack.c.l.b16 %v7869
          %v8043 = vunpack.c.h.b16 %v7869
          %v8044 = vunpack.c.l.b16 %v7870
          %v8045 = vunpack.c.h.b16 %v7870
          %v8046 = vunpack.c.l.b16 %v7871
          %v8047 = vunpack.c.h.b16 %v7871
          %v8048 = vunpack.c.l.b16 %v7872
          %v8049 = vunpack.c.h.b16 %v7872
          %v8050 = vunpack.c.l.b16 %v7873
          %v8051 = vunpack.c.h.b16 %v7873
          %v8052 = vunpack.c.l.b16 %v7874
          %v8053 = vunpack.c.h.b16 %v7874
          %v8054 = vunpack.c.l.b16 %v7875
          %v8055 = vunpack.c.h.b16 %v7875
          %v8056 = vunpack.c.l.b16 %v7876
          %v8057 = vunpack.c.h.b16 %v7876
          %v8058 = vunpack.c.l.b16 %v7877
          %v8059 = vunpack.c.h.b16 %v7877
          %v8060 = vunpack.c.l.b16 %v7878
          %v8061 = vunpack.c.h.b16 %v7878
          %v8062 = vunpack.c.l.b16 %v7879
          %v8063 = vunpack.c.h.b16 %v7879
          %v8064 = vunpack.c.l.b16 %v7880
          %v8065 = vunpack.c.h.b16 %v7880
          %v8066 = vunpack.c.l.b16 %v7881
          %v8067 = vunpack.c.h.b16 %v7881
          %v8068 = vunpack.c.l.b16 %v7882
          %v8069 = vunpack.c.h.b16 %v7882
          %v8070 = vunpack.c.l.b16 %v7883
          %v8071 = vunpack.c.h.b16 %v7883
          %v8072 = vunpack.c.l.b16 %v7884
          %v8073 = vunpack.c.h.b16 %v7884
          %v8074 = vunpack.c.l.b16 %v7885
          %v8075 = vunpack.c.h.b16 %v7885
          %v8076 = vunpack.c.l.b16 %v7886
          %v8077 = vunpack.c.h.b16 %v7886
          %v8078 = vunpack.c.l.b16 %v7887
          %v8079 = vunpack.c.h.b16 %v7887
          %v8080 = vunpack.c.l.b16 %v7888
          %v8081 = vunpack.c.h.b16 %v7888
          %v8082 = vpack.c.b16 %v7962, %v7954
          %v8083 = vpack.c.b16 %v7963, %v7955
          %v8084 = vpack.c.b16 %v7964, %v7956
          %v8085 = vpack.c.b16 %v7965, %v7957
          %v8086 = vpack.c.b16 %v7966, %v7958
          %v8087 = vpack.c.b16 %v7967, %v7959
          %v8088 = vpack.c.b16 %v7968, %v7960
          %v8089 = vpack.c.b16 %v7969, %v7961
          %v8090 = vpack.c.b16 %v7978, %v7970
          %v8091 = vpack.c.b16 %v7979, %v7971
          %v8092 = vpack.c.b16 %v7980, %v7972
          %v8093 = vpack.c.b16 %v7981, %v7973
          %v8094 = vpack.c.b16 %v7982, %v7974
          %v8095 = vpack.c.b16 %v7983, %v7975
          %v8096 = vpack.c.b16 %v7984, %v7976
          %v8097 = vpack.c.b16 %v7985, %v7977
          %v8098 = vpack.c.b16 %v7994, %v7986
          %v8099 = vpack.c.b16 %v7995, %v7987
          %v8100 = vpack.c.b16 %v7996, %v7988
          %v8101 = vpack.c.b16 %v7997, %v7989
          %v8102 = vpack.c.b16 %v7998, %v7990
          %v8103 = vpack.c.b16 %v7999, %v7991
          %v8104 = vpack.c.b16 %v8000, %v7992
          %v8105 = vpack.c.b16 %v8001, %v7993
          %v8106 = vpack.c.b16 %v8010, %v8002
          %v8107 = vpack.c.b16 %v8011, %v8003
          %v8108 = vpack.c.b16 %v8012, %v8004
          %v8109 = vpack.c.b16 %v8013, %v8005
          %v8110 = vpack.c.b16 %v8014, %v8006
          %v8111 = vpack.c.b16 %v8015, %v8007
          %v8112 = vpack.c.b16 %v8016, %v8008
          %v8113 = vpack.c.b16 %v8017, %v8009
          %v8114 = vpack.c.b16 %v8026, %v8018
          %v8115 = vpack.c.b16 %v8027, %v8019
          %v8116 = vpack.c.b16 %v8028, %v8020
          %v8117 = vpack.c.b16 %v8029, %v8021
          %v8118 = vpack.c.b16 %v8030, %v8022
          %v8119 = vpack.c.b16 %v8031, %v8023
          %v8120 = vpack.c.b16 %v8032, %v8024
          %v8121 = vpack.c.b16 %v8033, %v8025
          %v8122 = vpack.c.b16 %v8042, %v8034
          %v8123 = vpack.c.b16 %v8043, %v8035
          %v8124 = vpack.c.b16 %v8044, %v8036
          %v8125 = vpack.c.b16 %v8045, %v8037
          %v8126 = vpack.c.b16 %v8046, %v8038
          %v8127 = vpack.c.b16 %v8047, %v8039
          %v8128 = vpack.c.b16 %v8048, %v8040
          %v8129 = vpack.c.b16 %v8049, %v8041
          %v8130 = vpack.c.b16 %v8058, %v8050
          %v8131 = vpack.c.b16 %v8059, %v8051
          %v8132 = vpack.c.b16 %v8060, %v8052
          %v8133 = vpack.c.b16 %v8061, %v8053
          %v8134 = vpack.c.b16 %v8062, %v8054
          %v8135 = vpack.c.b16 %v8063, %v8055
          %v8136 = vpack.c.b16 %v8064, %v8056
          %v8137 = vpack.c.b16 %v8065, %v8057
          %v8138 = vpack.c.b16 %v8074, %v8066
          %v8139 = vpack.c.b16 %v8075, %v8067
          %v8140 = vpack.c.b16 %v8076, %v8068
          %v8141 = vpack.c.b16 %v8077, %v8069
          %v8142 = vpack.c.b16 %v8078, %v8070
          %v8143 = vpack.c.b16 %v8079, %v8071
          %v8144 = vpack.c.b16 %v8080, %v8072
          %v8145 = vpack.c.b16 %v8081, %v8073
          %8210 = vmatpush.bf16.msra.mxu0 %v8138
          %8211 = vmatpush.bf16.msra.mxu0 %v8130
          %8212 = vmatpush.bf16.msra.mxu0 %v8122
          %8213 = vmatpush.bf16.msra.mxu0 %v8114
          %8214 = vmatpush.bf16.msra.mxu0 %v8106
          %8215 = vmatpush.bf16.msra.mxu0 %v8098
          %8216 = vmatpush.bf16.msra.mxu0 %v8090
          %8217 = vmatpush.bf16.msra.mxu0 %v8082
          %8218 = vmatmul.bf16.gmra.mxu0 %v7889
          %v8219 = vpop.f32.mrf.mxu0
          %v8220 = vadd.f32 0.0, %v8219
          %v8221 = vpop.f32.mrf.mxu0
          %v8222 = vadd.f32 0.0, %v8221
          %8223 = vdwg.mxu0
          %8224 = vmatpush.bf16.msra.mxu0 %v8139
          %8225 = vmatpush.bf16.msra.mxu0 %v8131
          %8226 = vmatpush.bf16.msra.mxu0 %v8123
          %8227 = vmatpush.bf16.msra.mxu0 %v8115
          %8228 = vmatpush.bf16.msra.mxu0 %v8107
          %8229 = vmatpush.bf16.msra.mxu0 %v8099
          %8230 = vmatpush.bf16.msra.mxu0 %v8091
          %8231 = vmatpush.bf16.msra.mxu0 %v8083
          %8232 = vmatmul.bf16.gmra.mxu0 %v7889
          %v8233 = vpop.f32.mrf.mxu0
          %v8234 = vadd.f32 0.0, %v8233
          %v8235 = vpop.f32.mrf.mxu0
          %v8236 = vadd.f32 0.0, %v8235
          %8237 = vdwg.mxu0
          %8238 = vmatpush.bf16.msra.mxu0 %v8140
          %8239 = vmatpush.bf16.msra.mxu0 %v8132
          %8240 = vmatpush.bf16.msra.mxu0 %v8124
          %8241 = vmatpush.bf16.msra.mxu0 %v8116
          %8242 = vmatpush.bf16.msra.mxu0 %v8108
          %8243 = vmatpush.bf16.msra.mxu0 %v8100
          %8244 = vmatpush.bf16.msra.mxu0 %v8092
          %8245 = vmatpush.bf16.msra.mxu0 %v8084
          %8246 = vmatmul.bf16.gmra.mxu0 %v7889
          %v8247 = vpop.f32.mrf.mxu0
          %v8248 = vadd.f32 0.0, %v8247
          %v8249 = vpop.f32.mrf.mxu0
          %v8250 = vadd.f32 0.0, %v8249
          %8251 = vdwg.mxu0
          %8252 = vmatpush.bf16.msra.mxu0 %v8141
          %8253 = vmatpush.bf16.msra.mxu0 %v8133
          %8254 = vmatpush.bf16.msra.mxu0 %v8125
          %8255 = vmatpush.bf16.msra.mxu0 %v8117
          %8256 = vmatpush.bf16.msra.mxu0 %v8109
          %8257 = vmatpush.bf16.msra.mxu0 %v8101
          %8258 = vmatpush.bf16.msra.mxu0 %v8093
          %8259 = vmatpush.bf16.msra.mxu0 %v8085
          %8260 = vmatmul.bf16.gmra.mxu0 %v7889
          %v8261 = vpop.f32.mrf.mxu0
          %v8262 = vadd.f32 0.0, %v8261
          %v8263 = vpop.f32.mrf.mxu0
          %v8264 = vadd.f32 0.0, %v8263
          %8265 = vdwg.mxu0
          %8266 = vmatpush.bf16.msra.mxu0 %v8142
          %8267 = vmatpush.bf16.msra.mxu0 %v8134
          %8268 = vmatpush.bf16.msra.mxu0 %v8126
          %8269 = vmatpush.bf16.msra.mxu0 %v8118
          %8270 = vmatpush.bf16.msra.mxu0 %v8110
          %8271 = vmatpush.bf16.msra.mxu0 %v8102
          %8272 = vmatpush.bf16.msra.mxu0 %v8094
          %8273 = vmatpush.bf16.msra.mxu0 %v8086
          %8274 = vmatmul.bf16.gmra.mxu0 %v7889
          %v8275 = vpop.f32.mrf.mxu0
          %v8276 = vadd.f32 0.0, %v8275
          %v8277 = vpop.f32.mrf.mxu0
          %v8278 = vadd.f32 0.0, %v8277
          %8279 = vdwg.mxu0
          %8280 = vmatpush.bf16.msra.mxu0 %v8143
          %8281 = vmatpush.bf16.msra.mxu0 %v8135
          %8282 = vmatpush.bf16.msra.mxu0 %v8127
          %8283 = vmatpush.bf16.msra.mxu0 %v8119
          %8284 = vmatpush.bf16.msra.mxu0 %v8111
          %8285 = vmatpush.bf16.msra.mxu0 %v8103
          %8286 = vmatpush.bf16.msra.mxu0 %v8095
          %8287 = vmatpush.bf16.msra.mxu0 %v8087
          %8288 = vmatmul.bf16.gmra.mxu0 %v7889
          %v8289 = vpop.f32.mrf.mxu0
          %v8290 = vadd.f32 0.0, %v8289
          %v8291 = vpop.f32.mrf.mxu0
          %v8292 = vadd.f32 0.0, %v8291
          %8293 = vdwg.mxu0
          %8294 = vmatpush.bf16.msra.mxu0 %v8144
          %8295 = vmatpush.bf16.msra.mxu0 %v8136
          %8296 = vmatpush.bf16.msra.mxu0 %v8128
          %8297 = vmatpush.bf16.msra.mxu0 %v8120
          %8298 = vmatpush.bf16.msra.mxu0 %v8112
          %8299 = vmatpush.bf16.msra.mxu0 %v8104
          %8300 = vmatpush.bf16.msra.mxu0 %v8096
          %8301 = vmatpush.bf16.msra.mxu0 %v8088
          %8302 = vmatmul.bf16.gmra.mxu0 %v7889
          %v8303 = vpop.f32.mrf.mxu0
          %v8304 = vadd.f32 0.0, %v8303
          %v8305 = vpop.f32.mrf.mxu0
          %v8306 = vadd.f32 0.0, %v8305
          %8307 = vdwg.mxu0
          %8308 = vmatpush.bf16.msra.mxu0 %v8145
          %8309 = vmatpush.bf16.msra.mxu0 %v8137
          %8310 = vmatpush.bf16.msra.mxu0 %v8129
          %8311 = vmatpush.bf16.msra.mxu0 %v8121
          %8312 = vmatpush.bf16.msra.mxu0 %v8113
          %8313 = vmatpush.bf16.msra.mxu0 %v8105
          %8314 = vmatpush.bf16.msra.mxu0 %v8097
          %8315 = vmatpush.bf16.msra.mxu0 %v8089
          %8316 = vmatmul.bf16.gmra.mxu0 %v7889
          %v8317 = vpop.f32.mrf.mxu0
          %v8318 = vadd.f32 0.0, %v8317
          %v8319 = vpop.f32.mrf.mxu0
          %v8320 = vadd.f32 0.0, %v8319
          %8321 = vdwg.mxu0
          %v8322 = vmax.f32 %v8220, 0.0
          %v8323 = vmax.f32 %v8234, 0.0
          %v8324 = vmax.f32 %v8248, 0.0
          %v8325 = vmax.f32 %v8262, 0.0
          %v8326 = vmax.f32 %v8276, 0.0
          %v8327 = vmax.f32 %v8290, 0.0
          %v8328 = vmax.f32 %v8304, 0.0
          %v8329 = vmax.f32 %v8318, 0.0
          %v8330 = vmax.f32 %v8222, 0.0
          %v8331 = vmax.f32 %v8236, 0.0
          %v8332 = vmax.f32 %v8250, 0.0
          %v8333 = vmax.f32 %v8264, 0.0
          %v8334 = vmax.f32 %v8278, 0.0
          %v8335 = vmax.f32 %v8292, 0.0
          %v8336 = vmax.f32 %v8306, 0.0
          %v8337 = vmax.f32 %v8320, 0.0
          %v8338 = vld [vmem:[%s1427] sm:$0xf]
          %v8339 = vld [vmem:[%s1427 + $0x4] sm:$0xf]
          %v8340 = vld [vmem:[%s1427 + $0x8] sm:$0xf]
          %v8341 = vld [vmem:[%s1427 + $0xc] sm:$0xf]
          %v8342 = vld [vmem:[%s1427 + $0x10] sm:$0xf]
          %v8343 = vld [vmem:[%s1427 + $0x14] sm:$0xf]
          %v8344 = vld [vmem:[%s1427 + $0x18] sm:$0xf]
          %v8345 = vld [vmem:[%s1427 + $0x1c] sm:$0xf]
          %v8346 = vld [vmem:[%s1427 + $0x20] sm:$0xf]
          %v8347 = vld [vmem:[%s1427 + $0x24] sm:$0xf]
          %v8348 = vld [vmem:[%s1427 + $0x28] sm:$0xf]
          %v8349 = vld [vmem:[%s1427 + $0x2c] sm:$0xf]
          %v8350 = vld [vmem:[%s1427 + $0x30] sm:$0xf]
          %v8351 = vld [vmem:[%s1427 + $0x34] sm:$0xf]
          %v8352 = vld [vmem:[%s1427 + $0x38] sm:$0xf]
          %v8353 = vld [vmem:[%s1427 + $0x3c] sm:$0xf]
          %v8354 = vld [vmem:[%s1427 + $0x40] sm:$0xf]
          %v8355 = vld [vmem:[%s1427 + $0x44] sm:$0xf]
          %v8356 = vld [vmem:[%s1427 + $0x48] sm:$0xf]
          %v8357 = vld [vmem:[%s1427 + $0x4c] sm:$0xf]
          %v8358 = vld [vmem:[%s1427 + $0x50] sm:$0xf]
          %v8359 = vld [vmem:[%s1427 + $0x54] sm:$0xf]
          %v8360 = vld [vmem:[%s1427 + $0x58] sm:$0xf]
          %v8361 = vld [vmem:[%s1427 + $0x5c] sm:$0xf]
          %v8362 = vld [vmem:[%s1427 + $0x60] sm:$0xf]
          %v8363 = vld [vmem:[%s1427 + $0x64] sm:$0xf]
          %v8364 = vld [vmem:[%s1427 + $0x68] sm:$0xf]
          %v8365 = vld [vmem:[%s1427 + $0x6c] sm:$0xf]
          %v8366 = vld [vmem:[%s1427 + $0x70] sm:$0xf]
          %v8367 = vld [vmem:[%s1427 + $0x74] sm:$0xf]
          %v8368 = vld [vmem:[%s1427 + $0x78] sm:$0xf]
          %v8369 = vld [vmem:[%s1427 + $0x7c] sm:$0xf]
          %v8370 = vld [vmem:[%s1427 + $0x80] sm:$0xf]
          %v8371 = vld [vmem:[%s1427 + $0x84] sm:$0xf]
          %v8372 = vld [vmem:[%s1427 + $0x88] sm:$0xf]
          %v8373 = vld [vmem:[%s1427 + $0x8c] sm:$0xf]
          %v8374 = vld [vmem:[%s1427 + $0x90] sm:$0xf]
          %v8375 = vld [vmem:[%s1427 + $0x94] sm:$0xf]
          %v8376 = vld [vmem:[%s1427 + $0x98] sm:$0xf]
          %v8377 = vld [vmem:[%s1427 + $0x9c] sm:$0xf]
          %v8378 = vld [vmem:[%s1427 + $0xa0] sm:$0xf]
          %v8379 = vld [vmem:[%s1427 + $0xa4] sm:$0xf]
          %v8380 = vld [vmem:[%s1427 + $0xa8] sm:$0xf]
          %v8381 = vld [vmem:[%s1427 + $0xac] sm:$0xf]
          %v8382 = vld [vmem:[%s1427 + $0xb0] sm:$0xf]
          %v8383 = vld [vmem:[%s1427 + $0xb4] sm:$0xf]
          %v8384 = vld [vmem:[%s1427 + $0xb8] sm:$0xf]
          %v8385 = vld [vmem:[%s1427 + $0xbc] sm:$0xf]
          %v8386 = vld [vmem:[%s1427 + $0xc0] sm:$0xf]
          %v8387 = vld [vmem:[%s1427 + $0xc4] sm:$0xf]
          %v8388 = vld [vmem:[%s1427 + $0xc8] sm:$0xf]
          %v8389 = vld [vmem:[%s1427 + $0xcc] sm:$0xf]
          %v8390 = vld [vmem:[%s1427 + $0xd0] sm:$0xf]
          %v8391 = vld [vmem:[%s1427 + $0xd4] sm:$0xf]
          %v8392 = vld [vmem:[%s1427 + $0xd8] sm:$0xf]
          %v8393 = vld [vmem:[%s1427 + $0xdc] sm:$0xf]
          %v8394 = vld [vmem:[%s1427 + $0xe0] sm:$0xf]
          %v8395 = vld [vmem:[%s1427 + $0xe4] sm:$0xf]
          %v8396 = vld [vmem:[%s1427 + $0xe8] sm:$0xf]
          %v8397 = vld [vmem:[%s1427 + $0xec] sm:$0xf]
          %v8398 = vld [vmem:[%s1427 + $0xf0] sm:$0xf]
          %v8399 = vld [vmem:[%s1427 + $0xf4] sm:$0xf]
          %v8400 = vld [vmem:[%s1427 + $0xf8] sm:$0xf]
          %v8401 = vld [vmem:[%s1427 + $0xfc] sm:$0xf]
          %v8402 = vld [vmem:[%s1427 + $0x100] sm:$0xf]
          %v8403 = vld [vmem:[%s1427 + $0x104] sm:$0xf]
          %v8404 = vld [vmem:[%s1427 + $0x108] sm:$0xf]
          %v8405 = vld [vmem:[%s1427 + $0x10c] sm:$0xf]
          %v8406 = vld [vmem:[%s1427 + $0x110] sm:$0xf]
          %v8407 = vld [vmem:[%s1427 + $0x114] sm:$0xf]
          %v8408 = vld [vmem:[%s1427 + $0x118] sm:$0xf]
          %v8409 = vld [vmem:[%s1427 + $0x11c] sm:$0xf]
          %v8410 = vld [vmem:[%s1427 + $0x120] sm:$0xf]
          %v8411 = vld [vmem:[%s1427 + $0x124] sm:$0xf]
          %v8412 = vld [vmem:[%s1427 + $0x128] sm:$0xf]
          %v8413 = vld [vmem:[%s1427 + $0x12c] sm:$0xf]
          %v8414 = vld [vmem:[%s1427 + $0x130] sm:$0xf]
          %v8415 = vld [vmem:[%s1427 + $0x134] sm:$0xf]
          %v8416 = vld [vmem:[%s1427 + $0x138] sm:$0xf]
          %v8417 = vld [vmem:[%s1427 + $0x13c] sm:$0xf]
          %v8418 = vld [vmem:[%s1427 + $0x140] sm:$0xf]
          %v8419 = vld [vmem:[%s1427 + $0x144] sm:$0xf]
          %v8420 = vld [vmem:[%s1427 + $0x148] sm:$0xf]
          %v8421 = vld [vmem:[%s1427 + $0x14c] sm:$0xf]
          %v8422 = vld [vmem:[%s1427 + $0x150] sm:$0xf]
          %v8423 = vld [vmem:[%s1427 + $0x154] sm:$0xf]
          %v8424 = vld [vmem:[%s1427 + $0x158] sm:$0xf]
          %v8425 = vld [vmem:[%s1427 + $0x15c] sm:$0xf]
          %v8426 = vld [vmem:[%s1427 + $0x160] sm:$0xf]
          %v8427 = vld [vmem:[%s1427 + $0x164] sm:$0xf]
          %v8428 = vld [vmem:[%s1427 + $0x168] sm:$0xf]
          %v8429 = vld [vmem:[%s1427 + $0x16c] sm:$0xf]
          %v8430 = vld [vmem:[%s1427 + $0x170] sm:$0xf]
          %v8431 = vld [vmem:[%s1427 + $0x174] sm:$0xf]
          %v8432 = vld [vmem:[%s1427 + $0x178] sm:$0xf]
          %v8433 = vld [vmem:[%s1427 + $0x17c] sm:$0xf]
          %v8434 = vld [vmem:[%s1427 + $0x180] sm:$0xf]
          %v8435 = vld [vmem:[%s1427 + $0x184] sm:$0xf]
          %v8436 = vld [vmem:[%s1427 + $0x188] sm:$0xf]
          %v8437 = vld [vmem:[%s1427 + $0x18c] sm:$0xf]
          %v8438 = vld [vmem:[%s1427 + $0x190] sm:$0xf]
          %v8439 = vld [vmem:[%s1427 + $0x194] sm:$0xf]
          %v8440 = vld [vmem:[%s1427 + $0x198] sm:$0xf]
          %v8441 = vld [vmem:[%s1427 + $0x19c] sm:$0xf]
          %v8442 = vld [vmem:[%s1427 + $0x1a0] sm:$0xf]
          %v8443 = vld [vmem:[%s1427 + $0x1a4] sm:$0xf]
          %v8444 = vld [vmem:[%s1427 + $0x1a8] sm:$0xf]
          %v8445 = vld [vmem:[%s1427 + $0x1ac] sm:$0xf]
          %v8446 = vld [vmem:[%s1427 + $0x1b0] sm:$0xf]
          %v8447 = vld [vmem:[%s1427 + $0x1b4] sm:$0xf]
          %v8448 = vld [vmem:[%s1427 + $0x1b8] sm:$0xf]
          %v8449 = vld [vmem:[%s1427 + $0x1bc] sm:$0xf]
          %v8450 = vld [vmem:[%s1427 + $0x1c0] sm:$0xf]
          %v8451 = vld [vmem:[%s1427 + $0x1c4] sm:$0xf]
          %v8452 = vld [vmem:[%s1427 + $0x1c8] sm:$0xf]
          %v8453 = vld [vmem:[%s1427 + $0x1cc] sm:$0xf]
          %v8454 = vld [vmem:[%s1427 + $0x1d0] sm:$0xf]
          %v8455 = vld [vmem:[%s1427 + $0x1d4] sm:$0xf]
          %v8456 = vld [vmem:[%s1427 + $0x1d8] sm:$0xf]
          %v8457 = vld [vmem:[%s1427 + $0x1dc] sm:$0xf]
          %v8458 = vld [vmem:[%s1427 + $0x1e0] sm:$0xf]
          %v8459 = vld [vmem:[%s1427 + $0x1e4] sm:$0xf]
          %v8460 = vld [vmem:[%s1427 + $0x1e8] sm:$0xf]
          %v8461 = vld [vmem:[%s1427 + $0x1ec] sm:$0xf]
          %v8462 = vld [vmem:[%s1427 + $0x1f0] sm:$0xf]
          %v8463 = vld [vmem:[%s1427 + $0x1f4] sm:$0xf]
          %v8464 = vld [vmem:[%s1427 + $0x1f8] sm:$0xf]
          %v8465 = vld [vmem:[%s1427 + $0x1fc] sm:$0xf]
          %v8466 = vpack.c.bf16 %v8330, %v8322
          %v8467 = vpack.c.bf16 %v8331, %v8323
          %v8468 = vpack.c.bf16 %v8332, %v8324
          %v8469 = vpack.c.bf16 %v8333, %v8325
          %v8470 = vpack.c.bf16 %v8334, %v8326
          %v8471 = vpack.c.bf16 %v8335, %v8327
          %v8472 = vpack.c.bf16 %v8336, %v8328
          %v8473 = vpack.c.bf16 %v8337, %v8329
          %v8602 = vunpack.c.l.b16 %v8338
          %v8603 = vunpack.c.l.b16 %v8339
          %v8604 = vunpack.c.l.b16 %v8340
          %v8605 = vunpack.c.l.b16 %v8341
          %v8606 = vunpack.c.l.b16 %v8342
          %v8607 = vunpack.c.l.b16 %v8343
          %v8608 = vunpack.c.l.b16 %v8344
          %v8609 = vunpack.c.l.b16 %v8345
          %v8610 = vunpack.c.l.b16 %v8346
          %v8611 = vunpack.c.l.b16 %v8347
          %v8612 = vunpack.c.l.b16 %v8348
          %v8613 = vunpack.c.l.b16 %v8349
          %v8614 = vunpack.c.l.b16 %v8350
          %v8615 = vunpack.c.l.b16 %v8351
          %v8616 = vunpack.c.l.b16 %v8352
          %v8617 = vunpack.c.l.b16 %v8353
          %v8618 = vunpack.c.l.b16 %v8354
          %v8619 = vunpack.c.l.b16 %v8355
          %v8620 = vunpack.c.l.b16 %v8356
          %v8621 = vunpack.c.l.b16 %v8357
          %v8622 = vunpack.c.l.b16 %v8358
          %v8623 = vunpack.c.l.b16 %v8359
          %v8624 = vunpack.c.l.b16 %v8360
          %v8625 = vunpack.c.l.b16 %v8361
          %v8626 = vunpack.c.l.b16 %v8362
          %v8627 = vunpack.c.l.b16 %v8363
          %v8628 = vunpack.c.l.b16 %v8364
          %v8629 = vunpack.c.l.b16 %v8365
          %v8630 = vunpack.c.l.b16 %v8366
          %v8631 = vunpack.c.l.b16 %v8367
          %v8632 = vunpack.c.l.b16 %v8368
          %v8633 = vunpack.c.l.b16 %v8369
          %v8634 = vunpack.c.l.b16 %v8370
          %v8635 = vunpack.c.l.b16 %v8371
          %v8636 = vunpack.c.l.b16 %v8372
          %v8637 = vunpack.c.l.b16 %v8373
          %v8638 = vunpack.c.l.b16 %v8374
          %v8639 = vunpack.c.l.b16 %v8375
          %v8640 = vunpack.c.l.b16 %v8376
          %v8641 = vunpack.c.l.b16 %v8377
          %v8642 = vunpack.c.l.b16 %v8378
          %v8643 = vunpack.c.l.b16 %v8379
          %v8644 = vunpack.c.l.b16 %v8380
          %v8645 = vunpack.c.l.b16 %v8381
          %v8646 = vunpack.c.l.b16 %v8382
          %v8647 = vunpack.c.l.b16 %v8383
          %v8648 = vunpack.c.l.b16 %v8384
          %v8649 = vunpack.c.l.b16 %v8385
          %v8650 = vunpack.c.l.b16 %v8386
          %v8651 = vunpack.c.l.b16 %v8387
          %v8652 = vunpack.c.l.b16 %v8388
          %v8653 = vunpack.c.l.b16 %v8389
          %v8654 = vunpack.c.l.b16 %v8390
          %v8655 = vunpack.c.l.b16 %v8391
          %v8656 = vunpack.c.l.b16 %v8392
          %v8657 = vunpack.c.l.b16 %v8393
          %v8658 = vunpack.c.l.b16 %v8394
          %v8659 = vunpack.c.l.b16 %v8395
          %v8660 = vunpack.c.l.b16 %v8396
          %v8661 = vunpack.c.l.b16 %v8397
          %v8662 = vunpack.c.l.b16 %v8398
          %v8663 = vunpack.c.l.b16 %v8399
          %v8664 = vunpack.c.l.b16 %v8400
          %v8665 = vunpack.c.l.b16 %v8401
          %v8666 = vunpack.c.l.b16 %v8402
          %v8667 = vunpack.c.l.b16 %v8403
          %v8668 = vunpack.c.l.b16 %v8404
          %v8669 = vunpack.c.l.b16 %v8405
          %v8670 = vunpack.c.l.b16 %v8406
          %v8671 = vunpack.c.l.b16 %v8407
          %v8672 = vunpack.c.l.b16 %v8408
          %v8673 = vunpack.c.l.b16 %v8409
          %v8674 = vunpack.c.l.b16 %v8410
          %v8675 = vunpack.c.l.b16 %v8411
          %v8676 = vunpack.c.l.b16 %v8412
          %v8677 = vunpack.c.l.b16 %v8413
          %v8678 = vunpack.c.l.b16 %v8414
          %v8679 = vunpack.c.l.b16 %v8415
          %v8680 = vunpack.c.l.b16 %v8416
          %v8681 = vunpack.c.l.b16 %v8417
          %v8682 = vunpack.c.l.b16 %v8418
          %v8683 = vunpack.c.l.b16 %v8419
          %v8684 = vunpack.c.l.b16 %v8420
          %v8685 = vunpack.c.l.b16 %v8421
          %v8686 = vunpack.c.l.b16 %v8422
          %v8687 = vunpack.c.l.b16 %v8423
          %v8688 = vunpack.c.l.b16 %v8424
          %v8689 = vunpack.c.l.b16 %v8425
          %v8690 = vunpack.c.l.b16 %v8426
          %v8691 = vunpack.c.l.b16 %v8427
          %v8692 = vunpack.c.l.b16 %v8428
          %v8693 = vunpack.c.l.b16 %v8429
          %v8694 = vunpack.c.l.b16 %v8430
          %v8695 = vunpack.c.l.b16 %v8431
          %v8696 = vunpack.c.l.b16 %v8432
          %v8697 = vunpack.c.l.b16 %v8433
          %v8698 = vunpack.c.l.b16 %v8434
          %v8699 = vunpack.c.l.b16 %v8435
          %v8700 = vunpack.c.l.b16 %v8436
          %v8701 = vunpack.c.l.b16 %v8437
          %v8702 = vunpack.c.l.b16 %v8438
          %v8703 = vunpack.c.l.b16 %v8439
          %v8704 = vunpack.c.l.b16 %v8440
          %v8705 = vunpack.c.l.b16 %v8441
          %v8706 = vunpack.c.l.b16 %v8442
          %v8707 = vunpack.c.l.b16 %v8443
          %v8708 = vunpack.c.l.b16 %v8444
          %v8709 = vunpack.c.l.b16 %v8445
          %v8710 = vunpack.c.l.b16 %v8446
          %v8711 = vunpack.c.l.b16 %v8447
          %v8712 = vunpack.c.l.b16 %v8448
          %v8713 = vunpack.c.l.b16 %v8449
          %v8714 = vunpack.c.l.b16 %v8450
          %v8715 = vunpack.c.l.b16 %v8451
          %v8716 = vunpack.c.l.b16 %v8452
          %v8717 = vunpack.c.l.b16 %v8453
          %v8718 = vunpack.c.l.b16 %v8454
          %v8719 = vunpack.c.l.b16 %v8455
          %v8720 = vunpack.c.l.b16 %v8456
          %v8721 = vunpack.c.l.b16 %v8457
          %v8722 = vunpack.c.l.b16 %v8458
          %v8723 = vunpack.c.l.b16 %v8459
          %v8724 = vunpack.c.l.b16 %v8460
          %v8725 = vunpack.c.l.b16 %v8461
          %v8726 = vunpack.c.l.b16 %v8462
          %v8727 = vunpack.c.l.b16 %v8463
          %v8728 = vunpack.c.l.b16 %v8464
          %v8729 = vunpack.c.l.b16 %v8465
          %v8730 = vpack.c.b16 %v8603, %v8602
          %v8731 = vpack.c.b16 %v8605, %v8604
          %v8732 = vpack.c.b16 %v8607, %v8606
          %v8733 = vpack.c.b16 %v8609, %v8608
          %v8734 = vpack.c.b16 %v8611, %v8610
          %v8735 = vpack.c.b16 %v8613, %v8612
          %v8736 = vpack.c.b16 %v8615, %v8614
          %v8737 = vpack.c.b16 %v8617, %v8616
          %v8738 = vpack.c.b16 %v8619, %v8618
          %v8739 = vpack.c.b16 %v8621, %v8620
          %v8740 = vpack.c.b16 %v8623, %v8622
          %v8741 = vpack.c.b16 %v8625, %v8624
          %v8742 = vpack.c.b16 %v8627, %v8626
          %v8743 = vpack.c.b16 %v8629, %v8628
          %v8744 = vpack.c.b16 %v8631, %v8630
          %v8745 = vpack.c.b16 %v8633, %v8632
          %v8746 = vpack.c.b16 %v8635, %v8634
          %v8747 = vpack.c.b16 %v8637, %v8636
          %v8748 = vpack.c.b16 %v8639, %v8638
          %v8749 = vpack.c.b16 %v8641, %v8640
          %v8750 = vpack.c.b16 %v8643, %v8642
          %v8751 = vpack.c.b16 %v8645, %v8644
          %v8752 = vpack.c.b16 %v8647, %v8646
          %v8753 = vpack.c.b16 %v8649, %v8648
          %v8754 = vpack.c.b16 %v8651, %v8650
          %v8755 = vpack.c.b16 %v8653, %v8652
          %v8756 = vpack.c.b16 %v8655, %v8654
          %v8757 = vpack.c.b16 %v8657, %v8656
          %v8758 = vpack.c.b16 %v8659, %v8658
          %v8759 = vpack.c.b16 %v8661, %v8660
          %v8760 = vpack.c.b16 %v8663, %v8662
          %v8761 = vpack.c.b16 %v8665, %v8664
          %v8762 = vpack.c.b16 %v8667, %v8666
          %v8763 = vpack.c.b16 %v8669, %v8668
          %v8764 = vpack.c.b16 %v8671, %v8670
          %v8765 = vpack.c.b16 %v8673, %v8672
          %v8766 = vpack.c.b16 %v8675, %v8674
          %v8767 = vpack.c.b16 %v8677, %v8676
          %v8768 = vpack.c.b16 %v8679, %v8678
          %v8769 = vpack.c.b16 %v8681, %v8680
          %v8770 = vpack.c.b16 %v8683, %v8682
          %v8771 = vpack.c.b16 %v8685, %v8684
          %v8772 = vpack.c.b16 %v8687, %v8686
          %v8773 = vpack.c.b16 %v8689, %v8688
          %v8774 = vpack.c.b16 %v8691, %v8690
          %v8775 = vpack.c.b16 %v8693, %v8692
          %v8776 = vpack.c.b16 %v8695, %v8694
          %v8777 = vpack.c.b16 %v8697, %v8696
          %v8778 = vpack.c.b16 %v8699, %v8698
          %v8779 = vpack.c.b16 %v8701, %v8700
          %v8780 = vpack.c.b16 %v8703, %v8702
          %v8781 = vpack.c.b16 %v8705, %v8704
          %v8782 = vpack.c.b16 %v8707, %v8706
          %v8783 = vpack.c.b16 %v8709, %v8708
          %v8784 = vpack.c.b16 %v8711, %v8710
          %v8785 = vpack.c.b16 %v8713, %v8712
          %v8786 = vpack.c.b16 %v8715, %v8714
          %v8787 = vpack.c.b16 %v8717, %v8716
          %v8788 = vpack.c.b16 %v8719, %v8718
          %v8789 = vpack.c.b16 %v8721, %v8720
          %v8790 = vpack.c.b16 %v8723, %v8722
          %v8791 = vpack.c.b16 %v8725, %v8724
          %v8792 = vpack.c.b16 %v8727, %v8726
          %v8793 = vpack.c.b16 %v8729, %v8728
          %8858 = vmatpush.bf16.msra.mxu0 %v8737
          %8859 = vmatpush.bf16.msra.mxu0 %v8736
          %8860 = vmatpush.bf16.msra.mxu0 %v8735
          %8861 = vmatpush.bf16.msra.mxu0 %v8734
          %8862 = vmatpush.bf16.msra.mxu0 %v8733
          %8863 = vmatpush.bf16.msra.mxu0 %v8732
          %8864 = vmatpush.bf16.msra.mxu0 %v8731
          %8865 = vmatpush.bf16.msra.mxu0 %v8730
          %8866 = vmatmul.bf16.gmra.mxu0 %v8466
          %v8867 = vpop.f32.mrf.mxu0
          %v8868 = vadd.f32 0.0, %v8867
          %v8869 = vpop.f32.mrf.mxu0
          %v8870 = vadd.f32 0.0, %v8869
          %8871 = vdwg.mxu0
          %8872 = vmatpush.bf16.msra.mxu0 %v8745
          %8873 = vmatpush.bf16.msra.mxu0 %v8744
          %8874 = vmatpush.bf16.msra.mxu0 %v8743
          %8875 = vmatpush.bf16.msra.mxu0 %v8742
          %8876 = vmatpush.bf16.msra.mxu0 %v8741
          %8877 = vmatpush.bf16.msra.mxu0 %v8740
          %8878 = vmatpush.bf16.msra.mxu0 %v8739
          %8879 = vmatpush.bf16.msra.mxu0 %v8738
          %8880 = vmatmul.bf16.gmra.mxu0 %v8467
          %v8881 = vpop.f32.mrf.mxu0
          %v8882 = vadd.f32 %v8868, %v8881
          %v8883 = vpop.f32.mrf.mxu0
          %v8884 = vadd.f32 %v8870, %v8883
          %8885 = vdwg.mxu0
          %8886 = vmatpush.bf16.msra.mxu0 %v8753
          %8887 = vmatpush.bf16.msra.mxu0 %v8752
          %8888 = vmatpush.bf16.msra.mxu0 %v8751
          %8889 = vmatpush.bf16.msra.mxu0 %v8750
          %8890 = vmatpush.bf16.msra.mxu0 %v8749
          %8891 = vmatpush.bf16.msra.mxu0 %v8748
          %8892 = vmatpush.bf16.msra.mxu0 %v8747
          %8893 = vmatpush.bf16.msra.mxu0 %v8746
          %8894 = vmatmul.bf16.gmra.mxu0 %v8468
          %v8895 = vpop.f32.mrf.mxu0
          %v8896 = vadd.f32 %v8882, %v8895
          %v8897 = vpop.f32.mrf.mxu0
          %v8898 = vadd.f32 %v8884, %v8897
          %8899 = vdwg.mxu0
          %8900 = vmatpush.bf16.msra.mxu0 %v8761
          %8901 = vmatpush.bf16.msra.mxu0 %v8760
          %8902 = vmatpush.bf16.msra.mxu0 %v8759
          %8903 = vmatpush.bf16.msra.mxu0 %v8758
          %8904 = vmatpush.bf16.msra.mxu0 %v8757
          %8905 = vmatpush.bf16.msra.mxu0 %v8756
          %8906 = vmatpush.bf16.msra.mxu0 %v8755
          %8907 = vmatpush.bf16.msra.mxu0 %v8754
          %8908 = vmatmul.bf16.gmra.mxu0 %v8469
          %v8909 = vpop.f32.mrf.mxu0
          %v8910 = vadd.f32 %v8896, %v8909
          %v8911 = vpop.f32.mrf.mxu0
          %v8912 = vadd.f32 %v8898, %v8911
          %8913 = vdwg.mxu0
          %8914 = vmatpush.bf16.msra.mxu0 %v8769
          %8915 = vmatpush.bf16.msra.mxu0 %v8768
          %8916 = vmatpush.bf16.msra.mxu0 %v8767
          %8917 = vmatpush.bf16.msra.mxu0 %v8766
          %8918 = vmatpush.bf16.msra.mxu0 %v8765
          %8919 = vmatpush.bf16.msra.mxu0 %v8764
          %8920 = vmatpush.bf16.msra.mxu0 %v8763
          %8921 = vmatpush.bf16.msra.mxu0 %v8762
          %8922 = vmatmul.bf16.gmra.mxu0 %v8470
          %v8923 = vpop.f32.mrf.mxu0
          %v8924 = vadd.f32 %v8910, %v8923
          %v8925 = vpop.f32.mrf.mxu0
          %v8926 = vadd.f32 %v8912, %v8925
          %8927 = vdwg.mxu0
          %8928 = vmatpush.bf16.msra.mxu0 %v8777
          %8929 = vmatpush.bf16.msra.mxu0 %v8776
          %8930 = vmatpush.bf16.msra.mxu0 %v8775
          %8931 = vmatpush.bf16.msra.mxu0 %v8774
          %8932 = vmatpush.bf16.msra.mxu0 %v8773
          %8933 = vmatpush.bf16.msra.mxu0 %v8772
          %8934 = vmatpush.bf16.msra.mxu0 %v8771
          %8935 = vmatpush.bf16.msra.mxu0 %v8770
          %8936 = vmatmul.bf16.gmra.mxu0 %v8471
          %v8937 = vpop.f32.mrf.mxu0
          %v8938 = vadd.f32 %v8924, %v8937
          %v8939 = vpop.f32.mrf.mxu0
          %v8940 = vadd.f32 %v8926, %v8939
          %8941 = vdwg.mxu0
          %8942 = vmatpush.bf16.msra.mxu0 %v8785
          %8943 = vmatpush.bf16.msra.mxu0 %v8784
          %8944 = vmatpush.bf16.msra.mxu0 %v8783
          %8945 = vmatpush.bf16.msra.mxu0 %v8782
          %8946 = vmatpush.bf16.msra.mxu0 %v8781
          %8947 = vmatpush.bf16.msra.mxu0 %v8780
          %8948 = vmatpush.bf16.msra.mxu0 %v8779
          %8949 = vmatpush.bf16.msra.mxu0 %v8778
          %8950 = vmatmul.bf16.gmra.mxu0 %v8472
          %v8951 = vpop.f32.mrf.mxu0
          %v8952 = vadd.f32 %v8938, %v8951
          %v8953 = vpop.f32.mrf.mxu0
          %v8954 = vadd.f32 %v8940, %v8953
          %8955 = vdwg.mxu0
          %8956 = vmatpush.bf16.msra.mxu0 %v8793
          %8957 = vmatpush.bf16.msra.mxu0 %v8792
          %8958 = vmatpush.bf16.msra.mxu0 %v8791
          %8959 = vmatpush.bf16.msra.mxu0 %v8790
          %8960 = vmatpush.bf16.msra.mxu0 %v8789
          %8961 = vmatpush.bf16.msra.mxu0 %v8788
          %8962 = vmatpush.bf16.msra.mxu0 %v8787
          %8963 = vmatpush.bf16.msra.mxu0 %v8786
          %8964 = vmatmul.bf16.gmra.mxu0 %v8473
          %v8965 = vpop.f32.mrf.mxu0
          %v8966 = vadd.f32 %v8952, %v8965
          %v8967 = vpop.f32.mrf.mxu0
          %v8968 = vadd.f32 %v8954, %v8967
          %8969 = vdwg.mxu0
          %v8970 = vadd.f32 %v7785, %v8966
          %v8971 = vadd.f32 %v7786, %v8968
          %8972 = vst [vmem:[#allocation3] sm:$0xff] %v8970
          %8973 = vst [vmem:[#allocation3 + $0x8] sm:$0xff] %v8971
        $region208: #{forward.1} parent=119 // pred_fallthru
          _
        %p8974 = scmp.eq.s32.totalorder %s50, 8
        // Predicated region
        $region209: #{forward.1} parent=119 // pred_check
          %p8975 = pneg %p8974
        $region210: #{forward.1} parent=119 // pred_check_branch
          %8977 = sbr.rel (%p8975) target = $region212
        $region211: #{forward.1} parent=119 // pred_region
          %v8978 = vld [vmem:[#allocation3] sm:$0xff]
          %v8979 = vld [vmem:[#allocation3 + $0x8] sm:$0xff]
          %v8980 = vld [vmem:[#allocation28] sm:$0x1]
          %v8981 = vmul.f32 %v8978, %v8978
          %v8982 = vmul.f32 %v8979, %v8979
          %8983 = vadd.xlane.f32.xlu0 %v8981
          %v8984 = vpop.xlane.xlu0 %8983
          %8985 = vadd.xlane.f32.xlu0 %v8982
          %v8986 = vpop.xlane.xlu0 %8985
          %v8987 = vrcp.pop 128.0
          %v8988 = vmul.f32 128.0, %v8987
          %v8989 = vsub.f32 1.0, %v8988
          %v8990 = vmul.f32 %v8987, %v8989
          %v8991 = vadd.f32 %v8987, %v8990
          %vm8992 = vweird.f32 %v8987
          %v8993 = vsel %vm8992, %v8987, %v8991
          %v8994 = vmul.f32 %v8984, %v8993
          %v8995 = vmul.f32 %v8986, %v8993
          %v8996 = vadd.f32 %v8994, 1e-06
          %v8997 = vadd.f32 %v8995, 1e-06
          %v8998 = vrsqrt.pop %v8996
          %v8999 = vmul.f32 %v8998, %v8996
          %v9000 = vmul.f32 %v8999, %v8998
          %v9001 = vmul.f32 0.5, %v9000
          %v9002 = vsub.f32 1.5, %v9001
          %v9003 = vmul.f32 %v8998, %v9002
          %vm9004 = vweird.f32 %v8996
          %vm9005 = vweird.f32 %v8998
          %vm9006 = vmor %vm9004, %vm9005
          %v9007 = vsel %vm9006, %v8998, %v9003
          %v9008 = vrsqrt.pop %v8997
          %v9009 = vmul.f32 %v9008, %v8997
          %v9010 = vmul.f32 %v9009, %v9008
          %v9011 = vmul.f32 0.5, %v9010
          %v9012 = vsub.f32 1.5, %v9011
          %v9013 = vmul.f32 %v9008, %v9012
          %vm9014 = vweird.f32 %v8997
          %vm9015 = vweird.f32 %v9008
          %vm9016 = vmor %vm9014, %vm9015
          %v9017 = vsel %vm9016, %v9008, %v9013
          %v9018 = vmul.f32 %v8978, %v9007
          %v9019 = vmul.f32 %v8979, %v9017
          %v9021 = vperm.slane %v8980, 0
          %v9023 = vmul.f32 %v9018, %v9021
          %v9024 = vmul.f32 %v9019, %v9021
          %v9025 = vmul.f32 %v9023, 0.088388346
          %v9026 = vmul.f32 %v9024, 0.088388346
          %v9027 = vpack.c.bf16 %v9026, %v9025
          %v9028 = vld [vmem:[#allocation5] sm:$0xff]
          %v9029 = vld [vmem:[#allocation5 + $0x8] sm:$0xff]
          %v9030 = vld [vmem:[#allocation5 + $0x10] sm:$0xff]
          %v9031 = vld [vmem:[#allocation5 + $0x18] sm:$0xff]
          %v9032 = vld [vmem:[#allocation5 + $0x20] sm:$0xf]
          %v9033 = vld [vmem:[#allocation5 + $0x24] sm:$0xff]
          %v9034 = vld [vmem:[#allocation5 + $0x2c] sm:$0xff]
          %v9035 = vld [vmem:[#allocation5 + $0x34] sm:$0xff]
          %v9036 = vld [vmem:[#allocation5 + $0x3c] sm:$0xff]
          %v9037 = vld [vmem:[#allocation5 + $0x44] sm:$0xf]
          %v9038 = vld [vmem:[#allocation5 + $0x48] sm:$0xff]
          %v9039 = vld [vmem:[#allocation5 + $0x50] sm:$0xff]
          %v9040 = vld [vmem:[#allocation5 + $0x58] sm:$0xff]
          %v9041 = vld [vmem:[#allocation5 + $0x60] sm:$0xff]
          %v9042 = vld [vmem:[#allocation5 + $0x68] sm:$0xf]
          %v9043 = vld [vmem:[#allocation5 + $0x6c] sm:$0xff]
          %v9044 = vld [vmem:[#allocation5 + $0x74] sm:$0xff]
          %v9045 = vld [vmem:[#allocation5 + $0x7c] sm:$0xff]
          %v9046 = vld [vmem:[#allocation5 + $0x84] sm:$0xff]
          %v9047 = vld [vmem:[#allocation5 + $0x8c] sm:$0xf]
          %v9048 = vld [vmem:[#allocation5 + $0x90] sm:$0xff]
          %v9049 = vld [vmem:[#allocation5 + $0x98] sm:$0xff]
          %v9050 = vld [vmem:[#allocation5 + $0xa0] sm:$0xff]
          %v9051 = vld [vmem:[#allocation5 + $0xa8] sm:$0xff]
          %v9052 = vld [vmem:[#allocation5 + $0xb0] sm:$0xf]
          %v9053 = vld [vmem:[#allocation5 + $0xb4] sm:$0xff]
          %v9054 = vld [vmem:[#allocation5 + $0xbc] sm:$0xff]
          %v9055 = vld [vmem:[#allocation5 + $0xc4] sm:$0xff]
          %v9056 = vld [vmem:[#allocation5 + $0xcc] sm:$0xff]
          %v9057 = vld [vmem:[#allocation5 + $0xd4] sm:$0xf]
          %v9058 = vld [vmem:[#allocation5 + $0xd8] sm:$0xff]
          %v9059 = vld [vmem:[#allocation5 + $0xe0] sm:$0xff]
          %v9060 = vld [vmem:[#allocation5 + $0xe8] sm:$0xff]
          %v9061 = vld [vmem:[#allocation5 + $0xf0] sm:$0xff]
          %v9062 = vld [vmem:[#allocation5 + $0xf8] sm:$0xf]
          %v9063 = vld [vmem:[#allocation5 + $0xfc] sm:$0xff]
          %v9064 = vld [vmem:[#allocation5 + $0x104] sm:$0xff]
          %v9065 = vld [vmem:[#allocation5 + $0x10c] sm:$0xff]
          %v9066 = vld [vmem:[#allocation5 + $0x114] sm:$0xff]
          %v9067 = vld [vmem:[#allocation5 + $0x11c] sm:$0xf]
          %v9068 = vld [vmem:[#allocation5 + $0x120] sm:$0xff]
          %v9069 = vld [vmem:[#allocation5 + $0x128] sm:$0xff]
          %v9070 = vld [vmem:[#allocation5 + $0x130] sm:$0xff]
          %v9071 = vld [vmem:[#allocation5 + $0x138] sm:$0xff]
          %v9072 = vld [vmem:[#allocation5 + $0x140] sm:$0xf]
          %v9073 = vld [vmem:[#allocation5 + $0x144] sm:$0xff]
          %v9074 = vld [vmem:[#allocation5 + $0x14c] sm:$0xff]
          %v9075 = vld [vmem:[#allocation5 + $0x154] sm:$0xff]
          %v9076 = vld [vmem:[#allocation5 + $0x15c] sm:$0xff]
          %v9077 = vld [vmem:[#allocation5 + $0x164] sm:$0xf]
          %v9078 = vld [vmem:[#allocation5 + $0x168] sm:$0xff]
          %v9079 = vld [vmem:[#allocation5 + $0x170] sm:$0xff]
          %v9080 = vld [vmem:[#allocation5 + $0x178] sm:$0xff]
          %v9081 = vld [vmem:[#allocation5 + $0x180] sm:$0xff]
          %v9082 = vld [vmem:[#allocation5 + $0x188] sm:$0xf]
          %v9083 = vld [vmem:[#allocation5 + $0x18c] sm:$0xff]
          %v9084 = vld [vmem:[#allocation5 + $0x194] sm:$0xff]
          %v9085 = vld [vmem:[#allocation5 + $0x19c] sm:$0xff]
          %v9086 = vld [vmem:[#allocation5 + $0x1a4] sm:$0xff]
          %v9087 = vld [vmem:[#allocation5 + $0x1ac] sm:$0xf]
          %v9088 = vld [vmem:[#allocation5 + $0x1b0] sm:$0xff]
          %v9089 = vld [vmem:[#allocation5 + $0x1b8] sm:$0xff]
          %v9090 = vld [vmem:[#allocation5 + $0x1c0] sm:$0xff]
          %v9091 = vld [vmem:[#allocation5 + $0x1c8] sm:$0xff]
          %v9092 = vld [vmem:[#allocation5 + $0x1d0] sm:$0xf]
          %v9093 = vld [vmem:[#allocation5 + $0x1d4] sm:$0xff]
          %v9094 = vld [vmem:[#allocation5 + $0x1dc] sm:$0xff]
          %v9095 = vld [vmem:[#allocation5 + $0x1e4] sm:$0xff]
          %v9096 = vld [vmem:[#allocation5 + $0x1ec] sm:$0xff]
          %v9097 = vld [vmem:[#allocation5 + $0x1f4] sm:$0xf]
          %v9098 = vld [vmem:[#allocation5 + $0x1f8] sm:$0xff]
          %v9099 = vld [vmem:[#allocation5 + $0x200] sm:$0xff]
          %v9100 = vld [vmem:[#allocation5 + $0x208] sm:$0xff]
          %v9101 = vld [vmem:[#allocation5 + $0x210] sm:$0xff]
          %v9102 = vld [vmem:[#allocation5 + $0x218] sm:$0xf]
          %v9103 = vld [vmem:[#allocation5 + $0x21c] sm:$0xff]
          %v9104 = vld [vmem:[#allocation5 + $0x224] sm:$0xff]
          %v9105 = vld [vmem:[#allocation5 + $0x22c] sm:$0xff]
          %v9106 = vld [vmem:[#allocation5 + $0x234] sm:$0xff]
          %v9107 = vld [vmem:[#allocation5 + $0x23c] sm:$0xf]
          %v9188 = vunpack.c.l.b16 %v9028
          %v9189 = vunpack.c.h.b16 %v9028
          %v9190 = vunpack.c.l.b16 %v9029
          %v9191 = vunpack.c.h.b16 %v9029
          %v9192 = vunpack.c.l.b16 %v9030
          %v9193 = vunpack.c.h.b16 %v9030
          %v9194 = vunpack.c.l.b16 %v9031
          %v9195 = vunpack.c.h.b16 %v9031
          %v9196 = vunpack.c.l.b16 %v9032
          %v9197 = vunpack.c.l.b16 %v9033
          %v9198 = vunpack.c.h.b16 %v9033
          %v9199 = vunpack.c.l.b16 %v9034
          %v9200 = vunpack.c.h.b16 %v9034
          %v9201 = vunpack.c.l.b16 %v9035
          %v9202 = vunpack.c.h.b16 %v9035
          %v9203 = vunpack.c.l.b16 %v9036
          %v9204 = vunpack.c.h.b16 %v9036
          %v9205 = vunpack.c.l.b16 %v9037
          %v9206 = vunpack.c.l.b16 %v9038
          %v9207 = vunpack.c.h.b16 %v9038
          %v9208 = vunpack.c.l.b16 %v9039
          %v9209 = vunpack.c.h.b16 %v9039
          %v9210 = vunpack.c.l.b16 %v9040
          %v9211 = vunpack.c.h.b16 %v9040
          %v9212 = vunpack.c.l.b16 %v9041
          %v9213 = vunpack.c.h.b16 %v9041
          %v9214 = vunpack.c.l.b16 %v9042
          %v9215 = vunpack.c.l.b16 %v9043
          %v9216 = vunpack.c.h.b16 %v9043
          %v9217 = vunpack.c.l.b16 %v9044
          %v9218 = vunpack.c.h.b16 %v9044
          %v9219 = vunpack.c.l.b16 %v9045
          %v9220 = vunpack.c.h.b16 %v9045
          %v9221 = vunpack.c.l.b16 %v9046
          %v9222 = vunpack.c.h.b16 %v9046
          %v9223 = vunpack.c.l.b16 %v9047
          %v9224 = vunpack.c.l.b16 %v9048
          %v9225 = vunpack.c.h.b16 %v9048
          %v9226 = vunpack.c.l.b16 %v9049
          %v9227 = vunpack.c.h.b16 %v9049
          %v9228 = vunpack.c.l.b16 %v9050
          %v9229 = vunpack.c.h.b16 %v9050
          %v9230 = vunpack.c.l.b16 %v9051
          %v9231 = vunpack.c.h.b16 %v9051
          %v9232 = vunpack.c.l.b16 %v9052
          %v9233 = vunpack.c.l.b16 %v9053
          %v9234 = vunpack.c.h.b16 %v9053
          %v9235 = vunpack.c.l.b16 %v9054
          %v9236 = vunpack.c.h.b16 %v9054
          %v9237 = vunpack.c.l.b16 %v9055
          %v9238 = vunpack.c.h.b16 %v9055
          %v9239 = vunpack.c.l.b16 %v9056
          %v9240 = vunpack.c.h.b16 %v9056
          %v9241 = vunpack.c.l.b16 %v9057
          %v9242 = vunpack.c.l.b16 %v9058
          %v9243 = vunpack.c.h.b16 %v9058
          %v9244 = vunpack.c.l.b16 %v9059
          %v9245 = vunpack.c.h.b16 %v9059
          %v9246 = vunpack.c.l.b16 %v9060
          %v9247 = vunpack.c.h.b16 %v9060
          %v9248 = vunpack.c.l.b16 %v9061
          %v9249 = vunpack.c.h.b16 %v9061
          %v9250 = vunpack.c.l.b16 %v9062
          %v9251 = vunpack.c.l.b16 %v9063
          %v9252 = vunpack.c.h.b16 %v9063
          %v9253 = vunpack.c.l.b16 %v9064
          %v9254 = vunpack.c.h.b16 %v9064
          %v9255 = vunpack.c.l.b16 %v9065
          %v9256 = vunpack.c.h.b16 %v9065
          %v9257 = vunpack.c.l.b16 %v9066
          %v9258 = vunpack.c.h.b16 %v9066
          %v9259 = vunpack.c.l.b16 %v9067
          %v9260 = vunpack.c.l.b16 %v9068
          %v9261 = vunpack.c.h.b16 %v9068
          %v9262 = vunpack.c.l.b16 %v9069
          %v9263 = vunpack.c.h.b16 %v9069
          %v9264 = vunpack.c.l.b16 %v9070
          %v9265 = vunpack.c.h.b16 %v9070
          %v9266 = vunpack.c.l.b16 %v9071
          %v9267 = vunpack.c.h.b16 %v9071
          %v9268 = vunpack.c.l.b16 %v9072
          %v9269 = vunpack.c.l.b16 %v9073
          %v9270 = vunpack.c.h.b16 %v9073
          %v9271 = vunpack.c.l.b16 %v9074
          %v9272 = vunpack.c.h.b16 %v9074
          %v9273 = vunpack.c.l.b16 %v9075
          %v9274 = vunpack.c.h.b16 %v9075
          %v9275 = vunpack.c.l.b16 %v9076
          %v9276 = vunpack.c.h.b16 %v9076
          %v9277 = vunpack.c.l.b16 %v9077
          %v9278 = vunpack.c.l.b16 %v9078
          %v9279 = vunpack.c.h.b16 %v9078
          %v9280 = vunpack.c.l.b16 %v9079
          %v9281 = vunpack.c.h.b16 %v9079
          %v9282 = vunpack.c.l.b16 %v9080
          %v9283 = vunpack.c.h.b16 %v9080
          %v9284 = vunpack.c.l.b16 %v9081
          %v9285 = vunpack.c.h.b16 %v9081
          %v9286 = vunpack.c.l.b16 %v9082
          %v9287 = vunpack.c.l.b16 %v9083
          %v9288 = vunpack.c.h.b16 %v9083
          %v9289 = vunpack.c.l.b16 %v9084
          %v9290 = vunpack.c.h.b16 %v9084
          %v9291 = vunpack.c.l.b16 %v9085
          %v9292 = vunpack.c.h.b16 %v9085
          %v9293 = vunpack.c.l.b16 %v9086
          %v9294 = vunpack.c.h.b16 %v9086
          %v9295 = vunpack.c.l.b16 %v9087
          %v9296 = vunpack.c.l.b16 %v9088
          %v9297 = vunpack.c.h.b16 %v9088
          %v9298 = vunpack.c.l.b16 %v9089
          %v9299 = vunpack.c.h.b16 %v9089
          %v9300 = vunpack.c.l.b16 %v9090
          %v9301 = vunpack.c.h.b16 %v9090
          %v9302 = vunpack.c.l.b16 %v9091
          %v9303 = vunpack.c.h.b16 %v9091
          %v9304 = vunpack.c.l.b16 %v9092
          %v9305 = vunpack.c.l.b16 %v9093
          %v9306 = vunpack.c.h.b16 %v9093
          %v9307 = vunpack.c.l.b16 %v9094
          %v9308 = vunpack.c.h.b16 %v9094
          %v9309 = vunpack.c.l.b16 %v9095
          %v9310 = vunpack.c.h.b16 %v9095
          %v9311 = vunpack.c.l.b16 %v9096
          %v9312 = vunpack.c.h.b16 %v9096
          %v9313 = vunpack.c.l.b16 %v9097
          %v9314 = vunpack.c.l.b16 %v9098
          %v9315 = vunpack.c.h.b16 %v9098
          %v9316 = vunpack.c.l.b16 %v9099
          %v9317 = vunpack.c.h.b16 %v9099
          %v9318 = vunpack.c.l.b16 %v9100
          %v9319 = vunpack.c.h.b16 %v9100
          %v9320 = vunpack.c.l.b16 %v9101
          %v9321 = vunpack.c.h.b16 %v9101
          %v9322 = vunpack.c.l.b16 %v9102
          %v9323 = vunpack.c.l.b16 %v9103
          %v9324 = vunpack.c.h.b16 %v9103
          %v9325 = vunpack.c.l.b16 %v9104
          %v9326 = vunpack.c.h.b16 %v9104
          %v9327 = vunpack.c.l.b16 %v9105
          %v9328 = vunpack.c.h.b16 %v9105
          %v9329 = vunpack.c.l.b16 %v9106
          %v9330 = vunpack.c.h.b16 %v9106
          %v9331 = vunpack.c.l.b16 %v9107
          %v9332 = vpack.c.b16 %v9197, %v9188
          %v9333 = vpack.c.b16 %v9198, %v9189
          %v9334 = vpack.c.b16 %v9199, %v9190
          %v9335 = vpack.c.b16 %v9200, %v9191
          %v9336 = vpack.c.b16 %v9201, %v9192
          %v9337 = vpack.c.b16 %v9202, %v9193
          %v9338 = vpack.c.b16 %v9203, %v9194
          %v9339 = vpack.c.b16 %v9204, %v9195
          %v9340 = vpack.c.b16 %v9205, %v9196
          %v9341 = vpack.c.b16 %v9215, %v9206
          %v9342 = vpack.c.b16 %v9216, %v9207
          %v9343 = vpack.c.b16 %v9217, %v9208
          %v9344 = vpack.c.b16 %v9218, %v9209
          %v9345 = vpack.c.b16 %v9219, %v9210
          %v9346 = vpack.c.b16 %v9220, %v9211
          %v9347 = vpack.c.b16 %v9221, %v9212
          %v9348 = vpack.c.b16 %v9222, %v9213
          %v9349 = vpack.c.b16 %v9223, %v9214
          %v9350 = vpack.c.b16 %v9233, %v9224
          %v9351 = vpack.c.b16 %v9234, %v9225
          %v9352 = vpack.c.b16 %v9235, %v9226
          %v9353 = vpack.c.b16 %v9236, %v9227
          %v9354 = vpack.c.b16 %v9237, %v9228
          %v9355 = vpack.c.b16 %v9238, %v9229
          %v9356 = vpack.c.b16 %v9239, %v9230
          %v9357 = vpack.c.b16 %v9240, %v9231
          %v9358 = vpack.c.b16 %v9241, %v9232
          %v9359 = vpack.c.b16 %v9251, %v9242
          %v9360 = vpack.c.b16 %v9252, %v9243
          %v9361 = vpack.c.b16 %v9253, %v9244
          %v9362 = vpack.c.b16 %v9254, %v9245
          %v9363 = vpack.c.b16 %v9255, %v9246
          %v9364 = vpack.c.b16 %v9256, %v9247
          %v9365 = vpack.c.b16 %v9257, %v9248
          %v9366 = vpack.c.b16 %v9258, %v9249
          %v9367 = vpack.c.b16 %v9259, %v9250
          %v9368 = vpack.c.b16 %v9269, %v9260
          %v9369 = vpack.c.b16 %v9270, %v9261
          %v9370 = vpack.c.b16 %v9271, %v9262
          %v9371 = vpack.c.b16 %v9272, %v9263
          %v9372 = vpack.c.b16 %v9273, %v9264
          %v9373 = vpack.c.b16 %v9274, %v9265
          %v9374 = vpack.c.b16 %v9275, %v9266
          %v9375 = vpack.c.b16 %v9276, %v9267
          %v9376 = vpack.c.b16 %v9277, %v9268
          %v9377 = vpack.c.b16 %v9287, %v9278
          %v9378 = vpack.c.b16 %v9288, %v9279
          %v9379 = vpack.c.b16 %v9289, %v9280
          %v9380 = vpack.c.b16 %v9290, %v9281
          %v9381 = vpack.c.b16 %v9291, %v9282
          %v9382 = vpack.c.b16 %v9292, %v9283
          %v9383 = vpack.c.b16 %v9293, %v9284
          %v9384 = vpack.c.b16 %v9294, %v9285
          %v9385 = vpack.c.b16 %v9295, %v9286
          %v9386 = vpack.c.b16 %v9305, %v9296
          %v9387 = vpack.c.b16 %v9306, %v9297
          %v9388 = vpack.c.b16 %v9307, %v9298
          %v9389 = vpack.c.b16 %v9308, %v9299
          %v9390 = vpack.c.b16 %v9309, %v9300
          %v9391 = vpack.c.b16 %v9310, %v9301
          %v9392 = vpack.c.b16 %v9311, %v9302
          %v9393 = vpack.c.b16 %v9312, %v9303
          %v9394 = vpack.c.b16 %v9313, %v9304
          %v9395 = vpack.c.b16 %v9323, %v9314
          %v9396 = vpack.c.b16 %v9324, %v9315
          %v9397 = vpack.c.b16 %v9325, %v9316
          %v9398 = vpack.c.b16 %v9326, %v9317
          %v9399 = vpack.c.b16 %v9327, %v9318
          %v9400 = vpack.c.b16 %v9328, %v9319
          %v9401 = vpack.c.b16 %v9329, %v9320
          %v9402 = vpack.c.b16 %v9330, %v9321
          %v9403 = vpack.c.b16 %v9331, %v9322
          %9476 = vmatpush.bf16.msra.mxu0 %v9395
          %9477 = vmatpush.bf16.msra.mxu0 %v9386
          %9478 = vmatpush.bf16.msra.mxu0 %v9377
          %9479 = vmatpush.bf16.msra.mxu0 %v9368
          %9480 = vmatpush.bf16.msra.mxu0 %v9359
          %9481 = vmatpush.bf16.msra.mxu0 %v9350
          %9482 = vmatpush.bf16.msra.mxu0 %v9341
          %9483 = vmatpush.bf16.msra.mxu0 %v9332
          %9484 = vmatmul.bf16.gmra.mxu0 %v9027
          %v9485 = vpop.f32.mrf.mxu0
          %v9486 = vadd.f32 0.0, %v9485
          %v9487 = vpop.f32.mrf.mxu0
          %v9488 = vadd.f32 0.0, %v9487
          %9489 = vdwg.mxu0
          %9490 = vmatpush.bf16.msra.mxu0 %v9396
          %9491 = vmatpush.bf16.msra.mxu0 %v9387
          %9492 = vmatpush.bf16.msra.mxu0 %v9378
          %9493 = vmatpush.bf16.msra.mxu0 %v9369
          %9494 = vmatpush.bf16.msra.mxu0 %v9360
          %9495 = vmatpush.bf16.msra.mxu0 %v9351
          %9496 = vmatpush.bf16.msra.mxu0 %v9342
          %9497 = vmatpush.bf16.msra.mxu0 %v9333
          %9498 = vmatmul.bf16.gmra.mxu0 %v9027
          %v9499 = vpop.f32.mrf.mxu0
          %v9500 = vadd.f32 0.0, %v9499
          %v9501 = vpop.f32.mrf.mxu0
          %v9502 = vadd.f32 0.0, %v9501
          %9503 = vdwg.mxu0
          %9504 = vmatpush.bf16.msra.mxu0 %v9397
          %9505 = vmatpush.bf16.msra.mxu0 %v9388
          %9506 = vmatpush.bf16.msra.mxu0 %v9379
          %9507 = vmatpush.bf16.msra.mxu0 %v9370
          %9508 = vmatpush.bf16.msra.mxu0 %v9361
          %9509 = vmatpush.bf16.msra.mxu0 %v9352
          %9510 = vmatpush.bf16.msra.mxu0 %v9343
          %9511 = vmatpush.bf16.msra.mxu0 %v9334
          %9512 = vmatmul.bf16.gmra.mxu0 %v9027
          %v9513 = vpop.f32.mrf.mxu0
          %v9514 = vadd.f32 0.0, %v9513
          %v9515 = vpop.f32.mrf.mxu0
          %v9516 = vadd.f32 0.0, %v9515
          %9517 = vdwg.mxu0
          %9518 = vmatpush.bf16.msra.mxu0 %v9398
          %9519 = vmatpush.bf16.msra.mxu0 %v9389
          %9520 = vmatpush.bf16.msra.mxu0 %v9380
          %9521 = vmatpush.bf16.msra.mxu0 %v9371
          %9522 = vmatpush.bf16.msra.mxu0 %v9362
          %9523 = vmatpush.bf16.msra.mxu0 %v9353
          %9524 = vmatpush.bf16.msra.mxu0 %v9344
          %9525 = vmatpush.bf16.msra.mxu0 %v9335
          %9526 = vmatmul.bf16.gmra.mxu0 %v9027
          %v9527 = vpop.f32.mrf.mxu0
          %v9528 = vadd.f32 0.0, %v9527
          %v9529 = vpop.f32.mrf.mxu0
          %v9530 = vadd.f32 0.0, %v9529
          %9531 = vdwg.mxu0
          %9532 = vmatpush.bf16.msra.mxu0 %v9399
          %9533 = vmatpush.bf16.msra.mxu0 %v9390
          %9534 = vmatpush.bf16.msra.mxu0 %v9381
          %9535 = vmatpush.bf16.msra.mxu0 %v9372
          %9536 = vmatpush.bf16.msra.mxu0 %v9363
          %9537 = vmatpush.bf16.msra.mxu0 %v9354
          %9538 = vmatpush.bf16.msra.mxu0 %v9345
          %9539 = vmatpush.bf16.msra.mxu0 %v9336
          %9540 = vmatmul.bf16.gmra.mxu0 %v9027
          %v9541 = vpop.f32.mrf.mxu0
          %v9542 = vadd.f32 0.0, %v9541
          %v9543 = vpop.f32.mrf.mxu0
          %v9544 = vadd.f32 0.0, %v9543
          %9545 = vdwg.mxu0
          %9546 = vmatpush.bf16.msra.mxu0 %v9400
          %9547 = vmatpush.bf16.msra.mxu0 %v9391
          %9548 = vmatpush.bf16.msra.mxu0 %v9382
          %9549 = vmatpush.bf16.msra.mxu0 %v9373
          %9550 = vmatpush.bf16.msra.mxu0 %v9364
          %9551 = vmatpush.bf16.msra.mxu0 %v9355
          %9552 = vmatpush.bf16.msra.mxu0 %v9346
          %9553 = vmatpush.bf16.msra.mxu0 %v9337
          %9554 = vmatmul.bf16.gmra.mxu0 %v9027
          %v9555 = vpop.f32.mrf.mxu0
          %v9556 = vadd.f32 0.0, %v9555
          %v9557 = vpop.f32.mrf.mxu0
          %v9558 = vadd.f32 0.0, %v9557
          %9559 = vdwg.mxu0
          %9560 = vmatpush.bf16.msra.mxu0 %v9401
          %9561 = vmatpush.bf16.msra.mxu0 %v9392
          %9562 = vmatpush.bf16.msra.mxu0 %v9383
          %9563 = vmatpush.bf16.msra.mxu0 %v9374
          %9564 = vmatpush.bf16.msra.mxu0 %v9365
          %9565 = vmatpush.bf16.msra.mxu0 %v9356
          %9566 = vmatpush.bf16.msra.mxu0 %v9347
          %9567 = vmatpush.bf16.msra.mxu0 %v9338
          %9568 = vmatmul.bf16.gmra.mxu0 %v9027
          %v9569 = vpop.f32.mrf.mxu0
          %v9570 = vadd.f32 0.0, %v9569
          %v9571 = vpop.f32.mrf.mxu0
          %v9572 = vadd.f32 0.0, %v9571
          %9573 = vdwg.mxu0
          %9574 = vmatpush.bf16.msra.mxu0 %v9402
          %9575 = vmatpush.bf16.msra.mxu0 %v9393
          %9576 = vmatpush.bf16.msra.mxu0 %v9384
          %9577 = vmatpush.bf16.msra.mxu0 %v9375
          %9578 = vmatpush.bf16.msra.mxu0 %v9366
          %9579 = vmatpush.bf16.msra.mxu0 %v9357
          %9580 = vmatpush.bf16.msra.mxu0 %v9348
          %9581 = vmatpush.bf16.msra.mxu0 %v9339
          %9582 = vmatmul.bf16.gmra.mxu0 %v9027
          %v9583 = vpop.f32.mrf.mxu0
          %v9584 = vadd.f32 0.0, %v9583
          %v9585 = vpop.f32.mrf.mxu0
          %v9586 = vadd.f32 0.0, %v9585
          %9587 = vdwg.mxu0
          %9588 = vmatpush.bf16.msra.mxu0 %v9403
          %9589 = vmatpush.bf16.msra.mxu0 %v9394
          %9590 = vmatpush.bf16.msra.mxu0 %v9385
          %9591 = vmatpush.bf16.msra.mxu0 %v9376
          %9592 = vmatpush.bf16.msra.mxu0 %v9367
          %9593 = vmatpush.bf16.msra.mxu0 %v9358
          %9594 = vmatpush.bf16.msra.mxu0 %v9349
          %9595 = vmatpush.bf16.msra.mxu0 %v9340
          %9596 = vmatmul.bf16.gmra.mxu0 %v9027
          %v9597 = vpop.f32.mrf.mxu0
          %v9598 = vadd.f32 0.0, %v9597
          %v9599 = vpop.f32.mrf.mxu0
          %v9600 = vadd.f32 0.0, %v9599
          %9601 = vdwg.mxu0
          %9602 = vst [vmem:[%s25] sm:$0xff] %v9486
          %9603 = vst [vmem:[%s25 + $0x8] sm:$0xff] %v9500
          %9604 = vst [vmem:[%s25 + $0x10] sm:$0xff] %v9514
          %9605 = vst [vmem:[%s25 + $0x18] sm:$0xff] %v9528
          %9606 = vst [vmem:[%s25 + $0x20] sm:$0xff] %v9542
          %9607 = vst [vmem:[%s25 + $0x28] sm:$0xff] %v9556
          %9608 = vst [vmem:[%s25 + $0x30] sm:$0xff] %v9570
          %9609 = vst [vmem:[%s25 + $0x38] sm:$0xff] %v9584
          %9610 = vst [vmem:[%s25 + $0x40] sm:$0xff] %v9598
          %9611 = vst [vmem:[%s25 + $0x48] sm:$0xff] %v9488
          %9612 = vst [vmem:[%s25 + $0x50] sm:$0xff] %v9502
          %9613 = vst [vmem:[%s25 + $0x58] sm:$0xff] %v9516
          %9614 = vst [vmem:[%s25 + $0x60] sm:$0xff] %v9530
          %9615 = vst [vmem:[%s25 + $0x68] sm:$0xff] %v9544
          %9616 = vst [vmem:[%s25 + $0x70] sm:$0xff] %v9558
          %9617 = vst [vmem:[%s25 + $0x78] sm:$0xff] %v9572
          %9618 = vst [vmem:[%s25 + $0x80] sm:$0xff] %v9586
          %9619 = vst [vmem:[%s25 + $0x88] sm:$0xff] %v9600
          %v9620 = vlaneseq
          %v9621 = vand.u32 %v9620, 127
          %v9622 = vadd.s32 %v9621, 128
          %v9623 = vadd.s32 %v9621, 256
          %v9624 = vadd.s32 %v9621, 384
          %v9625 = vadd.s32 %v9621, 512
          %v9626 = vadd.s32 %v9621, 640
          %v9627 = vadd.s32 %v9621, 768
          %v9628 = vadd.s32 %v9621, 896
          %v9629 = vadd.s32 %v9621, 1024
          %vm9630 = vcmp.lt.s32.totalorder %v9621, 1025
          %vm9631 = vcmp.lt.s32.totalorder %v9622, 1025
          %vm9632 = vcmp.lt.s32.totalorder %v9623, 1025
          %vm9633 = vcmp.lt.s32.totalorder %v9624, 1025
          %vm9634 = vcmp.lt.s32.totalorder %v9625, 1025
          %vm9635 = vcmp.lt.s32.totalorder %v9626, 1025
          %vm9636 = vcmp.lt.s32.totalorder %v9627, 1025
          %vm9637 = vcmp.lt.s32.totalorder %v9628, 1025
          %vm9638 = vcmp.lt.s32.totalorder %v9629, 1025
          %v9639 = vsel %vm9630, %v9486, -1e+09
          %v9640 = vsel %vm9631, %v9500, -1e+09
          %v9641 = vsel %vm9632, %v9514, -1e+09
          %v9642 = vsel %vm9633, %v9528, -1e+09
          %v9643 = vsel %vm9634, %v9542, -1e+09
          %v9644 = vsel %vm9635, %v9556, -1e+09
          %v9645 = vsel %vm9636, %v9570, -1e+09
          %v9646 = vsel %vm9637, %v9584, -1e+09
          %v9647 = vsel %vm9638, %v9598, -1e+09
          %v9648 = vsel %vm9630, %v9488, -1e+09
          %v9649 = vsel %vm9631, %v9502, -1e+09
          %v9650 = vsel %vm9632, %v9516, -1e+09
          %v9651 = vsel %vm9633, %v9530, -1e+09
          %v9652 = vsel %vm9634, %v9544, -1e+09
          %v9653 = vsel %vm9635, %v9558, -1e+09
          %v9654 = vsel %vm9636, %v9572, -1e+09
          %v9655 = vsel %vm9637, %v9586, -1e+09
          %v9656 = vsel %vm9638, %v9600, -1e+09
          %v9657 = vmax.f32 %v9639, %v9641
          %v9658 = vmax.f32 %v9640, %v9642
          %v9659 = vmax.f32 %v9657, %v9643
          %v9660 = vmax.f32 %v9658, %v9644
          %v9661 = vmax.f32 %v9659, %v9645
          %v9662 = vmax.f32 %v9660, %v9646
          %v9663 = vmax.f32 %v9661, %v9647
          %v9664 = vmax.f32 %v9663, %v9662
          %9665 = vmax.xlane.f32.xlu0 %v9664
          %v9666 = vpop.xlane.xlu0 %9665
          %v9667 = vmax.f32 %v9648, %v9650
          %v9668 = vmax.f32 %v9649, %v9651
          %v9669 = vmax.f32 %v9667, %v9652
          %v9670 = vmax.f32 %v9668, %v9653
          %v9671 = vmax.f32 %v9669, %v9654
          %v9672 = vmax.f32 %v9670, %v9655
          %v9673 = vmax.f32 %v9671, %v9656
          %v9674 = vmax.f32 %v9673, %v9672
          %9675 = vmax.xlane.f32.xlu0 %v9674
          %v9676 = vpop.xlane.xlu0 %9675
          %v9677 = vsub.f32 %v9639, %v9666
          %v9678 = vsub.f32 %v9640, %v9666
          %v9679 = vsub.f32 %v9641, %v9666
          %v9680 = vsub.f32 %v9642, %v9666
          %v9681 = vsub.f32 %v9643, %v9666
          %v9682 = vsub.f32 %v9644, %v9666
          %v9683 = vsub.f32 %v9645, %v9666
          %v9684 = vsub.f32 %v9646, %v9666
          %v9685 = vsub.f32 %v9647, %v9666
          %v9686 = vsub.f32 %v9648, %v9676
          %v9687 = vsub.f32 %v9649, %v9676
          %v9688 = vsub.f32 %v9650, %v9676
          %v9689 = vsub.f32 %v9651, %v9676
          %v9690 = vsub.f32 %v9652, %v9676
          %v9691 = vsub.f32 %v9653, %v9676
          %v9692 = vsub.f32 %v9654, %v9676
          %v9693 = vsub.f32 %v9655, %v9676
          %v9694 = vsub.f32 %v9656, %v9676
          %v9695 = vmul.f32 %v9677, 1.442695
          %v9696 = vpow.pop %v9695
          %v9697 = vmul.f32 %v9678, 1.442695
          %v9698 = vpow.pop %v9697
          %v9699 = vmul.f32 %v9679, 1.442695
          %v9700 = vpow.pop %v9699
          %v9701 = vmul.f32 %v9680, 1.442695
          %v9702 = vpow.pop %v9701
          %v9703 = vmul.f32 %v9681, 1.442695
          %v9704 = vpow.pop %v9703
          %v9705 = vmul.f32 %v9682, 1.442695
          %v9706 = vpow.pop %v9705
          %v9707 = vmul.f32 %v9683, 1.442695
          %v9708 = vpow.pop %v9707
          %v9709 = vmul.f32 %v9684, 1.442695
          %v9710 = vpow.pop %v9709
          %v9711 = vmul.f32 %v9685, 1.442695
          %v9712 = vpow.pop %v9711
          %v9713 = vmul.f32 %v9686, 1.442695
          %v9714 = vpow.pop %v9713
          %v9715 = vmul.f32 %v9687, 1.442695
          %v9716 = vpow.pop %v9715
          %v9717 = vmul.f32 %v9688, 1.442695
          %v9718 = vpow.pop %v9717
          %v9719 = vmul.f32 %v9689, 1.442695
          %v9720 = vpow.pop %v9719
          %v9721 = vmul.f32 %v9690, 1.442695
          %v9722 = vpow.pop %v9721
          %v9723 = vmul.f32 %v9691, 1.442695
          %v9724 = vpow.pop %v9723
          %v9725 = vmul.f32 %v9692, 1.442695
          %v9726 = vpow.pop %v9725
          %v9727 = vmul.f32 %v9693, 1.442695
          %v9728 = vpow.pop %v9727
          %v9729 = vmul.f32 %v9694, 1.442695
          %v9730 = vpow.pop %v9729
          %v9731 = vadd.f32 %v9696, %v9698
          %v9732 = vadd.f32 %v9731, %v9700
          %v9733 = vadd.f32 %v9732, %v9702
          %v9734 = vadd.f32 %v9733, %v9704
          %v9735 = vadd.f32 %v9734, %v9706
          %v9736 = vadd.f32 %v9735, %v9708
          %v9737 = vadd.f32 %v9736, %v9710
          %v9738 = vadd.f32 %v9737, %v9712
          %9739 = vadd.xlane.f32.xlu0 %v9738
          %v9740 = vpop.xlane.xlu0 %9739
          %v9741 = vadd.f32 %v9714, %v9716
          %v9742 = vadd.f32 %v9741, %v9718
          %v9743 = vadd.f32 %v9742, %v9720
          %v9744 = vadd.f32 %v9743, %v9722
          %v9745 = vadd.f32 %v9744, %v9724
          %v9746 = vadd.f32 %v9745, %v9726
          %v9747 = vadd.f32 %v9746, %v9728
          %v9748 = vadd.f32 %v9747, %v9730
          %9749 = vadd.xlane.f32.xlu0 %v9748
          %v9750 = vpop.xlane.xlu0 %9749
          %v9751 = vlog2.pop %v9740
          %v9752 = vmul.f32 %v9751, 0.6931472
          %v9753 = vlog2.pop %v9750
          %v9754 = vmul.f32 %v9753, 0.6931472
          %v9755 = vadd.f32 %v9752, %v9666
          %v9756 = vadd.f32 %v9754, %v9676
          %v9757 = vld [vmem:[%s5] sm:$0xff]
          %v9758 = vld [vmem:[%s5 + $0x8] sm:$0xff]
          %9759 = vset.pattern.permute.xlu0 0
          %9760 = vperm.xlu0 %9759, %v9757
          %v9761 = vpop.permute.xlu0 %9760
          %9762 = vset.pattern.permute.xlu0 0
          %9763 = vperm.xlu0 %9762, %v9758
          %v9764 = vpop.permute.xlu0 %9763
          %vm9765 = vcmp.eq.s32.totalorder %v9621, %v9761
          %vm9766 = vcmp.eq.s32.totalorder %v9622, %v9761
          %vm9767 = vcmp.eq.s32.totalorder %v9623, %v9761
          %vm9768 = vcmp.eq.s32.totalorder %v9624, %v9761
          %vm9769 = vcmp.eq.s32.totalorder %v9625, %v9761
          %vm9770 = vcmp.eq.s32.totalorder %v9626, %v9761
          %vm9771 = vcmp.eq.s32.totalorder %v9627, %v9761
          %vm9772 = vcmp.eq.s32.totalorder %v9628, %v9761
          %vm9773 = vcmp.eq.s32.totalorder %v9629, %v9761
          %vm9774 = vcmp.eq.s32.totalorder %v9621, %v9764
          %vm9775 = vcmp.eq.s32.totalorder %v9622, %v9764
          %vm9776 = vcmp.eq.s32.totalorder %v9623, %v9764
          %vm9777 = vcmp.eq.s32.totalorder %v9624, %v9764
          %vm9778 = vcmp.eq.s32.totalorder %v9625, %v9764
          %vm9779 = vcmp.eq.s32.totalorder %v9626, %v9764
          %vm9780 = vcmp.eq.s32.totalorder %v9627, %v9764
          %vm9781 = vcmp.eq.s32.totalorder %v9628, %v9764
          %vm9782 = vcmp.eq.s32.totalorder %v9629, %v9764
          %v9783 = vsel %vm9765, %v9639, 0.0
          %v9784 = vsel %vm9766, %v9640, 0.0
          %v9785 = vsel %vm9767, %v9641, 0.0
          %v9786 = vsel %vm9768, %v9642, 0.0
          %v9787 = vsel %vm9769, %v9643, 0.0
          %v9788 = vsel %vm9770, %v9644, 0.0
          %v9789 = vsel %vm9771, %v9645, 0.0
          %v9790 = vsel %vm9772, %v9646, 0.0
          %v9791 = vsel %vm9773, %v9647, 0.0
          %v9792 = vsel %vm9774, %v9648, 0.0
          %v9793 = vsel %vm9775, %v9649, 0.0
          %v9794 = vsel %vm9776, %v9650, 0.0
          %v9795 = vsel %vm9777, %v9651, 0.0
          %v9796 = vsel %vm9778, %v9652, 0.0
          %v9797 = vsel %vm9779, %v9653, 0.0
          %v9798 = vsel %vm9780, %v9654, 0.0
          %v9799 = vsel %vm9781, %v9655, 0.0
          %v9800 = vsel %vm9782, %v9656, 0.0
          %v9801 = vadd.f32 %v9783, %v9784
          %v9802 = vadd.f32 %v9801, %v9785
          %v9803 = vadd.f32 %v9802, %v9786
          %v9804 = vadd.f32 %v9803, %v9787
          %v9805 = vadd.f32 %v9804, %v9788
          %v9806 = vadd.f32 %v9805, %v9789
          %v9807 = vadd.f32 %v9806, %v9790
          %v9808 = vadd.f32 %v9807, %v9791
          %9809 = vadd.xlane.f32.xlu0 %v9808
          %v9810 = vpop.xlane.xlu0 %9809
          %v9811 = vadd.f32 %v9792, %v9793
          %v9812 = vadd.f32 %v9811, %v9794
          %v9813 = vadd.f32 %v9812, %v9795
          %v9814 = vadd.f32 %v9813, %v9796
          %v9815 = vadd.f32 %v9814, %v9797
          %v9816 = vadd.f32 %v9815, %v9798
          %v9817 = vadd.f32 %v9816, %v9799
          %v9818 = vadd.f32 %v9817, %v9800
          %9819 = vadd.xlane.f32.xlu0 %v9818
          %v9820 = vpop.xlane.xlu0 %9819
          %vm9821 = vcmp.ne.s32.totalorder %v9757, 4294967196
          %vm9822 = vcmp.ne.s32.totalorder %v9758, 4294967196
          %v9823 = vsel %vm9821, 1, 0
          %v9824 = vsel %vm9822, 1, 0
          %v9825 = vcvt.s32.f32 %v9823
          %v9826 = vcvt.s32.f32 %v9824
          %v9827 = vsub.f32 %v9755, %v9810
          %v9828 = vsub.f32 %v9756, %v9820
          %v9829 = vmul.f32 %v9827, %v9825
          %v9830 = vmul.f32 %v9828, %v9826
          %vm9831 = vcmask 7168
          %v9832 = vsel %vm9831, %v9829, 0.0
          %v9833 = vsel %vm9831, %v9830, 0.0
          %v9834 = vadd.f32 %v9832, %v9833
          %9835 = vadd.xlane.f32.xlu0 %v9834
          %v9836 = vpop.xlane.xlu0 %9835
          %v9837 = vrot.slane %v9836, 4
          %v9838 = vadd.f32 %v9836, %v9837
          %v9839 = vrot.slane %v9838, 2
          %v9840 = vadd.f32 %v9838, %v9839
          %v9841 = vrot.slane %v9840, 1
          %v9842 = vadd.f32 %v9840, %v9841
          %s9843 = vtos %v9842
          %v9844 = vsel %vm9831, %v9825, 0.0
          %v9845 = vsel %vm9831, %v9826, 0.0
          %v9846 = vadd.f32 %v9844, %v9845
          %9847 = vadd.xlane.f32.xlu0 %v9846
          %v9848 = vpop.xlane.xlu0 %9847
          %v9849 = vrot.slane %v9848, 4
          %v9850 = vadd.f32 %v9848, %v9849
          %v9851 = vrot.slane %v9850, 2
          %v9852 = vadd.f32 %v9850, %v9851
          %v9853 = vrot.slane %v9852, 1
          %v9854 = vadd.f32 %v9852, %v9853
          %s9855 = vtos %v9854
          %s9856 = smax.f32 %s9855, 1.0
          %v9857 = vstv %s9856
          %v9858 = vrcp.pop %v9857
          %v9859 = vmul.f32 %v9857, %v9858
          %v9860 = vsub.f32 1.0, %v9859
          %v9861 = vmul.f32 %v9858, %v9860
          %v9862 = vadd.f32 %v9858, %v9861
          %vm9863 = vweird.f32 %v9857
          %vm9864 = vweird.f32 %v9858
          %vm9865 = vmor %vm9863, %vm9864
          %v9866 = vsel %vm9865, %v9858, %v9862
          %v9867 = vand.u32 2147483647, %v9857
          %vm9868 = vcmp.eq.f32.partialorder %v9867, 8.507059e+37
          %v9869 = vand.u32 %v9857, 2147483648
          %v9870 = vor.u32 1.1754944e-38, %v9869
          %v9871 = vsel %vm9868, %v9870, %v9866
          %s9872 = vtos %v9871
          %s9873 = smul.f32 %s9843, %s9872
          %vm9874 = vcmp.eq.s32.totalorder %v9621, 0
          %v9875 = vstv %s9873
          %v9876 = vsel %vm9874, %v9875, 0.0
          %9877 = vst [vmem:[#allocation29] sm:$0x1] %v9876
        $region212: #{forward.1} parent=119 // pred_fallthru
          _
        // Predicated region
        $region213: #{forward.1} parent=119 // pred_check
          %p9878 = pneg %p792
        $region214: #{forward.1} parent=119 // pred_check_branch
          %9880 = sbr.rel (%p9878) target = $region216
        $region215: #{forward.1} parent=119 // pred_region
          _
        $region216: #{forward.1} parent=119 // pred_fallthru
          _
        // Predicated region
        $region217: #{forward.1} parent=119 // pred_check
          %p9881 = pneg %p813
        $region218: #{forward.1} parent=119 // pred_check_branch
          %9883 = sbr.rel (%p9881) target = $region220
        $region219: #{forward.1} parent=119 // pred_region
          %9885 = vsyncadd [#allocation7], 0
          %s9887 = sshll.u32 [#allocation29], 4
          %s9888 = int_to_ptr.vmem [resolvable:$true] %s9887
          %s9889 = sshll.u32 %s26, 4
          %s9890 = int_to_ptr.hbm [resolvable:$true] %s9889
          %9892 = dma.vmem_to_hbm [thread:$0]  %s9888, 16, %s9890, [#allocation7]
        $region220: #{forward.1} parent=119 // pred_fallthru
          _
        // Predicated region
        $region221: #{forward.1} parent=119 // pred_check
          %p9893 = pneg %p792
        $region222: #{forward.1} parent=119 // pred_check_branch
          %9895 = sbr.rel (%p9893) target = $region224
        $region223: #{forward.1} parent=119 // pred_region
          _
        $region224: #{forward.1} parent=119 // pred_fallthru
          _
        // Predicated region
        $region225: #{forward.1} parent=119 // pred_check
          %p9896 = pneg %p813
        $region226: #{forward.1} parent=119 // pred_check_branch
          %9898 = sbr.rel (%p9896) target = $region228
        $region227: #{forward.1} parent=119 // pred_region
          %9900 = dma.done [#allocation7], 16
        $region228: #{forward.1} parent=119 // pred_fallthru
          _
      $region120: #{forward.1} parent=5 // pred_fallthru
        _
      %p9901 = scmp.le.s32.totalorder 2, %s45
      // Predicated region
      $region229: #{forward.1} parent=5 // pred_check
        %p9902 = pneg %p9901
      $region230: #{forward.1} parent=5 // pred_check_branch
        %9904 = sbr.rel (%p9902) target = $region232
      $region231: #{forward.1} parent=5 // pred_region
        %s9905 = ssub.s32 %s45, 2
      $region232: #{forward.1} parent=5 // pred_fallthru
        _
    $region6: #{forward.1} parent=1 // loop_footer
      %s49 = sadd.s32 1, %s45
    $region7: #{forward.1} parent=1 // loop_footer_branch
      %44 = sbr.rel target = $region3
    $region8: #{forward.1} parent=1 // loop_exit
      _
    %9906 = vsyncpa [#allocation6], 1
    %s9907 = scalar_lea.sflag [#allocation6], 1
    %9908 = vsyncpa %s9907, 1
    %9909 = vsyncpa [#allocation9], 1
    %s9910 = scalar_lea.sflag [#allocation9], 1
    %9911 = vsyncpa %s9910, 1
    %9912 = vsyncpa [#allocation12], 1
    %s9913 = scalar_lea.sflag [#allocation12], 1
    %9914 = vsyncpa %s9913, 1
    %9915 = vsyncpa [#allocation15], 1
    %s9916 = scalar_lea.sflag [#allocation15], 1
    %9917 = vsyncpa %s9916, 1
    %9918 = vsyncpa [#allocation18], 1
    %9919 = vsyncpa [#allocation7], 1
    %s9920 = scalar_lea.sflag [#allocation7], 1
    %9921 = vsyncpa %s9920, 1

</llo_original>
